<compile_context>
chip_gen: v7x
topology: tpu7x:2x2x1
jax: 0.10.0
libtpu: 0.0.40
codegen_flags: <defaults>
</compile_context>

<pallas_src>
import functools
import math

import jax
import jax.numpy as jnp
from jax import lax
from jax.experimental import pallas as pl
from jax.experimental.pallas import tpu as pltpu

LANE = 128         # H and E padded to multiples of this (lane width / f32 tile lanes)
BATCH_ALIGN = 16   # batch padded to this (bf16 sublane tile height; multiple of f32 tile 8)


def _round_up(x, m):
    return (x + m - 1) // m * m


# ----------------------------------------------------------------------------
# GRU cell (PyTorch gate order r, z, n).
#   gi already contains b_ih plus the folded r/z parts of b_hh.
#   gh is the raw hidden projection h @ W_hh (no bias).
#   b_hn is the n-gate hidden bias (must stay inside r * (.) for PyTorch parity).
# ----------------------------------------------------------------------------
def _gru_cell(gi, gh, b_hn, h, Hp):
    r = jax.nn.sigmoid(gi[:, :Hp] + gh[:, :Hp])
    z = jax.nn.sigmoid(gi[:, Hp:2 * Hp] + gh[:, Hp:2 * Hp])
    n = jnp.tanh(gi[:, 2 * Hp:3 * Hp] + r * (gh[:, 2 * Hp:3 * Hp] + b_hn))
    return (1.0 - z) * n + z * h


def _bidir_recurrence(gi_scr, w_hh_f, w_hh_b, b_hn_f, b_hn_b,
                      out_f_ref, out_b_ref, S, Bp, Hp, unroll):
    """Serial part of a bidirectional GRU layer.

    gi_scr: (S*Bp, 6*Hp) f32 scratch with hoisted input projections
            (forward gates in columns [:3Hp], backward gates in [3Hp:])."""

    def step(t, carry):
        h_f, h_b = carry
        gh_f = jnp.dot(h_f.astype(jnp.bfloat16), w_hh_f,
                       preferred_element_type=jnp.float32)
        gh_b = jnp.dot(h_b.astype(jnp.bfloat16), w_hh_b,
                       preferred_element_type=jnp.float32)
        i_f = pl.multiple_of(t * Bp, Bp)
        i_b = pl.multiple_of((S - 1 - t) * Bp, Bp)
        g_f = gi_scr[pl.ds(i_f, Bp), :]
        g_b = gi_scr[pl.ds(i_b, Bp), :]
        h_f_new = _gru_cell(g_f[:, :3 * Hp], gh_f, b_hn_f, h_f, Hp)
        h_b_new = _gru_cell(g_b[:, 3 * Hp:], gh_b, b_hn_b, h_b, Hp)
        out_f_ref[pl.ds(i_f, Bp), :] = h_f_new.astype(out_f_ref.dtype)
        out_b_ref[pl.ds(i_b, Bp), :] = h_b_new.astype(out_b_ref.dtype)
        return h_f_new, h_b_new

    h0 = jnp.zeros((Bp, Hp), jnp.float32)
    lax.fori_loop(0, S, step, (h0, h0), unroll=unroll)


# ----------------------------------------------------------------------------
# Layer 0: single (embedding) input, fused fwd+bwd directions.
# ----------------------------------------------------------------------------
def _bigru_first_kernel(x_ref, w6_ref, whf_ref, whb_ref, b6_ref, bhnf_ref, bhnb_ref,
                        out_f_ref, out_b_ref, gi_scr, *, S, Bp, Hp, unroll):
    # One hoisted input projection for BOTH directions: (S*Bp, Ep) x (Ep, 6Hp) on the MXU.
    gi = jnp.dot(x_ref[...], w6_ref[...], preferred_element_type=jnp.float32)
    gi_scr[...] = gi + b6_ref[...]
    _bidir_recurrence(gi_scr, whf_ref[...], whb_ref[...], bhnf_ref[...], bhnb_ref[...],
                      out_f_ref, out_b_ref, S, Bp, Hp, unroll)


# ----------------------------------------------------------------------------
# Intermediate layers (num_layers > 2): dual (fwd, bwd) inputs, W_ih rows split in-kernel
# (no XLA concat of the previous layer's halves).
# ----------------------------------------------------------------------------
def _bigru_mid_kernel(xf_ref, xb_ref, w6_ref, whf_ref, whb_ref, b6_ref, bhnf_ref, bhnb_ref,
                      out_f_ref, out_b_ref, gi_scr, *, S, Bp, Hp, unroll):
    w6 = w6_ref[...]
    gi = (jnp.dot(xf_ref[...], w6[:Hp], preferred_element_type=jnp.float32)
          + jnp.dot(xb_ref[...], w6[Hp:], preferred_element_type=jnp.float32))
    gi_scr[...] = gi + b6_ref[...]
    _bidir_recurrence(gi_scr, whf_ref[...], whb_ref[...], bhnf_ref[...], bhnb_ref[...],
                      out_f_ref, out_b_ref, S, Bp, Hp, unroll)


# ----------------------------------------------------------------------------
# Final layer + LayerNorm + Linear head — only gru_out[:, -1, :] is consumed.
# ----------------------------------------------------------------------------
def _final_head_kernel(in_f_ref, in_b_ref,
                       wif_ref, whf_ref, bgif_ref, bhnf_ref,
                       wib_ref, bgib_ref, bhnb_ref,
                       gamma_ref, beta_ref, fcw_ref, fcb_ref,
                       out_ref, gi_scr, *, S, Bp, H, Hp, unroll):
    # Hoisted forward-direction input projection for all timesteps.
    wif = wif_ref[...]
    gi = (jnp.dot(in_f_ref[...], wif[:Hp], preferred_element_type=jnp.float32)
          + jnp.dot(in_b_ref[...], wif[Hp:], preferred_element_type=jnp.float32))
    gi_scr[...] = gi + bgif_ref[...]

    w_hh_f = whf_ref[...]
    b_hn_f = bhnf_ref[...]

    def step(t, h_f):
        gh = jnp.dot(h_f.astype(jnp.bfloat16), w_hh_f, preferred_element_type=jnp.float32)
        i_f = pl.multiple_of(t * Bp, Bp)
        return _gru_cell(gi_scr[pl.ds(i_f, Bp), :], gh, b_hn_f, h_f, Hp)

    h0 = jnp.zeros((Bp, Hp), jnp.float32)
    h_f_last = lax.fori_loop(0, S, step, h0, unroll=unroll)

    # Backward half of gru_out[:, -1, :] is ONE GRU step on x[S-1] with h0 = 0
    # (reverse pass starts at the last timestep), so h @ W_hh_b vanishes.
    wib = wib_ref[...]
    xf_last = in_f_ref[pl.ds((S - 1) * Bp, Bp), :]
    xb_last = in_b_ref[pl.ds((S - 1) * Bp, Bp), :]
    gi_b = (jnp.dot(xf_last, wib[:Hp], preferred_element_type=jnp.float32)
            + jnp.dot(xb_last, wib[Hp:], preferred_element_type=jnp.float32)
            + bgib_ref[...])
    h_b_last = _gru_cell(gi_b, jnp.zeros((Bp, 3 * Hp), jnp.float32), bhnb_ref[...],
                         jnp.zeros((Bp, Hp), jnp.float32), Hp)

    # LayerNorm(2H) + Linear(2H -> C) on the real (unpadded) features; dropout = identity.
    last = jnp.concatenate([h_f_last[:, :H], h_b_last[:, :H]], axis=-1)   # (Bp, 2H)
    mean = jnp.mean(last, axis=-1, keepdims=True)
    var = jnp.mean((last - mean) ** 2, axis=-1, keepdims=True)
    xn = (last - mean) * lax.rsqrt(var + 1e-5)
    y = xn * gamma_ref[...] + beta_ref[...]
    out_ref[...] = (jnp.dot(y, fcw_ref[...], preferred_element_type=jnp.float32)
                    + fcb_ref[...])


# ----------------------------------------------------------------------------
# pallas_call wrappers (whole arrays resident in VMEM; no grid).
# ----------------------------------------------------------------------------
def _vmem_limit_bytes(arrs, scratch_bytes):
    total = scratch_bytes
    for a in arrs:
        total += math.prod(a.shape) * jnp.dtype(a.dtype).itemsize
    est = 2 * total + (4 << 20)
    return int(min(max(est, 16 << 20), 64 << 20))


def bigru_first_layer(x_flat, lp, S, Bp, Hp, unroll):
    out_sds = jax.ShapeDtypeStruct((S * Bp, Hp), jnp.bfloat16)
    args = (x_flat, lp["w6"], lp["w_hh_f"], lp["w_hh_b"],
            lp["b_gi6"], lp["b_hn_f"], lp["b_hn_b"])
    limit = _vmem_limit_bytes(list(args) + [out_sds, out_sds], S * Bp * 6 * Hp * 4)
    kern = functools.partial(_bigru_first_kernel, S=S, Bp=Bp, Hp=Hp, unroll=unroll)
    return pl.pallas_call(
        kern,
        out_shape=(out_sds, out_sds),
        scratch_shapes=[pltpu.VMEM((S * Bp, 6 * Hp), jnp.float32)],
        compiler_params=pltpu.CompilerParams(vmem_limit_bytes=limit),
    )(*args)


def bigru_mid_layer(in_f, in_b, lp, S, Bp, Hp, unroll):
    out_sds = jax.ShapeDtypeStruct((S * Bp, Hp), jnp.bfloat16)
    args = (in_f, in_b, lp["w6"], lp["w_hh_f"], lp["w_hh_b"],
            lp["b_gi6"], lp["b_hn_f"], lp["b_hn_b"])
    limit = _vmem_limit_bytes(list(args) + [out_sds, out_sds], S * Bp * 6 * Hp * 4)
    kern = functools.partial(_bigru_mid_kernel, S=S, Bp=Bp, Hp=Hp, unroll=unroll)
    return pl.pallas_call(
        kern,
        out_shape=(out_sds, out_sds),
        scratch_shapes=[pltpu.VMEM((S * Bp, 6 * Hp), jnp.float32)],
        compiler_params=pltpu.CompilerParams(vmem_limit_bytes=limit),
    )(*args)


def final_bigru_head(in_f, in_b, lp, ln_gamma, ln_beta, fc_w, fc_b,
                     S, Bp, H, Hp, num_classes, unroll):
    out_sds = jax.ShapeDtypeStruct((Bp, num_classes), jnp.float32)
    args = (in_f, in_b,
            lp["w_ih_f"], lp["w_hh_f"], lp["b_gi_f"], lp["b_hn_f"],
            lp["w_ih_b"], lp["b_gi_b"], lp["b_hn_b"],
            ln_gamma, ln_beta, fc_w, fc_b)
    limit = _vmem_limit_bytes(list(args) + [out_sds], S * Bp * 3 * Hp * 4)
    kern = functools.partial(_final_head_kernel, S=S, Bp=Bp, H=H, Hp=Hp, unroll=unroll)
    return pl.pallas_call(
        kern,
        out_shape=out_sds,
        scratch_shapes=[pltpu.VMEM((S * Bp, 3 * Hp), jnp.float32)],
        compiler_params=pltpu.CompilerParams(vmem_limit_bytes=limit),
    )(*args)


# ----------------------------------------------------------------------------
# Full TextRNN forward (inference; dropouts are identity).
# ----------------------------------------------------------------------------
def text_rnn_forward(x_idx, kp, *, hidden_size, num_layers, num_classes):
    assert num_layers >= 2, "this implementation expects num_layers >= 2 (module default: 2)"
    B, S = x_idx.shape
    H = hidden_size
    Hp = _round_up(H, LANE)
    Ep = kp["embedding"].shape[1]                   # already padded to a multiple of 128
    Bp = _round_up(max(B, BATCH_ALIGN), BATCH_ALIGN)
    unroll = max(1, min(8, S))                      # partial unroll of the serial loop

    # Embedding gather + time-major flatten + batch padding stay in XLA (glue).
    idx_p = jnp.pad(x_idx, ((0, Bp - B), (0, 0)))                 # (Bp, S)
    emb = jnp.take(kp["embedding"], idx_p, axis=0)                # (Bp, S, Ep) bf16
    x_flat = jnp.transpose(emb, (1, 0, 2)).reshape(S * Bp, Ep)    # time-major (S*Bp, Ep)

    out_f, out_b = bigru_first_layer(x_flat, kp["gru"][0], S, Bp, Hp, unroll)
    for layer in range(1, num_layers - 1):                        # only if num_layers > 2
        out_f, out_b = bigru_mid_layer(out_f, out_b, kp["gru"][layer], S, Bp, Hp, unroll)

    logits = final_bigru_head(out_f, out_b, kp["gru"][num_layers - 1],
                              kp["ln_gamma"], kp["ln_beta"], kp["fc_w"], kp["fc_b"],
                              S, Bp, H, Hp, num_classes, unroll)
    return logits[:B]


# ----------------------------------------------------------------------------
# Parameter construction (mirrors nn.Module __init__ shapes) + kernel-layout packing.
# ----------------------------------------------------------------------------
def make_params(key, vocab_size, embedding_dim, hidden_size, num_layers, num_classes):
    keys = iter(jax.random.split(key, 8 * num_layers + 8))

    # Embedding: xavier_normal_, then row-wise L2 normalization (F.normalize p=2 dim=1).
    std = (2.0 / (vocab_size + embedding_dim)) ** 0.5
    emb = jax.random.normal(next(keys), (vocab_size, embedding_dim), jnp.float32) * std
    emb = emb / jnp.maximum(jnp.linalg.norm(emb, axis=1, keepdims=True), 1e-12)

    def uniform(k, shape, bound):
        return jax.random.uniform(k, shape, jnp.float32, -bound, bound)

    bound = 1.0 / (hidden_size ** 0.5)
    gru_layers = []
    for layer in range(num_layers):
        in_dim = embedding_dim if layer == 0 else 2 * hidden_size
        lp = {}
        for tag in ("f", "b"):
            lp[f"w_ih_{tag}"] = uniform(next(keys), (in_dim, 3 * hidden_size), bound)
            lp[f"w_hh_{tag}"] = uniform(next(keys), (hidden_size, 3 * hidden_size), bound)
            lp[f"b_ih_{tag}"] = uniform(next(keys), (1, 3 * hidden_size), bound)
            lp[f"b_hh_{tag}"] = uniform(next(keys), (1, 3 * hidden_size), bound)
        gru_layers.append(lp)

    fc_bound = 1.0 / ((2 * hidden_size) ** 0.5)
    return {
        "embedding": emb,
        "gru": gru_layers,
        "ln_gamma": jnp.ones((1, 2 * hidden_size), jnp.float32),
        "ln_beta": jnp.zeros((1, 2 * hidden_size), jnp.float32),
        "fc_w": uniform(next(keys), (2 * hidden_size, num_classes), fc_bound),
        "fc_b": uniform(next(keys), (1, num_classes), fc_bound),
    }


def prepare_kernel_params(raw, embedding_dim, hidden_size, num_layers):
    """Pad to lane/sublane-aligned shapes, fuse the two directions' W_ih, fold biases,
    cast MXU operands to bf16."""
    H = hidden_size
    Hp = _round_up(H, LANE)
    Ep = _round_up(embedding_dim, LANE)

    def pad_gate_cols(w):   # (..., 3H) -> (..., 3Hp), each gate block padded separately
        parts = [w[:, g * H:(g + 1) * H] for g in range(3)]
        parts = [jnp.pad(p, ((0, 0), (0, Hp - H))) for p in parts]
        return jnp.concatenate(parts, axis=1)

    def pad_rows(w, rows):
        return jnp.pad(w, ((0, rows - w.shape[0]), (0, 0)))

    gru = []
    for layer in range(num_layers):
        rp = raw["gru"][layer]
        lp = {}
        ih_padded = {}
        for tag in ("f", "b"):
            w_ih, w_hh = rp[f"w_ih_{tag}"], rp[f"w_hh_{tag}"]
            b_ih, b_hh = rp[f"b_ih_{tag}"], rp[f"b_hh_{tag}"]
            if layer == 0:
                w_ih_p = pad_rows(pad_gate_cols(w_ih), Ep)                    # (Ep, 3Hp)
            else:
                # rows [0:H] multiply the forward half of the previous layer's output,
                # rows [H:2H] the backward half; pad each row block to Hp.
                w_ih_p = jnp.concatenate(
                    [pad_rows(pad_gate_cols(w_ih[:H]), Hp),
                     pad_rows(pad_gate_cols(w_ih[H:]), Hp)], axis=0)          # (2Hp, 3Hp)
            ih_padded[tag] = w_ih_p
            lp[f"w_ih_{tag}"] = w_ih_p.astype(jnp.bfloat16)
            lp[f"w_hh_{tag}"] = pad_rows(pad_gate_cols(w_hh), Hp).astype(jnp.bfloat16)
            # Fold r/z components of b_hh into the input-projection bias (done once, off the
            # serial path); keep only the n-gate hidden bias for the in-loop r*(h_n + b_hn).
            b_gi = jnp.concatenate(
                [b_ih[:, :2 * H] + b_hh[:, :2 * H], b_ih[:, 2 * H:]], axis=1)
            lp[f"b_gi_{tag}"] = pad_gate_cols(b_gi)                            # (1, 3Hp) f32
            lp[f"b_hn_{tag}"] = jnp.pad(b_hh[:, 2 * H:], ((0, 0), (0, Hp - H)))  # (1, Hp) f32
        lp["w6"] = jnp.concatenate([ih_padded["f"], ih_padded["b"]],
                                   axis=1).astype(jnp.bfloat16)                # (rows, 6Hp)
        lp["b_gi6"] = jnp.concatenate([lp["b_gi_f"], lp["b_gi_b"]], axis=1)    # (1, 6Hp) f32
        gru.append(lp)

    emb = jnp.pad(raw["embedding"],
                  ((0, 0), (0, Ep - embedding_dim))).astype(jnp.bfloat16)
    return {
        "embedding": emb,
        "gru": gru,
        "ln_gamma": raw["ln_gamma"], "ln_beta": raw["ln_beta"],
        "fc_w": raw["fc_w"], "fc_b": raw["fc_b"],
    }


if __name__ == "__main__":
    VOCAB = 50
    EMB_DIM = 16
    HIDDEN = 32
    NUM_LAYERS = 2
    NUM_CLASSES = 5
    B, S = 2, 8

    key = jax.random.PRNGKey(0)
    k_params, k_x = jax.random.split(key)

    raw_params = make_params(k_params, VOCAB, EMB_DIM, HIDDEN, NUM_LAYERS, NUM_CLASSES)
    kparams = prepare_kernel_params(raw_params, EMB_DIM, HIDDEN, NUM_LAYERS)
    x_idx = jax.random.randint(k_x, (B, S), 0, VOCAB, dtype=jnp.int32)

    fwd = jax.jit(functools.partial(text_rnn_forward,
                                    hidden_size=HIDDEN,
                                    num_layers=NUM_LAYERS,
                                    num_classes=NUM_CLASSES))
    logits = fwd(x_idx, kparams)
    jax.block_until_ready(logits)

    assert logits.shape == (B, NUM_CLASSES)
    assert bool(jnp.all(jnp.isfinite(logits)))
    print("KERNEL_OK")
</pallas_src>

<mosaic_0001>
module attributes {stable_mosaic.version = 11 : i64} {
  func.func @_final_head_kernel(%arg0: memref<128x128xbf16, #tpu.memory_space<vmem>>, %arg1: memref<128x128xbf16, #tpu.memory_space<vmem>>, %arg2: memref<256x384xbf16, #tpu.memory_space<vmem>>, %arg3: memref<128x384xbf16, #tpu.memory_space<vmem>>, %arg4: memref<1x384xf32, #tpu.memory_space<vmem>>, %arg5: memref<1x128xf32, #tpu.memory_space<vmem>>, %arg6: memref<256x384xbf16, #tpu.memory_space<vmem>>, %arg7: memref<1x384xf32, #tpu.memory_space<vmem>>, %arg8: memref<1x128xf32, #tpu.memory_space<vmem>>, %arg9: memref<1x64xf32, #tpu.memory_space<vmem>>, %arg10: memref<1x64xf32, #tpu.memory_space<vmem>>, %arg11: memref<64x5xf32, #tpu.memory_space<vmem>>, %arg12: memref<1x5xf32, #tpu.memory_space<vmem>>, %arg13: memref<16x5xf32, #tpu.memory_space<vmem>>, %arg14: memref<128x384xf32, #tpu.memory_space<vmem>>) attributes {dimension_semantics = [], scalar_prefetch = 0 : i64, scratch_operands = 1 : i64, tpu.core_type = #tpu.core_type<tc>} {
    %c0 = arith.constant 0 : index
    %c0_0 = arith.constant 0 : index
    %0 = vector.load %arg2[%c0, %c0_0] : memref<256x384xbf16, #tpu.memory_space<vmem>>, vector<256x384xbf16>
    %c0_1 = arith.constant 0 : index
    %c0_2 = arith.constant 0 : index
    %1 = vector.load %arg0[%c0_1, %c0_2] : memref<128x128xbf16, #tpu.memory_space<vmem>>, vector<128x128xbf16>
    %2 = vector.extract_strided_slice %0 {offsets = [0, 0], sizes = [128, 384], strides = [1, 1]} : vector<256x384xbf16> to vector<128x384xbf16>
    %cst = arith.constant dense<0.000000e+00> : vector<128x384xf32>
    %3 = tpu.matmul %1, %2, %cst {dimension_numbers = #tpu.dot_dimension_numbers<[1], [0], [0], [1], [0, 0, 1, 1], [], []>} : vector<128x128xbf16>, vector<128x384xbf16>, vector<128x384xf32> -> vector<128x384xf32>
    %c0_3 = arith.constant 0 : index
    %c0_4 = arith.constant 0 : index
    %4 = vector.load %arg1[%c0_3, %c0_4] : memref<128x128xbf16, #tpu.memory_space<vmem>>, vector<128x128xbf16>
    %5 = vector.extract_strided_slice %0 {offsets = [128, 0], sizes = [128, 384], strides = [1, 1]} : vector<256x384xbf16> to vector<128x384xbf16>
    %cst_5 = arith.constant dense<0.000000e+00> : vector<128x384xf32>
    %6 = tpu.matmul %4, %5, %cst_5 {dimension_numbers = #tpu.dot_dimension_numbers<[1], [0], [0], [1], [0, 0, 1, 1], [], []>} : vector<128x128xbf16>, vector<128x384xbf16>, vector<128x384xf32> -> vector<128x384xf32>
    %7 = arith.addf %3, %6 : vector<128x384xf32>
    %c0_6 = arith.constant 0 : index
    %c0_7 = arith.constant 0 : index
    %8 = vector.load %arg4[%c0_6, %c0_7] : memref<1x384xf32, #tpu.memory_space<vmem>>, vector<1x384xf32>
    %9 = vector.broadcast %8 : vector<1x384xf32> to vector<128x384xf32>
    %10 = arith.addf %7, %9 : vector<128x384xf32>
    %c0_8 = arith.constant 0 : index
    %c0_9 = arith.constant 0 : index
    %11 = vector.load %arg14[%c0_8, %c0_9] : memref<128x384xf32, #tpu.memory_space<vmem>>, vector<128x384xf32>
    tpu.vector_store %arg14[%c0_8, %c0_9], %10 {strides = array<i32>} : memref<128x384xf32, #tpu.memory_space<vmem>>, vector<128x384xf32>,
    %c0_10 = arith.constant 0 : index
    %c0_11 = arith.constant 0 : index
    %12 = vector.load %arg3[%c0_10, %c0_11] : memref<128x384xbf16, #tpu.memory_space<vmem>>, vector<128x384xbf16>
    %c0_12 = arith.constant 0 : index
    %c0_13 = arith.constant 0 : index
    %13 = vector.load %arg5[%c0_12, %c0_13] : memref<1x128xf32, #tpu.memory_space<vmem>>, vector<1x128xf32>
    %cst_14 = arith.constant 0.000000e+00 : f32
    %14 = vector.broadcast %cst_14 : f32 to vector<16x128xf32>
    %c0_i32 = arith.constant 0 : i32
    %15 = arith.truncf %14 : vector<16x128xf32> to vector<16x128xbf16>
    %cst_15 = arith.constant dense<0.000000e+00> : vector<16x384xf32>
    %16 = tpu.matmul %15, %12, %cst_15 {dimension_numbers = #tpu.dot_dimension_numbers<[1], [0], [0], [1], [0, 0, 1, 1], [], []>} : vector<16x128xbf16>, vector<128x384xbf16>, vector<16x384xf32> -> vector<16x384xf32>
    %c16_i32 = arith.constant 16 : i32
    %17 = arith.muli %c0_i32, %c16_i32 : i32
    %18 = tpu.assume_multiple %17, 16 : i32
    %19 = arith.index_cast %18 : i32 to index
    %c0_16 = arith.constant 0 : index
    %20 = vector.load %arg14[%19, %c0_16] : memref<128x384xf32, #tpu.memory_space<vmem>>, vector<16x384xf32>
    %21 = vector.extract_strided_slice %20 {offsets = [0, 0], sizes = [16, 128], strides = [1, 1]} : vector<16x384xf32> to vector<16x128xf32>
    %22 = vector.extract_strided_slice %16 {offsets = [0, 0], sizes = [16, 128], strides = [1, 1]} : vector<16x384xf32> to vector<16x128xf32>
    %23 = arith.addf %21, %22 : vector<16x128xf32>
    %24 = arith.negf %23 : vector<16x128xf32>
    %25 = math.exp %24 : vector<16x128xf32>
    %cst_17 = arith.constant 1.000000e+00 : f32
    %26 = vector.broadcast %cst_17 : f32 to vector<16x128xf32>
    %27 = arith.addf %26, %25 : vector<16x128xf32>
    %28 = arith.divf %26, %27 : vector<16x128xf32>
    %29 = vector.extract_strided_slice %20 {offsets = [0, 128], sizes = [16, 128], strides = [1, 1]} : vector<16x384xf32> to vector<16x128xf32>
    %30 = vector.extract_strided_slice %16 {offsets = [0, 128], sizes = [16, 128], strides = [1, 1]} : vector<16x384xf32> to vector<16x128xf32>
    %31 = arith.addf %29, %30 : vector<16x128xf32>
    %32 = arith.negf %31 : vector<16x128xf32>
    %33 = math.exp %32 : vector<16x128xf32>
    %cst_18 = arith.constant 1.000000e+00 : f32
    %34 = vector.broadcast %cst_18 : f32 to vector<16x128xf32>
    %35 = arith.addf %34, %33 : vector<16x128xf32>
    %36 = arith.divf %34, %35 : vector<16x128xf32>
    %37 = vector.extract_strided_slice %20 {offsets = [0, 256], sizes = [16, 128], strides = [1, 1]} : vector<16x384xf32> to vector<16x128xf32>
    %38 = vector.extract_strided_slice %16 {offsets = [0, 256], sizes = [16, 128], strides = [1, 1]} : vector<16x384xf32> to vector<16x128xf32>
    %39 = vector.broadcast %13 : vector<1x128xf32> to vector<16x128xf32>
    %40 = arith.addf %38, %39 : vector<16x128xf32>
    %41 = arith.mulf %28, %40 : vector<16x128xf32>
    %42 = arith.addf %37, %41 : vector<16x128xf32>
    %43 = math.tanh %42 : vector<16x128xf32>
    %cst_19 = arith.constant 1.000000e+00 : f32
    %44 = vector.broadcast %cst_19 : f32 to vector<16x128xf32>
    %45 = arith.subf %44, %36 : vector<16x128xf32>
    %46 = arith.mulf %45, %43 : vector<16x128xf32>
    %47 = arith.mulf %36, %14 : vector<16x128xf32>
    %48 = arith.addf %46, %47 : vector<16x128xf32>
    %c1_i32 = arith.constant 1 : i32
    %49 = arith.truncf %48 : vector<16x128xf32> to vector<16x128xbf16>
    %cst_20 = arith.constant dense<0.000000e+00> : vector<16x384xf32>
    %50 = tpu.matmul %49, %12, %cst_20 {dimension_numbers = #tpu.dot_dimension_numbers<[1], [0], [0], [1], [0, 0, 1, 1], [], []>} : vector<16x128xbf16>, vector<128x384xbf16>, vector<16x384xf32> -> vector<16x384xf32>
    %c16_i32_21 = arith.constant 16 : i32
    %51 = arith.muli %c1_i32, %c16_i32_21 : i32
    %52 = tpu.assume_multiple %51, 16 : i32
    %53 = arith.index_cast %52 : i32 to index
    %c0_22 = arith.constant 0 : index
    %54 = vector.load %arg14[%53, %c0_22] : memref<128x384xf32, #tpu.memory_space<vmem>>, vector<16x384xf32>
    %55 = vector.extract_strided_slice %54 {offsets = [0, 0], sizes = [16, 128], strides = [1, 1]} : vector<16x384xf32> to vector<16x128xf32>
    %56 = vector.extract_strided_slice %50 {offsets = [0, 0], sizes = [16, 128], strides = [1, 1]} : vector<16x384xf32> to vector<16x128xf32>
    %57 = arith.addf %55, %56 : vector<16x128xf32>
    %58 = arith.negf %57 : vector<16x128xf32>
    %59 = math.exp %58 : vector<16x128xf32>
    %cst_23 = arith.constant 1.000000e+00 : f32
    %60 = vector.broadcast %cst_23 : f32 to vector<16x128xf32>
    %61 = arith.addf %60, %59 : vector<16x128xf32>
    %62 = arith.divf %60, %61 : vector<16x128xf32>
    %63 = vector.extract_strided_slice %54 {offsets = [0, 128], sizes = [16, 128], strides = [1, 1]} : vector<16x384xf32> to vector<16x128xf32>
    %64 = vector.extract_strided_slice %50 {offsets = [0, 128], sizes = [16, 128], strides = [1, 1]} : vector<16x384xf32> to vector<16x128xf32>
    %65 = arith.addf %63, %64 : vector<16x128xf32>
    %66 = arith.negf %65 : vector<16x128xf32>
    %67 = math.exp %66 : vector<16x128xf32>
    %cst_24 = arith.constant 1.000000e+00 : f32
    %68 = vector.broadcast %cst_24 : f32 to vector<16x128xf32>
    %69 = arith.addf %68, %67 : vector<16x128xf32>
    %70 = arith.divf %68, %69 : vector<16x128xf32>
    %71 = vector.extract_strided_slice %54 {offsets = [0, 256], sizes = [16, 128], strides = [1, 1]} : vector<16x384xf32> to vector<16x128xf32>
    %72 = vector.extract_strided_slice %50 {offsets = [0, 256], sizes = [16, 128], strides = [1, 1]} : vector<16x384xf32> to vector<16x128xf32>
    %73 = vector.broadcast %13 : vector<1x128xf32> to vector<16x128xf32>
    %74 = arith.addf %72, %73 : vector<16x128xf32>
    %75 = arith.mulf %62, %74 : vector<16x128xf32>
    %76 = arith.addf %71, %75 : vector<16x128xf32>
    %77 = math.tanh %76 : vector<16x128xf32>
    %cst_25 = arith.constant 1.000000e+00 : f32
    %78 = vector.broadcast %cst_25 : f32 to vector<16x128xf32>
    %79 = arith.subf %78, %70 : vector<16x128xf32>
    %80 = arith.mulf %79, %77 : vector<16x128xf32>
    %81 = arith.mulf %70, %48 : vector<16x128xf32>
    %82 = arith.addf %80, %81 : vector<16x128xf32>
    %c2_i32 = arith.constant 2 : i32
    %83 = arith.truncf %82 : vector<16x128xf32> to vector<16x128xbf16>
    %cst_26 = arith.constant dense<0.000000e+00> : vector<16x384xf32>
    %84 = tpu.matmul %83, %12, %cst_26 {dimension_numbers = #tpu.dot_dimension_numbers<[1], [0], [0], [1], [0, 0, 1, 1], [], []>} : vector<16x128xbf16>, vector<128x384xbf16>, vector<16x384xf32> -> vector<16x384xf32>
    %c16_i32_27 = arith.constant 16 : i32
    %85 = arith.muli %c2_i32, %c16_i32_27 : i32
    %86 = tpu.assume_multiple %85, 16 : i32
    %87 = arith.index_cast %86 : i32 to index
    %c0_28 = arith.constant 0 : index
    %88 = vector.load %arg14[%87, %c0_28] : memref<128x384xf32, #tpu.memory_space<vmem>>, vector<16x384xf32>
    %89 = vector.extract_strided_slice %88 {offsets = [0, 0], sizes = [16, 128], strides = [1, 1]} : vector<16x384xf32> to vector<16x128xf32>
    %90 = vector.extract_strided_slice %84 {offsets = [0, 0], sizes = [16, 128], strides = [1, 1]} : vector<16x384xf32> to vector<16x128xf32>
    %91 = arith.addf %89, %90 : vector<16x128xf32>
    %92 = arith.negf %91 : vector<16x128xf32>
    %93 = math.exp %92 : vector<16x128xf32>
    %cst_29 = arith.constant 1.000000e+00 : f32
    %94 = vector.broadcast %cst_29 : f32 to vector<16x128xf32>
    %95 = arith.addf %94, %93 : vector<16x128xf32>
    %96 = arith.divf %94, %95 : vector<16x128xf32>
    %97 = vector.extract_strided_slice %88 {offsets = [0, 128], sizes = [16, 128], strides = [1, 1]} : vector<16x384xf32> to vector<16x128xf32>
    %98 = vector.extract_strided_slice %84 {offsets = [0, 128], sizes = [16, 128], strides = [1, 1]} : vector<16x384xf32> to vector<16x128xf32>
    %99 = arith.addf %97, %98 : vector<16x128xf32>
    %100 = arith.negf %99 : vector<16x128xf32>
    %101 = math.exp %100 : vector<16x128xf32>
    %cst_30 = arith.constant 1.000000e+00 : f32
    %102 = vector.broadcast %cst_30 : f32 to vector<16x128xf32>
    %103 = arith.addf %102, %101 : vector<16x128xf32>
    %104 = arith.divf %102, %103 : vector<16x128xf32>
    %105 = vector.extract_strided_slice %88 {offsets = [0, 256], sizes = [16, 128], strides = [1, 1]} : vector<16x384xf32> to vector<16x128xf32>
    %106 = vector.extract_strided_slice %84 {offsets = [0, 256], sizes = [16, 128], strides = [1, 1]} : vector<16x384xf32> to vector<16x128xf32>
    %107 = vector.broadcast %13 : vector<1x128xf32> to vector<16x128xf32>
    %108 = arith.addf %106, %107 : vector<16x128xf32>
    %109 = arith.mulf %96, %108 : vector<16x128xf32>
    %110 = arith.addf %105, %109 : vector<16x128xf32>
    %111 = math.tanh %110 : vector<16x128xf32>
    %cst_31 = arith.constant 1.000000e+00 : f32
    %112 = vector.broadcast %cst_31 : f32 to vector<16x128xf32>
    %113 = arith.subf %112, %104 : vector<16x128xf32>
    %114 = arith.mulf %113, %111 : vector<16x128xf32>
    %115 = arith.mulf %104, %82 : vector<16x128xf32>
    %116 = arith.addf %114, %115 : vector<16x128xf32>
    %c3_i32 = arith.constant 3 : i32
    %117 = arith.truncf %116 : vector<16x128xf32> to vector<16x128xbf16>
    %cst_32 = arith.constant dense<0.000000e+00> : vector<16x384xf32>
    %118 = tpu.matmul %117, %12, %cst_32 {dimension_numbers = #tpu.dot_dimension_numbers<[1], [0], [0], [1], [0, 0, 1, 1], [], []>} : vector<16x128xbf16>, vector<128x384xbf16>, vector<16x384xf32> -> vector<16x384xf32>
    %c16_i32_33 = arith.constant 16 : i32
    %119 = arith.muli %c3_i32, %c16_i32_33 : i32
    %120 = tpu.assume_multiple %119, 16 : i32
    %121 = arith.index_cast %120 : i32 to index
    %c0_34 = arith.constant 0 : index
    %122 = vector.load %arg14[%121, %c0_34] : memref<128x384xf32, #tpu.memory_space<vmem>>, vector<16x384xf32>
    %123 = vector.extract_strided_slice %122 {offsets = [0, 0], sizes = [16, 128], strides = [1, 1]} : vector<16x384xf32> to vector<16x128xf32>
    %124 = vector.extract_strided_slice %118 {offsets = [0, 0], sizes = [16, 128], strides = [1, 1]} : vector<16x384xf32> to vector<16x128xf32>
    %125 = arith.addf %123, %124 : vector<16x128xf32>
    %126 = arith.negf %125 : vector<16x128xf32>
    %127 = math.exp %126 : vector<16x128xf32>
    %cst_35 = arith.constant 1.000000e+00 : f32
    %128 = vector.broadcast %cst_35 : f32 to vector<16x128xf32>
    %129 = arith.addf %128, %127 : vector<16x128xf32>
    %130 = arith.divf %128, %129 : vector<16x128xf32>
    %131 = vector.extract_strided_slice %122 {offsets = [0, 128], sizes = [16, 128], strides = [1, 1]} : vector<16x384xf32> to vector<16x128xf32>
    %132 = vector.extract_strided_slice %118 {offsets = [0, 128], sizes = [16, 128], strides = [1, 1]} : vector<16x384xf32> to vector<16x128xf32>
    %133 = arith.addf %131, %132 : vector<16x128xf32>
    %134 = arith.negf %133 : vector<16x128xf32>
    %135 = math.exp %134 : vector<16x128xf32>
    %cst_36 = arith.constant 1.000000e+00 : f32
    %136 = vector.broadcast %cst_36 : f32 to vector<16x128xf32>
    %137 = arith.addf %136, %135 : vector<16x128xf32>
    %138 = arith.divf %136, %137 : vector<16x128xf32>
    %139 = vector.extract_strided_slice %122 {offsets = [0, 256], sizes = [16, 128], strides = [1, 1]} : vector<16x384xf32> to vector<16x128xf32>
    %140 = vector.extract_strided_slice %118 {offsets = [0, 256], sizes = [16, 128], strides = [1, 1]} : vector<16x384xf32> to vector<16x128xf32>
    %141 = vector.broadcast %13 : vector<1x128xf32> to vector<16x128xf32>
    %142 = arith.addf %140, %141 : vector<16x128xf32>
    %143 = arith.mulf %130, %142 : vector<16x128xf32>
    %144 = arith.addf %139, %143 : vector<16x128xf32>
    %145 = math.tanh %144 : vector<16x128xf32>
    %cst_37 = arith.constant 1.000000e+00 : f32
    %146 = vector.broadcast %cst_37 : f32 to vector<16x128xf32>
    %147 = arith.subf %146, %138 : vector<16x128xf32>
    %148 = arith.mulf %147, %145 : vector<16x128xf32>
    %149 = arith.mulf %138, %116 : vector<16x128xf32>
    %150 = arith.addf %148, %149 : vector<16x128xf32>
    %c4_i32 = arith.constant 4 : i32
    %151 = arith.truncf %150 : vector<16x128xf32> to vector<16x128xbf16>
    %cst_38 = arith.constant dense<0.000000e+00> : vector<16x384xf32>
    %152 = tpu.matmul %151, %12, %cst_38 {dimension_numbers = #tpu.dot_dimension_numbers<[1], [0], [0], [1], [0, 0, 1, 1], [], []>} : vector<16x128xbf16>, vector<128x384xbf16>, vector<16x384xf32> -> vector<16x384xf32>
    %c16_i32_39 = arith.constant 16 : i32
    %153 = arith.muli %c4_i32, %c16_i32_39 : i32
    %154 = tpu.assume_multiple %153, 16 : i32
    %155 = arith.index_cast %154 : i32 to index
    %c0_40 = arith.constant 0 : index
    %156 = vector.load %arg14[%155, %c0_40] : memref<128x384xf32, #tpu.memory_space<vmem>>, vector<16x384xf32>
    %157 = vector.extract_strided_slice %156 {offsets = [0, 0], sizes = [16, 128], strides = [1, 1]} : vector<16x384xf32> to vector<16x128xf32>
    %158 = vector.extract_strided_slice %152 {offsets = [0, 0], sizes = [16, 128], strides = [1, 1]} : vector<16x384xf32> to vector<16x128xf32>
    %159 = arith.addf %157, %158 : vector<16x128xf32>
    %160 = arith.negf %159 : vector<16x128xf32>
    %161 = math.exp %160 : vector<16x128xf32>
    %cst_41 = arith.constant 1.000000e+00 : f32
    %162 = vector.broadcast %cst_41 : f32 to vector<16x128xf32>
    %163 = arith.addf %162, %161 : vector<16x128xf32>
    %164 = arith.divf %162, %163 : vector<16x128xf32>
    %165 = vector.extract_strided_slice %156 {offsets = [0, 128], sizes = [16, 128], strides = [1, 1]} : vector<16x384xf32> to vector<16x128xf32>
    %166 = vector.extract_strided_slice %152 {offsets = [0, 128], sizes = [16, 128], strides = [1, 1]} : vector<16x384xf32> to vector<16x128xf32>
    %167 = arith.addf %165, %166 : vector<16x128xf32>
    %168 = arith.negf %167 : vector<16x128xf32>
    %169 = math.exp %168 : vector<16x128xf32>
    %cst_42 = arith.constant 1.000000e+00 : f32
    %170 = vector.broadcast %cst_42 : f32 to vector<16x128xf32>
    %171 = arith.addf %170, %169 : vector<16x128xf32>
    %172 = arith.divf %170, %171 : vector<16x128xf32>
    %173 = vector.extract_strided_slice %156 {offsets = [0, 256], sizes = [16, 128], strides = [1, 1]} : vector<16x384xf32> to vector<16x128xf32>
    %174 = vector.extract_strided_slice %152 {offsets = [0, 256], sizes = [16, 128], strides = [1, 1]} : vector<16x384xf32> to vector<16x128xf32>
    %175 = vector.broadcast %13 : vector<1x128xf32> to vector<16x128xf32>
    %176 = arith.addf %174, %175 : vector<16x128xf32>
    %177 = arith.mulf %164, %176 : vector<16x128xf32>
    %178 = arith.addf %173, %177 : vector<16x128xf32>
    %179 = math.tanh %178 : vector<16x128xf32>
    %cst_43 = arith.constant 1.000000e+00 : f32
    %180 = vector.broadcast %cst_43 : f32 to vector<16x128xf32>
    %181 = arith.subf %180, %172 : vector<16x128xf32>
    %182 = arith.mulf %181, %179 : vector<16x128xf32>
    %183 = arith.mulf %172, %150 : vector<16x128xf32>
    %184 = arith.addf %182, %183 : vector<16x128xf32>
    %c5_i32 = arith.constant 5 : i32
    %185 = arith.truncf %184 : vector<16x128xf32> to vector<16x128xbf16>
    %cst_44 = arith.constant dense<0.000000e+00> : vector<16x384xf32>
    %186 = tpu.matmul %185, %12, %cst_44 {dimension_numbers = #tpu.dot_dimension_numbers<[1], [0], [0], [1], [0, 0, 1, 1], [], []>} : vector<16x128xbf16>, vector<128x384xbf16>, vector<16x384xf32> -> vector<16x384xf32>
    %c16_i32_45 = arith.constant 16 : i32
    %187 = arith.muli %c5_i32, %c16_i32_45 : i32
    %188 = tpu.assume_multiple %187, 16 : i32
    %189 = arith.index_cast %188 : i32 to index
    %c0_46 = arith.constant 0 : index
    %190 = vector.load %arg14[%189, %c0_46] : memref<128x384xf32, #tpu.memory_space<vmem>>, vector<16x384xf32>
    %191 = vector.extract_strided_slice %190 {offsets = [0, 0], sizes = [16, 128], strides = [1, 1]} : vector<16x384xf32> to vector<16x128xf32>
    %192 = vector.extract_strided_slice %186 {offsets = [0, 0], sizes = [16, 128], strides = [1, 1]} : vector<16x384xf32> to vector<16x128xf32>
    %193 = arith.addf %191, %192 : vector<16x128xf32>
    %194 = arith.negf %193 : vector<16x128xf32>
    %195 = math.exp %194 : vector<16x128xf32>
    %cst_47 = arith.constant 1.000000e+00 : f32
    %196 = vector.broadcast %cst_47 : f32 to vector<16x128xf32>
    %197 = arith.addf %196, %195 : vector<16x128xf32>
    %198 = arith.divf %196, %197 : vector<16x128xf32>
    %199 = vector.extract_strided_slice %190 {offsets = [0, 128], sizes = [16, 128], strides = [1, 1]} : vector<16x384xf32> to vector<16x128xf32>
    %200 = vector.extract_strided_slice %186 {offsets = [0, 128], sizes = [16, 128], strides = [1, 1]} : vector<16x384xf32> to vector<16x128xf32>
    %201 = arith.addf %199, %200 : vector<16x128xf32>
    %202 = arith.negf %201 : vector<16x128xf32>
    %203 = math.exp %202 : vector<16x128xf32>
    %cst_48 = arith.constant 1.000000e+00 : f32
    %204 = vector.broadcast %cst_48 : f32 to vector<16x128xf32>
    %205 = arith.addf %204, %203 : vector<16x128xf32>
    %206 = arith.divf %204, %205 : vector<16x128xf32>
    %207 = vector.extract_strided_slice %190 {offsets = [0, 256], sizes = [16, 128], strides = [1, 1]} : vector<16x384xf32> to vector<16x128xf32>
    %208 = vector.extract_strided_slice %186 {offsets = [0, 256], sizes = [16, 128], strides = [1, 1]} : vector<16x384xf32> to vector<16x128xf32>
    %209 = vector.broadcast %13 : vector<1x128xf32> to vector<16x128xf32>
    %210 = arith.addf %208, %209 : vector<16x128xf32>
    %211 = arith.mulf %198, %210 : vector<16x128xf32>
    %212 = arith.addf %207, %211 : vector<16x128xf32>
    %213 = math.tanh %212 : vector<16x128xf32>
    %cst_49 = arith.constant 1.000000e+00 : f32
    %214 = vector.broadcast %cst_49 : f32 to vector<16x128xf32>
    %215 = arith.subf %214, %206 : vector<16x128xf32>
    %216 = arith.mulf %215, %213 : vector<16x128xf32>
    %217 = arith.mulf %206, %184 : vector<16x128xf32>
    %218 = arith.addf %216, %217 : vector<16x128xf32>
    %c6_i32 = arith.constant 6 : i32
    %219 = arith.truncf %218 : vector<16x128xf32> to vector<16x128xbf16>
    %cst_50 = arith.constant dense<0.000000e+00> : vector<16x384xf32>
    %220 = tpu.matmul %219, %12, %cst_50 {dimension_numbers = #tpu.dot_dimension_numbers<[1], [0], [0], [1], [0, 0, 1, 1], [], []>} : vector<16x128xbf16>, vector<128x384xbf16>, vector<16x384xf32> -> vector<16x384xf32>
    %c16_i32_51 = arith.constant 16 : i32
    %221 = arith.muli %c6_i32, %c16_i32_51 : i32
    %222 = tpu.assume_multiple %221, 16 : i32
    %223 = arith.index_cast %222 : i32 to index
    %c0_52 = arith.constant 0 : index
    %224 = vector.load %arg14[%223, %c0_52] : memref<128x384xf32, #tpu.memory_space<vmem>>, vector<16x384xf32>
    %225 = vector.extract_strided_slice %224 {offsets = [0, 0], sizes = [16, 128], strides = [1, 1]} : vector<16x384xf32> to vector<16x128xf32>
    %226 = vector.extract_strided_slice %220 {offsets = [0, 0], sizes = [16, 128], strides = [1, 1]} : vector<16x384xf32> to vector<16x128xf32>
    %227 = arith.addf %225, %226 : vector<16x128xf32>
    %228 = arith.negf %227 : vector<16x128xf32>
    %229 = math.exp %228 : vector<16x128xf32>
    %cst_53 = arith.constant 1.000000e+00 : f32
    %230 = vector.broadcast %cst_53 : f32 to vector<16x128xf32>
    %231 = arith.addf %230, %229 : vector<16x128xf32>
    %232 = arith.divf %230, %231 : vector<16x128xf32>
    %233 = vector.extract_strided_slice %224 {offsets = [0, 128], sizes = [16, 128], strides = [1, 1]} : vector<16x384xf32> to vector<16x128xf32>
    %234 = vector.extract_strided_slice %220 {offsets = [0, 128], sizes = [16, 128], strides = [1, 1]} : vector<16x384xf32> to vector<16x128xf32>
    %235 = arith.addf %233, %234 : vector<16x128xf32>
    %236 = arith.negf %235 : vector<16x128xf32>
    %237 = math.exp %236 : vector<16x128xf32>
    %cst_54 = arith.constant 1.000000e+00 : f32
    %238 = vector.broadcast %cst_54 : f32 to vector<16x128xf32>
    %239 = arith.addf %238, %237 : vector<16x128xf32>
    %240 = arith.divf %238, %239 : vector<16x128xf32>
    %241 = vector.extract_strided_slice %224 {offsets = [0, 256], sizes = [16, 128], strides = [1, 1]} : vector<16x384xf32> to vector<16x128xf32>
    %242 = vector.extract_strided_slice %220 {offsets = [0, 256], sizes = [16, 128], strides = [1, 1]} : vector<16x384xf32> to vector<16x128xf32>
    %243 = vector.broadcast %13 : vector<1x128xf32> to vector<16x128xf32>
    %244 = arith.addf %242, %243 : vector<16x128xf32>
    %245 = arith.mulf %232, %244 : vector<16x128xf32>
    %246 = arith.addf %241, %245 : vector<16x128xf32>
    %247 = math.tanh %246 : vector<16x128xf32>
    %cst_55 = arith.constant 1.000000e+00 : f32
    %248 = vector.broadcast %cst_55 : f32 to vector<16x128xf32>
    %249 = arith.subf %248, %240 : vector<16x128xf32>
    %250 = arith.mulf %249, %247 : vector<16x128xf32>
    %251 = arith.mulf %240, %218 : vector<16x128xf32>
    %252 = arith.addf %250, %251 : vector<16x128xf32>
    %c7_i32 = arith.constant 7 : i32
    %253 = arith.truncf %252 : vector<16x128xf32> to vector<16x128xbf16>
    %cst_56 = arith.constant dense<0.000000e+00> : vector<16x384xf32>
    %254 = tpu.matmul %253, %12, %cst_56 {dimension_numbers = #tpu.dot_dimension_numbers<[1], [0], [0], [1], [0, 0, 1, 1], [], []>} : vector<16x128xbf16>, vector<128x384xbf16>, vector<16x384xf32> -> vector<16x384xf32>
    %c16_i32_57 = arith.constant 16 : i32
    %255 = arith.muli %c7_i32, %c16_i32_57 : i32
    %256 = tpu.assume_multiple %255, 16 : i32
    %257 = arith.index_cast %256 : i32 to index
    %c0_58 = arith.constant 0 : index
    %258 = vector.load %arg14[%257, %c0_58] : memref<128x384xf32, #tpu.memory_space<vmem>>, vector<16x384xf32>
    %259 = vector.extract_strided_slice %258 {offsets = [0, 0], sizes = [16, 128], strides = [1, 1]} : vector<16x384xf32> to vector<16x128xf32>
    %260 = vector.extract_strided_slice %254 {offsets = [0, 0], sizes = [16, 128], strides = [1, 1]} : vector<16x384xf32> to vector<16x128xf32>
    %261 = arith.addf %259, %260 : vector<16x128xf32>
    %262 = arith.negf %261 : vector<16x128xf32>
    %263 = math.exp %262 : vector<16x128xf32>
    %cst_59 = arith.constant 1.000000e+00 : f32
    %264 = vector.broadcast %cst_59 : f32 to vector<16x128xf32>
    %265 = arith.addf %264, %263 : vector<16x128xf32>
    %266 = arith.divf %264, %265 : vector<16x128xf32>
    %267 = vector.extract_strided_slice %258 {offsets = [0, 128], sizes = [16, 128], strides = [1, 1]} : vector<16x384xf32> to vector<16x128xf32>
    %268 = vector.extract_strided_slice %254 {offsets = [0, 128], sizes = [16, 128], strides = [1, 1]} : vector<16x384xf32> to vector<16x128xf32>
    %269 = arith.addf %267, %268 : vector<16x128xf32>
    %270 = arith.negf %269 : vector<16x128xf32>
    %271 = math.exp %270 : vector<16x128xf32>
    %cst_60 = arith.constant 1.000000e+00 : f32
    %272 = vector.broadcast %cst_60 : f32 to vector<16x128xf32>
    %273 = arith.addf %272, %271 : vector<16x128xf32>
    %274 = arith.divf %272, %273 : vector<16x128xf32>
    %275 = vector.extract_strided_slice %258 {offsets = [0, 256], sizes = [16, 128], strides = [1, 1]} : vector<16x384xf32> to vector<16x128xf32>
    %276 = vector.extract_strided_slice %254 {offsets = [0, 256], sizes = [16, 128], strides = [1, 1]} : vector<16x384xf32> to vector<16x128xf32>
    %277 = vector.broadcast %13 : vector<1x128xf32> to vector<16x128xf32>
    %278 = arith.addf %276, %277 : vector<16x128xf32>
    %279 = arith.mulf %266, %278 : vector<16x128xf32>
    %280 = arith.addf %275, %279 : vector<16x128xf32>
    %281 = math.tanh %280 : vector<16x128xf32>
    %cst_61 = arith.constant 1.000000e+00 : f32
    %282 = vector.broadcast %cst_61 : f32 to vector<16x128xf32>
    %283 = arith.subf %282, %274 : vector<16x128xf32>
    %284 = arith.mulf %283, %281 : vector<16x128xf32>
    %285 = arith.mulf %274, %252 : vector<16x128xf32>
    %286 = arith.addf %284, %285 : vector<16x128xf32>
    %c8_i32 = arith.constant 8 : i32
    %c0_62 = arith.constant 0 : index
    %c0_63 = arith.constant 0 : index
    %287 = vector.load %arg6[%c0_62, %c0_63] : memref<256x384xbf16, #tpu.memory_space<vmem>>, vector<256x384xbf16>
    %c112 = arith.constant 112 : index
    %c0_64 = arith.constant 0 : index
    %288 = vector.load %arg0[%c112, %c0_64] : memref<128x128xbf16, #tpu.memory_space<vmem>>, vector<16x128xbf16>
    %c112_65 = arith.constant 112 : index
    %c0_66 = arith.constant 0 : index
    %289 = vector.load %arg1[%c112_65, %c0_66] : memref<128x128xbf16, #tpu.memory_space<vmem>>, vector<16x128xbf16>
    %290 = vector.extract_strided_slice %287 {offsets = [0, 0], sizes = [128, 384], strides = [1, 1]} : vector<256x384xbf16> to vector<128x384xbf16>
    %cst_67 = arith.constant dense<0.000000e+00> : vector<16x384xf32>
    %291 = tpu.matmul %288, %290, %cst_67 {dimension_numbers = #tpu.dot_dimension_numbers<[1], [0], [0], [1], [0, 0, 1, 1], [], []>} : vector<16x128xbf16>, vector<128x384xbf16>, vector<16x384xf32> -> vector<16x384xf32>
    %292 = vector.extract_strided_slice %287 {offsets = [128, 0], sizes = [128, 384], strides = [1, 1]} : vector<256x384xbf16> to vector<128x384xbf16>
    %cst_68 = arith.constant dense<0.000000e+00> : vector<16x384xf32>
    %293 = tpu.matmul %289, %292, %cst_68 {dimension_numbers = #tpu.dot_dimension_numbers<[1], [0], [0], [1], [0, 0, 1, 1], [], []>} : vector<16x128xbf16>, vector<128x384xbf16>, vector<16x384xf32> -> vector<16x384xf32>
    %294 = arith.addf %291, %293 : vector<16x384xf32>
    %c0_69 = arith.constant 0 : index
    %c0_70 = arith.constant 0 : index
    %295 = vector.load %arg7[%c0_69, %c0_70] : memref<1x384xf32, #tpu.memory_space<vmem>>, vector<1x384xf32>
    %296 = vector.broadcast %295 : vector<1x384xf32> to vector<16x384xf32>
    %297 = arith.addf %294, %296 : vector<16x384xf32>
    %cst_71 = arith.constant 0.000000e+00 : f32
    %298 = vector.broadcast %cst_71 : f32 to vector<16x384xf32>
    %c0_72 = arith.constant 0 : index
    %c0_73 = arith.constant 0 : index
    %299 = vector.load %arg8[%c0_72, %c0_73] : memref<1x128xf32, #tpu.memory_space<vmem>>, vector<1x128xf32>
    %cst_74 = arith.constant 0.000000e+00 : f32
    %300 = vector.broadcast %cst_74 : f32 to vector<16x128xf32>
    %301 = vector.extract_strided_slice %297 {offsets = [0, 0], sizes = [16, 128], strides = [1, 1]} : vector<16x384xf32> to vector<16x128xf32>
    %302 = vector.extract_strided_slice %298 {offsets = [0, 0], sizes = [16, 128], strides = [1, 1]} : vector<16x384xf32> to vector<16x128xf32>
    %303 = arith.addf %301, %302 : vector<16x128xf32>
    %304 = arith.negf %303 : vector<16x128xf32>
    %305 = math.exp %304 : vector<16x128xf32>
    %cst_75 = arith.constant 1.000000e+00 : f32
    %306 = vector.broadcast %cst_75 : f32 to vector<16x128xf32>
    %307 = arith.addf %306, %305 : vector<16x128xf32>
    %308 = arith.divf %306, %307 : vector<16x128xf32>
    %309 = vector.extract_strided_slice %297 {offsets = [0, 128], sizes = [16, 128], strides = [1, 1]} : vector<16x384xf32> to vector<16x128xf32>
    %310 = vector.extract_strided_slice %298 {offsets = [0, 128], sizes = [16, 128], strides = [1, 1]} : vector<16x384xf32> to vector<16x128xf32>
    %311 = arith.addf %309, %310 : vector<16x128xf32>
    %312 = arith.negf %311 : vector<16x128xf32>
    %313 = math.exp %312 : vector<16x128xf32>
    %cst_76 = arith.constant 1.000000e+00 : f32
    %314 = vector.broadcast %cst_76 : f32 to vector<16x128xf32>
    %315 = arith.addf %314, %313 : vector<16x128xf32>
    %316 = arith.divf %314, %315 : vector<16x128xf32>
    %317 = vector.extract_strided_slice %297 {offsets = [0, 256], sizes = [16, 128], strides = [1, 1]} : vector<16x384xf32> to vector<16x128xf32>
    %318 = vector.extract_strided_slice %298 {offsets = [0, 256], sizes = [16, 128], strides = [1, 1]} : vector<16x384xf32> to vector<16x128xf32>
    %319 = vector.broadcast %299 : vector<1x128xf32> to vector<16x128xf32>
    %320 = arith.addf %318, %319 : vector<16x128xf32>
    %321 = arith.mulf %308, %320 : vector<16x128xf32>
    %322 = arith.addf %317, %321 : vector<16x128xf32>
    %323 = math.tanh %322 : vector<16x128xf32>
    %cst_77 = arith.constant 1.000000e+00 : f32
    %324 = vector.broadcast %cst_77 : f32 to vector<16x128xf32>
    %325 = arith.subf %324, %316 : vector<16x128xf32>
    %326 = arith.mulf %325, %323 : vector<16x128xf32>
    %327 = arith.mulf %316, %300 : vector<16x128xf32>
    %328 = arith.addf %326, %327 : vector<16x128xf32>
    %329 = vector.extract_strided_slice %286 {offsets = [0, 0], sizes = [16, 32], strides = [1, 1]} : vector<16x128xf32> to vector<16x32xf32>
    %330 = vector.extract_strided_slice %328 {offsets = [0, 0], sizes = [16, 32], strides = [1, 1]} : vector<16x128xf32> to vector<16x32xf32>
    %331 = tpu.concatenate %329, %330 in 1 : vector<16x32xf32>, vector<16x32xf32> -> vector<16x64xf32>
    %cst_78 = arith.constant dense<0.000000e+00> : vector<16xf32>
    %332 = vector.multi_reduction <add>, %331, %cst_78 [1] : vector<16x64xf32> to vector<16xf32>
    %333 = vector.shape_cast %332 : vector<16xf32> to vector<16x1xf32>
    %cst_79 = arith.constant 6.400000e+01 : f32
    %334 = vector.broadcast %cst_79 : f32 to vector<16x1xf32>
    %335 = arith.divf %333, %334 : vector<16x1xf32>
    %336 = vector.broadcast %335 : vector<16x1xf32> to vector<16x64xf32>
    %337 = arith.subf %331, %336 : vector<16x64xf32>
    %338 = arith.mulf %337, %337 : vector<16x64xf32>
    %cst_80 = arith.constant dense<0.000000e+00> : vector<16xf32>
    %339 = vector.multi_reduction <add>, %338, %cst_80 [1] : vector<16x64xf32> to vector<16xf32>
    %340 = vector.shape_cast %339 : vector<16xf32> to vector<16x1xf32>
    %cst_81 = arith.constant 6.400000e+01 : f32
    %341 = vector.broadcast %cst_81 : f32 to vector<16x1xf32>
    %342 = arith.divf %340, %341 : vector<16x1xf32>
    %343 = vector.broadcast %335 : vector<16x1xf32> to vector<16x64xf32>
    %344 = arith.subf %331, %343 : vector<16x64xf32>
    %cst_82 = arith.constant 9.99999974E-6 : f32
    %345 = vector.broadcast %cst_82 : f32 to vector<16x1xf32>
    %346 = arith.addf %342, %345 : vector<16x1xf32>
    %347 = math.rsqrt %346 : vector<16x1xf32>
    %348 = vector.broadcast %347 : vector<16x1xf32> to vector<16x64xf32>
    %349 = arith.mulf %344, %348 : vector<16x64xf32>
    %c0_83 = arith.constant 0 : index
    %c0_84 = arith.constant 0 : index
    %350 = vector.load %arg9[%c0_83, %c0_84] : memref<1x64xf32, #tpu.memory_space<vmem>>, vector<1x64xf32>
    %351 = vector.broadcast %350 : vector<1x64xf32> to vector<16x64xf32>
    %352 = arith.mulf %349, %351 : vector<16x64xf32>
    %c0_85 = arith.constant 0 : index
    %c0_86 = arith.constant 0 : index
    %353 = vector.load %arg10[%c0_85, %c0_86] : memref<1x64xf32, #tpu.memory_space<vmem>>, vector<1x64xf32>
    %354 = vector.broadcast %353 : vector<1x64xf32> to vector<16x64xf32>
    %355 = arith.addf %352, %354 : vector<16x64xf32>
    %c0_87 = arith.constant 0 : index
    %c0_88 = arith.constant 0 : index
    %356 = vector.load %arg11[%c0_87, %c0_88] : memref<64x5xf32, #tpu.memory_space<vmem>>, vector<64x5xf32>
    %cst_89 = arith.constant dense<0.000000e+00> : vector<16x5xf32>
    %357 = tpu.matmul %355, %356, %cst_89 {dimension_numbers = #tpu.dot_dimension_numbers<[1], [0], [0], [1], [0, 0, 1, 1], [], []>} : vector<16x64xf32>, vector<64x5xf32>, vector<16x5xf32> -> vector<16x5xf32>
    %c0_90 = arith.constant 0 : index
    %c0_91 = arith.constant 0 : index
    %358 = vector.load %arg12[%c0_90, %c0_91] : memref<1x5xf32, #tpu.memory_space<vmem>>, vector<1x5xf32>
    %359 = vector.broadcast %358 : vector<1x5xf32> to vector<16x5xf32>
    %360 = arith.addf %357, %359 : vector<16x5xf32>
    %c0_92 = arith.constant 0 : index
    %c0_93 = arith.constant 0 : index
    %361 = vector.load %arg13[%c0_92, %c0_93] : memref<16x5xf32, #tpu.memory_space<vmem>>, vector<16x5xf32>
    tpu.vector_store %arg13[%c0_92, %c0_93], %360 {strides = array<i32>} : memref<16x5xf32, #tpu.memory_space<vmem>>, vector<16x5xf32>,
    return
  }
}

module attributes {stable_mosaic.version = 11 : i64} {
  func.func @_bigru_first_kernel(%arg0: memref<128x128xbf16, #tpu.memory_space<vmem>>, %arg1: memref<128x768xbf16, #tpu.memory_space<vmem>>, %arg2: memref<128x384xbf16, #tpu.memory_space<vmem>>, %arg3: memref<128x384xbf16, #tpu.memory_space<vmem>>, %arg4: memref<1x768xf32, #tpu.memory_space<vmem>>, %arg5: memref<1x128xf32, #tpu.memory_space<vmem>>, %arg6: memref<1x128xf32, #tpu.memory_space<vmem>>, %arg7: memref<128x128xbf16, #tpu.memory_space<vmem>>, %arg8: memref<128x128xbf16, #tpu.memory_space<vmem>>, %arg9: memref<128x768xf32, #tpu.memory_space<vmem>>) attributes {dimension_semantics = [], scalar_prefetch = 0 : i64, scratch_operands = 1 : i64, tpu.core_type = #tpu.core_type<tc>} {
    %c0 = arith.constant 0 : index
    %c0_0 = arith.constant 0 : index
    %0 = vector.load %arg0[%c0, %c0_0] : memref<128x128xbf16, #tpu.memory_space<vmem>>, vector<128x128xbf16>
    %c0_1 = arith.constant 0 : index
    %c0_2 = arith.constant 0 : index
    %1 = vector.load %arg1[%c0_1, %c0_2] : memref<128x768xbf16, #tpu.memory_space<vmem>>, vector<128x768xbf16>
    %cst = arith.constant dense<0.000000e+00> : vector<128x768xf32>
    %2 = tpu.matmul %0, %1, %cst {dimension_numbers = #tpu.dot_dimension_numbers<[1], [0], [0], [1], [0, 0, 1, 1], [], []>} : vector<128x128xbf16>, vector<128x768xbf16>, vector<128x768xf32> -> vector<128x768xf32>
    %c0_3 = arith.constant 0 : index
    %c0_4 = arith.constant 0 : index
    %3 = vector.load %arg4[%c0_3, %c0_4] : memref<1x768xf32, #tpu.memory_space<vmem>>, vector<1x768xf32>
    %4 = vector.broadcast %3 : vector<1x768xf32> to vector<128x768xf32>
    %5 = arith.addf %2, %4 : vector<128x768xf32>
    %c0_5 = arith.constant 0 : index
    %c0_6 = arith.constant 0 : index
    %6 = vector.load %arg9[%c0_5, %c0_6] : memref<128x768xf32, #tpu.memory_space<vmem>>, vector<128x768xf32>
    tpu.vector_store %arg9[%c0_5, %c0_6], %5 {strides = array<i32>} : memref<128x768xf32, #tpu.memory_space<vmem>>, vector<128x768xf32>,
    %c0_7 = arith.constant 0 : index
    %c0_8 = arith.constant 0 : index
    %7 = vector.load %arg2[%c0_7, %c0_8] : memref<128x384xbf16, #tpu.memory_space<vmem>>, vector<128x384xbf16>
    %c0_9 = arith.constant 0 : index
    %c0_10 = arith.constant 0 : index
    %8 = vector.load %arg3[%c0_9, %c0_10] : memref<128x384xbf16, #tpu.memory_space<vmem>>, vector<128x384xbf16>
    %c0_11 = arith.constant 0 : index
    %c0_12 = arith.constant 0 : index
    %9 = vector.load %arg5[%c0_11, %c0_12] : memref<1x128xf32, #tpu.memory_space<vmem>>, vector<1x128xf32>
    %c0_13 = arith.constant 0 : index
    %c0_14 = arith.constant 0 : index
    %10 = vector.load %arg6[%c0_13, %c0_14] : memref<1x128xf32, #tpu.memory_space<vmem>>, vector<1x128xf32>
    %cst_15 = arith.constant 0.000000e+00 : f32
    %11 = vector.broadcast %cst_15 : f32 to vector<16x128xf32>
    %c0_i32 = arith.constant 0 : i32
    %12 = arith.truncf %11 : vector<16x128xf32> to vector<16x128xbf16>
    %cst_16 = arith.constant dense<0.000000e+00> : vector<16x384xf32>
    %13 = tpu.matmul %12, %7, %cst_16 {dimension_numbers = #tpu.dot_dimension_numbers<[1], [0], [0], [1], [0, 0, 1, 1], [], []>} : vector<16x128xbf16>, vector<128x384xbf16>, vector<16x384xf32> -> vector<16x384xf32>
    %14 = arith.truncf %11 : vector<16x128xf32> to vector<16x128xbf16>
    %cst_17 = arith.constant dense<0.000000e+00> : vector<16x384xf32>
    %15 = tpu.matmul %14, %8, %cst_17 {dimension_numbers = #tpu.dot_dimension_numbers<[1], [0], [0], [1], [0, 0, 1, 1], [], []>} : vector<16x128xbf16>, vector<128x384xbf16>, vector<16x384xf32> -> vector<16x384xf32>
    %c16_i32 = arith.constant 16 : i32
    %16 = arith.muli %c0_i32, %c16_i32 : i32
    %17 = tpu.assume_multiple %16, 16 : i32
    %c7_i32 = arith.constant 7 : i32
    %18 = arith.subi %c7_i32, %c0_i32 : i32
    %c16_i32_18 = arith.constant 16 : i32
    %19 = arith.muli %18, %c16_i32_18 : i32
    %20 = tpu.assume_multiple %19, 16 : i32
    %21 = arith.index_cast %17 : i32 to index
    %c0_19 = arith.constant 0 : index
    %22 = vector.load %arg9[%21, %c0_19] : memref<128x768xf32, #tpu.memory_space<vmem>>, vector<16x768xf32>
    %23 = arith.index_cast %20 : i32 to index
    %c0_20 = arith.constant 0 : index
    %24 = vector.load %arg9[%23, %c0_20] : memref<128x768xf32, #tpu.memory_space<vmem>>, vector<16x768xf32>
    %25 = vector.extract_strided_slice %22 {offsets = [0, 0], sizes = [16, 384], strides = [1, 1]} : vector<16x768xf32> to vector<16x384xf32>
    %26 = vector.extract_strided_slice %25 {offsets = [0, 0], sizes = [16, 128], strides = [1, 1]} : vector<16x384xf32> to vector<16x128xf32>
    %27 = vector.extract_strided_slice %13 {offsets = [0, 0], sizes = [16, 128], strides = [1, 1]} : vector<16x384xf32> to vector<16x128xf32>
    %28 = arith.addf %26, %27 : vector<16x128xf32>
    %29 = arith.negf %28 : vector<16x128xf32>
    %30 = math.exp %29 : vector<16x128xf32>
    %cst_21 = arith.constant 1.000000e+00 : f32
    %31 = vector.broadcast %cst_21 : f32 to vector<16x128xf32>
    %32 = arith.addf %31, %30 : vector<16x128xf32>
    %33 = arith.divf %31, %32 : vector<16x128xf32>
    %34 = vector.extract_strided_slice %25 {offsets = [0, 128], sizes = [16, 128], strides = [1, 1]} : vector<16x384xf32> to vector<16x128xf32>
    %35 = vector.extract_strided_slice %13 {offsets = [0, 128], sizes = [16, 128], strides = [1, 1]} : vector<16x384xf32> to vector<16x128xf32>
    %36 = arith.addf %34, %35 : vector<16x128xf32>
    %37 = arith.negf %36 : vector<16x128xf32>
    %38 = math.exp %37 : vector<16x128xf32>
    %cst_22 = arith.constant 1.000000e+00 : f32
    %39 = vector.broadcast %cst_22 : f32 to vector<16x128xf32>
    %40 = arith.addf %39, %38 : vector<16x128xf32>
    %41 = arith.divf %39, %40 : vector<16x128xf32>
    %42 = vector.extract_strided_slice %25 {offsets = [0, 256], sizes = [16, 128], strides = [1, 1]} : vector<16x384xf32> to vector<16x128xf32>
    %43 = vector.extract_strided_slice %13 {offsets = [0, 256], sizes = [16, 128], strides = [1, 1]} : vector<16x384xf32> to vector<16x128xf32>
    %44 = vector.broadcast %9 : vector<1x128xf32> to vector<16x128xf32>
    %45 = arith.addf %43, %44 : vector<16x128xf32>
    %46 = arith.mulf %33, %45 : vector<16x128xf32>
    %47 = arith.addf %42, %46 : vector<16x128xf32>
    %48 = math.tanh %47 : vector<16x128xf32>
    %cst_23 = arith.constant 1.000000e+00 : f32
    %49 = vector.broadcast %cst_23 : f32 to vector<16x128xf32>
    %50 = arith.subf %49, %41 : vector<16x128xf32>
    %51 = arith.mulf %50, %48 : vector<16x128xf32>
    %52 = arith.mulf %41, %11 : vector<16x128xf32>
    %53 = arith.addf %51, %52 : vector<16x128xf32>
    %54 = vector.extract_strided_slice %24 {offsets = [0, 384], sizes = [16, 384], strides = [1, 1]} : vector<16x768xf32> to vector<16x384xf32>
    %55 = vector.extract_strided_slice %54 {offsets = [0, 0], sizes = [16, 128], strides = [1, 1]} : vector<16x384xf32> to vector<16x128xf32>
    %56 = vector.extract_strided_slice %15 {offsets = [0, 0], sizes = [16, 128], strides = [1, 1]} : vector<16x384xf32> to vector<16x128xf32>
    %57 = arith.addf %55, %56 : vector<16x128xf32>
    %58 = arith.negf %57 : vector<16x128xf32>
    %59 = math.exp %58 : vector<16x128xf32>
    %cst_24 = arith.constant 1.000000e+00 : f32
    %60 = vector.broadcast %cst_24 : f32 to vector<16x128xf32>
    %61 = arith.addf %60, %59 : vector<16x128xf32>
    %62 = arith.divf %60, %61 : vector<16x128xf32>
    %63 = vector.extract_strided_slice %54 {offsets = [0, 128], sizes = [16, 128], strides = [1, 1]} : vector<16x384xf32> to vector<16x128xf32>
    %64 = vector.extract_strided_slice %15 {offsets = [0, 128], sizes = [16, 128], strides = [1, 1]} : vector<16x384xf32> to vector<16x128xf32>
    %65 = arith.addf %63, %64 : vector<16x128xf32>
    %66 = arith.negf %65 : vector<16x128xf32>
    %67 = math.exp %66 : vector<16x128xf32>
    %cst_25 = arith.constant 1.000000e+00 : f32
    %68 = vector.broadcast %cst_25 : f32 to vector<16x128xf32>
    %69 = arith.addf %68, %67 : vector<16x128xf32>
    %70 = arith.divf %68, %69 : vector<16x128xf32>
    %71 = vector.extract_strided_slice %54 {offsets = [0, 256], sizes = [16, 128], strides = [1, 1]} : vector<16x384xf32> to vector<16x128xf32>
    %72 = vector.extract_strided_slice %15 {offsets = [0, 256], sizes = [16, 128], strides = [1, 1]} : vector<16x384xf32> to vector<16x128xf32>
    %73 = vector.broadcast %10 : vector<1x128xf32> to vector<16x128xf32>
    %74 = arith.addf %72, %73 : vector<16x128xf32>
    %75 = arith.mulf %62, %74 : vector<16x128xf32>
    %76 = arith.addf %71, %75 : vector<16x128xf32>
    %77 = math.tanh %76 : vector<16x128xf32>
    %cst_26 = arith.constant 1.000000e+00 : f32
    %78 = vector.broadcast %cst_26 : f32 to vector<16x128xf32>
    %79 = arith.subf %78, %70 : vector<16x128xf32>
    %80 = arith.mulf %79, %77 : vector<16x128xf32>
    %81 = arith.mulf %70, %11 : vector<16x128xf32>
    %82 = arith.addf %80, %81 : vector<16x128xf32>
    %83 = arith.truncf %53 : vector<16x128xf32> to vector<16x128xbf16>
    %84 = arith.index_cast %17 : i32 to index
    %c0_27 = arith.constant 0 : index
    %85 = vector.load %arg7[%84, %c0_27] : memref<128x128xbf16, #tpu.memory_space<vmem>>, vector<16x128xbf16>
    tpu.vector_store %arg7[%84, %c0_27], %83 {strides = array<i32>} : memref<128x128xbf16, #tpu.memory_space<vmem>>, vector<16x128xbf16>,
    %86 = arith.truncf %82 : vector<16x128xf32> to vector<16x128xbf16>
    %87 = arith.index_cast %20 : i32 to index
    %c0_28 = arith.constant 0 : index
    %88 = vector.load %arg8[%87, %c0_28] : memref<128x128xbf16, #tpu.memory_space<vmem>>, vector<16x128xbf16>
    tpu.vector_store %arg8[%87, %c0_28], %86 {strides = array<i32>} : memref<128x128xbf16, #tpu.memory_space<vmem>>, vector<16x128xbf16>,
    %c1_i32 = arith.constant 1 : i32
    %89 = arith.truncf %53 : vector<16x128xf32> to vector<16x128xbf16>
    %cst_29 = arith.constant dense<0.000000e+00> : vector<16x384xf32>
    %90 = tpu.matmul %89, %7, %cst_29 {dimension_numbers = #tpu.dot_dimension_numbers<[1], [0], [0], [1], [0, 0, 1, 1], [], []>} : vector<16x128xbf16>, vector<128x384xbf16>, vector<16x384xf32> -> vector<16x384xf32>
    %91 = arith.truncf %82 : vector<16x128xf32> to vector<16x128xbf16>
    %cst_30 = arith.constant dense<0.000000e+00> : vector<16x384xf32>
    %92 = tpu.matmul %91, %8, %cst_30 {dimension_numbers = #tpu.dot_dimension_numbers<[1], [0], [0], [1], [0, 0, 1, 1], [], []>} : vector<16x128xbf16>, vector<128x384xbf16>, vector<16x384xf32> -> vector<16x384xf32>
    %c16_i32_31 = arith.constant 16 : i32
    %93 = arith.muli %c1_i32, %c16_i32_31 : i32
    %94 = tpu.assume_multiple %93, 16 : i32
    %c7_i32_32 = arith.constant 7 : i32
    %95 = arith.subi %c7_i32_32, %c1_i32 : i32
    %c16_i32_33 = arith.constant 16 : i32
    %96 = arith.muli %95, %c16_i32_33 : i32
    %97 = tpu.assume_multiple %96, 16 : i32
    %98 = arith.index_cast %94 : i32 to index
    %c0_34 = arith.constant 0 : index
    %99 = vector.load %arg9[%98, %c0_34] : memref<128x768xf32, #tpu.memory_space<vmem>>, vector<16x768xf32>
    %100 = arith.index_cast %97 : i32 to index
    %c0_35 = arith.constant 0 : index
    %101 = vector.load %arg9[%100, %c0_35] : memref<128x768xf32, #tpu.memory_space<vmem>>, vector<16x768xf32>
    %102 = vector.extract_strided_slice %99 {offsets = [0, 0], sizes = [16, 384], strides = [1, 1]} : vector<16x768xf32> to vector<16x384xf32>
    %103 = vector.extract_strided_slice %102 {offsets = [0, 0], sizes = [16, 128], strides = [1, 1]} : vector<16x384xf32> to vector<16x128xf32>
    %104 = vector.extract_strided_slice %90 {offsets = [0, 0], sizes = [16, 128], strides = [1, 1]} : vector<16x384xf32> to vector<16x128xf32>
    %105 = arith.addf %103, %104 : vector<16x128xf32>
    %106 = arith.negf %105 : vector<16x128xf32>
    %107 = math.exp %106 : vector<16x128xf32>
    %cst_36 = arith.constant 1.000000e+00 : f32
    %108 = vector.broadcast %cst_36 : f32 to vector<16x128xf32>
    %109 = arith.addf %108, %107 : vector<16x128xf32>
    %110 = arith.divf %108, %109 : vector<16x128xf32>
    %111 = vector.extract_strided_slice %102 {offsets = [0, 128], sizes = [16, 128], strides = [1, 1]} : vector<16x384xf32> to vector<16x128xf32>
    %112 = vector.extract_strided_slice %90 {offsets = [0, 128], sizes = [16, 128], strides = [1, 1]} : vector<16x384xf32> to vector<16x128xf32>
    %113 = arith.addf %111, %112 : vector<16x128xf32>
    %114 = arith.negf %113 : vector<16x128xf32>
    %115 = math.exp %114 : vector<16x128xf32>
    %cst_37 = arith.constant 1.000000e+00 : f32
    %116 = vector.broadcast %cst_37 : f32 to vector<16x128xf32>
    %117 = arith.addf %116, %115 : vector<16x128xf32>
    %118 = arith.divf %116, %117 : vector<16x128xf32>
    %119 = vector.extract_strided_slice %102 {offsets = [0, 256], sizes = [16, 128], strides = [1, 1]} : vector<16x384xf32> to vector<16x128xf32>
    %120 = vector.extract_strided_slice %90 {offsets = [0, 256], sizes = [16, 128], strides = [1, 1]} : vector<16x384xf32> to vector<16x128xf32>
    %121 = vector.broadcast %9 : vector<1x128xf32> to vector<16x128xf32>
    %122 = arith.addf %120, %121 : vector<16x128xf32>
    %123 = arith.mulf %110, %122 : vector<16x128xf32>
    %124 = arith.addf %119, %123 : vector<16x128xf32>
    %125 = math.tanh %124 : vector<16x128xf32>
    %cst_38 = arith.constant 1.000000e+00 : f32
    %126 = vector.broadcast %cst_38 : f32 to vector<16x128xf32>
    %127 = arith.subf %126, %118 : vector<16x128xf32>
    %128 = arith.mulf %127, %125 : vector<16x128xf32>
    %129 = arith.mulf %118, %53 : vector<16x128xf32>
    %130 = arith.addf %128, %129 : vector<16x128xf32>
    %131 = vector.extract_strided_slice %101 {offsets = [0, 384], sizes = [16, 384], strides = [1, 1]} : vector<16x768xf32> to vector<16x384xf32>
    %132 = vector.extract_strided_slice %131 {offsets = [0, 0], sizes = [16, 128], strides = [1, 1]} : vector<16x384xf32> to vector<16x128xf32>
    %133 = vector.extract_strided_slice %92 {offsets = [0, 0], sizes = [16, 128], strides = [1, 1]} : vector<16x384xf32> to vector<16x128xf32>
    %134 = arith.addf %132, %133 : vector<16x128xf32>
    %135 = arith.negf %134 : vector<16x128xf32>
    %136 = math.exp %135 : vector<16x128xf32>
    %cst_39 = arith.constant 1.000000e+00 : f32
    %137 = vector.broadcast %cst_39 : f32 to vector<16x128xf32>
    %138 = arith.addf %137, %136 : vector<16x128xf32>
    %139 = arith.divf %137, %138 : vector<16x128xf32>
    %140 = vector.extract_strided_slice %131 {offsets = [0, 128], sizes = [16, 128], strides = [1, 1]} : vector<16x384xf32> to vector<16x128xf32>
    %141 = vector.extract_strided_slice %92 {offsets = [0, 128], sizes = [16, 128], strides = [1, 1]} : vector<16x384xf32> to vector<16x128xf32>
    %142 = arith.addf %140, %141 : vector<16x128xf32>
    %143 = arith.negf %142 : vector<16x128xf32>
    %144 = math.exp %143 : vector<16x128xf32>
    %cst_40 = arith.constant 1.000000e+00 : f32
    %145 = vector.broadcast %cst_40 : f32 to vector<16x128xf32>
    %146 = arith.addf %145, %144 : vector<16x128xf32>
    %147 = arith.divf %145, %146 : vector<16x128xf32>
    %148 = vector.extract_strided_slice %131 {offsets = [0, 256], sizes = [16, 128], strides = [1, 1]} : vector<16x384xf32> to vector<16x128xf32>
    %149 = vector.extract_strided_slice %92 {offsets = [0, 256], sizes = [16, 128], strides = [1, 1]} : vector<16x384xf32> to vector<16x128xf32>
    %150 = vector.broadcast %10 : vector<1x128xf32> to vector<16x128xf32>
    %151 = arith.addf %149, %150 : vector<16x128xf32>
    %152 = arith.mulf %139, %151 : vector<16x128xf32>
    %153 = arith.addf %148, %152 : vector<16x128xf32>
    %154 = math.tanh %153 : vector<16x128xf32>
    %cst_41 = arith.constant 1.000000e+00 : f32
    %155 = vector.broadcast %cst_41 : f32 to vector<16x128xf32>
    %156 = arith.subf %155, %147 : vector<16x128xf32>
    %157 = arith.mulf %156, %154 : vector<16x128xf32>
    %158 = arith.mulf %147, %82 : vector<16x128xf32>
    %159 = arith.addf %157, %158 : vector<16x128xf32>
    %160 = arith.truncf %130 : vector<16x128xf32> to vector<16x128xbf16>
    %161 = arith.index_cast %94 : i32 to index
    %c0_42 = arith.constant 0 : index
    %162 = vector.load %arg7[%161, %c0_42] : memref<128x128xbf16, #tpu.memory_space<vmem>>, vector<16x128xbf16>
    tpu.vector_store %arg7[%161, %c0_42], %160 {strides = array<i32>} : memref<128x128xbf16, #tpu.memory_space<vmem>>, vector<16x128xbf16>,
    %163 = arith.truncf %159 : vector<16x128xf32> to vector<16x128xbf16>
    %164 = arith.index_cast %97 : i32 to index
    %c0_43 = arith.constant 0 : index
    %165 = vector.load %arg8[%164, %c0_43] : memref<128x128xbf16, #tpu.memory_space<vmem>>, vector<16x128xbf16>
    tpu.vector_store %arg8[%164, %c0_43], %163 {strides = array<i32>} : memref<128x128xbf16, #tpu.memory_space<vmem>>, vector<16x128xbf16>,
    %c2_i32 = arith.constant 2 : i32
    %166 = arith.truncf %130 : vector<16x128xf32> to vector<16x128xbf16>
    %cst_44 = arith.constant dense<0.000000e+00> : vector<16x384xf32>
    %167 = tpu.matmul %166, %7, %cst_44 {dimension_numbers = #tpu.dot_dimension_numbers<[1], [0], [0], [1], [0, 0, 1, 1], [], []>} : vector<16x128xbf16>, vector<128x384xbf16>, vector<16x384xf32> -> vector<16x384xf32>
    %168 = arith.truncf %159 : vector<16x128xf32> to vector<16x128xbf16>
    %cst_45 = arith.constant dense<0.000000e+00> : vector<16x384xf32>
    %169 = tpu.matmul %168, %8, %cst_45 {dimension_numbers = #tpu.dot_dimension_numbers<[1], [0], [0], [1], [0, 0, 1, 1], [], []>} : vector<16x128xbf16>, vector<128x384xbf16>, vector<16x384xf32> -> vector<16x384xf32>
    %c16_i32_46 = arith.constant 16 : i32
    %170 = arith.muli %c2_i32, %c16_i32_46 : i32
    %171 = tpu.assume_multiple %170, 16 : i32
    %c7_i32_47 = arith.constant 7 : i32
    %172 = arith.subi %c7_i32_47, %c2_i32 : i32
    %c16_i32_48 = arith.constant 16 : i32
    %173 = arith.muli %172, %c16_i32_48 : i32
    %174 = tpu.assume_multiple %173, 16 : i32
    %175 = arith.index_cast %171 : i32 to index
    %c0_49 = arith.constant 0 : index
    %176 = vector.load %arg9[%175, %c0_49] : memref<128x768xf32, #tpu.memory_space<vmem>>, vector<16x768xf32>
    %177 = arith.index_cast %174 : i32 to index
    %c0_50 = arith.constant 0 : index
    %178 = vector.load %arg9[%177, %c0_50] : memref<128x768xf32, #tpu.memory_space<vmem>>, vector<16x768xf32>
    %179 = vector.extract_strided_slice %176 {offsets = [0, 0], sizes = [16, 384], strides = [1, 1]} : vector<16x768xf32> to vector<16x384xf32>
    %180 = vector.extract_strided_slice %179 {offsets = [0, 0], sizes = [16, 128], strides = [1, 1]} : vector<16x384xf32> to vector<16x128xf32>
    %181 = vector.extract_strided_slice %167 {offsets = [0, 0], sizes = [16, 128], strides = [1, 1]} : vector<16x384xf32> to vector<16x128xf32>
    %182 = arith.addf %180, %181 : vector<16x128xf32>
    %183 = arith.negf %182 : vector<16x128xf32>
    %184 = math.exp %183 : vector<16x128xf32>
    %cst_51 = arith.constant 1.000000e+00 : f32
    %185 = vector.broadcast %cst_51 : f32 to vector<16x128xf32>
    %186 = arith.addf %185, %184 : vector<16x128xf32>
    %187 = arith.divf %185, %186 : vector<16x128xf32>
    %188 = vector.extract_strided_slice %179 {offsets = [0, 128], sizes = [16, 128], strides = [1, 1]} : vector<16x384xf32> to vector<16x128xf32>
    %189 = vector.extract_strided_slice %167 {offsets = [0, 128], sizes = [16, 128], strides = [1, 1]} : vector<16x384xf32> to vector<16x128xf32>
    %190 = arith.addf %188, %189 : vector<16x128xf32>
    %191 = arith.negf %190 : vector<16x128xf32>
    %192 = math.exp %191 : vector<16x128xf32>
    %cst_52 = arith.constant 1.000000e+00 : f32
    %193 = vector.broadcast %cst_52 : f32 to vector<16x128xf32>
    %194 = arith.addf %193, %192 : vector<16x128xf32>
    %195 = arith.divf %193, %194 : vector<16x128xf32>
    %196 = vector.extract_strided_slice %179 {offsets = [0, 256], sizes = [16, 128], strides = [1, 1]} : vector<16x384xf32> to vector<16x128xf32>
    %197 = vector.extract_strided_slice %167 {offsets = [0, 256], sizes = [16, 128], strides = [1, 1]} : vector<16x384xf32> to vector<16x128xf32>
    %198 = vector.broadcast %9 : vector<1x128xf32> to vector<16x128xf32>
    %199 = arith.addf %197, %198 : vector<16x128xf32>
    %200 = arith.mulf %187, %199 : vector<16x128xf32>
    %201 = arith.addf %196, %200 : vector<16x128xf32>
    %202 = math.tanh %201 : vector<16x128xf32>
    %cst_53 = arith.constant 1.000000e+00 : f32
    %203 = vector.broadcast %cst_53 : f32 to vector<16x128xf32>
    %204 = arith.subf %203, %195 : vector<16x128xf32>
    %205 = arith.mulf %204, %202 : vector<16x128xf32>
    %206 = arith.mulf %195, %130 : vector<16x128xf32>
    %207 = arith.addf %205, %206 : vector<16x128xf32>
    %208 = vector.extract_strided_slice %178 {offsets = [0, 384], sizes = [16, 384], strides = [1, 1]} : vector<16x768xf32> to vector<16x384xf32>
    %209 = vector.extract_strided_slice %208 {offsets = [0, 0], sizes = [16, 128], strides = [1, 1]} : vector<16x384xf32> to vector<16x128xf32>
    %210 = vector.extract_strided_slice %169 {offsets = [0, 0], sizes = [16, 128], strides = [1, 1]} : vector<16x384xf32> to vector<16x128xf32>
    %211 = arith.addf %209, %210 : vector<16x128xf32>
    %212 = arith.negf %211 : vector<16x128xf32>
    %213 = math.exp %212 : vector<16x128xf32>
    %cst_54 = arith.constant 1.000000e+00 : f32
    %214 = vector.broadcast %cst_54 : f32 to vector<16x128xf32>
    %215 = arith.addf %214, %213 : vector<16x128xf32>
    %216 = arith.divf %214, %215 : vector<16x128xf32>
    %217 = vector.extract_strided_slice %208 {offsets = [0, 128], sizes = [16, 128], strides = [1, 1]} : vector<16x384xf32> to vector<16x128xf32>
    %218 = vector.extract_strided_slice %169 {offsets = [0, 128], sizes = [16, 128], strides = [1, 1]} : vector<16x384xf32> to vector<16x128xf32>
    %219 = arith.addf %217, %218 : vector<16x128xf32>
    %220 = arith.negf %219 : vector<16x128xf32>
    %221 = math.exp %220 : vector<16x128xf32>
    %cst_55 = arith.constant 1.000000e+00 : f32
    %222 = vector.broadcast %cst_55 : f32 to vector<16x128xf32>
    %223 = arith.addf %222, %221 : vector<16x128xf32>
    %224 = arith.divf %222, %223 : vector<16x128xf32>
    %225 = vector.extract_strided_slice %208 {offsets = [0, 256], sizes = [16, 128], strides = [1, 1]} : vector<16x384xf32> to vector<16x128xf32>
    %226 = vector.extract_strided_slice %169 {offsets = [0, 256], sizes = [16, 128], strides = [1, 1]} : vector<16x384xf32> to vector<16x128xf32>
    %227 = vector.broadcast %10 : vector<1x128xf32> to vector<16x128xf32>
    %228 = arith.addf %226, %227 : vector<16x128xf32>
    %229 = arith.mulf %216, %228 : vector<16x128xf32>
    %230 = arith.addf %225, %229 : vector<16x128xf32>
    %231 = math.tanh %230 : vector<16x128xf32>
    %cst_56 = arith.constant 1.000000e+00 : f32
    %232 = vector.broadcast %cst_56 : f32 to vector<16x128xf32>
    %233 = arith.subf %232, %224 : vector<16x128xf32>
    %234 = arith.mulf %233, %231 : vector<16x128xf32>
    %235 = arith.mulf %224, %159 : vector<16x128xf32>
    %236 = arith.addf %234, %235 : vector<16x128xf32>
    %237 = arith.truncf %207 : vector<16x128xf32> to vector<16x128xbf16>
    %238 = arith.index_cast %171 : i32 to index
    %c0_57 = arith.constant 0 : index
    %239 = vector.load %arg7[%238, %c0_57] : memref<128x128xbf16, #tpu.memory_space<vmem>>, vector<16x128xbf16>
    tpu.vector_store %arg7[%238, %c0_57], %237 {strides = array<i32>} : memref<128x128xbf16, #tpu.memory_space<vmem>>, vector<16x128xbf16>,
    %240 = arith.truncf %236 : vector<16x128xf32> to vector<16x128xbf16>
    %241 = arith.index_cast %174 : i32 to index
    %c0_58 = arith.constant 0 : index
    %242 = vector.load %arg8[%241, %c0_58] : memref<128x128xbf16, #tpu.memory_space<vmem>>, vector<16x128xbf16>
    tpu.vector_store %arg8[%241, %c0_58], %240 {strides = array<i32>} : memref<128x128xbf16, #tpu.memory_space<vmem>>, vector<16x128xbf16>,
    %c3_i32 = arith.constant 3 : i32
    %243 = arith.truncf %207 : vector<16x128xf32> to vector<16x128xbf16>
    %cst_59 = arith.constant dense<0.000000e+00> : vector<16x384xf32>
    %244 = tpu.matmul %243, %7, %cst_59 {dimension_numbers = #tpu.dot_dimension_numbers<[1], [0], [0], [1], [0, 0, 1, 1], [], []>} : vector<16x128xbf16>, vector<128x384xbf16>, vector<16x384xf32> -> vector<16x384xf32>
    %245 = arith.truncf %236 : vector<16x128xf32> to vector<16x128xbf16>
    %cst_60 = arith.constant dense<0.000000e+00> : vector<16x384xf32>
    %246 = tpu.matmul %245, %8, %cst_60 {dimension_numbers = #tpu.dot_dimension_numbers<[1], [0], [0], [1], [0, 0, 1, 1], [], []>} : vector<16x128xbf16>, vector<128x384xbf16>, vector<16x384xf32> -> vector<16x384xf32>
    %c16_i32_61 = arith.constant 16 : i32
    %247 = arith.muli %c3_i32, %c16_i32_61 : i32
    %248 = tpu.assume_multiple %247, 16 : i32
    %c7_i32_62 = arith.constant 7 : i32
    %249 = arith.subi %c7_i32_62, %c3_i32 : i32
    %c16_i32_63 = arith.constant 16 : i32
    %250 = arith.muli %249, %c16_i32_63 : i32
    %251 = tpu.assume_multiple %250, 16 : i32
    %252 = arith.index_cast %248 : i32 to index
    %c0_64 = arith.constant 0 : index
    %253 = vector.load %arg9[%252, %c0_64] : memref<128x768xf32, #tpu.memory_space<vmem>>, vector<16x768xf32>
    %254 = arith.index_cast %251 : i32 to index
    %c0_65 = arith.constant 0 : index
    %255 = vector.load %arg9[%254, %c0_65] : memref<128x768xf32, #tpu.memory_space<vmem>>, vector<16x768xf32>
    %256 = vector.extract_strided_slice %253 {offsets = [0, 0], sizes = [16, 384], strides = [1, 1]} : vector<16x768xf32> to vector<16x384xf32>
    %257 = vector.extract_strided_slice %256 {offsets = [0, 0], sizes = [16, 128], strides = [1, 1]} : vector<16x384xf32> to vector<16x128xf32>
    %258 = vector.extract_strided_slice %244 {offsets = [0, 0], sizes = [16, 128], strides = [1, 1]} : vector<16x384xf32> to vector<16x128xf32>
    %259 = arith.addf %257, %258 : vector<16x128xf32>
    %260 = arith.negf %259 : vector<16x128xf32>
    %261 = math.exp %260 : vector<16x128xf32>
    %cst_66 = arith.constant 1.000000e+00 : f32
    %262 = vector.broadcast %cst_66 : f32 to vector<16x128xf32>
    %263 = arith.addf %262, %261 : vector<16x128xf32>
    %264 = arith.divf %262, %263 : vector<16x128xf32>
    %265 = vector.extract_strided_slice %256 {offsets = [0, 128], sizes = [16, 128], strides = [1, 1]} : vector<16x384xf32> to vector<16x128xf32>
    %266 = vector.extract_strided_slice %244 {offsets = [0, 128], sizes = [16, 128], strides = [1, 1]} : vector<16x384xf32> to vector<16x128xf32>
    %267 = arith.addf %265, %266 : vector<16x128xf32>
    %268 = arith.negf %267 : vector<16x128xf32>
    %269 = math.exp %268 : vector<16x128xf32>
    %cst_67 = arith.constant 1.000000e+00 : f32
    %270 = vector.broadcast %cst_67 : f32 to vector<16x128xf32>
    %271 = arith.addf %270, %269 : vector<16x128xf32>
    %272 = arith.divf %270, %271 : vector<16x128xf32>
    %273 = vector.extract_strided_slice %256 {offsets = [0, 256], sizes = [16, 128], strides = [1, 1]} : vector<16x384xf32> to vector<16x128xf32>
    %274 = vector.extract_strided_slice %244 {offsets = [0, 256], sizes = [16, 128], strides = [1, 1]} : vector<16x384xf32> to vector<16x128xf32>
    %275 = vector.broadcast %9 : vector<1x128xf32> to vector<16x128xf32>
    %276 = arith.addf %274, %275 : vector<16x128xf32>
    %277 = arith.mulf %264, %276 : vector<16x128xf32>
    %278 = arith.addf %273, %277 : vector<16x128xf32>
    %279 = math.tanh %278 : vector<16x128xf32>
    %cst_68 = arith.constant 1.000000e+00 : f32
    %280 = vector.broadcast %cst_68 : f32 to vector<16x128xf32>
    %281 = arith.subf %280, %272 : vector<16x128xf32>
    %282 = arith.mulf %281, %279 : vector<16x128xf32>
    %283 = arith.mulf %272, %207 : vector<16x128xf32>
    %284 = arith.addf %282, %283 : vector<16x128xf32>
    %285 = vector.extract_strided_slice %255 {offsets = [0, 384], sizes = [16, 384], strides = [1, 1]} : vector<16x768xf32> to vector<16x384xf32>
    %286 = vector.extract_strided_slice %285 {offsets = [0, 0], sizes = [16, 128], strides = [1, 1]} : vector<16x384xf32> to vector<16x128xf32>
    %287 = vector.extract_strided_slice %246 {offsets = [0, 0], sizes = [16, 128], strides = [1, 1]} : vector<16x384xf32> to vector<16x128xf32>
    %288 = arith.addf %286, %287 : vector<16x128xf32>
    %289 = arith.negf %288 : vector<16x128xf32>
    %290 = math.exp %289 : vector<16x128xf32>
    %cst_69 = arith.constant 1.000000e+00 : f32
    %291 = vector.broadcast %cst_69 : f32 to vector<16x128xf32>
    %292 = arith.addf %291, %290 : vector<16x128xf32>
    %293 = arith.divf %291, %292 : vector<16x128xf32>
    %294 = vector.extract_strided_slice %285 {offsets = [0, 128], sizes = [16, 128], strides = [1, 1]} : vector<16x384xf32> to vector<16x128xf32>
    %295 = vector.extract_strided_slice %246 {offsets = [0, 128], sizes = [16, 128], strides = [1, 1]} : vector<16x384xf32> to vector<16x128xf32>
    %296 = arith.addf %294, %295 : vector<16x128xf32>
    %297 = arith.negf %296 : vector<16x128xf32>
    %298 = math.exp %297 : vector<16x128xf32>
    %cst_70 = arith.constant 1.000000e+00 : f32
    %299 = vector.broadcast %cst_70 : f32 to vector<16x128xf32>
    %300 = arith.addf %299, %298 : vector<16x128xf32>
    %301 = arith.divf %299, %300 : vector<16x128xf32>
    %302 = vector.extract_strided_slice %285 {offsets = [0, 256], sizes = [16, 128], strides = [1, 1]} : vector<16x384xf32> to vector<16x128xf32>
    %303 = vector.extract_strided_slice %246 {offsets = [0, 256], sizes = [16, 128], strides = [1, 1]} : vector<16x384xf32> to vector<16x128xf32>
    %304 = vector.broadcast %10 : vector<1x128xf32> to vector<16x128xf32>
    %305 = arith.addf %303, %304 : vector<16x128xf32>
    %306 = arith.mulf %293, %305 : vector<16x128xf32>
    %307 = arith.addf %302, %306 : vector<16x128xf32>
    %308 = math.tanh %307 : vector<16x128xf32>
    %cst_71 = arith.constant 1.000000e+00 : f32
    %309 = vector.broadcast %cst_71 : f32 to vector<16x128xf32>
    %310 = arith.subf %309, %301 : vector<16x128xf32>
    %311 = arith.mulf %310, %308 : vector<16x128xf32>
    %312 = arith.mulf %301, %236 : vector<16x128xf32>
    %313 = arith.addf %311, %312 : vector<16x128xf32>
    %314 = arith.truncf %284 : vector<16x128xf32> to vector<16x128xbf16>
    %315 = arith.index_cast %248 : i32 to index
    %c0_72 = arith.constant 0 : index
    %316 = vector.load %arg7[%315, %c0_72] : memref<128x128xbf16, #tpu.memory_space<vmem>>, vector<16x128xbf16>
    tpu.vector_store %arg7[%315, %c0_72], %314 {strides = array<i32>} : memref<128x128xbf16, #tpu.memory_space<vmem>>, vector<16x128xbf16>,
    %317 = arith.truncf %313 : vector<16x128xf32> to vector<16x128xbf16>
    %318 = arith.index_cast %251 : i32 to index
    %c0_73 = arith.constant 0 : index
    %319 = vector.load %arg8[%318, %c0_73] : memref<128x128xbf16, #tpu.memory_space<vmem>>, vector<16x128xbf16>
    tpu.vector_store %arg8[%318, %c0_73], %317 {strides = array<i32>} : memref<128x128xbf16, #tpu.memory_space<vmem>>, vector<16x128xbf16>,
    %c4_i32 = arith.constant 4 : i32
    %320 = arith.truncf %284 : vector<16x128xf32> to vector<16x128xbf16>
    %cst_74 = arith.constant dense<0.000000e+00> : vector<16x384xf32>
    %321 = tpu.matmul %320, %7, %cst_74 {dimension_numbers = #tpu.dot_dimension_numbers<[1], [0], [0], [1], [0, 0, 1, 1], [], []>} : vector<16x128xbf16>, vector<128x384xbf16>, vector<16x384xf32> -> vector<16x384xf32>
    %322 = arith.truncf %313 : vector<16x128xf32> to vector<16x128xbf16>
    %cst_75 = arith.constant dense<0.000000e+00> : vector<16x384xf32>
    %323 = tpu.matmul %322, %8, %cst_75 {dimension_numbers = #tpu.dot_dimension_numbers<[1], [0], [0], [1], [0, 0, 1, 1], [], []>} : vector<16x128xbf16>, vector<128x384xbf16>, vector<16x384xf32> -> vector<16x384xf32>
    %c16_i32_76 = arith.constant 16 : i32
    %324 = arith.muli %c4_i32, %c16_i32_76 : i32
    %325 = tpu.assume_multiple %324, 16 : i32
    %c7_i32_77 = arith.constant 7 : i32
    %326 = arith.subi %c7_i32_77, %c4_i32 : i32
    %c16_i32_78 = arith.constant 16 : i32
    %327 = arith.muli %326, %c16_i32_78 : i32
    %328 = tpu.assume_multiple %327, 16 : i32
    %329 = arith.index_cast %325 : i32 to index
    %c0_79 = arith.constant 0 : index
    %330 = vector.load %arg9[%329, %c0_79] : memref<128x768xf32, #tpu.memory_space<vmem>>, vector<16x768xf32>
    %331 = arith.index_cast %328 : i32 to index
    %c0_80 = arith.constant 0 : index
    %332 = vector.load %arg9[%331, %c0_80] : memref<128x768xf32, #tpu.memory_space<vmem>>, vector<16x768xf32>
    %333 = vector.extract_strided_slice %330 {offsets = [0, 0], sizes = [16, 384], strides = [1, 1]} : vector<16x768xf32> to vector<16x384xf32>
    %334 = vector.extract_strided_slice %333 {offsets = [0, 0], sizes = [16, 128], strides = [1, 1]} : vector<16x384xf32> to vector<16x128xf32>
    %335 = vector.extract_strided_slice %321 {offsets = [0, 0], sizes = [16, 128], strides = [1, 1]} : vector<16x384xf32> to vector<16x128xf32>
    %336 = arith.addf %334, %335 : vector<16x128xf32>
    %337 = arith.negf %336 : vector<16x128xf32>
    %338 = math.exp %337 : vector<16x128xf32>
    %cst_81 = arith.constant 1.000000e+00 : f32
    %339 = vector.broadcast %cst_81 : f32 to vector<16x128xf32>
    %340 = arith.addf %339, %338 : vector<16x128xf32>
    %341 = arith.divf %339, %340 : vector<16x128xf32>
    %342 = vector.extract_strided_slice %333 {offsets = [0, 128], sizes = [16, 128], strides = [1, 1]} : vector<16x384xf32> to vector<16x128xf32>
    %343 = vector.extract_strided_slice %321 {offsets = [0, 128], sizes = [16, 128], strides = [1, 1]} : vector<16x384xf32> to vector<16x128xf32>
    %344 = arith.addf %342, %343 : vector<16x128xf32>
    %345 = arith.negf %344 : vector<16x128xf32>
    %346 = math.exp %345 : vector<16x128xf32>
    %cst_82 = arith.constant 1.000000e+00 : f32
    %347 = vector.broadcast %cst_82 : f32 to vector<16x128xf32>
    %348 = arith.addf %347, %346 : vector<16x128xf32>
    %349 = arith.divf %347, %348 : vector<16x128xf32>
    %350 = vector.extract_strided_slice %333 {offsets = [0, 256], sizes = [16, 128], strides = [1, 1]} : vector<16x384xf32> to vector<16x128xf32>
    %351 = vector.extract_strided_slice %321 {offsets = [0, 256], sizes = [16, 128], strides = [1, 1]} : vector<16x384xf32> to vector<16x128xf32>
    %352 = vector.broadcast %9 : vector<1x128xf32> to vector<16x128xf32>
    %353 = arith.addf %351, %352 : vector<16x128xf32>
    %354 = arith.mulf %341, %353 : vector<16x128xf32>
    %355 = arith.addf %350, %354 : vector<16x128xf32>
    %356 = math.tanh %355 : vector<16x128xf32>
    %cst_83 = arith.constant 1.000000e+00 : f32
    %357 = vector.broadcast %cst_83 : f32 to vector<16x128xf32>
    %358 = arith.subf %357, %349 : vector<16x128xf32>
    %359 = arith.mulf %358, %356 : vector<16x128xf32>
    %360 = arith.mulf %349, %284 : vector<16x128xf32>
    %361 = arith.addf %359, %360 : vector<16x128xf32>
    %362 = vector.extract_strided_slice %332 {offsets = [0, 384], sizes = [16, 384], strides = [1, 1]} : vector<16x768xf32> to vector<16x384xf32>
    %363 = vector.extract_strided_slice %362 {offsets = [0, 0], sizes = [16, 128], strides = [1, 1]} : vector<16x384xf32> to vector<16x128xf32>
    %364 = vector.extract_strided_slice %323 {offsets = [0, 0], sizes = [16, 128], strides = [1, 1]} : vector<16x384xf32> to vector<16x128xf32>
    %365 = arith.addf %363, %364 : vector<16x128xf32>
    %366 = arith.negf %365 : vector<16x128xf32>
    %367 = math.exp %366 : vector<16x128xf32>
    %cst_84 = arith.constant 1.000000e+00 : f32
    %368 = vector.broadcast %cst_84 : f32 to vector<16x128xf32>
    %369 = arith.addf %368, %367 : vector<16x128xf32>
    %370 = arith.divf %368, %369 : vector<16x128xf32>
    %371 = vector.extract_strided_slice %362 {offsets = [0, 128], sizes = [16, 128], strides = [1, 1]} : vector<16x384xf32> to vector<16x128xf32>
    %372 = vector.extract_strided_slice %323 {offsets = [0, 128], sizes = [16, 128], strides = [1, 1]} : vector<16x384xf32> to vector<16x128xf32>
    %373 = arith.addf %371, %372 : vector<16x128xf32>
    %374 = arith.negf %373 : vector<16x128xf32>
    %375 = math.exp %374 : vector<16x128xf32>
    %cst_85 = arith.constant 1.000000e+00 : f32
    %376 = vector.broadcast %cst_85 : f32 to vector<16x128xf32>
    %377 = arith.addf %376, %375 : vector<16x128xf32>
    %378 = arith.divf %376, %377 : vector<16x128xf32>
    %379 = vector.extract_strided_slice %362 {offsets = [0, 256], sizes = [16, 128], strides = [1, 1]} : vector<16x384xf32> to vector<16x128xf32>
    %380 = vector.extract_strided_slice %323 {offsets = [0, 256], sizes = [16, 128], strides = [1, 1]} : vector<16x384xf32> to vector<16x128xf32>
    %381 = vector.broadcast %10 : vector<1x128xf32> to vector<16x128xf32>
    %382 = arith.addf %380, %381 : vector<16x128xf32>
    %383 = arith.mulf %370, %382 : vector<16x128xf32>
    %384 = arith.addf %379, %383 : vector<16x128xf32>
    %385 = math.tanh %384 : vector<16x128xf32>
    %cst_86 = arith.constant 1.000000e+00 : f32
    %386 = vector.broadcast %cst_86 : f32 to vector<16x128xf32>
    %387 = arith.subf %386, %378 : vector<16x128xf32>
    %388 = arith.mulf %387, %385 : vector<16x128xf32>
    %389 = arith.mulf %378, %313 : vector<16x128xf32>
    %390 = arith.addf %388, %389 : vector<16x128xf32>
    %391 = arith.truncf %361 : vector<16x128xf32> to vector<16x128xbf16>
    %392 = arith.index_cast %325 : i32 to index
    %c0_87 = arith.constant 0 : index
    %393 = vector.load %arg7[%392, %c0_87] : memref<128x128xbf16, #tpu.memory_space<vmem>>, vector<16x128xbf16>
    tpu.vector_store %arg7[%392, %c0_87], %391 {strides = array<i32>} : memref<128x128xbf16, #tpu.memory_space<vmem>>, vector<16x128xbf16>,
    %394 = arith.truncf %390 : vector<16x128xf32> to vector<16x128xbf16>
    %395 = arith.index_cast %328 : i32 to index
    %c0_88 = arith.constant 0 : index
    %396 = vector.load %arg8[%395, %c0_88] : memref<128x128xbf16, #tpu.memory_space<vmem>>, vector<16x128xbf16>
    tpu.vector_store %arg8[%395, %c0_88], %394 {strides = array<i32>} : memref<128x128xbf16, #tpu.memory_space<vmem>>, vector<16x128xbf16>,
    %c5_i32 = arith.constant 5 : i32
    %397 = arith.truncf %361 : vector<16x128xf32> to vector<16x128xbf16>
    %cst_89 = arith.constant dense<0.000000e+00> : vector<16x384xf32>
    %398 = tpu.matmul %397, %7, %cst_89 {dimension_numbers = #tpu.dot_dimension_numbers<[1], [0], [0], [1], [0, 0, 1, 1], [], []>} : vector<16x128xbf16>, vector<128x384xbf16>, vector<16x384xf32> -> vector<16x384xf32>
    %399 = arith.truncf %390 : vector<16x128xf32> to vector<16x128xbf16>
    %cst_90 = arith.constant dense<0.000000e+00> : vector<16x384xf32>
    %400 = tpu.matmul %399, %8, %cst_90 {dimension_numbers = #tpu.dot_dimension_numbers<[1], [0], [0], [1], [0, 0, 1, 1], [], []>} : vector<16x128xbf16>, vector<128x384xbf16>, vector<16x384xf32> -> vector<16x384xf32>
    %c16_i32_91 = arith.constant 16 : i32
    %401 = arith.muli %c5_i32, %c16_i32_91 : i32
    %402 = tpu.assume_multiple %401, 16 : i32
    %c7_i32_92 = arith.constant 7 : i32
    %403 = arith.subi %c7_i32_92, %c5_i32 : i32
    %c16_i32_93 = arith.constant 16 : i32
    %404 = arith.muli %403, %c16_i32_93 : i32
    %405 = tpu.assume_multiple %404, 16 : i32
    %406 = arith.index_cast %402 : i32 to index
    %c0_94 = arith.constant 0 : index
    %407 = vector.load %arg9[%406, %c0_94] : memref<128x768xf32, #tpu.memory_space<vmem>>, vector<16x768xf32>
    %408 = arith.index_cast %405 : i32 to index
    %c0_95 = arith.constant 0 : index
    %409 = vector.load %arg9[%408, %c0_95] : memref<128x768xf32, #tpu.memory_space<vmem>>, vector<16x768xf32>
    %410 = vector.extract_strided_slice %407 {offsets = [0, 0], sizes = [16, 384], strides = [1, 1]} : vector<16x768xf32> to vector<16x384xf32>
    %411 = vector.extract_strided_slice %410 {offsets = [0, 0], sizes = [16, 128], strides = [1, 1]} : vector<16x384xf32> to vector<16x128xf32>
    %412 = vector.extract_strided_slice %398 {offsets = [0, 0], sizes = [16, 128], strides = [1, 1]} : vector<16x384xf32> to vector<16x128xf32>
    %413 = arith.addf %411, %412 : vector<16x128xf32>
    %414 = arith.negf %413 : vector<16x128xf32>
    %415 = math.exp %414 : vector<16x128xf32>
    %cst_96 = arith.constant 1.000000e+00 : f32
    %416 = vector.broadcast %cst_96 : f32 to vector<16x128xf32>
    %417 = arith.addf %416, %415 : vector<16x128xf32>
    %418 = arith.divf %416, %417 : vector<16x128xf32>
    %419 = vector.extract_strided_slice %410 {offsets = [0, 128], sizes = [16, 128], strides = [1, 1]} : vector<16x384xf32> to vector<16x128xf32>
    %420 = vector.extract_strided_slice %398 {offsets = [0, 128], sizes = [16, 128], strides = [1, 1]} : vector<16x384xf32> to vector<16x128xf32>
    %421 = arith.addf %419, %420 : vector<16x128xf32>
    %422 = arith.negf %421 : vector<16x128xf32>
    %423 = math.exp %422 : vector<16x128xf32>
    %cst_97 = arith.constant 1.000000e+00 : f32
    %424 = vector.broadcast %cst_97 : f32 to vector<16x128xf32>
    %425 = arith.addf %424, %423 : vector<16x128xf32>
    %426 = arith.divf %424, %425 : vector<16x128xf32>
    %427 = vector.extract_strided_slice %410 {offsets = [0, 256], sizes = [16, 128], strides = [1, 1]} : vector<16x384xf32> to vector<16x128xf32>
    %428 = vector.extract_strided_slice %398 {offsets = [0, 256], sizes = [16, 128], strides = [1, 1]} : vector<16x384xf32> to vector<16x128xf32>
    %429 = vector.broadcast %9 : vector<1x128xf32> to vector<16x128xf32>
    %430 = arith.addf %428, %429 : vector<16x128xf32>
    %431 = arith.mulf %418, %430 : vector<16x128xf32>
    %432 = arith.addf %427, %431 : vector<16x128xf32>
    %433 = math.tanh %432 : vector<16x128xf32>
    %cst_98 = arith.constant 1.000000e+00 : f32
    %434 = vector.broadcast %cst_98 : f32 to vector<16x128xf32>
    %435 = arith.subf %434, %426 : vector<16x128xf32>
    %436 = arith.mulf %435, %433 : vector<16x128xf32>
    %437 = arith.mulf %426, %361 : vector<16x128xf32>
    %438 = arith.addf %436, %437 : vector<16x128xf32>
    %439 = vector.extract_strided_slice %409 {offsets = [0, 384], sizes = [16, 384], strides = [1, 1]} : vector<16x768xf32> to vector<16x384xf32>
    %440 = vector.extract_strided_slice %439 {offsets = [0, 0], sizes = [16, 128], strides = [1, 1]} : vector<16x384xf32> to vector<16x128xf32>
    %441 = vector.extract_strided_slice %400 {offsets = [0, 0], sizes = [16, 128], strides = [1, 1]} : vector<16x384xf32> to vector<16x128xf32>
    %442 = arith.addf %440, %441 : vector<16x128xf32>
    %443 = arith.negf %442 : vector<16x128xf32>
    %444 = math.exp %443 : vector<16x128xf32>
    %cst_99 = arith.constant 1.000000e+00 : f32
    %445 = vector.broadcast %cst_99 : f32 to vector<16x128xf32>
    %446 = arith.addf %445, %444 : vector<16x128xf32>
    %447 = arith.divf %445, %446 : vector<16x128xf32>
    %448 = vector.extract_strided_slice %439 {offsets = [0, 128], sizes = [16, 128], strides = [1, 1]} : vector<16x384xf32> to vector<16x128xf32>
    %449 = vector.extract_strided_slice %400 {offsets = [0, 128], sizes = [16, 128], strides = [1, 1]} : vector<16x384xf32> to vector<16x128xf32>
    %450 = arith.addf %448, %449 : vector<16x128xf32>
    %451 = arith.negf %450 : vector<16x128xf32>
    %452 = math.exp %451 : vector<16x128xf32>
    %cst_100 = arith.constant 1.000000e+00 : f32
    %453 = vector.broadcast %cst_100 : f32 to vector<16x128xf32>
    %454 = arith.addf %453, %452 : vector<16x128xf32>
    %455 = arith.divf %453, %454 : vector<16x128xf32>
    %456 = vector.extract_strided_slice %439 {offsets = [0, 256], sizes = [16, 128], strides = [1, 1]} : vector<16x384xf32> to vector<16x128xf32>
    %457 = vector.extract_strided_slice %400 {offsets = [0, 256], sizes = [16, 128], strides = [1, 1]} : vector<16x384xf32> to vector<16x128xf32>
    %458 = vector.broadcast %10 : vector<1x128xf32> to vector<16x128xf32>
    %459 = arith.addf %457, %458 : vector<16x128xf32>
    %460 = arith.mulf %447, %459 : vector<16x128xf32>
    %461 = arith.addf %456, %460 : vector<16x128xf32>
    %462 = math.tanh %461 : vector<16x128xf32>
    %cst_101 = arith.constant 1.000000e+00 : f32
    %463 = vector.broadcast %cst_101 : f32 to vector<16x128xf32>
    %464 = arith.subf %463, %455 : vector<16x128xf32>
    %465 = arith.mulf %464, %462 : vector<16x128xf32>
    %466 = arith.mulf %455, %390 : vector<16x128xf32>
    %467 = arith.addf %465, %466 : vector<16x128xf32>
    %468 = arith.truncf %438 : vector<16x128xf32> to vector<16x128xbf16>
    %469 = arith.index_cast %402 : i32 to index
    %c0_102 = arith.constant 0 : index
    %470 = vector.load %arg7[%469, %c0_102] : memref<128x128xbf16, #tpu.memory_space<vmem>>, vector<16x128xbf16>
    tpu.vector_store %arg7[%469, %c0_102], %468 {strides = array<i32>} : memref<128x128xbf16, #tpu.memory_space<vmem>>, vector<16x128xbf16>,
    %471 = arith.truncf %467 : vector<16x128xf32> to vector<16x128xbf16>
    %472 = arith.index_cast %405 : i32 to index
    %c0_103 = arith.constant 0 : index
    %473 = vector.load %arg8[%472, %c0_103] : memref<128x128xbf16, #tpu.memory_space<vmem>>, vector<16x128xbf16>
    tpu.vector_store %arg8[%472, %c0_103], %471 {strides = array<i32>} : memref<128x128xbf16, #tpu.memory_space<vmem>>, vector<16x128xbf16>,
    %c6_i32 = arith.constant 6 : i32
    %474 = arith.truncf %438 : vector<16x128xf32> to vector<16x128xbf16>
    %cst_104 = arith.constant dense<0.000000e+00> : vector<16x384xf32>
    %475 = tpu.matmul %474, %7, %cst_104 {dimension_numbers = #tpu.dot_dimension_numbers<[1], [0], [0], [1], [0, 0, 1, 1], [], []>} : vector<16x128xbf16>, vector<128x384xbf16>, vector<16x384xf32> -> vector<16x384xf32>
    %476 = arith.truncf %467 : vector<16x128xf32> to vector<16x128xbf16>
    %cst_105 = arith.constant dense<0.000000e+00> : vector<16x384xf32>
    %477 = tpu.matmul %476, %8, %cst_105 {dimension_numbers = #tpu.dot_dimension_numbers<[1], [0], [0], [1], [0, 0, 1, 1], [], []>} : vector<16x128xbf16>, vector<128x384xbf16>, vector<16x384xf32> -> vector<16x384xf32>
    %c16_i32_106 = arith.constant 16 : i32
    %478 = arith.muli %c6_i32, %c16_i32_106 : i32
    %479 = tpu.assume_multiple %478, 16 : i32
    %c7_i32_107 = arith.constant 7 : i32
    %480 = arith.subi %c7_i32_107, %c6_i32 : i32
    %c16_i32_108 = arith.constant 16 : i32
    %481 = arith.muli %480, %c16_i32_108 : i32
    %482 = tpu.assume_multiple %481, 16 : i32
    %483 = arith.index_cast %479 : i32 to index
    %c0_109 = arith.constant 0 : index
    %484 = vector.load %arg9[%483, %c0_109] : memref<128x768xf32, #tpu.memory_space<vmem>>, vector<16x768xf32>
    %485 = arith.index_cast %482 : i32 to index
    %c0_110 = arith.constant 0 : index
    %486 = vector.load %arg9[%485, %c0_110] : memref<128x768xf32, #tpu.memory_space<vmem>>, vector<16x768xf32>
    %487 = vector.extract_strided_slice %484 {offsets = [0, 0], sizes = [16, 384], strides = [1, 1]} : vector<16x768xf32> to vector<16x384xf32>
    %488 = vector.extract_strided_slice %487 {offsets = [0, 0], sizes = [16, 128], strides = [1, 1]} : vector<16x384xf32> to vector<16x128xf32>
    %489 = vector.extract_strided_slice %475 {offsets = [0, 0], sizes = [16, 128], strides = [1, 1]} : vector<16x384xf32> to vector<16x128xf32>
    %490 = arith.addf %488, %489 : vector<16x128xf32>
    %491 = arith.negf %490 : vector<16x128xf32>
    %492 = math.exp %491 : vector<16x128xf32>
    %cst_111 = arith.constant 1.000000e+00 : f32
    %493 = vector.broadcast %cst_111 : f32 to vector<16x128xf32>
    %494 = arith.addf %493, %492 : vector<16x128xf32>
    %495 = arith.divf %493, %494 : vector<16x128xf32>
    %496 = vector.extract_strided_slice %487 {offsets = [0, 128], sizes = [16, 128], strides = [1, 1]} : vector<16x384xf32> to vector<16x128xf32>
    %497 = vector.extract_strided_slice %475 {offsets = [0, 128], sizes = [16, 128], strides = [1, 1]} : vector<16x384xf32> to vector<16x128xf32>
    %498 = arith.addf %496, %497 : vector<16x128xf32>
    %499 = arith.negf %498 : vector<16x128xf32>
    %500 = math.exp %499 : vector<16x128xf32>
    %cst_112 = arith.constant 1.000000e+00 : f32
    %501 = vector.broadcast %cst_112 : f32 to vector<16x128xf32>
    %502 = arith.addf %501, %500 : vector<16x128xf32>
    %503 = arith.divf %501, %502 : vector<16x128xf32>
    %504 = vector.extract_strided_slice %487 {offsets = [0, 256], sizes = [16, 128], strides = [1, 1]} : vector<16x384xf32> to vector<16x128xf32>
    %505 = vector.extract_strided_slice %475 {offsets = [0, 256], sizes = [16, 128], strides = [1, 1]} : vector<16x384xf32> to vector<16x128xf32>
    %506 = vector.broadcast %9 : vector<1x128xf32> to vector<16x128xf32>
    %507 = arith.addf %505, %506 : vector<16x128xf32>
    %508 = arith.mulf %495, %507 : vector<16x128xf32>
    %509 = arith.addf %504, %508 : vector<16x128xf32>
    %510 = math.tanh %509 : vector<16x128xf32>
    %cst_113 = arith.constant 1.000000e+00 : f32
    %511 = vector.broadcast %cst_113 : f32 to vector<16x128xf32>
    %512 = arith.subf %511, %503 : vector<16x128xf32>
    %513 = arith.mulf %512, %510 : vector<16x128xf32>
    %514 = arith.mulf %503, %438 : vector<16x128xf32>
    %515 = arith.addf %513, %514 : vector<16x128xf32>
    %516 = vector.extract_strided_slice %486 {offsets = [0, 384], sizes = [16, 384], strides = [1, 1]} : vector<16x768xf32> to vector<16x384xf32>
    %517 = vector.extract_strided_slice %516 {offsets = [0, 0], sizes = [16, 128], strides = [1, 1]} : vector<16x384xf32> to vector<16x128xf32>
    %518 = vector.extract_strided_slice %477 {offsets = [0, 0], sizes = [16, 128], strides = [1, 1]} : vector<16x384xf32> to vector<16x128xf32>
    %519 = arith.addf %517, %518 : vector<16x128xf32>
    %520 = arith.negf %519 : vector<16x128xf32>
    %521 = math.exp %520 : vector<16x128xf32>
    %cst_114 = arith.constant 1.000000e+00 : f32
    %522 = vector.broadcast %cst_114 : f32 to vector<16x128xf32>
    %523 = arith.addf %522, %521 : vector<16x128xf32>
    %524 = arith.divf %522, %523 : vector<16x128xf32>
    %525 = vector.extract_strided_slice %516 {offsets = [0, 128], sizes = [16, 128], strides = [1, 1]} : vector<16x384xf32> to vector<16x128xf32>
    %526 = vector.extract_strided_slice %477 {offsets = [0, 128], sizes = [16, 128], strides = [1, 1]} : vector<16x384xf32> to vector<16x128xf32>
    %527 = arith.addf %525, %526 : vector<16x128xf32>
    %528 = arith.negf %527 : vector<16x128xf32>
    %529 = math.exp %528 : vector<16x128xf32>
    %cst_115 = arith.constant 1.000000e+00 : f32
    %530 = vector.broadcast %cst_115 : f32 to vector<16x128xf32>
    %531 = arith.addf %530, %529 : vector<16x128xf32>
    %532 = arith.divf %530, %531 : vector<16x128xf32>
    %533 = vector.extract_strided_slice %516 {offsets = [0, 256], sizes = [16, 128], strides = [1, 1]} : vector<16x384xf32> to vector<16x128xf32>
    %534 = vector.extract_strided_slice %477 {offsets = [0, 256], sizes = [16, 128], strides = [1, 1]} : vector<16x384xf32> to vector<16x128xf32>
    %535 = vector.broadcast %10 : vector<1x128xf32> to vector<16x128xf32>
    %536 = arith.addf %534, %535 : vector<16x128xf32>
    %537 = arith.mulf %524, %536 : vector<16x128xf32>
    %538 = arith.addf %533, %537 : vector<16x128xf32>
    %539 = math.tanh %538 : vector<16x128xf32>
    %cst_116 = arith.constant 1.000000e+00 : f32
    %540 = vector.broadcast %cst_116 : f32 to vector<16x128xf32>
    %541 = arith.subf %540, %532 : vector<16x128xf32>
    %542 = arith.mulf %541, %539 : vector<16x128xf32>
    %543 = arith.mulf %532, %467 : vector<16x128xf32>
    %544 = arith.addf %542, %543 : vector<16x128xf32>
    %545 = arith.truncf %515 : vector<16x128xf32> to vector<16x128xbf16>
    %546 = arith.index_cast %479 : i32 to index
    %c0_117 = arith.constant 0 : index
    %547 = vector.load %arg7[%546, %c0_117] : memref<128x128xbf16, #tpu.memory_space<vmem>>, vector<16x128xbf16>
    tpu.vector_store %arg7[%546, %c0_117], %545 {strides = array<i32>} : memref<128x128xbf16, #tpu.memory_space<vmem>>, vector<16x128xbf16>,
    %548 = arith.truncf %544 : vector<16x128xf32> to vector<16x128xbf16>
    %549 = arith.index_cast %482 : i32 to index
    %c0_118 = arith.constant 0 : index
    %550 = vector.load %arg8[%549, %c0_118] : memref<128x128xbf16, #tpu.memory_space<vmem>>, vector<16x128xbf16>
    tpu.vector_store %arg8[%549, %c0_118], %548 {strides = array<i32>} : memref<128x128xbf16, #tpu.memory_space<vmem>>, vector<16x128xbf16>,
    %c7_i32_119 = arith.constant 7 : i32
    %551 = arith.truncf %515 : vector<16x128xf32> to vector<16x128xbf16>
    %cst_120 = arith.constant dense<0.000000e+00> : vector<16x384xf32>
    %552 = tpu.matmul %551, %7, %cst_120 {dimension_numbers = #tpu.dot_dimension_numbers<[1], [0], [0], [1], [0, 0, 1, 1], [], []>} : vector<16x128xbf16>, vector<128x384xbf16>, vector<16x384xf32> -> vector<16x384xf32>
    %553 = arith.truncf %544 : vector<16x128xf32> to vector<16x128xbf16>
    %cst_121 = arith.constant dense<0.000000e+00> : vector<16x384xf32>
    %554 = tpu.matmul %553, %8, %cst_121 {dimension_numbers = #tpu.dot_dimension_numbers<[1], [0], [0], [1], [0, 0, 1, 1], [], []>} : vector<16x128xbf16>, vector<128x384xbf16>, vector<16x384xf32> -> vector<16x384xf32>
    %c16_i32_122 = arith.constant 16 : i32
    %555 = arith.muli %c7_i32_119, %c16_i32_122 : i32
    %556 = tpu.assume_multiple %555, 16 : i32
    %c7_i32_123 = arith.constant 7 : i32
    %557 = arith.subi %c7_i32_123, %c7_i32_119 : i32
    %c16_i32_124 = arith.constant 16 : i32
    %558 = arith.muli %557, %c16_i32_124 : i32
    %559 = tpu.assume_multiple %558, 16 : i32
    %560 = arith.index_cast %556 : i32 to index
    %c0_125 = arith.constant 0 : index
    %561 = vector.load %arg9[%560, %c0_125] : memref<128x768xf32, #tpu.memory_space<vmem>>, vector<16x768xf32>
    %562 = arith.index_cast %559 : i32 to index
    %c0_126 = arith.constant 0 : index
    %563 = vector.load %arg9[%562, %c0_126] : memref<128x768xf32, #tpu.memory_space<vmem>>, vector<16x768xf32>
    %564 = vector.extract_strided_slice %561 {offsets = [0, 0], sizes = [16, 384], strides = [1, 1]} : vector<16x768xf32> to vector<16x384xf32>
    %565 = vector.extract_strided_slice %564 {offsets = [0, 0], sizes = [16, 128], strides = [1, 1]} : vector<16x384xf32> to vector<16x128xf32>
    %566 = vector.extract_strided_slice %552 {offsets = [0, 0], sizes = [16, 128], strides = [1, 1]} : vector<16x384xf32> to vector<16x128xf32>
    %567 = arith.addf %565, %566 : vector<16x128xf32>
    %568 = arith.negf %567 : vector<16x128xf32>
    %569 = math.exp %568 : vector<16x128xf32>
    %cst_127 = arith.constant 1.000000e+00 : f32
    %570 = vector.broadcast %cst_127 : f32 to vector<16x128xf32>
    %571 = arith.addf %570, %569 : vector<16x128xf32>
    %572 = arith.divf %570, %571 : vector<16x128xf32>
    %573 = vector.extract_strided_slice %564 {offsets = [0, 128], sizes = [16, 128], strides = [1, 1]} : vector<16x384xf32> to vector<16x128xf32>
    %574 = vector.extract_strided_slice %552 {offsets = [0, 128], sizes = [16, 128], strides = [1, 1]} : vector<16x384xf32> to vector<16x128xf32>
    %575 = arith.addf %573, %574 : vector<16x128xf32>
    %576 = arith.negf %575 : vector<16x128xf32>
    %577 = math.exp %576 : vector<16x128xf32>
    %cst_128 = arith.constant 1.000000e+00 : f32
    %578 = vector.broadcast %cst_128 : f32 to vector<16x128xf32>
    %579 = arith.addf %578, %577 : vector<16x128xf32>
    %580 = arith.divf %578, %579 : vector<16x128xf32>
    %581 = vector.extract_strided_slice %564 {offsets = [0, 256], sizes = [16, 128], strides = [1, 1]} : vector<16x384xf32> to vector<16x128xf32>
    %582 = vector.extract_strided_slice %552 {offsets = [0, 256], sizes = [16, 128], strides = [1, 1]} : vector<16x384xf32> to vector<16x128xf32>
    %583 = vector.broadcast %9 : vector<1x128xf32> to vector<16x128xf32>
    %584 = arith.addf %582, %583 : vector<16x128xf32>
    %585 = arith.mulf %572, %584 : vector<16x128xf32>
    %586 = arith.addf %581, %585 : vector<16x128xf32>
    %587 = math.tanh %586 : vector<16x128xf32>
    %cst_129 = arith.constant 1.000000e+00 : f32
    %588 = vector.broadcast %cst_129 : f32 to vector<16x128xf32>
    %589 = arith.subf %588, %580 : vector<16x128xf32>
    %590 = arith.mulf %589, %587 : vector<16x128xf32>
    %591 = arith.mulf %580, %515 : vector<16x128xf32>
    %592 = arith.addf %590, %591 : vector<16x128xf32>
    %593 = vector.extract_strided_slice %563 {offsets = [0, 384], sizes = [16, 384], strides = [1, 1]} : vector<16x768xf32> to vector<16x384xf32>
    %594 = vector.extract_strided_slice %593 {offsets = [0, 0], sizes = [16, 128], strides = [1, 1]} : vector<16x384xf32> to vector<16x128xf32>
    %595 = vector.extract_strided_slice %554 {offsets = [0, 0], sizes = [16, 128], strides = [1, 1]} : vector<16x384xf32> to vector<16x128xf32>
    %596 = arith.addf %594, %595 : vector<16x128xf32>
    %597 = arith.negf %596 : vector<16x128xf32>
    %598 = math.exp %597 : vector<16x128xf32>
    %cst_130 = arith.constant 1.000000e+00 : f32
    %599 = vector.broadcast %cst_130 : f32 to vector<16x128xf32>
    %600 = arith.addf %599, %598 : vector<16x128xf32>
    %601 = arith.divf %599, %600 : vector<16x128xf32>
    %602 = vector.extract_strided_slice %593 {offsets = [0, 128], sizes = [16, 128], strides = [1, 1]} : vector<16x384xf32> to vector<16x128xf32>
    %603 = vector.extract_strided_slice %554 {offsets = [0, 128], sizes = [16, 128], strides = [1, 1]} : vector<16x384xf32> to vector<16x128xf32>
    %604 = arith.addf %602, %603 : vector<16x128xf32>
    %605 = arith.negf %604 : vector<16x128xf32>
    %606 = math.exp %605 : vector<16x128xf32>
    %cst_131 = arith.constant 1.000000e+00 : f32
    %607 = vector.broadcast %cst_131 : f32 to vector<16x128xf32>
    %608 = arith.addf %607, %606 : vector<16x128xf32>
    %609 = arith.divf %607, %608 : vector<16x128xf32>
    %610 = vector.extract_strided_slice %593 {offsets = [0, 256], sizes = [16, 128], strides = [1, 1]} : vector<16x384xf32> to vector<16x128xf32>
    %611 = vector.extract_strided_slice %554 {offsets = [0, 256], sizes = [16, 128], strides = [1, 1]} : vector<16x384xf32> to vector<16x128xf32>
    %612 = vector.broadcast %10 : vector<1x128xf32> to vector<16x128xf32>
    %613 = arith.addf %611, %612 : vector<16x128xf32>
    %614 = arith.mulf %601, %613 : vector<16x128xf32>
    %615 = arith.addf %610, %614 : vector<16x128xf32>
    %616 = math.tanh %615 : vector<16x128xf32>
    %cst_132 = arith.constant 1.000000e+00 : f32
    %617 = vector.broadcast %cst_132 : f32 to vector<16x128xf32>
    %618 = arith.subf %617, %609 : vector<16x128xf32>
    %619 = arith.mulf %618, %616 : vector<16x128xf32>
    %620 = arith.mulf %609, %544 : vector<16x128xf32>
    %621 = arith.addf %619, %620 : vector<16x128xf32>
    %622 = arith.truncf %592 : vector<16x128xf32> to vector<16x128xbf16>
    %623 = arith.index_cast %556 : i32 to index
    %c0_133 = arith.constant 0 : index
    %624 = vector.load %arg7[%623, %c0_133] : memref<128x128xbf16, #tpu.memory_space<vmem>>, vector<16x128xbf16>
    tpu.vector_store %arg7[%623, %c0_133], %622 {strides = array<i32>} : memref<128x128xbf16, #tpu.memory_space<vmem>>, vector<16x128xbf16>,
    %625 = arith.truncf %621 : vector<16x128xf32> to vector<16x128xbf16>
    %626 = arith.index_cast %559 : i32 to index
    %c0_134 = arith.constant 0 : index
    %627 = vector.load %arg8[%626, %c0_134] : memref<128x128xbf16, #tpu.memory_space<vmem>>, vector<16x128xbf16>
    tpu.vector_store %arg8[%626, %c0_134], %625 {strides = array<i32>} : memref<128x128xbf16, #tpu.memory_space<vmem>>, vector<16x128xbf16>,
    %c8_i32 = arith.constant 8 : i32
    return
  }
}

</mosaic_0001>

<llo_original>
// kernel: text_rnn_forward.3
$region0: #{text_rnn_forward.3}
  #allocation0 [shape = 'u32[]', space=smem, size = 0x4, offset = 0x4, fixed_abs, tag = 'smem constant byte address 0x4 - core index']
  #allocation1 [shape = 'u32[144,128]{1,0:T(1,128)}', space=vmem, size = 0x12000, scoped, tag = 'internal scratch']
  #allocation2 [shape = 'f32[128,384]{1,0:T(8,128)}', space=vmem, size = 0x30000, scoped, tag = 'scratch operand']
  %s0 = inlined_call_operand.vmem [shape: bf16[128,128], index: 0, kind: input, shape index: {}]
  %s1 = inlined_call_operand.vmem [shape: bf16[128,128], index: 1, kind: input, shape index: {}]
  %s2 = inlined_call_operand.vmem [shape: bf16[256,384], index: 2, kind: input, shape index: {}]
  %s3 = inlined_call_operand.hbm [shape: bf16[128,384], index: 3, kind: input, shape index: {}]
  %s4 = inlined_call_operand.vmem [shape: f32[1,384], index: 4, kind: input, shape index: {}]
  %s5 = inlined_call_operand.vmem [shape: f32[1,128], index: 5, kind: input, shape index: {}]
  %s6 = inlined_call_operand.vmem [shape: bf16[256,384], index: 6, kind: input, shape index: {}]
  %s7 = inlined_call_operand.vmem [shape: f32[1,384], index: 7, kind: input, shape index: {}]
  %s8 = inlined_call_operand.vmem [shape: f32[1,128], index: 8, kind: input, shape index: {}]
  %s9 = inlined_call_operand.vmem [shape: f32[1,64], index: 9, kind: input, shape index: {}]
  %s10 = inlined_call_operand.vmem [shape: f32[1,64], index: 10, kind: input, shape index: {}]
  %s11 = inlined_call_operand.vmem [shape: f32[64,5], index: 11, kind: input, shape index: {}]
  %s12 = inlined_call_operand.vmem [shape: f32[1,5], index: 12, kind: input, shape index: {}]
  %s13 = inlined_call_operand.vmem [shape: f32[16,5], index: 13, kind: output, shape index: {}]
  %s14 = sld [smem:[#allocation0]]
  $region66: #{text_rnn_forward.3} parent=0
    _
  %s16 = ssub.s32 1, %s14
  %s17 = scalar_select 0, %s16, %s14
  $region1: #{text_rnn_forward.3} parent=0
    #allocation3 [shape = 'u8[98304]{0}', space=vmem, size = 0x18000, scoped, tag = 'input window, operand 3, single buffered']
    #allocation4 [shape = 's32[1]{0}', space=sflag, size = 0x4, scoped, tag = 'scoped memory for text_rnn_forward.3']
    %18 = vsyncpa [#allocation4], 0
    // Predicated region
    $region2: #{text_rnn_forward.3} parent=1 // pred_check
      _
    $region3: #{text_rnn_forward.3} parent=1 // pred_check_branch
      %20 = sbr.rel (0) target = $region5
    $region4: #{text_rnn_forward.3} parent=1 // pred_region
      _
    $region5: #{text_rnn_forward.3} parent=1 // pred_fallthru
      _
    // Predicated region
    $region6: #{text_rnn_forward.3} parent=1 // pred_check
      _
    $region7: #{text_rnn_forward.3} parent=1 // pred_check_branch
      %22 = sbr.rel (0) target = $region9
    $region8: #{text_rnn_forward.3} parent=1 // pred_region
      _
    $region9: #{text_rnn_forward.3} parent=1 // pred_fallthru
      _
    // Predicated region
    $region10: #{text_rnn_forward.3} parent=1 // pred_check
      _
    $region11: #{text_rnn_forward.3} parent=1 // pred_check_branch
      %24 = sbr.rel (0) target = $region13
    $region12: #{text_rnn_forward.3} parent=1 // pred_region
      _
    $region13: #{text_rnn_forward.3} parent=1 // pred_fallthru
      _
    // Predicated region
    $region14: #{text_rnn_forward.3} parent=1 // pred_check
      _
    $region15: #{text_rnn_forward.3} parent=1 // pred_check_branch
      %26 = sbr.rel (0) target = $region17
    $region16: #{text_rnn_forward.3} parent=1 // pred_region
      %s28 = ssub.s32 3072, 3072
      %29 = vsyncadd [#allocation4], %s28
      %s30 = sshll.u32 [#allocation3], 4
      %s31 = int_to_ptr.vmem [resolvable:$true] %s30
      %36 = dma.hbm_to_vmem [thread:$0]  %s3, 3072, %s31, [#allocation4], 192, 192, 12
    $region17: #{text_rnn_forward.3} parent=1 // pred_fallthru
      _
    // Predicated region
    $region18: #{text_rnn_forward.3} parent=1 // pred_check
      _
    $region19: #{text_rnn_forward.3} parent=1 // pred_check_branch
      %38 = sbr.rel (0) target = $region21
    $region20: #{text_rnn_forward.3} parent=1 // pred_region
      _
    $region21: #{text_rnn_forward.3} parent=1 // pred_fallthru
      _
    // Predicated region
    $region22: #{text_rnn_forward.3} parent=1 // pred_check
      _
    $region23: #{text_rnn_forward.3} parent=1 // pred_check_branch
      %40 = sbr.rel (0) target = $region25
    $region24: #{text_rnn_forward.3} parent=1 // pred_region
      _
    $region25: #{text_rnn_forward.3} parent=1 // pred_fallthru
      _
    // Predicated region
    $region26: #{text_rnn_forward.3} parent=1 // pred_check
      _
    $region27: #{text_rnn_forward.3} parent=1 // pred_check_branch
      %42 = sbr.rel (0) target = $region29
    $region28: #{text_rnn_forward.3} parent=1 // pred_region
      _
    $region29: #{text_rnn_forward.3} parent=1 // pred_fallthru
      _
    // Predicated region
    $region30: #{text_rnn_forward.3} parent=1 // pred_check
      _
    $region31: #{text_rnn_forward.3} parent=1 // pred_check_branch
      %44 = sbr.rel (0) target = $region33
    $region32: #{text_rnn_forward.3} parent=1 // pred_region
      _
    $region33: #{text_rnn_forward.3} parent=1 // pred_fallthru
      _
    // Predicated region
    $region34: #{text_rnn_forward.3} parent=1 // pred_check
      _
    $region35: #{text_rnn_forward.3} parent=1 // pred_check_branch
      %46 = sbr.rel (0) target = $region37
    $region36: #{text_rnn_forward.3} parent=1 // pred_region
      _
    $region37: #{text_rnn_forward.3} parent=1 // pred_fallthru
      _
    // Predicated region
    $region38: #{text_rnn_forward.3} parent=1 // pred_check
      _
    $region39: #{text_rnn_forward.3} parent=1 // pred_check_branch
      %48 = sbr.rel (0) target = $region41
    $region40: #{text_rnn_forward.3} parent=1 // pred_region
      _
    $region41: #{text_rnn_forward.3} parent=1 // pred_fallthru
      _
    // Predicated region
    $region42: #{text_rnn_forward.3} parent=1 // pred_check
      _
    $region43: #{text_rnn_forward.3} parent=1 // pred_check_branch
      %50 = sbr.rel (0) target = $region45
    $region44: #{text_rnn_forward.3} parent=1 // pred_region
      _
    $region45: #{text_rnn_forward.3} parent=1 // pred_fallthru
      _
    // Predicated region
    $region46: #{text_rnn_forward.3} parent=1 // pred_check
      _
    $region47: #{text_rnn_forward.3} parent=1 // pred_check_branch
      %52 = sbr.rel (0) target = $region49
    $region48: #{text_rnn_forward.3} parent=1 // pred_region
      _
    $region49: #{text_rnn_forward.3} parent=1 // pred_fallthru
      _
    // Predicated region
    $region50: #{text_rnn_forward.3} parent=1 // pred_check
      _
    $region51: #{text_rnn_forward.3} parent=1 // pred_check_branch
      %54 = sbr.rel (0) target = $region53
    $region52: #{text_rnn_forward.3} parent=1 // pred_region
      _
    $region53: #{text_rnn_forward.3} parent=1 // pred_fallthru
      _
    // Predicated region
    $region54: #{text_rnn_forward.3} parent=1 // pred_check
      _
    $region55: #{text_rnn_forward.3} parent=1 // pred_check_branch
      %56 = sbr.rel (0) target = $region57
    $region56: #{text_rnn_forward.3} parent=1 // pred_region
      %57 = dma.done [#allocation4], 3072
    $region57: #{text_rnn_forward.3} parent=1 // pred_fallthru
      _
    %v59 = vld [vmem:[%s2] sm:$0xff]
    %v60 = vld [vmem:[%s2 + $0x8] sm:$0xf]
    %v61 = vld [vmem:[%s2 + $0xc] sm:$0xff]
    %v62 = vld [vmem:[%s2 + $0x14] sm:$0xf]
    %v63 = vld [vmem:[%s2 + $0x18] sm:$0xff]
    %v64 = vld [vmem:[%s2 + $0x20] sm:$0xf]
    %v65 = vld [vmem:[%s2 + $0x24] sm:$0xff]
    %v66 = vld [vmem:[%s2 + $0x2c] sm:$0xf]
    %v67 = vld [vmem:[%s2 + $0x30] sm:$0xff]
    %v68 = vld [vmem:[%s2 + $0x38] sm:$0xf]
    %v69 = vld [vmem:[%s2 + $0x3c] sm:$0xff]
    %v70 = vld [vmem:[%s2 + $0x44] sm:$0xf]
    %v71 = vld [vmem:[%s2 + $0x48] sm:$0xff]
    %v72 = vld [vmem:[%s2 + $0x50] sm:$0xf]
    %v73 = vld [vmem:[%s2 + $0x54] sm:$0xff]
    %v74 = vld [vmem:[%s2 + $0x5c] sm:$0xf]
    %v75 = vld [vmem:[%s2 + $0x60] sm:$0xff]
    %v76 = vld [vmem:[%s2 + $0x68] sm:$0xf]
    %v77 = vld [vmem:[%s2 + $0x6c] sm:$0xff]
    %v78 = vld [vmem:[%s2 + $0x74] sm:$0xf]
    %v79 = vld [vmem:[%s2 + $0x78] sm:$0xff]
    %v80 = vld [vmem:[%s2 + $0x80] sm:$0xf]
    %v81 = vld [vmem:[%s2 + $0x84] sm:$0xff]
    %v82 = vld [vmem:[%s2 + $0x8c] sm:$0xf]
    %v83 = vld [vmem:[%s2 + $0x90] sm:$0xff]
    %v84 = vld [vmem:[%s2 + $0x98] sm:$0xf]
    %v85 = vld [vmem:[%s2 + $0x9c] sm:$0xff]
    %v86 = vld [vmem:[%s2 + $0xa4] sm:$0xf]
    %v87 = vld [vmem:[%s2 + $0xa8] sm:$0xff]
    %v88 = vld [vmem:[%s2 + $0xb0] sm:$0xf]
    %v89 = vld [vmem:[%s2 + $0xb4] sm:$0xff]
    %v90 = vld [vmem:[%s2 + $0xbc] sm:$0xf]
    %v91 = vld [vmem:[%s2 + $0xc0] sm:$0xff]
    %v92 = vld [vmem:[%s2 + $0xc8] sm:$0xf]
    %v93 = vld [vmem:[%s2 + $0xcc] sm:$0xff]
    %v94 = vld [vmem:[%s2 + $0xd4] sm:$0xf]
    %v95 = vld [vmem:[%s2 + $0xd8] sm:$0xff]
    %v96 = vld [vmem:[%s2 + $0xe0] sm:$0xf]
    %v97 = vld [vmem:[%s2 + $0xe4] sm:$0xff]
    %v98 = vld [vmem:[%s2 + $0xec] sm:$0xf]
    %v99 = vld [vmem:[%s2 + $0xf0] sm:$0xff]
    %v100 = vld [vmem:[%s2 + $0xf8] sm:$0xf]
    %v101 = vld [vmem:[%s2 + $0xfc] sm:$0xff]
    %v102 = vld [vmem:[%s2 + $0x104] sm:$0xf]
    %v103 = vld [vmem:[%s2 + $0x108] sm:$0xff]
    %v104 = vld [vmem:[%s2 + $0x110] sm:$0xf]
    %v105 = vld [vmem:[%s2 + $0x114] sm:$0xff]
    %v106 = vld [vmem:[%s2 + $0x11c] sm:$0xf]
    %v107 = vld [vmem:[%s2 + $0x120] sm:$0xff]
    %v108 = vld [vmem:[%s2 + $0x128] sm:$0xf]
    %v109 = vld [vmem:[%s2 + $0x12c] sm:$0xff]
    %v110 = vld [vmem:[%s2 + $0x134] sm:$0xf]
    %v111 = vld [vmem:[%s2 + $0x138] sm:$0xff]
    %v112 = vld [vmem:[%s2 + $0x140] sm:$0xf]
    %v113 = vld [vmem:[%s2 + $0x144] sm:$0xff]
    %v114 = vld [vmem:[%s2 + $0x14c] sm:$0xf]
    %v115 = vld [vmem:[%s2 + $0x150] sm:$0xff]
    %v116 = vld [vmem:[%s2 + $0x158] sm:$0xf]
    %v117 = vld [vmem:[%s2 + $0x15c] sm:$0xff]
    %v118 = vld [vmem:[%s2 + $0x164] sm:$0xf]
    %v119 = vld [vmem:[%s2 + $0x168] sm:$0xff]
    %v120 = vld [vmem:[%s2 + $0x170] sm:$0xf]
    %v121 = vld [vmem:[%s2 + $0x174] sm:$0xff]
    %v122 = vld [vmem:[%s2 + $0x17c] sm:$0xf]
    %v123 = vld [vmem:[%s0] sm:$0xf]
    %v124 = vld [vmem:[%s0 + $0x4] sm:$0xf]
    %v125 = vld [vmem:[%s0 + $0x8] sm:$0xf]
    %v126 = vld [vmem:[%s0 + $0xc] sm:$0xf]
    %v127 = vld [vmem:[%s0 + $0x10] sm:$0xf]
    %v128 = vld [vmem:[%s0 + $0x14] sm:$0xf]
    %v129 = vld [vmem:[%s0 + $0x18] sm:$0xf]
    %v130 = vld [vmem:[%s0 + $0x1c] sm:$0xf]
    %v131 = vld [vmem:[%s0 + $0x20] sm:$0xf]
    %v132 = vld [vmem:[%s0 + $0x24] sm:$0xf]
    %v133 = vld [vmem:[%s0 + $0x28] sm:$0xf]
    %v134 = vld [vmem:[%s0 + $0x2c] sm:$0xf]
    %v135 = vld [vmem:[%s0 + $0x30] sm:$0xf]
    %v136 = vld [vmem:[%s0 + $0x34] sm:$0xf]
    %v137 = vld [vmem:[%s0 + $0x38] sm:$0xf]
    %v138 = vld [vmem:[%s0 + $0x3c] sm:$0xf]
    %v139 = vld [vmem:[%s1] sm:$0xf]
    %v140 = vld [vmem:[%s1 + $0x4] sm:$0xf]
    %v141 = vld [vmem:[%s1 + $0x8] sm:$0xf]
    %v142 = vld [vmem:[%s1 + $0xc] sm:$0xf]
    %v143 = vld [vmem:[%s1 + $0x10] sm:$0xf]
    %v144 = vld [vmem:[%s1 + $0x14] sm:$0xf]
    %v145 = vld [vmem:[%s1 + $0x18] sm:$0xf]
    %v146 = vld [vmem:[%s1 + $0x1c] sm:$0xf]
    %v147 = vld [vmem:[%s1 + $0x20] sm:$0xf]
    %v148 = vld [vmem:[%s1 + $0x24] sm:$0xf]
    %v149 = vld [vmem:[%s1 + $0x28] sm:$0xf]
    %v150 = vld [vmem:[%s1 + $0x2c] sm:$0xf]
    %v151 = vld [vmem:[%s1 + $0x30] sm:$0xf]
    %v152 = vld [vmem:[%s1 + $0x34] sm:$0xf]
    %v153 = vld [vmem:[%s1 + $0x38] sm:$0xf]
    %v154 = vld [vmem:[%s1 + $0x3c] sm:$0xf]
    %v171 = vunpack.c.l.b16 %v139
    %v172 = vunpack.c.l.b16 %v140
    %v173 = vunpack.c.l.b16 %v141
    %v174 = vunpack.c.l.b16 %v142
    %v175 = vunpack.c.l.b16 %v143
    %v176 = vunpack.c.l.b16 %v144
    %v177 = vunpack.c.l.b16 %v145
    %v178 = vunpack.c.l.b16 %v146
    %v179 = vunpack.c.l.b16 %v147
    %v180 = vunpack.c.l.b16 %v148
    %v181 = vunpack.c.l.b16 %v149
    %v182 = vunpack.c.l.b16 %v150
    %v183 = vunpack.c.l.b16 %v151
    %v184 = vunpack.c.l.b16 %v152
    %v185 = vunpack.c.l.b16 %v153
    %v186 = vunpack.c.l.b16 %v154
    %v187 = vpack.c.b16 %v172, %v171
    %v188 = vpack.c.b16 %v174, %v173
    %v189 = vpack.c.b16 %v176, %v175
    %v190 = vpack.c.b16 %v178, %v177
    %v191 = vpack.c.b16 %v180, %v179
    %v192 = vpack.c.b16 %v182, %v181
    %v193 = vpack.c.b16 %v184, %v183
    %v194 = vpack.c.b16 %v186, %v185
    %v235 = vunpack.c.l.b16 %v91
    %v236 = vunpack.c.h.b16 %v91
    %v237 = vunpack.c.l.b16 %v92
    %v238 = vunpack.c.l.b16 %v93
    %v239 = vunpack.c.h.b16 %v93
    %v240 = vunpack.c.l.b16 %v94
    %v241 = vunpack.c.l.b16 %v95
    %v242 = vunpack.c.h.b16 %v95
    %v243 = vunpack.c.l.b16 %v96
    %v244 = vunpack.c.l.b16 %v97
    %v245 = vunpack.c.h.b16 %v97
    %v246 = vunpack.c.l.b16 %v98
    %v247 = vunpack.c.l.b16 %v99
    %v248 = vunpack.c.h.b16 %v99
    %v249 = vunpack.c.l.b16 %v100
    %v250 = vunpack.c.l.b16 %v101
    %v251 = vunpack.c.h.b16 %v101
    %v252 = vunpack.c.l.b16 %v102
    %v253 = vunpack.c.l.b16 %v103
    %v254 = vunpack.c.h.b16 %v103
    %v255 = vunpack.c.l.b16 %v104
    %v256 = vunpack.c.l.b16 %v105
    %v257 = vunpack.c.h.b16 %v105
    %v258 = vunpack.c.l.b16 %v106
    %v259 = vunpack.c.l.b16 %v107
    %v260 = vunpack.c.h.b16 %v107
    %v261 = vunpack.c.l.b16 %v108
    %v262 = vunpack.c.l.b16 %v109
    %v263 = vunpack.c.h.b16 %v109
    %v264 = vunpack.c.l.b16 %v110
    %v265 = vunpack.c.l.b16 %v111
    %v266 = vunpack.c.h.b16 %v111
    %v267 = vunpack.c.l.b16 %v112
    %v268 = vunpack.c.l.b16 %v113
    %v269 = vunpack.c.h.b16 %v113
    %v270 = vunpack.c.l.b16 %v114
    %v271 = vunpack.c.l.b16 %v115
    %v272 = vunpack.c.h.b16 %v115
    %v273 = vunpack.c.l.b16 %v116
    %v274 = vunpack.c.l.b16 %v117
    %v275 = vunpack.c.h.b16 %v117
    %v276 = vunpack.c.l.b16 %v118
    %v277 = vunpack.c.l.b16 %v119
    %v278 = vunpack.c.h.b16 %v119
    %v279 = vunpack.c.l.b16 %v120
    %v280 = vunpack.c.l.b16 %v121
    %v281 = vunpack.c.h.b16 %v121
    %v282 = vunpack.c.l.b16 %v122
    %v283 = vpack.c.b16 %v238, %v235
    %v284 = vpack.c.b16 %v239, %v236
    %v285 = vpack.c.b16 %v240, %v237
    %v286 = vpack.c.b16 %v244, %v241
    %v287 = vpack.c.b16 %v245, %v242
    %v288 = vpack.c.b16 %v246, %v243
    %v289 = vpack.c.b16 %v250, %v247
    %v290 = vpack.c.b16 %v251, %v248
    %v291 = vpack.c.b16 %v252, %v249
    %v292 = vpack.c.b16 %v256, %v253
    %v293 = vpack.c.b16 %v257, %v254
    %v294 = vpack.c.b16 %v258, %v255
    %v295 = vpack.c.b16 %v262, %v259
    %v296 = vpack.c.b16 %v263, %v260
    %v297 = vpack.c.b16 %v264, %v261
    %v298 = vpack.c.b16 %v268, %v265
    %v299 = vpack.c.b16 %v269, %v266
    %v300 = vpack.c.b16 %v270, %v267
    %v301 = vpack.c.b16 %v274, %v271
    %v302 = vpack.c.b16 %v275, %v272
    %v303 = vpack.c.b16 %v276, %v273
    %v304 = vpack.c.b16 %v280, %v277
    %v305 = vpack.c.b16 %v281, %v278
    %v306 = vpack.c.b16 %v282, %v279
    %331 = vmatprep.subr.bf16.mxu0 %v284
    %332 = vmatpush1.bf16.msra.mxu0 %v283
    %333 = vmatprep.subr.bf16.mxu0 %v287
    %334 = vmatpush1.bf16.msra.mxu0 %v286
    %335 = vmatprep.subr.bf16.mxu0 %v290
    %336 = vmatpush1.bf16.msra.mxu0 %v289
    %337 = vmatprep.subr.bf16.mxu0 %v293
    %338 = vmatpush1.bf16.msra.mxu0 %v292
    %339 = vmatprep.subr.bf16.mxu0 %v296
    %340 = vmatpush1.bf16.msra.mxu0 %v295
    %341 = vmatprep.subr.bf16.mxu0 %v299
    %342 = vmatpush1.bf16.msra.mxu0 %v298
    %343 = vmatprep.subr.bf16.mxu0 %v302
    %344 = vmatpush1.bf16.msra.mxu0 %v301
    %345 = vmatprep.subr.bf16.mxu0 %v305
    %346 = vmatpush1.bf16.msra.mxu0 %v304
    %347 = vmatprep.subr.bf16.mxu0 0
    %348 = vmatpush1.bf16.msra.mxu0 0
    %349 = vmatprep.subr.bf16.mxu0 0
    %350 = vmatpush1.bf16.msra.mxu0 0
    %351 = vmatprep.subr.bf16.mxu0 0
    %352 = vmatpush1.bf16.msra.mxu0 0
    %353 = vmatprep.subr.bf16.mxu0 0
    %354 = vmatpush1.bf16.msra.mxu0 0
    %355 = vmatprep.subr.bf16.mxu0 0
    %356 = vmatpush1.bf16.msra.mxu0 0
    %357 = vmatprep.subr.bf16.mxu0 0
    %358 = vmatpush1.bf16.msra.mxu0 0
    %359 = vmatprep.subr.bf16.mxu0 0
    %360 = vmatpush1.bf16.msra.mxu0 0
    %361 = vmatprep.subr.bf16.mxu0 0
    %362 = vmatpush1.bf16.msra.mxu0 0
    %363 = vmatprep.mubr.bf16.mxu0 0
    %364 = vmatmul.mubr.bf16.gmra.mrb[0].mxu0 %v187
    %v365 = vpop.f32.mrb[0].mxu0
    %v366 = vadd.f32 0.0, %v365
    %v367 = vpop.f32.mrb[0].mxu0
    %v368 = vadd.f32 0.0, %v367
    %v369 = vpop.f32.mrb[0].mxu0
    %v370 = vadd.f32 0.0, %v369
    %v371 = vpop.f32.mrb[0].mxu0
    %v372 = vadd.f32 0.0, %v371
    %373 = vmatprep.mubr.bf16.mxu0 0
    %374 = vmatmul.mubr.bf16.gmra.mrb[0].mxu0 %v188
    %v375 = vpop.f32.mrb[0].mxu0
    %v376 = vadd.f32 0.0, %v375
    %v377 = vpop.f32.mrb[0].mxu0
    %v378 = vadd.f32 0.0, %v377
    %v379 = vpop.f32.mrb[0].mxu0
    %v380 = vadd.f32 0.0, %v379
    %v381 = vpop.f32.mrb[0].mxu0
    %v382 = vadd.f32 0.0, %v381
    %383 = vmatprep.mubr.bf16.mxu0 0
    %384 = vmatmul.mubr.bf16.gmra.mrb[0].mxu0 %v189
    %v385 = vpop.f32.mrb[0].mxu0
    %v386 = vadd.f32 0.0, %v385
    %v387 = vpop.f32.mrb[0].mxu0
    %v388 = vadd.f32 0.0, %v387
    %v389 = vpop.f32.mrb[0].mxu0
    %v390 = vadd.f32 0.0, %v389
    %v391 = vpop.f32.mrb[0].mxu0
    %v392 = vadd.f32 0.0, %v391
    %393 = vmatprep.mubr.bf16.mxu0 0
    %394 = vmatmul.mubr.bf16.gmra.mrb[0].mxu0 %v190
    %v395 = vpop.f32.mrb[0].mxu0
    %v396 = vadd.f32 0.0, %v395
    %v397 = vpop.f32.mrb[0].mxu0
    %v398 = vadd.f32 0.0, %v397
    %v399 = vpop.f32.mrb[0].mxu0
    %v400 = vadd.f32 0.0, %v399
    %v401 = vpop.f32.mrb[0].mxu0
    %v402 = vadd.f32 0.0, %v401
    %403 = vmatprep.mubr.bf16.mxu0 0
    %404 = vmatmul.mubr.bf16.gmra.mrb[0].mxu0 %v191
    %v405 = vpop.f32.mrb[0].mxu0
    %v406 = vadd.f32 0.0, %v405
    %v407 = vpop.f32.mrb[0].mxu0
    %v408 = vadd.f32 0.0, %v407
    %v409 = vpop.f32.mrb[0].mxu0
    %v410 = vadd.f32 0.0, %v409
    %v411 = vpop.f32.mrb[0].mxu0
    %v412 = vadd.f32 0.0, %v411
    %413 = vmatprep.mubr.bf16.mxu0 0
    %414 = vmatmul.mubr.bf16.gmra.mrb[0].mxu0 %v192
    %v415 = vpop.f32.mrb[0].mxu0
    %v416 = vadd.f32 0.0, %v415
    %v417 = vpop.f32.mrb[0].mxu0
    %v418 = vadd.f32 0.0, %v417
    %v419 = vpop.f32.mrb[0].mxu0
    %v420 = vadd.f32 0.0, %v419
    %v421 = vpop.f32.mrb[0].mxu0
    %v422 = vadd.f32 0.0, %v421
    %423 = vmatprep.mubr.bf16.mxu0 0
    %424 = vmatmul.mubr.bf16.gmra.mrb[0].mxu0 %v193
    %v425 = vpop.f32.mrb[0].mxu0
    %v426 = vadd.f32 0.0, %v425
    %v427 = vpop.f32.mrb[0].mxu0
    %v428 = vadd.f32 0.0, %v427
    %v429 = vpop.f32.mrb[0].mxu0
    %v430 = vadd.f32 0.0, %v429
    %v431 = vpop.f32.mrb[0].mxu0
    %v432 = vadd.f32 0.0, %v431
    %433 = vmatprep.mubr.bf16.mxu0 0
    %434 = vmatmul.mubr.bf16.gmra.mrb[0].mxu0 %v194
    %v435 = vpop.f32.mrb[0].mxu0
    %v436 = vadd.f32 0.0, %v435
    %v437 = vpop.f32.mrb[0].mxu0
    %v438 = vadd.f32 0.0, %v437
    %v439 = vpop.f32.mrb[0].mxu0
    %v440 = vadd.f32 0.0, %v439
    %v441 = vpop.f32.mrb[0].mxu0
    %v442 = vadd.f32 0.0, %v441
    %443 = vdwg.mxu0
    %444 = vmatprep.subr.bf16.mxu0 0
    %445 = vmatpush1.bf16.msra.mxu0 %v285
    %446 = vmatprep.subr.bf16.mxu0 0
    %447 = vmatpush1.bf16.msra.mxu0 %v288
    %448 = vmatprep.subr.bf16.mxu0 0
    %449 = vmatpush1.bf16.msra.mxu0 %v291
    %450 = vmatprep.subr.bf16.mxu0 0
    %451 = vmatpush1.bf16.msra.mxu0 %v294
    %452 = vmatprep.subr.bf16.mxu0 0
    %453 = vmatpush1.bf16.msra.mxu0 %v297
    %454 = vmatprep.subr.bf16.mxu0 0
    %455 = vmatpush1.bf16.msra.mxu0 %v300
    %456 = vmatprep.subr.bf16.mxu0 0
    %457 = vmatpush1.bf16.msra.mxu0 %v303
    %458 = vmatprep.subr.bf16.mxu0 0
    %459 = vmatpush1.bf16.msra.mxu0 %v306
    %460 = vmatprep.subr.bf16.mxu0 0
    %461 = vmatpush1.bf16.msra.mxu0 0
    %462 = vmatprep.subr.bf16.mxu0 0
    %463 = vmatpush1.bf16.msra.mxu0 0
    %464 = vmatprep.subr.bf16.mxu0 0
    %465 = vmatpush1.bf16.msra.mxu0 0
    %466 = vmatprep.subr.bf16.mxu0 0
    %467 = vmatpush1.bf16.msra.mxu0 0
    %468 = vmatprep.subr.bf16.mxu0 0
    %469 = vmatpush1.bf16.msra.mxu0 0
    %470 = vmatprep.subr.bf16.mxu0 0
    %471 = vmatpush1.bf16.msra.mxu0 0
    %472 = vmatprep.subr.bf16.mxu0 0
    %473 = vmatpush1.bf16.msra.mxu0 0
    %474 = vmatprep.subr.bf16.mxu0 0
    %475 = vmatpush1.bf16.msra.mxu0 0
    %476 = vmatprep.mubr.bf16.mxu0 0
    %477 = vmatmul.mubr.bf16.gmra.mrb[0].mxu0 %v187
    %v478 = vpop.f32.mrb[0].mxu0
    %v479 = vadd.f32 0.0, %v478
    %v480 = vpop.f32.mrb[0].mxu0
    %v481 = vpop.f32.mrb[0].mxu0
    %v482 = vadd.f32 0.0, %v481
    %v483 = vpop.f32.mrb[0].mxu0
    %484 = vmatprep.mubr.bf16.mxu0 0
    %485 = vmatmul.mubr.bf16.gmra.mrb[0].mxu0 %v188
    %v486 = vpop.f32.mrb[0].mxu0
    %v487 = vadd.f32 0.0, %v486
    %v488 = vpop.f32.mrb[0].mxu0
    %v489 = vpop.f32.mrb[0].mxu0
    %v490 = vadd.f32 0.0, %v489
    %v491 = vpop.f32.mrb[0].mxu0
    %492 = vmatprep.mubr.bf16.mxu0 0
    %493 = vmatmul.mubr.bf16.gmra.mrb[0].mxu0 %v189
    %v494 = vpop.f32.mrb[0].mxu0
    %v495 = vadd.f32 0.0, %v494
    %v496 = vpop.f32.mrb[0].mxu0
    %v497 = vpop.f32.mrb[0].mxu0
    %v498 = vadd.f32 0.0, %v497
    %v499 = vpop.f32.mrb[0].mxu0
    %500 = vmatprep.mubr.bf16.mxu0 0
    %501 = vmatmul.mubr.bf16.gmra.mrb[0].mxu0 %v190
    %v502 = vpop.f32.mrb[0].mxu0
    %v503 = vadd.f32 0.0, %v502
    %v504 = vpop.f32.mrb[0].mxu0
    %v505 = vpop.f32.mrb[0].mxu0
    %v506 = vadd.f32 0.0, %v505
    %v507 = vpop.f32.mrb[0].mxu0
    %508 = vmatprep.mubr.bf16.mxu0 0
    %509 = vmatmul.mubr.bf16.gmra.mrb[0].mxu0 %v191
    %v510 = vpop.f32.mrb[0].mxu0
    %v511 = vadd.f32 0.0, %v510
    %v512 = vpop.f32.mrb[0].mxu0
    %v513 = vpop.f32.mrb[0].mxu0
    %v514 = vadd.f32 0.0, %v513
    %v515 = vpop.f32.mrb[0].mxu0
    %516 = vmatprep.mubr.bf16.mxu0 0
    %517 = vmatmul.mubr.bf16.gmra.mrb[0].mxu0 %v192
    %v518 = vpop.f32.mrb[0].mxu0
    %v519 = vadd.f32 0.0, %v518
    %v520 = vpop.f32.mrb[0].mxu0
    %v521 = vpop.f32.mrb[0].mxu0
    %v522 = vadd.f32 0.0, %v521
    %v523 = vpop.f32.mrb[0].mxu0
    %524 = vmatprep.mubr.bf16.mxu0 0
    %525 = vmatmul.mubr.bf16.gmra.mrb[0].mxu0 %v193
    %v526 = vpop.f32.mrb[0].mxu0
    %v527 = vadd.f32 0.0, %v526
    %v528 = vpop.f32.mrb[0].mxu0
    %v529 = vpop.f32.mrb[0].mxu0
    %v530 = vadd.f32 0.0, %v529
    %v531 = vpop.f32.mrb[0].mxu0
    %532 = vmatprep.mubr.bf16.mxu0 0
    %533 = vmatmul.mubr.bf16.gmra.mrb[0].mxu0 %v194
    %v534 = vpop.f32.mrb[0].mxu0
    %v535 = vadd.f32 0.0, %v534
    %v536 = vpop.f32.mrb[0].mxu0
    %v537 = vpop.f32.mrb[0].mxu0
    %v538 = vadd.f32 0.0, %v537
    %v539 = vpop.f32.mrb[0].mxu0
    %540 = vdwg.mxu0
    %v557 = vunpack.c.l.b16 %v123
    %v558 = vunpack.c.l.b16 %v124
    %v559 = vunpack.c.l.b16 %v125
    %v560 = vunpack.c.l.b16 %v126
    %v561 = vunpack.c.l.b16 %v127
    %v562 = vunpack.c.l.b16 %v128
    %v563 = vunpack.c.l.b16 %v129
    %v564 = vunpack.c.l.b16 %v130
    %v565 = vunpack.c.l.b16 %v131
    %v566 = vunpack.c.l.b16 %v132
    %v567 = vunpack.c.l.b16 %v133
    %v568 = vunpack.c.l.b16 %v134
    %v569 = vunpack.c.l.b16 %v135
    %v570 = vunpack.c.l.b16 %v136
    %v571 = vunpack.c.l.b16 %v137
    %v572 = vunpack.c.l.b16 %v138
    %v573 = vpack.c.b16 %v558, %v557
    %v574 = vpack.c.b16 %v560, %v559
    %v575 = vpack.c.b16 %v562, %v561
    %v576 = vpack.c.b16 %v564, %v563
    %v577 = vpack.c.b16 %v566, %v565
    %v578 = vpack.c.b16 %v568, %v567
    %v579 = vpack.c.b16 %v570, %v569
    %v580 = vpack.c.b16 %v572, %v571
    %v621 = vunpack.c.l.b16 %v59
    %v622 = vunpack.c.h.b16 %v59
    %v623 = vunpack.c.l.b16 %v60
    %v624 = vunpack.c.l.b16 %v61
    %v625 = vunpack.c.h.b16 %v61
    %v626 = vunpack.c.l.b16 %v62
    %v627 = vunpack.c.l.b16 %v63
    %v628 = vunpack.c.h.b16 %v63
    %v629 = vunpack.c.l.b16 %v64
    %v630 = vunpack.c.l.b16 %v65
    %v631 = vunpack.c.h.b16 %v65
    %v632 = vunpack.c.l.b16 %v66
    %v633 = vunpack.c.l.b16 %v67
    %v634 = vunpack.c.h.b16 %v67
    %v635 = vunpack.c.l.b16 %v68
    %v636 = vunpack.c.l.b16 %v69
    %v637 = vunpack.c.h.b16 %v69
    %v638 = vunpack.c.l.b16 %v70
    %v639 = vunpack.c.l.b16 %v71
    %v640 = vunpack.c.h.b16 %v71
    %v641 = vunpack.c.l.b16 %v72
    %v642 = vunpack.c.l.b16 %v73
    %v643 = vunpack.c.h.b16 %v73
    %v644 = vunpack.c.l.b16 %v74
    %v645 = vunpack.c.l.b16 %v75
    %v646 = vunpack.c.h.b16 %v75
    %v647 = vunpack.c.l.b16 %v76
    %v648 = vunpack.c.l.b16 %v77
    %v649 = vunpack.c.h.b16 %v77
    %v650 = vunpack.c.l.b16 %v78
    %v651 = vunpack.c.l.b16 %v79
    %v652 = vunpack.c.h.b16 %v79
    %v653 = vunpack.c.l.b16 %v80
    %v654 = vunpack.c.l.b16 %v81
    %v655 = vunpack.c.h.b16 %v81
    %v656 = vunpack.c.l.b16 %v82
    %v657 = vunpack.c.l.b16 %v83
    %v658 = vunpack.c.h.b16 %v83
    %v659 = vunpack.c.l.b16 %v84
    %v660 = vunpack.c.l.b16 %v85
    %v661 = vunpack.c.h.b16 %v85
    %v662 = vunpack.c.l.b16 %v86
    %v663 = vunpack.c.l.b16 %v87
    %v664 = vunpack.c.h.b16 %v87
    %v665 = vunpack.c.l.b16 %v88
    %v666 = vunpack.c.l.b16 %v89
    %v667 = vunpack.c.h.b16 %v89
    %v668 = vunpack.c.l.b16 %v90
    %v669 = vpack.c.b16 %v624, %v621
    %v670 = vpack.c.b16 %v625, %v622
    %v671 = vpack.c.b16 %v626, %v623
    %v672 = vpack.c.b16 %v630, %v627
    %v673 = vpack.c.b16 %v631, %v628
    %v674 = vpack.c.b16 %v632, %v629
    %v675 = vpack.c.b16 %v636, %v633
    %v676 = vpack.c.b16 %v637, %v634
    %v677 = vpack.c.b16 %v638, %v635
    %v678 = vpack.c.b16 %v642, %v639
    %v679 = vpack.c.b16 %v643, %v640
    %v680 = vpack.c.b16 %v644, %v641
    %v681 = vpack.c.b16 %v648, %v645
    %v682 = vpack.c.b16 %v649, %v646
    %v683 = vpack.c.b16 %v650, %v647
    %v684 = vpack.c.b16 %v654, %v651
    %v685 = vpack.c.b16 %v655, %v652
    %v686 = vpack.c.b16 %v656, %v653
    %v687 = vpack.c.b16 %v660, %v657
    %v688 = vpack.c.b16 %v661, %v658
    %v689 = vpack.c.b16 %v662, %v659
    %v690 = vpack.c.b16 %v666, %v663
    %v691 = vpack.c.b16 %v667, %v664
    %v692 = vpack.c.b16 %v668, %v665
    %717 = vmatprep.subr.bf16.mxu0 %v670
    %718 = vmatpush1.bf16.msra.mxu0 %v669
    %719 = vmatprep.subr.bf16.mxu0 %v673
    %720 = vmatpush1.bf16.msra.mxu0 %v672
    %721 = vmatprep.subr.bf16.mxu0 %v676
    %722 = vmatpush1.bf16.msra.mxu0 %v675
    %723 = vmatprep.subr.bf16.mxu0 %v679
    %724 = vmatpush1.bf16.msra.mxu0 %v678
    %725 = vmatprep.subr.bf16.mxu0 %v682
    %726 = vmatpush1.bf16.msra.mxu0 %v681
    %727 = vmatprep.subr.bf16.mxu0 %v685
    %728 = vmatpush1.bf16.msra.mxu0 %v684
    %729 = vmatprep.subr.bf16.mxu0 %v688
    %730 = vmatpush1.bf16.msra.mxu0 %v687
    %731 = vmatprep.subr.bf16.mxu0 %v691
    %732 = vmatpush1.bf16.msra.mxu0 %v690
    %733 = vmatprep.subr.bf16.mxu0 0
    %734 = vmatpush1.bf16.msra.mxu0 0
    %735 = vmatprep.subr.bf16.mxu0 0
    %736 = vmatpush1.bf16.msra.mxu0 0
    %737 = vmatprep.subr.bf16.mxu0 0
    %738 = vmatpush1.bf16.msra.mxu0 0
    %739 = vmatprep.subr.bf16.mxu0 0
    %740 = vmatpush1.bf16.msra.mxu0 0
    %741 = vmatprep.subr.bf16.mxu0 0
    %742 = vmatpush1.bf16.msra.mxu0 0
    %743 = vmatprep.subr.bf16.mxu0 0
    %744 = vmatpush1.bf16.msra.mxu0 0
    %745 = vmatprep.subr.bf16.mxu0 0
    %746 = vmatpush1.bf16.msra.mxu0 0
    %747 = vmatprep.subr.bf16.mxu0 0
    %748 = vmatpush1.bf16.msra.mxu0 0
    %749 = vmatprep.mubr.bf16.mxu0 0
    %750 = vmatmul.mubr.bf16.gmra.mrb[0].mxu0 %v573
    %v751 = vpop.f32.mrb[0].mxu0
    %v752 = vadd.f32 %v366, %v751
    %v753 = vpop.f32.mrb[0].mxu0
    %v754 = vadd.f32 %v368, %v753
    %v755 = vpop.f32.mrb[0].mxu0
    %v756 = vadd.f32 %v370, %v755
    %v757 = vpop.f32.mrb[0].mxu0
    %v758 = vadd.f32 %v372, %v757
    %759 = vmatprep.mubr.bf16.mxu0 0
    %760 = vmatmul.mubr.bf16.gmra.mrb[0].mxu0 %v574
    %v761 = vpop.f32.mrb[0].mxu0
    %v762 = vadd.f32 %v376, %v761
    %v763 = vpop.f32.mrb[0].mxu0
    %v764 = vadd.f32 %v378, %v763
    %v765 = vpop.f32.mrb[0].mxu0
    %v766 = vadd.f32 %v380, %v765
    %v767 = vpop.f32.mrb[0].mxu0
    %v768 = vadd.f32 %v382, %v767
    %769 = vmatprep.mubr.bf16.mxu0 0
    %770 = vmatmul.mubr.bf16.gmra.mrb[0].mxu0 %v575
    %v771 = vpop.f32.mrb[0].mxu0
    %v772 = vadd.f32 %v386, %v771
    %v773 = vpop.f32.mrb[0].mxu0
    %v774 = vadd.f32 %v388, %v773
    %v775 = vpop.f32.mrb[0].mxu0
    %v776 = vadd.f32 %v390, %v775
    %v777 = vpop.f32.mrb[0].mxu0
    %v778 = vadd.f32 %v392, %v777
    %779 = vmatprep.mubr.bf16.mxu0 0
    %780 = vmatmul.mubr.bf16.gmra.mrb[0].mxu0 %v576
    %v781 = vpop.f32.mrb[0].mxu0
    %v782 = vadd.f32 %v396, %v781
    %v783 = vpop.f32.mrb[0].mxu0
    %v784 = vadd.f32 %v398, %v783
    %v785 = vpop.f32.mrb[0].mxu0
    %v786 = vadd.f32 %v400, %v785
    %v787 = vpop.f32.mrb[0].mxu0
    %v788 = vadd.f32 %v402, %v787
    %789 = vmatprep.mubr.bf16.mxu0 0
    %790 = vmatmul.mubr.bf16.gmra.mrb[0].mxu0 %v577
    %v791 = vpop.f32.mrb[0].mxu0
    %v792 = vadd.f32 %v406, %v791
    %v793 = vpop.f32.mrb[0].mxu0
    %v794 = vadd.f32 %v408, %v793
    %v795 = vpop.f32.mrb[0].mxu0
    %v796 = vadd.f32 %v410, %v795
    %v797 = vpop.f32.mrb[0].mxu0
    %v798 = vadd.f32 %v412, %v797
    %799 = vmatprep.mubr.bf16.mxu0 0
    %800 = vmatmul.mubr.bf16.gmra.mrb[0].mxu0 %v578
    %v801 = vpop.f32.mrb[0].mxu0
    %v802 = vadd.f32 %v416, %v801
    %v803 = vpop.f32.mrb[0].mxu0
    %v804 = vadd.f32 %v418, %v803
    %v805 = vpop.f32.mrb[0].mxu0
    %v806 = vadd.f32 %v420, %v805
    %v807 = vpop.f32.mrb[0].mxu0
    %v808 = vadd.f32 %v422, %v807
    %809 = vmatprep.mubr.bf16.mxu0 0
    %810 = vmatmul.mubr.bf16.gmra.mrb[0].mxu0 %v579
    %v811 = vpop.f32.mrb[0].mxu0
    %v812 = vadd.f32 %v426, %v811
    %v813 = vpop.f32.mrb[0].mxu0
    %v814 = vadd.f32 %v428, %v813
    %v815 = vpop.f32.mrb[0].mxu0
    %v816 = vadd.f32 %v430, %v815
    %v817 = vpop.f32.mrb[0].mxu0
    %v818 = vadd.f32 %v432, %v817
    %819 = vmatprep.mubr.bf16.mxu0 0
    %820 = vmatmul.mubr.bf16.gmra.mrb[0].mxu0 %v580
    %v821 = vpop.f32.mrb[0].mxu0
    %v822 = vadd.f32 %v436, %v821
    %v823 = vpop.f32.mrb[0].mxu0
    %v824 = vadd.f32 %v438, %v823
    %v825 = vpop.f32.mrb[0].mxu0
    %v826 = vadd.f32 %v440, %v825
    %v827 = vpop.f32.mrb[0].mxu0
    %v828 = vadd.f32 %v442, %v827
    %829 = vdwg.mxu0
    %830 = vmatprep.subr.bf16.mxu0 0
    %831 = vmatpush1.bf16.msra.mxu0 %v671
    %832 = vmatprep.subr.bf16.mxu0 0
    %833 = vmatpush1.bf16.msra.mxu0 %v674
    %834 = vmatprep.subr.bf16.mxu0 0
    %835 = vmatpush1.bf16.msra.mxu0 %v677
    %836 = vmatprep.subr.bf16.mxu0 0
    %837 = vmatpush1.bf16.msra.mxu0 %v680
    %838 = vmatprep.subr.bf16.mxu0 0
    %839 = vmatpush1.bf16.msra.mxu0 %v683
    %840 = vmatprep.subr.bf16.mxu0 0
    %841 = vmatpush1.bf16.msra.mxu0 %v686
    %842 = vmatprep.subr.bf16.mxu0 0
    %843 = vmatpush1.bf16.msra.mxu0 %v689
    %844 = vmatprep.subr.bf16.mxu0 0
    %845 = vmatpush1.bf16.msra.mxu0 %v692
    %846 = vmatprep.subr.bf16.mxu0 0
    %847 = vmatpush1.bf16.msra.mxu0 0
    %848 = vmatprep.subr.bf16.mxu0 0
    %849 = vmatpush1.bf16.msra.mxu0 0
    %850 = vmatprep.subr.bf16.mxu0 0
    %851 = vmatpush1.bf16.msra.mxu0 0
    %852 = vmatprep.subr.bf16.mxu0 0
    %853 = vmatpush1.bf16.msra.mxu0 0
    %854 = vmatprep.subr.bf16.mxu0 0
    %855 = vmatpush1.bf16.msra.mxu0 0
    %856 = vmatprep.subr.bf16.mxu0 0
    %857 = vmatpush1.bf16.msra.mxu0 0
    %858 = vmatprep.subr.bf16.mxu0 0
    %859 = vmatpush1.bf16.msra.mxu0 0
    %860 = vmatprep.subr.bf16.mxu0 0
    %861 = vmatpush1.bf16.msra.mxu0 0
    %862 = vmatprep.mubr.bf16.mxu0 0
    %863 = vmatmul.mubr.bf16.gmra.mrb[0].mxu0 %v573
    %v864 = vpop.f32.mrb[0].mxu0
    %v865 = vadd.f32 %v479, %v864
    %v866 = vpop.f32.mrb[0].mxu0
    %v867 = vpop.f32.mrb[0].mxu0
    %v868 = vadd.f32 %v482, %v867
    %v869 = vpop.f32.mrb[0].mxu0
    %870 = vmatprep.mubr.bf16.mxu0 0
    %871 = vmatmul.mubr.bf16.gmra.mrb[0].mxu0 %v574
    %v872 = vpop.f32.mrb[0].mxu0
    %v873 = vadd.f32 %v487, %v872
    %v874 = vpop.f32.mrb[0].mxu0
    %v875 = vpop.f32.mrb[0].mxu0
    %v876 = vadd.f32 %v490, %v875
    %v877 = vpop.f32.mrb[0].mxu0
    %878 = vmatprep.mubr.bf16.mxu0 0
    %879 = vmatmul.mubr.bf16.gmra.mrb[0].mxu0 %v575
    %v880 = vpop.f32.mrb[0].mxu0
    %v881 = vadd.f32 %v495, %v880
    %v882 = vpop.f32.mrb[0].mxu0
    %v883 = vpop.f32.mrb[0].mxu0
    %v884 = vadd.f32 %v498, %v883
    %v885 = vpop.f32.mrb[0].mxu0
    %886 = vmatprep.mubr.bf16.mxu0 0
    %887 = vmatmul.mubr.bf16.gmra.mrb[0].mxu0 %v576
    %v888 = vpop.f32.mrb[0].mxu0
    %v889 = vadd.f32 %v503, %v888
    %v890 = vpop.f32.mrb[0].mxu0
    %v891 = vpop.f32.mrb[0].mxu0
    %v892 = vadd.f32 %v506, %v891
    %v893 = vpop.f32.mrb[0].mxu0
    %894 = vmatprep.mubr.bf16.mxu0 0
    %895 = vmatmul.mubr.bf16.gmra.mrb[0].mxu0 %v577
    %v896 = vpop.f32.mrb[0].mxu0
    %v897 = vadd.f32 %v511, %v896
    %v898 = vpop.f32.mrb[0].mxu0
    %v899 = vpop.f32.mrb[0].mxu0
    %v900 = vadd.f32 %v514, %v899
    %v901 = vpop.f32.mrb[0].mxu0
    %902 = vmatprep.mubr.bf16.mxu0 0
    %903 = vmatmul.mubr.bf16.gmra.mrb[0].mxu0 %v578
    %v904 = vpop.f32.mrb[0].mxu0
    %v905 = vadd.f32 %v519, %v904
    %v906 = vpop.f32.mrb[0].mxu0
    %v907 = vpop.f32.mrb[0].mxu0
    %v908 = vadd.f32 %v522, %v907
    %v909 = vpop.f32.mrb[0].mxu0
    %910 = vmatprep.mubr.bf16.mxu0 0
    %911 = vmatmul.mubr.bf16.gmra.mrb[0].mxu0 %v579
    %v912 = vpop.f32.mrb[0].mxu0
    %v913 = vadd.f32 %v527, %v912
    %v914 = vpop.f32.mrb[0].mxu0
    %v915 = vpop.f32.mrb[0].mxu0
    %v916 = vadd.f32 %v530, %v915
    %v917 = vpop.f32.mrb[0].mxu0
    %918 = vmatprep.mubr.bf16.mxu0 0
    %919 = vmatmul.mubr.bf16.gmra.mrb[0].mxu0 %v580
    %v920 = vpop.f32.mrb[0].mxu0
    %v921 = vadd.f32 %v535, %v920
    %v922 = vpop.f32.mrb[0].mxu0
    %v923 = vpop.f32.mrb[0].mxu0
    %v924 = vadd.f32 %v538, %v923
    %v925 = vpop.f32.mrb[0].mxu0
    %926 = vdwg.mxu0
    %v927 = vld [vmem:[%s4] sm:$0x7]
    %v929 = vlaneseq
    %v930 = vshrl.u32 %v929, 7
    %v931 = vsub.s32 0, %v930
    %v932 = vrot.slane %v927, %v931
    %v933 = vlaneseq
    %v934 = vshrl.u32 %v933, 7
    %v935 = vsub.s32 1, %v934
    %v936 = vrot.slane %v927, %v935
    %v937 = vlaneseq
    %v938 = vshrl.u32 %v937, 7
    %v939 = vsub.s32 2, %v938
    %v940 = vrot.slane %v927, %v939
    %v944 = vadd.f32 %v752, %v932
    %v945 = vadd.f32 %v754, %v936
    %v946 = vadd.f32 %v865, %v940
    %v947 = vadd.f32 %v756, %v932
    %v948 = vadd.f32 %v758, %v936
    %v949 = vadd.f32 %v868, %v940
    %v950 = vadd.f32 %v762, %v932
    %v951 = vadd.f32 %v764, %v936
    %v952 = vadd.f32 %v873, %v940
    %v953 = vadd.f32 %v766, %v932
    %v954 = vadd.f32 %v768, %v936
    %v955 = vadd.f32 %v876, %v940
    %v956 = vadd.f32 %v772, %v932
    %v957 = vadd.f32 %v774, %v936
    %v958 = vadd.f32 %v881, %v940
    %v959 = vadd.f32 %v776, %v932
    %v960 = vadd.f32 %v778, %v936
    %v961 = vadd.f32 %v884, %v940
    %v962 = vadd.f32 %v782, %v932
    %v963 = vadd.f32 %v784, %v936
    %v964 = vadd.f32 %v889, %v940
    %v965 = vadd.f32 %v786, %v932
    %v966 = vadd.f32 %v788, %v936
    %v967 = vadd.f32 %v892, %v940
    %v968 = vadd.f32 %v792, %v932
    %v969 = vadd.f32 %v794, %v936
    %v970 = vadd.f32 %v897, %v940
    %v971 = vadd.f32 %v796, %v932
    %v972 = vadd.f32 %v798, %v936
    %v973 = vadd.f32 %v900, %v940
    %v974 = vadd.f32 %v802, %v932
    %v975 = vadd.f32 %v804, %v936
    %v976 = vadd.f32 %v905, %v940
    %v977 = vadd.f32 %v806, %v932
    %v978 = vadd.f32 %v808, %v936
    %v979 = vadd.f32 %v908, %v940
    %v980 = vadd.f32 %v812, %v932
    %v981 = vadd.f32 %v814, %v936
    %v982 = vadd.f32 %v913, %v940
    %v983 = vadd.f32 %v816, %v932
    %v984 = vadd.f32 %v818, %v936
    %v985 = vadd.f32 %v916, %v940
    %v986 = vadd.f32 %v822, %v932
    %v987 = vadd.f32 %v824, %v936
    %v988 = vadd.f32 %v921, %v940
    %v989 = vadd.f32 %v826, %v932
    %v990 = vadd.f32 %v828, %v936
    %v991 = vadd.f32 %v924, %v940
    %992 = vst [vmem:[#allocation2] sm:$0xff] %v944
    %993 = vst [vmem:[#allocation2 + $0x8] sm:$0xff] %v945
    %994 = vst [vmem:[#allocation2 + $0x10] sm:$0xff] %v946
    %995 = vst [vmem:[#allocation2 + $0x18] sm:$0xff] %v947
    %996 = vst [vmem:[#allocation2 + $0x20] sm:$0xff] %v948
    %997 = vst [vmem:[#allocation2 + $0x28] sm:$0xff] %v949
    %998 = vst [vmem:[#allocation2 + $0x30] sm:$0xff] %v950
    %999 = vst [vmem:[#allocation2 + $0x38] sm:$0xff] %v951
    %1000 = vst [vmem:[#allocation2 + $0x40] sm:$0xff] %v952
    %1001 = vst [vmem:[#allocation2 + $0x48] sm:$0xff] %v953
    %1002 = vst [vmem:[#allocation2 + $0x50] sm:$0xff] %v954
    %1003 = vst [vmem:[#allocation2 + $0x58] sm:$0xff] %v955
    %1004 = vst [vmem:[#allocation2 + $0x60] sm:$0xff] %v956
    %1005 = vst [vmem:[#allocation2 + $0x68] sm:$0xff] %v957
    %1006 = vst [vmem:[#allocation2 + $0x70] sm:$0xff] %v958
    %1007 = vst [vmem:[#allocation2 + $0x78] sm:$0xff] %v959
    %1008 = vst [vmem:[#allocation2 + $0x80] sm:$0xff] %v960
    %1009 = vst [vmem:[#allocation2 + $0x88] sm:$0xff] %v961
    %1010 = vst [vmem:[#allocation2 + $0x90] sm:$0xff] %v962
    %1011 = vst [vmem:[#allocation2 + $0x98] sm:$0xff] %v963
    %1012 = vst [vmem:[#allocation2 + $0xa0] sm:$0xff] %v964
    %1013 = vst [vmem:[#allocation2 + $0xa8] sm:$0xff] %v965
    %1014 = vst [vmem:[#allocation2 + $0xb0] sm:$0xff] %v966
    %1015 = vst [vmem:[#allocation2 + $0xb8] sm:$0xff] %v967
    %1016 = vst [vmem:[#allocation2 + $0xc0] sm:$0xff] %v968
    %1017 = vst [vmem:[#allocation2 + $0xc8] sm:$0xff] %v969
    %1018 = vst [vmem:[#allocation2 + $0xd0] sm:$0xff] %v970
    %1019 = vst [vmem:[#allocation2 + $0xd8] sm:$0xff] %v971
    %1020 = vst [vmem:[#allocation2 + $0xe0] sm:$0xff] %v972
    %1021 = vst [vmem:[#allocation2 + $0xe8] sm:$0xff] %v973
    %1022 = vst [vmem:[#allocation2 + $0xf0] sm:$0xff] %v974
    %1023 = vst [vmem:[#allocation2 + $0xf8] sm:$0xff] %v975
    %1024 = vst [vmem:[#allocation2 + $0x100] sm:$0xff] %v976
    %1025 = vst [vmem:[#allocation2 + $0x108] sm:$0xff] %v977
    %1026 = vst [vmem:[#allocation2 + $0x110] sm:$0xff] %v978
    %1027 = vst [vmem:[#allocation2 + $0x118] sm:$0xff] %v979
    %1028 = vst [vmem:[#allocation2 + $0x120] sm:$0xff] %v980
    %1029 = vst [vmem:[#allocation2 + $0x128] sm:$0xff] %v981
    %1030 = vst [vmem:[#allocation2 + $0x130] sm:$0xff] %v982
    %1031 = vst [vmem:[#allocation2 + $0x138] sm:$0xff] %v983
    %1032 = vst [vmem:[#allocation2 + $0x140] sm:$0xff] %v984
    %1033 = vst [vmem:[#allocation2 + $0x148] sm:$0xff] %v985
    %1034 = vst [vmem:[#allocation2 + $0x150] sm:$0xff] %v986
    %1035 = vst [vmem:[#allocation2 + $0x158] sm:$0xff] %v987
    %1036 = vst [vmem:[#allocation2 + $0x160] sm:$0xff] %v988
    %1037 = vst [vmem:[#allocation2 + $0x168] sm:$0xff] %v989
    %1038 = vst [vmem:[#allocation2 + $0x170] sm:$0xff] %v990
    %1039 = vst [vmem:[#allocation2 + $0x178] sm:$0xff] %v991
    %v1040 = vld [vmem:[#allocation3] sm:$0xff]
    %v1041 = vld [vmem:[#allocation3 + $0x8] sm:$0xf]
    %v1042 = vld [vmem:[#allocation3 + $0xc] sm:$0xff]
    %v1043 = vld [vmem:[#allocation3 + $0x14] sm:$0xf]
    %v1044 = vld [vmem:[#allocation3 + $0x18] sm:$0xff]
    %v1045 = vld [vmem:[#allocation3 + $0x20] sm:$0xf]
    %v1046 = vld [vmem:[#allocation3 + $0x24] sm:$0xff]
    %v1047 = vld [vmem:[#allocation3 + $0x2c] sm:$0xf]
    %v1048 = vld [vmem:[#allocation3 + $0x30] sm:$0xff]
    %v1049 = vld [vmem:[#allocation3 + $0x38] sm:$0xf]
    %v1050 = vld [vmem:[#allocation3 + $0x3c] sm:$0xff]
    %v1051 = vld [vmem:[#allocation3 + $0x44] sm:$0xf]
    %v1052 = vld [vmem:[#allocation3 + $0x48] sm:$0xff]
    %v1053 = vld [vmem:[#allocation3 + $0x50] sm:$0xf]
    %v1054 = vld [vmem:[#allocation3 + $0x54] sm:$0xff]
    %v1055 = vld [vmem:[#allocation3 + $0x5c] sm:$0xf]
    %v1056 = vld [vmem:[#allocation3 + $0x60] sm:$0xff]
    %v1057 = vld [vmem:[#allocation3 + $0x68] sm:$0xf]
    %v1058 = vld [vmem:[#allocation3 + $0x6c] sm:$0xff]
    %v1059 = vld [vmem:[#allocation3 + $0x74] sm:$0xf]
    %v1060 = vld [vmem:[#allocation3 + $0x78] sm:$0xff]
    %v1061 = vld [vmem:[#allocation3 + $0x80] sm:$0xf]
    %v1062 = vld [vmem:[#allocation3 + $0x84] sm:$0xff]
    %v1063 = vld [vmem:[#allocation3 + $0x8c] sm:$0xf]
    %v1064 = vld [vmem:[#allocation3 + $0x90] sm:$0xff]
    %v1065 = vld [vmem:[#allocation3 + $0x98] sm:$0xf]
    %v1066 = vld [vmem:[#allocation3 + $0x9c] sm:$0xff]
    %v1067 = vld [vmem:[#allocation3 + $0xa4] sm:$0xf]
    %v1068 = vld [vmem:[#allocation3 + $0xa8] sm:$0xff]
    %v1069 = vld [vmem:[#allocation3 + $0xb0] sm:$0xf]
    %v1070 = vld [vmem:[#allocation3 + $0xb4] sm:$0xff]
    %v1071 = vld [vmem:[#allocation3 + $0xbc] sm:$0xf]
    %v1072 = vld [vmem:[%s5] sm:$0x1]
    %v1105 = vunpack.c.l.b16 %v1040
    %v1106 = vunpack.c.h.b16 %v1040
    %v1107 = vunpack.c.l.b16 %v1041
    %v1108 = vunpack.c.l.b16 %v1042
    %v1109 = vunpack.c.h.b16 %v1042
    %v1110 = vunpack.c.l.b16 %v1043
    %v1111 = vunpack.c.l.b16 %v1044
    %v1112 = vunpack.c.h.b16 %v1044
    %v1113 = vunpack.c.l.b16 %v1045
    %v1114 = vunpack.c.l.b16 %v1046
    %v1115 = vunpack.c.h.b16 %v1046
    %v1116 = vunpack.c.l.b16 %v1047
    %v1117 = vunpack.c.l.b16 %v1048
    %v1118 = vunpack.c.h.b16 %v1048
    %v1119 = vunpack.c.l.b16 %v1049
    %v1120 = vunpack.c.l.b16 %v1050
    %v1121 = vunpack.c.h.b16 %v1050
    %v1122 = vunpack.c.l.b16 %v1051
    %v1123 = vunpack.c.l.b16 %v1052
    %v1124 = vunpack.c.h.b16 %v1052
    %v1125 = vunpack.c.l.b16 %v1053
    %v1126 = vunpack.c.l.b16 %v1054
    %v1127 = vunpack.c.h.b16 %v1054
    %v1128 = vunpack.c.l.b16 %v1055
    %v1129 = vunpack.c.l.b16 %v1056
    %v1130 = vunpack.c.h.b16 %v1056
    %v1131 = vunpack.c.l.b16 %v1057
    %v1132 = vunpack.c.l.b16 %v1058
    %v1133 = vunpack.c.h.b16 %v1058
    %v1134 = vunpack.c.l.b16 %v1059
    %v1135 = vunpack.c.l.b16 %v1060
    %v1136 = vunpack.c.h.b16 %v1060
    %v1137 = vunpack.c.l.b16 %v1061
    %v1138 = vunpack.c.l.b16 %v1062
    %v1139 = vunpack.c.h.b16 %v1062
    %v1140 = vunpack.c.l.b16 %v1063
    %v1141 = vunpack.c.l.b16 %v1064
    %v1142 = vunpack.c.h.b16 %v1064
    %v1143 = vunpack.c.l.b16 %v1065
    %v1144 = vunpack.c.l.b16 %v1066
    %v1145 = vunpack.c.h.b16 %v1066
    %v1146 = vunpack.c.l.b16 %v1067
    %v1147 = vunpack.c.l.b16 %v1068
    %v1148 = vunpack.c.h.b16 %v1068
    %v1149 = vunpack.c.l.b16 %v1069
    %v1150 = vunpack.c.l.b16 %v1070
    %v1151 = vunpack.c.h.b16 %v1070
    %v1152 = vunpack.c.l.b16 %v1071
    %v1153 = vpack.c.b16 %v1108, %v1105
    %v1154 = vpack.c.b16 %v1109, %v1106
    %v1155 = vpack.c.b16 %v1110, %v1107
    %v1156 = vpack.c.b16 %v1114, %v1111
    %v1157 = vpack.c.b16 %v1115, %v1112
    %v1158 = vpack.c.b16 %v1116, %v1113
    %v1159 = vpack.c.b16 %v1120, %v1117
    %v1160 = vpack.c.b16 %v1121, %v1118
    %v1161 = vpack.c.b16 %v1122, %v1119
    %v1162 = vpack.c.b16 %v1126, %v1123
    %v1163 = vpack.c.b16 %v1127, %v1124
    %v1164 = vpack.c.b16 %v1128, %v1125
    %v1165 = vpack.c.b16 %v1132, %v1129
    %v1166 = vpack.c.b16 %v1133, %v1130
    %v1167 = vpack.c.b16 %v1134, %v1131
    %v1168 = vpack.c.b16 %v1138, %v1135
    %v1169 = vpack.c.b16 %v1139, %v1136
    %v1170 = vpack.c.b16 %v1140, %v1137
    %v1171 = vpack.c.b16 %v1144, %v1141
    %v1172 = vpack.c.b16 %v1145, %v1142
    %v1173 = vpack.c.b16 %v1146, %v1143
    %v1174 = vpack.c.b16 %v1150, %v1147
    %v1175 = vpack.c.b16 %v1151, %v1148
    %v1176 = vpack.c.b16 %v1152, %v1149
    %1201 = vmatprep.subr.bf16.mxu0 %v1154
    %1202 = vmatpush1.bf16.msra.mxu0 %v1153
    %1203 = vmatprep.subr.bf16.mxu0 %v1157
    %1204 = vmatpush1.bf16.msra.mxu0 %v1156
    %1205 = vmatprep.subr.bf16.mxu0 %v1160
    %1206 = vmatpush1.bf16.msra.mxu0 %v1159
    %1207 = vmatprep.subr.bf16.mxu0 %v1163
    %1208 = vmatpush1.bf16.msra.mxu0 %v1162
    %1209 = vmatprep.subr.bf16.mxu0 %v1166
    %1210 = vmatpush1.bf16.msra.mxu0 %v1165
    %1211 = vmatprep.subr.bf16.mxu0 %v1169
    %1212 = vmatpush1.bf16.msra.mxu0 %v1168
    %1213 = vmatprep.subr.bf16.mxu0 %v1172
    %1214 = vmatpush1.bf16.msra.mxu0 %v1171
    %1215 = vmatprep.subr.bf16.mxu0 %v1175
    %1216 = vmatpush1.bf16.msra.mxu0 %v1174
    %1217 = vmatprep.subr.bf16.mxu0 0
    %1218 = vmatpush1.bf16.msra.mxu0 0
    %1219 = vmatprep.subr.bf16.mxu0 0
    %1220 = vmatpush1.bf16.msra.mxu0 0
    %1221 = vmatprep.subr.bf16.mxu0 0
    %1222 = vmatpush1.bf16.msra.mxu0 0
    %1223 = vmatprep.subr.bf16.mxu0 0
    %1224 = vmatpush1.bf16.msra.mxu0 0
    %1225 = vmatprep.subr.bf16.mxu0 0
    %1226 = vmatpush1.bf16.msra.mxu0 0
    %1227 = vmatprep.subr.bf16.mxu0 0
    %1228 = vmatpush1.bf16.msra.mxu0 0
    %1229 = vmatprep.subr.bf16.mxu0 0
    %1230 = vmatpush1.bf16.msra.mxu0 0
    %1231 = vmatprep.subr.bf16.mxu0 0
    %1232 = vmatpush1.bf16.msra.mxu0 0
    %1233 = vmatprep.mubr.bf16.mxu0 0
    %1234 = vmatmul.mubr.bf16.gmra.mrb[0].mxu0 0
    %v1235 = vpop.f32.mrb[0].mxu0
    %v1236 = vadd.f32 0.0, %v1235
    %v1237 = vpop.f32.mrb[0].mxu0
    %v1238 = vadd.f32 0.0, %v1237
    %v1239 = vpop.f32.mrb[0].mxu0
    %v1240 = vadd.f32 0.0, %v1239
    %v1241 = vpop.f32.mrb[0].mxu0
    %v1242 = vadd.f32 0.0, %v1241
    %1243 = vdwg.mxu0
    %1244 = vmatprep.subr.bf16.mxu0 0
    %1245 = vmatpush1.bf16.msra.mxu0 %v1155
    %1246 = vmatprep.subr.bf16.mxu0 0
    %1247 = vmatpush1.bf16.msra.mxu0 %v1158
    %1248 = vmatprep.subr.bf16.mxu0 0
    %1249 = vmatpush1.bf16.msra.mxu0 %v1161
    %1250 = vmatprep.subr.bf16.mxu0 0
    %1251 = vmatpush1.bf16.msra.mxu0 %v1164
    %1252 = vmatprep.subr.bf16.mxu0 0
    %1253 = vmatpush1.bf16.msra.mxu0 %v1167
    %1254 = vmatprep.subr.bf16.mxu0 0
    %1255 = vmatpush1.bf16.msra.mxu0 %v1170
    %1256 = vmatprep.subr.bf16.mxu0 0
    %1257 = vmatpush1.bf16.msra.mxu0 %v1173
    %1258 = vmatprep.subr.bf16.mxu0 0
    %1259 = vmatpush1.bf16.msra.mxu0 %v1176
    %1260 = vmatprep.subr.bf16.mxu0 0
    %1261 = vmatpush1.bf16.msra.mxu0 0
    %1262 = vmatprep.subr.bf16.mxu0 0
    %1263 = vmatpush1.bf16.msra.mxu0 0
    %1264 = vmatprep.subr.bf16.mxu0 0
    %1265 = vmatpush1.bf16.msra.mxu0 0
    %1266 = vmatprep.subr.bf16.mxu0 0
    %1267 = vmatpush1.bf16.msra.mxu0 0
    %1268 = vmatprep.subr.bf16.mxu0 0
    %1269 = vmatpush1.bf16.msra.mxu0 0
    %1270 = vmatprep.subr.bf16.mxu0 0
    %1271 = vmatpush1.bf16.msra.mxu0 0
    %1272 = vmatprep.subr.bf16.mxu0 0
    %1273 = vmatpush1.bf16.msra.mxu0 0
    %1274 = vmatprep.subr.bf16.mxu0 0
    %1275 = vmatpush1.bf16.msra.mxu0 0
    %1276 = vmatprep.mubr.bf16.mxu0 0
    %1277 = vmatmul.mubr.bf16.gmra.mrb[0].mxu0 0
    %v1278 = vpop.f32.mrb[0].mxu0
    %v1279 = vadd.f32 0.0, %v1278
    %v1280 = vpop.f32.mrb[0].mxu0
    %v1281 = vpop.f32.mrb[0].mxu0
    %v1282 = vadd.f32 0.0, %v1281
    %v1283 = vpop.f32.mrb[0].mxu0
    %1284 = vdwg.mxu0
    %s1285 = smul.u32 0, 3
    %s1286 = smul.addr %s1285, 8
    %s1287 = scalar_lea.vmem [#allocation2], %s1286
    %v1288 = vld [vmem:[%s1287] sm:$0xff]
    %v1289 = vld [vmem:[%s1287 + $0x8] sm:$0xff]
    %v1290 = vld [vmem:[%s1287 + $0x10] sm:$0xff]
    %v1291 = vld [vmem:[%s1287 + $0x18] sm:$0xff]
    %v1292 = vld [vmem:[%s1287 + $0x20] sm:$0xff]
    %v1293 = vld [vmem:[%s1287 + $0x28] sm:$0xff]
    %v1294 = vadd.f32 %v1288, %v1236
    %v1295 = vadd.f32 %v1291, %v1240
    %v1296 = vxor.u32 %v1294, 2147483648
    %v1297 = vxor.u32 %v1295, 2147483648
    %v1298 = vmul.f32 %v1296, 1.442695
    %v1299 = vpow.pop %v1298
    %v1300 = vmul.f32 %v1297, 1.442695
    %v1301 = vpow.pop %v1300
    %v1302 = vadd.f32 %v1299, 1.0
    %v1303 = vadd.f32 %v1301, 1.0
    %v1304 = vrcp.pop %v1302
    %v1305 = vmul.f32 1.0, %v1304
    %v1306 = vrcp.pop %v1303
    %v1307 = vmul.f32 1.0, %v1306
    %v1308 = vadd.f32 %v1289, %v1238
    %v1309 = vadd.f32 %v1292, %v1242
    %v1310 = vxor.u32 %v1308, 2147483648
    %v1311 = vxor.u32 %v1309, 2147483648
    %v1312 = vmul.f32 %v1310, 1.442695
    %v1313 = vpow.pop %v1312
    %v1314 = vmul.f32 %v1311, 1.442695
    %v1315 = vpow.pop %v1314
    %v1316 = vadd.f32 %v1313, 1.0
    %v1317 = vadd.f32 %v1315, 1.0
    %v1318 = vrcp.pop %v1316
    %v1319 = vmul.f32 1.0, %v1318
    %v1320 = vrcp.pop %v1317
    %v1321 = vmul.f32 1.0, %v1320
    %v1323 = vlaneseq
    %v1324 = vshrl.u32 %v1323, 7
    %v1325 = vsub.s32 0, %v1324
    %v1326 = vrot.slane %v1072, %v1325
    %v1328 = vadd.f32 %v1279, %v1326
    %v1329 = vadd.f32 %v1282, %v1326
    %v1330 = vmul.f32 %v1305, %v1328
    %v1331 = vmul.f32 %v1307, %v1329
    %v1332 = vadd.f32 %v1290, %v1330
    %v1333 = vadd.f32 %v1293, %v1331
    %v1334 = vtanh.pop %v1332
    %v1335 = vtanh.pop %v1333
    %v1336 = vsub.f32 1.0, %v1319
    %v1337 = vsub.f32 1.0, %v1321
    %v1338 = vmul.f32 %v1336, %v1334
    %v1339 = vmul.f32 %v1337, %v1335
    %v1340 = vmul.f32 %v1319, 0.0
    %v1341 = vmul.f32 %v1321, 0.0
    %v1342 = vadd.f32 %v1338, %v1340
    %v1343 = vadd.f32 %v1339, %v1341
    %v1344 = vpack.c.bf16 %v1343, %v1342
    %1345 = vmatprep.subr.bf16.mxu0 %v1154
    %1346 = vmatpush1.bf16.msra.mxu0 %v1153
    %1347 = vmatprep.subr.bf16.mxu0 %v1157
    %1348 = vmatpush1.bf16.msra.mxu0 %v1156
    %1349 = vmatprep.subr.bf16.mxu0 %v1160
    %1350 = vmatpush1.bf16.msra.mxu0 %v1159
    %1351 = vmatprep.subr.bf16.mxu0 %v1163
    %1352 = vmatpush1.bf16.msra.mxu0 %v1162
    %1353 = vmatprep.subr.bf16.mxu0 %v1166
    %1354 = vmatpush1.bf16.msra.mxu0 %v1165
    %1355 = vmatprep.subr.bf16.mxu0 %v1169
    %1356 = vmatpush1.bf16.msra.mxu0 %v1168
    %1357 = vmatprep.subr.bf16.mxu0 %v1172
    %1358 = vmatpush1.bf16.msra.mxu0 %v1171
    %1359 = vmatprep.subr.bf16.mxu0 %v1175
    %1360 = vmatpush1.bf16.msra.mxu0 %v1174
    %1361 = vmatprep.subr.bf16.mxu0 0
    %1362 = vmatpush1.bf16.msra.mxu0 0
    %1363 = vmatprep.subr.bf16.mxu0 0
    %1364 = vmatpush1.bf16.msra.mxu0 0
    %1365 = vmatprep.subr.bf16.mxu0 0
    %1366 = vmatpush1.bf16.msra.mxu0 0
    %1367 = vmatprep.subr.bf16.mxu0 0
    %1368 = vmatpush1.bf16.msra.mxu0 0
    %1369 = vmatprep.subr.bf16.mxu0 0
    %1370 = vmatpush1.bf16.msra.mxu0 0
    %1371 = vmatprep.subr.bf16.mxu0 0
    %1372 = vmatpush1.bf16.msra.mxu0 0
    %1373 = vmatprep.subr.bf16.mxu0 0
    %1374 = vmatpush1.bf16.msra.mxu0 0
    %1375 = vmatprep.subr.bf16.mxu0 0
    %1376 = vmatpush1.bf16.msra.mxu0 0
    %1377 = vmatprep.mubr.bf16.mxu0 0
    %1378 = vmatmul.mubr.bf16.gmra.mrb[0].mxu0 %v1344
    %v1379 = vpop.f32.mrb[0].mxu0
    %v1380 = vadd.f32 0.0, %v1379
    %v1381 = vpop.f32.mrb[0].mxu0
    %v1382 = vadd.f32 0.0, %v1381
    %v1383 = vpop.f32.mrb[0].mxu0
    %v1384 = vadd.f32 0.0, %v1383
    %v1385 = vpop.f32.mrb[0].mxu0
    %v1386 = vadd.f32 0.0, %v1385
    %1387 = vdwg.mxu0
    %1388 = vmatprep.subr.bf16.mxu0 0
    %1389 = vmatpush1.bf16.msra.mxu0 %v1155
    %1390 = vmatprep.subr.bf16.mxu0 0
    %1391 = vmatpush1.bf16.msra.mxu0 %v1158
    %1392 = vmatprep.subr.bf16.mxu0 0
    %1393 = vmatpush1.bf16.msra.mxu0 %v1161
    %1394 = vmatprep.subr.bf16.mxu0 0
    %1395 = vmatpush1.bf16.msra.mxu0 %v1164
    %1396 = vmatprep.subr.bf16.mxu0 0
    %1397 = vmatpush1.bf16.msra.mxu0 %v1167
    %1398 = vmatprep.subr.bf16.mxu0 0
    %1399 = vmatpush1.bf16.msra.mxu0 %v1170
    %1400 = vmatprep.subr.bf16.mxu0 0
    %1401 = vmatpush1.bf16.msra.mxu0 %v1173
    %1402 = vmatprep.subr.bf16.mxu0 0
    %1403 = vmatpush1.bf16.msra.mxu0 %v1176
    %1404 = vmatprep.subr.bf16.mxu0 0
    %1405 = vmatpush1.bf16.msra.mxu0 0
    %1406 = vmatprep.subr.bf16.mxu0 0
    %1407 = vmatpush1.bf16.msra.mxu0 0
    %1408 = vmatprep.subr.bf16.mxu0 0
    %1409 = vmatpush1.bf16.msra.mxu0 0
    %1410 = vmatprep.subr.bf16.mxu0 0
    %1411 = vmatpush1.bf16.msra.mxu0 0
    %1412 = vmatprep.subr.bf16.mxu0 0
    %1413 = vmatpush1.bf16.msra.mxu0 0
    %1414 = vmatprep.subr.bf16.mxu0 0
    %1415 = vmatpush1.bf16.msra.mxu0 0
    %1416 = vmatprep.subr.bf16.mxu0 0
    %1417 = vmatpush1.bf16.msra.mxu0 0
    %1418 = vmatprep.subr.bf16.mxu0 0
    %1419 = vmatpush1.bf16.msra.mxu0 0
    %1420 = vmatprep.mubr.bf16.mxu0 0
    %1421 = vmatmul.mubr.bf16.gmra.mrb[0].mxu0 %v1344
    %v1422 = vpop.f32.mrb[0].mxu0
    %v1423 = vadd.f32 0.0, %v1422
    %v1424 = vpop.f32.mrb[0].mxu0
    %v1425 = vpop.f32.mrb[0].mxu0
    %v1426 = vadd.f32 0.0, %v1425
    %v1427 = vpop.f32.mrb[0].mxu0
    %1428 = vdwg.mxu0
    %s1429 = smul.u32 2, 3
    %s1430 = smul.addr %s1429, 8
    %s1431 = scalar_lea.vmem [#allocation2], %s1430
    %v1432 = vld [vmem:[%s1431] sm:$0xff]
    %v1433 = vld [vmem:[%s1431 + $0x8] sm:$0xff]
    %v1434 = vld [vmem:[%s1431 + $0x10] sm:$0xff]
    %v1435 = vld [vmem:[%s1431 + $0x18] sm:$0xff]
    %v1436 = vld [vmem:[%s1431 + $0x20] sm:$0xff]
    %v1437 = vld [vmem:[%s1431 + $0x28] sm:$0xff]
    %v1438 = vadd.f32 %v1432, %v1380
    %v1439 = vadd.f32 %v1435, %v1384
    %v1440 = vxor.u32 %v1438, 2147483648
    %v1441 = vxor.u32 %v1439, 2147483648
    %v1442 = vmul.f32 %v1440, 1.442695
    %v1443 = vpow.pop %v1442
    %v1444 = vmul.f32 %v1441, 1.442695
    %v1445 = vpow.pop %v1444
    %v1446 = vadd.f32 %v1443, 1.0
    %v1447 = vadd.f32 %v1445, 1.0
    %v1448 = vrcp.pop %v1446
    %v1449 = vmul.f32 1.0, %v1448
    %v1450 = vrcp.pop %v1447
    %v1451 = vmul.f32 1.0, %v1450
    %v1452 = vadd.f32 %v1433, %v1382
    %v1453 = vadd.f32 %v1436, %v1386
    %v1454 = vxor.u32 %v1452, 2147483648
    %v1455 = vxor.u32 %v1453, 2147483648
    %v1456 = vmul.f32 %v1454, 1.442695
    %v1457 = vpow.pop %v1456
    %v1458 = vmul.f32 %v1455, 1.442695
    %v1459 = vpow.pop %v1458
    %v1460 = vadd.f32 %v1457, 1.0
    %v1461 = vadd.f32 %v1459, 1.0
    %v1462 = vrcp.pop %v1460
    %v1463 = vmul.f32 1.0, %v1462
    %v1464 = vrcp.pop %v1461
    %v1465 = vmul.f32 1.0, %v1464
    %v1466 = vadd.f32 %v1423, %v1326
    %v1467 = vadd.f32 %v1426, %v1326
    %v1468 = vmul.f32 %v1449, %v1466
    %v1469 = vmul.f32 %v1451, %v1467
    %v1470 = vadd.f32 %v1434, %v1468
    %v1471 = vadd.f32 %v1437, %v1469
    %v1472 = vtanh.pop %v1470
    %v1473 = vtanh.pop %v1471
    %v1474 = vsub.f32 1.0, %v1463
    %v1475 = vsub.f32 1.0, %v1465
    %v1476 = vmul.f32 %v1474, %v1472
    %v1477 = vmul.f32 %v1475, %v1473
    %v1478 = vmul.f32 %v1463, %v1342
    %v1479 = vmul.f32 %v1465, %v1343
    %v1480 = vadd.f32 %v1476, %v1478
    %v1481 = vadd.f32 %v1477, %v1479
    %v1482 = vpack.c.bf16 %v1481, %v1480
    %1483 = vmatprep.subr.bf16.mxu0 %v1154
    %1484 = vmatpush1.bf16.msra.mxu0 %v1153
    %1485 = vmatprep.subr.bf16.mxu0 %v1157
    %1486 = vmatpush1.bf16.msra.mxu0 %v1156
    %1487 = vmatprep.subr.bf16.mxu0 %v1160
    %1488 = vmatpush1.bf16.msra.mxu0 %v1159
    %1489 = vmatprep.subr.bf16.mxu0 %v1163
    %1490 = vmatpush1.bf16.msra.mxu0 %v1162
    %1491 = vmatprep.subr.bf16.mxu0 %v1166
    %1492 = vmatpush1.bf16.msra.mxu0 %v1165
    %1493 = vmatprep.subr.bf16.mxu0 %v1169
    %1494 = vmatpush1.bf16.msra.mxu0 %v1168
    %1495 = vmatprep.subr.bf16.mxu0 %v1172
    %1496 = vmatpush1.bf16.msra.mxu0 %v1171
    %1497 = vmatprep.subr.bf16.mxu0 %v1175
    %1498 = vmatpush1.bf16.msra.mxu0 %v1174
    %1499 = vmatprep.subr.bf16.mxu0 0
    %1500 = vmatpush1.bf16.msra.mxu0 0
    %1501 = vmatprep.subr.bf16.mxu0 0
    %1502 = vmatpush1.bf16.msra.mxu0 0
    %1503 = vmatprep.subr.bf16.mxu0 0
    %1504 = vmatpush1.bf16.msra.mxu0 0
    %1505 = vmatprep.subr.bf16.mxu0 0
    %1506 = vmatpush1.bf16.msra.mxu0 0
    %1507 = vmatprep.subr.bf16.mxu0 0
    %1508 = vmatpush1.bf16.msra.mxu0 0
    %1509 = vmatprep.subr.bf16.mxu0 0
    %1510 = vmatpush1.bf16.msra.mxu0 0
    %1511 = vmatprep.subr.bf16.mxu0 0
    %1512 = vmatpush1.bf16.msra.mxu0 0
    %1513 = vmatprep.subr.bf16.mxu0 0
    %1514 = vmatpush1.bf16.msra.mxu0 0
    %1515 = vmatprep.mubr.bf16.mxu0 0
    %1516 = vmatmul.mubr.bf16.gmra.mrb[0].mxu0 %v1482
    %v1517 = vpop.f32.mrb[0].mxu0
    %v1518 = vadd.f32 0.0, %v1517
    %v1519 = vpop.f32.mrb[0].mxu0
    %v1520 = vadd.f32 0.0, %v1519
    %v1521 = vpop.f32.mrb[0].mxu0
    %v1522 = vadd.f32 0.0, %v1521
    %v1523 = vpop.f32.mrb[0].mxu0
    %v1524 = vadd.f32 0.0, %v1523
    %1525 = vdwg.mxu0
    %1526 = vmatprep.subr.bf16.mxu0 0
    %1527 = vmatpush1.bf16.msra.mxu0 %v1155
    %1528 = vmatprep.subr.bf16.mxu0 0
    %1529 = vmatpush1.bf16.msra.mxu0 %v1158
    %1530 = vmatprep.subr.bf16.mxu0 0
    %1531 = vmatpush1.bf16.msra.mxu0 %v1161
    %1532 = vmatprep.subr.bf16.mxu0 0
    %1533 = vmatpush1.bf16.msra.mxu0 %v1164
    %1534 = vmatprep.subr.bf16.mxu0 0
    %1535 = vmatpush1.bf16.msra.mxu0 %v1167
    %1536 = vmatprep.subr.bf16.mxu0 0
    %1537 = vmatpush1.bf16.msra.mxu0 %v1170
    %1538 = vmatprep.subr.bf16.mxu0 0
    %1539 = vmatpush1.bf16.msra.mxu0 %v1173
    %1540 = vmatprep.subr.bf16.mxu0 0
    %1541 = vmatpush1.bf16.msra.mxu0 %v1176
    %1542 = vmatprep.subr.bf16.mxu0 0
    %1543 = vmatpush1.bf16.msra.mxu0 0
    %1544 = vmatprep.subr.bf16.mxu0 0
    %1545 = vmatpush1.bf16.msra.mxu0 0
    %1546 = vmatprep.subr.bf16.mxu0 0
    %1547 = vmatpush1.bf16.msra.mxu0 0
    %1548 = vmatprep.subr.bf16.mxu0 0
    %1549 = vmatpush1.bf16.msra.mxu0 0
    %1550 = vmatprep.subr.bf16.mxu0 0
    %1551 = vmatpush1.bf16.msra.mxu0 0
    %1552 = vmatprep.subr.bf16.mxu0 0
    %1553 = vmatpush1.bf16.msra.mxu0 0
    %1554 = vmatprep.subr.bf16.mxu0 0
    %1555 = vmatpush1.bf16.msra.mxu0 0
    %1556 = vmatprep.subr.bf16.mxu0 0
    %1557 = vmatpush1.bf16.msra.mxu0 0
    %1558 = vmatprep.mubr.bf16.mxu0 0
    %1559 = vmatmul.mubr.bf16.gmra.mrb[0].mxu0 %v1482
    %v1560 = vpop.f32.mrb[0].mxu0
    %v1561 = vadd.f32 0.0, %v1560
    %v1562 = vpop.f32.mrb[0].mxu0
    %v1563 = vpop.f32.mrb[0].mxu0
    %v1564 = vadd.f32 0.0, %v1563
    %v1565 = vpop.f32.mrb[0].mxu0
    %1566 = vdwg.mxu0
    %s1567 = smul.u32 4, 3
    %s1568 = smul.addr %s1567, 8
    %s1569 = scalar_lea.vmem [#allocation2], %s1568
    %v1570 = vld [vmem:[%s1569] sm:$0xff]
    %v1571 = vld [vmem:[%s1569 + $0x8] sm:$0xff]
    %v1572 = vld [vmem:[%s1569 + $0x10] sm:$0xff]
    %v1573 = vld [vmem:[%s1569 + $0x18] sm:$0xff]
    %v1574 = vld [vmem:[%s1569 + $0x20] sm:$0xff]
    %v1575 = vld [vmem:[%s1569 + $0x28] sm:$0xff]
    %v1576 = vadd.f32 %v1570, %v1518
    %v1577 = vadd.f32 %v1573, %v1522
    %v1578 = vxor.u32 %v1576, 2147483648
    %v1579 = vxor.u32 %v1577, 2147483648
    %v1580 = vmul.f32 %v1578, 1.442695
    %v1581 = vpow.pop %v1580
    %v1582 = vmul.f32 %v1579, 1.442695
    %v1583 = vpow.pop %v1582
    %v1584 = vadd.f32 %v1581, 1.0
    %v1585 = vadd.f32 %v1583, 1.0
    %v1586 = vrcp.pop %v1584
    %v1587 = vmul.f32 1.0, %v1586
    %v1588 = vrcp.pop %v1585
    %v1589 = vmul.f32 1.0, %v1588
    %v1590 = vadd.f32 %v1571, %v1520
    %v1591 = vadd.f32 %v1574, %v1524
    %v1592 = vxor.u32 %v1590, 2147483648
    %v1593 = vxor.u32 %v1591, 2147483648
    %v1594 = vmul.f32 %v1592, 1.442695
    %v1595 = vpow.pop %v1594
    %v1596 = vmul.f32 %v1593, 1.442695
    %v1597 = vpow.pop %v1596
    %v1598 = vadd.f32 %v1595, 1.0
    %v1599 = vadd.f32 %v1597, 1.0
    %v1600 = vrcp.pop %v1598
    %v1601 = vmul.f32 1.0, %v1600
    %v1602 = vrcp.pop %v1599
    %v1603 = vmul.f32 1.0, %v1602
    %v1604 = vadd.f32 %v1561, %v1326
    %v1605 = vadd.f32 %v1564, %v1326
    %v1606 = vmul.f32 %v1587, %v1604
    %v1607 = vmul.f32 %v1589, %v1605
    %v1608 = vadd.f32 %v1572, %v1606
    %v1609 = vadd.f32 %v1575, %v1607
    %v1610 = vtanh.pop %v1608
    %v1611 = vtanh.pop %v1609
    %v1612 = vsub.f32 1.0, %v1601
    %v1613 = vsub.f32 1.0, %v1603
    %v1614 = vmul.f32 %v1612, %v1610
    %v1615 = vmul.f32 %v1613, %v1611
    %v1616 = vmul.f32 %v1601, %v1480
    %v1617 = vmul.f32 %v1603, %v1481
    %v1618 = vadd.f32 %v1614, %v1616
    %v1619 = vadd.f32 %v1615, %v1617
    %v1620 = vpack.c.bf16 %v1619, %v1618
    %1621 = vmatprep.subr.bf16.mxu0 %v1154
    %1622 = vmatpush1.bf16.msra.mxu0 %v1153
    %1623 = vmatprep.subr.bf16.mxu0 %v1157
    %1624 = vmatpush1.bf16.msra.mxu0 %v1156
    %1625 = vmatprep.subr.bf16.mxu0 %v1160
    %1626 = vmatpush1.bf16.msra.mxu0 %v1159
    %1627 = vmatprep.subr.bf16.mxu0 %v1163
    %1628 = vmatpush1.bf16.msra.mxu0 %v1162
    %1629 = vmatprep.subr.bf16.mxu0 %v1166
    %1630 = vmatpush1.bf16.msra.mxu0 %v1165
    %1631 = vmatprep.subr.bf16.mxu0 %v1169
    %1632 = vmatpush1.bf16.msra.mxu0 %v1168
    %1633 = vmatprep.subr.bf16.mxu0 %v1172
    %1634 = vmatpush1.bf16.msra.mxu0 %v1171
    %1635 = vmatprep.subr.bf16.mxu0 %v1175
    %1636 = vmatpush1.bf16.msra.mxu0 %v1174
    %1637 = vmatprep.subr.bf16.mxu0 0
    %1638 = vmatpush1.bf16.msra.mxu0 0
    %1639 = vmatprep.subr.bf16.mxu0 0
    %1640 = vmatpush1.bf16.msra.mxu0 0
    %1641 = vmatprep.subr.bf16.mxu0 0
    %1642 = vmatpush1.bf16.msra.mxu0 0
    %1643 = vmatprep.subr.bf16.mxu0 0
    %1644 = vmatpush1.bf16.msra.mxu0 0
    %1645 = vmatprep.subr.bf16.mxu0 0
    %1646 = vmatpush1.bf16.msra.mxu0 0
    %1647 = vmatprep.subr.bf16.mxu0 0
    %1648 = vmatpush1.bf16.msra.mxu0 0
    %1649 = vmatprep.subr.bf16.mxu0 0
    %1650 = vmatpush1.bf16.msra.mxu0 0
    %1651 = vmatprep.subr.bf16.mxu0 0
    %1652 = vmatpush1.bf16.msra.mxu0 0
    %1653 = vmatprep.mubr.bf16.mxu0 0
    %1654 = vmatmul.mubr.bf16.gmra.mrb[0].mxu0 %v1620
    %v1655 = vpop.f32.mrb[0].mxu0
    %v1656 = vadd.f32 0.0, %v1655
    %v1657 = vpop.f32.mrb[0].mxu0
    %v1658 = vadd.f32 0.0, %v1657
    %v1659 = vpop.f32.mrb[0].mxu0
    %v1660 = vadd.f32 0.0, %v1659
    %v1661 = vpop.f32.mrb[0].mxu0
    %v1662 = vadd.f32 0.0, %v1661
    %1663 = vdwg.mxu0
    %1664 = vmatprep.subr.bf16.mxu0 0
    %1665 = vmatpush1.bf16.msra.mxu0 %v1155
    %1666 = vmatprep.subr.bf16.mxu0 0
    %1667 = vmatpush1.bf16.msra.mxu0 %v1158
    %1668 = vmatprep.subr.bf16.mxu0 0
    %1669 = vmatpush1.bf16.msra.mxu0 %v1161
    %1670 = vmatprep.subr.bf16.mxu0 0
    %1671 = vmatpush1.bf16.msra.mxu0 %v1164
    %1672 = vmatprep.subr.bf16.mxu0 0
    %1673 = vmatpush1.bf16.msra.mxu0 %v1167
    %1674 = vmatprep.subr.bf16.mxu0 0
    %1675 = vmatpush1.bf16.msra.mxu0 %v1170
    %1676 = vmatprep.subr.bf16.mxu0 0
    %1677 = vmatpush1.bf16.msra.mxu0 %v1173
    %1678 = vmatprep.subr.bf16.mxu0 0
    %1679 = vmatpush1.bf16.msra.mxu0 %v1176
    %1680 = vmatprep.subr.bf16.mxu0 0
    %1681 = vmatpush1.bf16.msra.mxu0 0
    %1682 = vmatprep.subr.bf16.mxu0 0
    %1683 = vmatpush1.bf16.msra.mxu0 0
    %1684 = vmatprep.subr.bf16.mxu0 0
    %1685 = vmatpush1.bf16.msra.mxu0 0
    %1686 = vmatprep.subr.bf16.mxu0 0
    %1687 = vmatpush1.bf16.msra.mxu0 0
    %1688 = vmatprep.subr.bf16.mxu0 0
    %1689 = vmatpush1.bf16.msra.mxu0 0
    %1690 = vmatprep.subr.bf16.mxu0 0
    %1691 = vmatpush1.bf16.msra.mxu0 0
    %1692 = vmatprep.subr.bf16.mxu0 0
    %1693 = vmatpush1.bf16.msra.mxu0 0
    %1694 = vmatprep.subr.bf16.mxu0 0
    %1695 = vmatpush1.bf16.msra.mxu0 0
    %1696 = vmatprep.mubr.bf16.mxu0 0
    %1697 = vmatmul.mubr.bf16.gmra.mrb[0].mxu0 %v1620
    %v1698 = vpop.f32.mrb[0].mxu0
    %v1699 = vadd.f32 0.0, %v1698
    %v1700 = vpop.f32.mrb[0].mxu0
    %v1701 = vpop.f32.mrb[0].mxu0
    %v1702 = vadd.f32 0.0, %v1701
    %v1703 = vpop.f32.mrb[0].mxu0
    %1704 = vdwg.mxu0
    %s1705 = smul.u32 6, 3
    %s1706 = smul.addr %s1705, 8
    %s1707 = scalar_lea.vmem [#allocation2], %s1706
    %v1708 = vld [vmem:[%s1707] sm:$0xff]
    %v1709 = vld [vmem:[%s1707 + $0x8] sm:$0xff]
    %v1710 = vld [vmem:[%s1707 + $0x10] sm:$0xff]
    %v1711 = vld [vmem:[%s1707 + $0x18] sm:$0xff]
    %v1712 = vld [vmem:[%s1707 + $0x20] sm:$0xff]
    %v1713 = vld [vmem:[%s1707 + $0x28] sm:$0xff]
    %v1714 = vadd.f32 %v1708, %v1656
    %v1715 = vadd.f32 %v1711, %v1660
    %v1716 = vxor.u32 %v1714, 2147483648
    %v1717 = vxor.u32 %v1715, 2147483648
    %v1718 = vmul.f32 %v1716, 1.442695
    %v1719 = vpow.pop %v1718
    %v1720 = vmul.f32 %v1717, 1.442695
    %v1721 = vpow.pop %v1720
    %v1722 = vadd.f32 %v1719, 1.0
    %v1723 = vadd.f32 %v1721, 1.0
    %v1724 = vrcp.pop %v1722
    %v1725 = vmul.f32 1.0, %v1724
    %v1726 = vrcp.pop %v1723
    %v1727 = vmul.f32 1.0, %v1726
    %v1728 = vadd.f32 %v1709, %v1658
    %v1729 = vadd.f32 %v1712, %v1662
    %v1730 = vxor.u32 %v1728, 2147483648
    %v1731 = vxor.u32 %v1729, 2147483648
    %v1732 = vmul.f32 %v1730, 1.442695
    %v1733 = vpow.pop %v1732
    %v1734 = vmul.f32 %v1731, 1.442695
    %v1735 = vpow.pop %v1734
    %v1736 = vadd.f32 %v1733, 1.0
    %v1737 = vadd.f32 %v1735, 1.0
    %v1738 = vrcp.pop %v1736
    %v1739 = vmul.f32 1.0, %v1738
    %v1740 = vrcp.pop %v1737
    %v1741 = vmul.f32 1.0, %v1740
    %v1742 = vadd.f32 %v1699, %v1326
    %v1743 = vadd.f32 %v1702, %v1326
    %v1744 = vmul.f32 %v1725, %v1742
    %v1745 = vmul.f32 %v1727, %v1743
    %v1746 = vadd.f32 %v1710, %v1744
    %v1747 = vadd.f32 %v1713, %v1745
    %v1748 = vtanh.pop %v1746
    %v1749 = vtanh.pop %v1747
    %v1750 = vsub.f32 1.0, %v1739
    %v1751 = vsub.f32 1.0, %v1741
    %v1752 = vmul.f32 %v1750, %v1748
    %v1753 = vmul.f32 %v1751, %v1749
    %v1754 = vmul.f32 %v1739, %v1618
    %v1755 = vmul.f32 %v1741, %v1619
    %v1756 = vadd.f32 %v1752, %v1754
    %v1757 = vadd.f32 %v1753, %v1755
    %v1758 = vpack.c.bf16 %v1757, %v1756
    %1759 = vmatprep.subr.bf16.mxu0 %v1154
    %1760 = vmatpush1.bf16.msra.mxu0 %v1153
    %1761 = vmatprep.subr.bf16.mxu0 %v1157
    %1762 = vmatpush1.bf16.msra.mxu0 %v1156
    %1763 = vmatprep.subr.bf16.mxu0 %v1160
    %1764 = vmatpush1.bf16.msra.mxu0 %v1159
    %1765 = vmatprep.subr.bf16.mxu0 %v1163
    %1766 = vmatpush1.bf16.msra.mxu0 %v1162
    %1767 = vmatprep.subr.bf16.mxu0 %v1166
    %1768 = vmatpush1.bf16.msra.mxu0 %v1165
    %1769 = vmatprep.subr.bf16.mxu0 %v1169
    %1770 = vmatpush1.bf16.msra.mxu0 %v1168
    %1771 = vmatprep.subr.bf16.mxu0 %v1172
    %1772 = vmatpush1.bf16.msra.mxu0 %v1171
    %1773 = vmatprep.subr.bf16.mxu0 %v1175
    %1774 = vmatpush1.bf16.msra.mxu0 %v1174
    %1775 = vmatprep.subr.bf16.mxu0 0
    %1776 = vmatpush1.bf16.msra.mxu0 0
    %1777 = vmatprep.subr.bf16.mxu0 0
    %1778 = vmatpush1.bf16.msra.mxu0 0
    %1779 = vmatprep.subr.bf16.mxu0 0
    %1780 = vmatpush1.bf16.msra.mxu0 0
    %1781 = vmatprep.subr.bf16.mxu0 0
    %1782 = vmatpush1.bf16.msra.mxu0 0
    %1783 = vmatprep.subr.bf16.mxu0 0
    %1784 = vmatpush1.bf16.msra.mxu0 0
    %1785 = vmatprep.subr.bf16.mxu0 0
    %1786 = vmatpush1.bf16.msra.mxu0 0
    %1787 = vmatprep.subr.bf16.mxu0 0
    %1788 = vmatpush1.bf16.msra.mxu0 0
    %1789 = vmatprep.subr.bf16.mxu0 0
    %1790 = vmatpush1.bf16.msra.mxu0 0
    %1791 = vmatprep.mubr.bf16.mxu0 0
    %1792 = vmatmul.mubr.bf16.gmra.mrb[0].mxu0 %v1758
    %v1793 = vpop.f32.mrb[0].mxu0
    %v1794 = vadd.f32 0.0, %v1793
    %v1795 = vpop.f32.mrb[0].mxu0
    %v1796 = vadd.f32 0.0, %v1795
    %v1797 = vpop.f32.mrb[0].mxu0
    %v1798 = vadd.f32 0.0, %v1797
    %v1799 = vpop.f32.mrb[0].mxu0
    %v1800 = vadd.f32 0.0, %v1799
    %1801 = vdwg.mxu0
    %1802 = vmatprep.subr.bf16.mxu0 0
    %1803 = vmatpush1.bf16.msra.mxu0 %v1155
    %1804 = vmatprep.subr.bf16.mxu0 0
    %1805 = vmatpush1.bf16.msra.mxu0 %v1158
    %1806 = vmatprep.subr.bf16.mxu0 0
    %1807 = vmatpush1.bf16.msra.mxu0 %v1161
    %1808 = vmatprep.subr.bf16.mxu0 0
    %1809 = vmatpush1.bf16.msra.mxu0 %v1164
    %1810 = vmatprep.subr.bf16.mxu0 0
    %1811 = vmatpush1.bf16.msra.mxu0 %v1167
    %1812 = vmatprep.subr.bf16.mxu0 0
    %1813 = vmatpush1.bf16.msra.mxu0 %v1170
    %1814 = vmatprep.subr.bf16.mxu0 0
    %1815 = vmatpush1.bf16.msra.mxu0 %v1173
    %1816 = vmatprep.subr.bf16.mxu0 0
    %1817 = vmatpush1.bf16.msra.mxu0 %v1176
    %1818 = vmatprep.subr.bf16.mxu0 0
    %1819 = vmatpush1.bf16.msra.mxu0 0
    %1820 = vmatprep.subr.bf16.mxu0 0
    %1821 = vmatpush1.bf16.msra.mxu0 0
    %1822 = vmatprep.subr.bf16.mxu0 0
    %1823 = vmatpush1.bf16.msra.mxu0 0
    %1824 = vmatprep.subr.bf16.mxu0 0
    %1825 = vmatpush1.bf16.msra.mxu0 0
    %1826 = vmatprep.subr.bf16.mxu0 0
    %1827 = vmatpush1.bf16.msra.mxu0 0
    %1828 = vmatprep.subr.bf16.mxu0 0
    %1829 = vmatpush1.bf16.msra.mxu0 0
    %1830 = vmatprep.subr.bf16.mxu0 0
    %1831 = vmatpush1.bf16.msra.mxu0 0
    %1832 = vmatprep.subr.bf16.mxu0 0
    %1833 = vmatpush1.bf16.msra.mxu0 0
    %1834 = vmatprep.mubr.bf16.mxu0 0
    %1835 = vmatmul.mubr.bf16.gmra.mrb[0].mxu0 %v1758
    %v1836 = vpop.f32.mrb[0].mxu0
    %v1837 = vadd.f32 0.0, %v1836
    %v1838 = vpop.f32.mrb[0].mxu0
    %v1839 = vpop.f32.mrb[0].mxu0
    %v1840 = vadd.f32 0.0, %v1839
    %v1841 = vpop.f32.mrb[0].mxu0
    %1842 = vdwg.mxu0
    %s1843 = smul.u32 8, 3
    %s1844 = smul.addr %s1843, 8
    %s1845 = scalar_lea.vmem [#allocation2], %s1844
    %v1846 = vld [vmem:[%s1845] sm:$0xff]
    %v1847 = vld [vmem:[%s1845 + $0x8] sm:$0xff]
    %v1848 = vld [vmem:[%s1845 + $0x10] sm:$0xff]
    %v1849 = vld [vmem:[%s1845 + $0x18] sm:$0xff]
    %v1850 = vld [vmem:[%s1845 + $0x20] sm:$0xff]
    %v1851 = vld [vmem:[%s1845 + $0x28] sm:$0xff]
    %v1852 = vadd.f32 %v1846, %v1794
    %v1853 = vadd.f32 %v1849, %v1798
    %v1854 = vxor.u32 %v1852, 2147483648
    %v1855 = vxor.u32 %v1853, 2147483648
    %v1856 = vmul.f32 %v1854, 1.442695
    %v1857 = vpow.pop %v1856
    %v1858 = vmul.f32 %v1855, 1.442695
    %v1859 = vpow.pop %v1858
    %v1860 = vadd.f32 %v1857, 1.0
    %v1861 = vadd.f32 %v1859, 1.0
    %v1862 = vrcp.pop %v1860
    %v1863 = vmul.f32 1.0, %v1862
    %v1864 = vrcp.pop %v1861
    %v1865 = vmul.f32 1.0, %v1864
    %v1866 = vadd.f32 %v1847, %v1796
    %v1867 = vadd.f32 %v1850, %v1800
    %v1868 = vxor.u32 %v1866, 2147483648
    %v1869 = vxor.u32 %v1867, 2147483648
    %v1870 = vmul.f32 %v1868, 1.442695
    %v1871 = vpow.pop %v1870
    %v1872 = vmul.f32 %v1869, 1.442695
    %v1873 = vpow.pop %v1872
    %v1874 = vadd.f32 %v1871, 1.0
    %v1875 = vadd.f32 %v1873, 1.0
    %v1876 = vrcp.pop %v1874
    %v1877 = vmul.f32 1.0, %v1876
    %v1878 = vrcp.pop %v1875
    %v1879 = vmul.f32 1.0, %v1878
    %v1880 = vadd.f32 %v1837, %v1326
    %v1881 = vadd.f32 %v1840, %v1326
    %v1882 = vmul.f32 %v1863, %v1880
    %v1883 = vmul.f32 %v1865, %v1881
    %v1884 = vadd.f32 %v1848, %v1882
    %v1885 = vadd.f32 %v1851, %v1883
    %v1886 = vtanh.pop %v1884
    %v1887 = vtanh.pop %v1885
    %v1888 = vsub.f32 1.0, %v1877
    %v1889 = vsub.f32 1.0, %v1879
    %v1890 = vmul.f32 %v1888, %v1886
    %v1891 = vmul.f32 %v1889, %v1887
    %v1892 = vmul.f32 %v1877, %v1756
    %v1893 = vmul.f32 %v1879, %v1757
    %v1894 = vadd.f32 %v1890, %v1892
    %v1895 = vadd.f32 %v1891, %v1893
    %v1896 = vpack.c.bf16 %v1895, %v1894
    %1897 = vmatprep.subr.bf16.mxu0 %v1154
    %1898 = vmatpush1.bf16.msra.mxu0 %v1153
    %1899 = vmatprep.subr.bf16.mxu0 %v1157
    %1900 = vmatpush1.bf16.msra.mxu0 %v1156
    %1901 = vmatprep.subr.bf16.mxu0 %v1160
    %1902 = vmatpush1.bf16.msra.mxu0 %v1159
    %1903 = vmatprep.subr.bf16.mxu0 %v1163
    %1904 = vmatpush1.bf16.msra.mxu0 %v1162
    %1905 = vmatprep.subr.bf16.mxu0 %v1166
    %1906 = vmatpush1.bf16.msra.mxu0 %v1165
    %1907 = vmatprep.subr.bf16.mxu0 %v1169
    %1908 = vmatpush1.bf16.msra.mxu0 %v1168
    %1909 = vmatprep.subr.bf16.mxu0 %v1172
    %1910 = vmatpush1.bf16.msra.mxu0 %v1171
    %1911 = vmatprep.subr.bf16.mxu0 %v1175
    %1912 = vmatpush1.bf16.msra.mxu0 %v1174
    %1913 = vmatprep.subr.bf16.mxu0 0
    %1914 = vmatpush1.bf16.msra.mxu0 0
    %1915 = vmatprep.subr.bf16.mxu0 0
    %1916 = vmatpush1.bf16.msra.mxu0 0
    %1917 = vmatprep.subr.bf16.mxu0 0
    %1918 = vmatpush1.bf16.msra.mxu0 0
    %1919 = vmatprep.subr.bf16.mxu0 0
    %1920 = vmatpush1.bf16.msra.mxu0 0
    %1921 = vmatprep.subr.bf16.mxu0 0
    %1922 = vmatpush1.bf16.msra.mxu0 0
    %1923 = vmatprep.subr.bf16.mxu0 0
    %1924 = vmatpush1.bf16.msra.mxu0 0
    %1925 = vmatprep.subr.bf16.mxu0 0
    %1926 = vmatpush1.bf16.msra.mxu0 0
    %1927 = vmatprep.subr.bf16.mxu0 0
    %1928 = vmatpush1.bf16.msra.mxu0 0
    %1929 = vmatprep.mubr.bf16.mxu0 0
    %1930 = vmatmul.mubr.bf16.gmra.mrb[0].mxu0 %v1896
    %v1931 = vpop.f32.mrb[0].mxu0
    %v1932 = vadd.f32 0.0, %v1931
    %v1933 = vpop.f32.mrb[0].mxu0
    %v1934 = vadd.f32 0.0, %v1933
    %v1935 = vpop.f32.mrb[0].mxu0
    %v1936 = vadd.f32 0.0, %v1935
    %v1937 = vpop.f32.mrb[0].mxu0
    %v1938 = vadd.f32 0.0, %v1937
    %1939 = vdwg.mxu0
    %1940 = vmatprep.subr.bf16.mxu0 0
    %1941 = vmatpush1.bf16.msra.mxu0 %v1155
    %1942 = vmatprep.subr.bf16.mxu0 0
    %1943 = vmatpush1.bf16.msra.mxu0 %v1158
    %1944 = vmatprep.subr.bf16.mxu0 0
    %1945 = vmatpush1.bf16.msra.mxu0 %v1161
    %1946 = vmatprep.subr.bf16.mxu0 0
    %1947 = vmatpush1.bf16.msra.mxu0 %v1164
    %1948 = vmatprep.subr.bf16.mxu0 0
    %1949 = vmatpush1.bf16.msra.mxu0 %v1167
    %1950 = vmatprep.subr.bf16.mxu0 0
    %1951 = vmatpush1.bf16.msra.mxu0 %v1170
    %1952 = vmatprep.subr.bf16.mxu0 0
    %1953 = vmatpush1.bf16.msra.mxu0 %v1173
    %1954 = vmatprep.subr.bf16.mxu0 0
    %1955 = vmatpush1.bf16.msra.mxu0 %v1176
    %1956 = vmatprep.subr.bf16.mxu0 0
    %1957 = vmatpush1.bf16.msra.mxu0 0
    %1958 = vmatprep.subr.bf16.mxu0 0
    %1959 = vmatpush1.bf16.msra.mxu0 0
    %1960 = vmatprep.subr.bf16.mxu0 0
    %1961 = vmatpush1.bf16.msra.mxu0 0
    %1962 = vmatprep.subr.bf16.mxu0 0
    %1963 = vmatpush1.bf16.msra.mxu0 0
    %1964 = vmatprep.subr.bf16.mxu0 0
    %1965 = vmatpush1.bf16.msra.mxu0 0
    %1966 = vmatprep.subr.bf16.mxu0 0
    %1967 = vmatpush1.bf16.msra.mxu0 0
    %1968 = vmatprep.subr.bf16.mxu0 0
    %1969 = vmatpush1.bf16.msra.mxu0 0
    %1970 = vmatprep.subr.bf16.mxu0 0
    %1971 = vmatpush1.bf16.msra.mxu0 0
    %1972 = vmatprep.mubr.bf16.mxu0 0
    %1973 = vmatmul.mubr.bf16.gmra.mrb[0].mxu0 %v1896
    %v1974 = vpop.f32.mrb[0].mxu0
    %v1975 = vadd.f32 0.0, %v1974
    %v1976 = vpop.f32.mrb[0].mxu0
    %v1977 = vpop.f32.mrb[0].mxu0
    %v1978 = vadd.f32 0.0, %v1977
    %v1979 = vpop.f32.mrb[0].mxu0
    %1980 = vdwg.mxu0
    %s1981 = smul.u32 10, 3
    %s1982 = smul.addr %s1981, 8
    %s1983 = scalar_lea.vmem [#allocation2], %s1982
    %v1984 = vld [vmem:[%s1983] sm:$0xff]
    %v1985 = vld [vmem:[%s1983 + $0x8] sm:$0xff]
    %v1986 = vld [vmem:[%s1983 + $0x10] sm:$0xff]
    %v1987 = vld [vmem:[%s1983 + $0x18] sm:$0xff]
    %v1988 = vld [vmem:[%s1983 + $0x20] sm:$0xff]
    %v1989 = vld [vmem:[%s1983 + $0x28] sm:$0xff]
    %v1990 = vadd.f32 %v1984, %v1932
    %v1991 = vadd.f32 %v1987, %v1936
    %v1992 = vxor.u32 %v1990, 2147483648
    %v1993 = vxor.u32 %v1991, 2147483648
    %v1994 = vmul.f32 %v1992, 1.442695
    %v1995 = vpow.pop %v1994
    %v1996 = vmul.f32 %v1993, 1.442695
    %v1997 = vpow.pop %v1996
    %v1998 = vadd.f32 %v1995, 1.0
    %v1999 = vadd.f32 %v1997, 1.0
    %v2000 = vrcp.pop %v1998
    %v2001 = vmul.f32 1.0, %v2000
    %v2002 = vrcp.pop %v1999
    %v2003 = vmul.f32 1.0, %v2002
    %v2004 = vadd.f32 %v1985, %v1934
    %v2005 = vadd.f32 %v1988, %v1938
    %v2006 = vxor.u32 %v2004, 2147483648
    %v2007 = vxor.u32 %v2005, 2147483648
    %v2008 = vmul.f32 %v2006, 1.442695
    %v2009 = vpow.pop %v2008
    %v2010 = vmul.f32 %v2007, 1.442695
    %v2011 = vpow.pop %v2010
    %v2012 = vadd.f32 %v2009, 1.0
    %v2013 = vadd.f32 %v2011, 1.0
    %v2014 = vrcp.pop %v2012
    %v2015 = vmul.f32 1.0, %v2014
    %v2016 = vrcp.pop %v2013
    %v2017 = vmul.f32 1.0, %v2016
    %v2018 = vadd.f32 %v1975, %v1326
    %v2019 = vadd.f32 %v1978, %v1326
    %v2020 = vmul.f32 %v2001, %v2018
    %v2021 = vmul.f32 %v2003, %v2019
    %v2022 = vadd.f32 %v1986, %v2020
    %v2023 = vadd.f32 %v1989, %v2021
    %v2024 = vtanh.pop %v2022
    %v2025 = vtanh.pop %v2023
    %v2026 = vsub.f32 1.0, %v2015
    %v2027 = vsub.f32 1.0, %v2017
    %v2028 = vmul.f32 %v2026, %v2024
    %v2029 = vmul.f32 %v2027, %v2025
    %v2030 = vmul.f32 %v2015, %v1894
    %v2031 = vmul.f32 %v2017, %v1895
    %v2032 = vadd.f32 %v2028, %v2030
    %v2033 = vadd.f32 %v2029, %v2031
    %v2034 = vpack.c.bf16 %v2033, %v2032
    %2035 = vmatprep.subr.bf16.mxu0 %v1154
    %2036 = vmatpush1.bf16.msra.mxu0 %v1153
    %2037 = vmatprep.subr.bf16.mxu0 %v1157
    %2038 = vmatpush1.bf16.msra.mxu0 %v1156
    %2039 = vmatprep.subr.bf16.mxu0 %v1160
    %2040 = vmatpush1.bf16.msra.mxu0 %v1159
    %2041 = vmatprep.subr.bf16.mxu0 %v1163
    %2042 = vmatpush1.bf16.msra.mxu0 %v1162
    %2043 = vmatprep.subr.bf16.mxu0 %v1166
    %2044 = vmatpush1.bf16.msra.mxu0 %v1165
    %2045 = vmatprep.subr.bf16.mxu0 %v1169
    %2046 = vmatpush1.bf16.msra.mxu0 %v1168
    %2047 = vmatprep.subr.bf16.mxu0 %v1172
    %2048 = vmatpush1.bf16.msra.mxu0 %v1171
    %2049 = vmatprep.subr.bf16.mxu0 %v1175
    %2050 = vmatpush1.bf16.msra.mxu0 %v1174
    %2051 = vmatprep.subr.bf16.mxu0 0
    %2052 = vmatpush1.bf16.msra.mxu0 0
    %2053 = vmatprep.subr.bf16.mxu0 0
    %2054 = vmatpush1.bf16.msra.mxu0 0
    %2055 = vmatprep.subr.bf16.mxu0 0
    %2056 = vmatpush1.bf16.msra.mxu0 0
    %2057 = vmatprep.subr.bf16.mxu0 0
    %2058 = vmatpush1.bf16.msra.mxu0 0
    %2059 = vmatprep.subr.bf16.mxu0 0
    %2060 = vmatpush1.bf16.msra.mxu0 0
    %2061 = vmatprep.subr.bf16.mxu0 0
    %2062 = vmatpush1.bf16.msra.mxu0 0
    %2063 = vmatprep.subr.bf16.mxu0 0
    %2064 = vmatpush1.bf16.msra.mxu0 0
    %2065 = vmatprep.subr.bf16.mxu0 0
    %2066 = vmatpush1.bf16.msra.mxu0 0
    %2067 = vmatprep.mubr.bf16.mxu0 0
    %2068 = vmatmul.mubr.bf16.gmra.mrb[0].mxu0 %v2034
    %v2069 = vpop.f32.mrb[0].mxu0
    %v2070 = vadd.f32 0.0, %v2069
    %v2071 = vpop.f32.mrb[0].mxu0
    %v2072 = vadd.f32 0.0, %v2071
    %v2073 = vpop.f32.mrb[0].mxu0
    %v2074 = vadd.f32 0.0, %v2073
    %v2075 = vpop.f32.mrb[0].mxu0
    %v2076 = vadd.f32 0.0, %v2075
    %2077 = vdwg.mxu0
    %2078 = vmatprep.subr.bf16.mxu0 0
    %2079 = vmatpush1.bf16.msra.mxu0 %v1155
    %2080 = vmatprep.subr.bf16.mxu0 0
    %2081 = vmatpush1.bf16.msra.mxu0 %v1158
    %2082 = vmatprep.subr.bf16.mxu0 0
    %2083 = vmatpush1.bf16.msra.mxu0 %v1161
    %2084 = vmatprep.subr.bf16.mxu0 0
    %2085 = vmatpush1.bf16.msra.mxu0 %v1164
    %2086 = vmatprep.subr.bf16.mxu0 0
    %2087 = vmatpush1.bf16.msra.mxu0 %v1167
    %2088 = vmatprep.subr.bf16.mxu0 0
    %2089 = vmatpush1.bf16.msra.mxu0 %v1170
    %2090 = vmatprep.subr.bf16.mxu0 0
    %2091 = vmatpush1.bf16.msra.mxu0 %v1173
    %2092 = vmatprep.subr.bf16.mxu0 0
    %2093 = vmatpush1.bf16.msra.mxu0 %v1176
    %2094 = vmatprep.subr.bf16.mxu0 0
    %2095 = vmatpush1.bf16.msra.mxu0 0
    %2096 = vmatprep.subr.bf16.mxu0 0
    %2097 = vmatpush1.bf16.msra.mxu0 0
    %2098 = vmatprep.subr.bf16.mxu0 0
    %2099 = vmatpush1.bf16.msra.mxu0 0
    %2100 = vmatprep.subr.bf16.mxu0 0
    %2101 = vmatpush1.bf16.msra.mxu0 0
    %2102 = vmatprep.subr.bf16.mxu0 0
    %2103 = vmatpush1.bf16.msra.mxu0 0
    %2104 = vmatprep.subr.bf16.mxu0 0
    %2105 = vmatpush1.bf16.msra.mxu0 0
    %2106 = vmatprep.subr.bf16.mxu0 0
    %2107 = vmatpush1.bf16.msra.mxu0 0
    %2108 = vmatprep.subr.bf16.mxu0 0
    %2109 = vmatpush1.bf16.msra.mxu0 0
    %2110 = vmatprep.mubr.bf16.mxu0 0
    %2111 = vmatmul.mubr.bf16.gmra.mrb[0].mxu0 %v2034
    %v2112 = vpop.f32.mrb[0].mxu0
    %v2113 = vadd.f32 0.0, %v2112
    %v2114 = vpop.f32.mrb[0].mxu0
    %v2115 = vpop.f32.mrb[0].mxu0
    %v2116 = vadd.f32 0.0, %v2115
    %v2117 = vpop.f32.mrb[0].mxu0
    %2118 = vdwg.mxu0
    %s2119 = smul.u32 12, 3
    %s2120 = smul.addr %s2119, 8
    %s2121 = scalar_lea.vmem [#allocation2], %s2120
    %v2122 = vld [vmem:[%s2121] sm:$0xff]
    %v2123 = vld [vmem:[%s2121 + $0x8] sm:$0xff]
    %v2124 = vld [vmem:[%s2121 + $0x10] sm:$0xff]
    %v2125 = vld [vmem:[%s2121 + $0x18] sm:$0xff]
    %v2126 = vld [vmem:[%s2121 + $0x20] sm:$0xff]
    %v2127 = vld [vmem:[%s2121 + $0x28] sm:$0xff]
    %v2128 = vadd.f32 %v2122, %v2070
    %v2129 = vadd.f32 %v2125, %v2074
    %v2130 = vxor.u32 %v2128, 2147483648
    %v2131 = vxor.u32 %v2129, 2147483648
    %v2132 = vmul.f32 %v2130, 1.442695
    %v2133 = vpow.pop %v2132
    %v2134 = vmul.f32 %v2131, 1.442695
    %v2135 = vpow.pop %v2134
    %v2136 = vadd.f32 %v2133, 1.0
    %v2137 = vadd.f32 %v2135, 1.0
    %v2138 = vrcp.pop %v2136
    %v2139 = vmul.f32 1.0, %v2138
    %v2140 = vrcp.pop %v2137
    %v2141 = vmul.f32 1.0, %v2140
    %v2142 = vadd.f32 %v2123, %v2072
    %v2143 = vadd.f32 %v2126, %v2076
    %v2144 = vxor.u32 %v2142, 2147483648
    %v2145 = vxor.u32 %v2143, 2147483648
    %v2146 = vmul.f32 %v2144, 1.442695
    %v2147 = vpow.pop %v2146
    %v2148 = vmul.f32 %v2145, 1.442695
    %v2149 = vpow.pop %v2148
    %v2150 = vadd.f32 %v2147, 1.0
    %v2151 = vadd.f32 %v2149, 1.0
    %v2152 = vrcp.pop %v2150
    %v2153 = vmul.f32 1.0, %v2152
    %v2154 = vrcp.pop %v2151
    %v2155 = vmul.f32 1.0, %v2154
    %v2156 = vadd.f32 %v2113, %v1326
    %v2157 = vadd.f32 %v2116, %v1326
    %v2158 = vmul.f32 %v2139, %v2156
    %v2159 = vmul.f32 %v2141, %v2157
    %v2160 = vadd.f32 %v2124, %v2158
    %v2161 = vadd.f32 %v2127, %v2159
    %v2162 = vtanh.pop %v2160
    %v2163 = vtanh.pop %v2161
    %v2164 = vsub.f32 1.0, %v2153
    %v2165 = vsub.f32 1.0, %v2155
    %v2166 = vmul.f32 %v2164, %v2162
    %v2167 = vmul.f32 %v2165, %v2163
    %v2168 = vmul.f32 %v2153, %v2032
    %v2169 = vmul.f32 %v2155, %v2033
    %v2170 = vadd.f32 %v2166, %v2168
    %v2171 = vadd.f32 %v2167, %v2169
    %v2172 = vpack.c.bf16 %v2171, %v2170
    %2173 = vmatprep.subr.bf16.mxu0 %v1154
    %2174 = vmatpush1.bf16.msra.mxu0 %v1153
    %2175 = vmatprep.subr.bf16.mxu0 %v1157
    %2176 = vmatpush1.bf16.msra.mxu0 %v1156
    %2177 = vmatprep.subr.bf16.mxu0 %v1160
    %2178 = vmatpush1.bf16.msra.mxu0 %v1159
    %2179 = vmatprep.subr.bf16.mxu0 %v1163
    %2180 = vmatpush1.bf16.msra.mxu0 %v1162
    %2181 = vmatprep.subr.bf16.mxu0 %v1166
    %2182 = vmatpush1.bf16.msra.mxu0 %v1165
    %2183 = vmatprep.subr.bf16.mxu0 %v1169
    %2184 = vmatpush1.bf16.msra.mxu0 %v1168
    %2185 = vmatprep.subr.bf16.mxu0 %v1172
    %2186 = vmatpush1.bf16.msra.mxu0 %v1171
    %2187 = vmatprep.subr.bf16.mxu0 %v1175
    %2188 = vmatpush1.bf16.msra.mxu0 %v1174
    %2189 = vmatprep.subr.bf16.mxu0 0
    %2190 = vmatpush1.bf16.msra.mxu0 0
    %2191 = vmatprep.subr.bf16.mxu0 0
    %2192 = vmatpush1.bf16.msra.mxu0 0
    %2193 = vmatprep.subr.bf16.mxu0 0
    %2194 = vmatpush1.bf16.msra.mxu0 0
    %2195 = vmatprep.subr.bf16.mxu0 0
    %2196 = vmatpush1.bf16.msra.mxu0 0
    %2197 = vmatprep.subr.bf16.mxu0 0
    %2198 = vmatpush1.bf16.msra.mxu0 0
    %2199 = vmatprep.subr.bf16.mxu0 0
    %2200 = vmatpush1.bf16.msra.mxu0 0
    %2201 = vmatprep.subr.bf16.mxu0 0
    %2202 = vmatpush1.bf16.msra.mxu0 0
    %2203 = vmatprep.subr.bf16.mxu0 0
    %2204 = vmatpush1.bf16.msra.mxu0 0
    %2205 = vmatprep.mubr.bf16.mxu0 0
    %2206 = vmatmul.mubr.bf16.gmra.mrb[0].mxu0 %v2172
    %v2207 = vpop.f32.mrb[0].mxu0
    %v2208 = vadd.f32 0.0, %v2207
    %v2209 = vpop.f32.mrb[0].mxu0
    %v2210 = vadd.f32 0.0, %v2209
    %v2211 = vpop.f32.mrb[0].mxu0
    %v2212 = vadd.f32 0.0, %v2211
    %v2213 = vpop.f32.mrb[0].mxu0
    %v2214 = vadd.f32 0.0, %v2213
    %2215 = vdwg.mxu0
    %2216 = vmatprep.subr.bf16.mxu0 0
    %2217 = vmatpush1.bf16.msra.mxu0 %v1155
    %2218 = vmatprep.subr.bf16.mxu0 0
    %2219 = vmatpush1.bf16.msra.mxu0 %v1158
    %2220 = vmatprep.subr.bf16.mxu0 0
    %2221 = vmatpush1.bf16.msra.mxu0 %v1161
    %2222 = vmatprep.subr.bf16.mxu0 0
    %2223 = vmatpush1.bf16.msra.mxu0 %v1164
    %2224 = vmatprep.subr.bf16.mxu0 0
    %2225 = vmatpush1.bf16.msra.mxu0 %v1167
    %2226 = vmatprep.subr.bf16.mxu0 0
    %2227 = vmatpush1.bf16.msra.mxu0 %v1170
    %2228 = vmatprep.subr.bf16.mxu0 0
    %2229 = vmatpush1.bf16.msra.mxu0 %v1173
    %2230 = vmatprep.subr.bf16.mxu0 0
    %2231 = vmatpush1.bf16.msra.mxu0 %v1176
    %2232 = vmatprep.subr.bf16.mxu0 0
    %2233 = vmatpush1.bf16.msra.mxu0 0
    %2234 = vmatprep.subr.bf16.mxu0 0
    %2235 = vmatpush1.bf16.msra.mxu0 0
    %2236 = vmatprep.subr.bf16.mxu0 0
    %2237 = vmatpush1.bf16.msra.mxu0 0
    %2238 = vmatprep.subr.bf16.mxu0 0
    %2239 = vmatpush1.bf16.msra.mxu0 0
    %2240 = vmatprep.subr.bf16.mxu0 0
    %2241 = vmatpush1.bf16.msra.mxu0 0
    %2242 = vmatprep.subr.bf16.mxu0 0
    %2243 = vmatpush1.bf16.msra.mxu0 0
    %2244 = vmatprep.subr.bf16.mxu0 0
    %2245 = vmatpush1.bf16.msra.mxu0 0
    %2246 = vmatprep.subr.bf16.mxu0 0
    %2247 = vmatpush1.bf16.msra.mxu0 0
    %2248 = vmatprep.mubr.bf16.mxu0 0
    %2249 = vmatmul.mubr.bf16.gmra.mrb[0].mxu0 %v2172
    %v2250 = vpop.f32.mrb[0].mxu0
    %v2251 = vadd.f32 0.0, %v2250
    %v2252 = vpop.f32.mrb[0].mxu0
    %v2253 = vpop.f32.mrb[0].mxu0
    %v2254 = vadd.f32 0.0, %v2253
    %v2255 = vpop.f32.mrb[0].mxu0
    %2256 = vdwg.mxu0
    %s2257 = smul.u32 14, 3
    %s2258 = smul.addr %s2257, 8
    %s2259 = scalar_lea.vmem [#allocation2], %s2258
    %v2260 = vld [vmem:[%s2259] sm:$0xff]
    %v2261 = vld [vmem:[%s2259 + $0x8] sm:$0xff]
    %v2262 = vld [vmem:[%s2259 + $0x10] sm:$0xff]
    %v2263 = vld [vmem:[%s2259 + $0x18] sm:$0xff]
    %v2264 = vld [vmem:[%s2259 + $0x20] sm:$0xff]
    %v2265 = vld [vmem:[%s2259 + $0x28] sm:$0xff]
    %v2266 = vadd.f32 %v2260, %v2208
    %v2267 = vadd.f32 %v2263, %v2212
    %v2268 = vxor.u32 %v2266, 2147483648
    %v2269 = vxor.u32 %v2267, 2147483648
    %v2270 = vmul.f32 %v2268, 1.442695
    %v2271 = vpow.pop %v2270
    %v2272 = vmul.f32 %v2269, 1.442695
    %v2273 = vpow.pop %v2272
    %v2274 = vadd.f32 %v2271, 1.0
    %v2275 = vadd.f32 %v2273, 1.0
    %v2276 = vrcp.pop %v2274
    %v2277 = vmul.f32 1.0, %v2276
    %v2278 = vrcp.pop %v2275
    %v2279 = vmul.f32 1.0, %v2278
    %v2280 = vadd.f32 %v2261, %v2210
    %v2281 = vadd.f32 %v2264, %v2214
    %v2282 = vxor.u32 %v2280, 2147483648
    %v2283 = vxor.u32 %v2281, 2147483648
    %v2284 = vmul.f32 %v2282, 1.442695
    %v2285 = vpow.pop %v2284
    %v2286 = vmul.f32 %v2283, 1.442695
    %v2287 = vpow.pop %v2286
    %v2288 = vadd.f32 %v2285, 1.0
    %v2289 = vadd.f32 %v2287, 1.0
    %v2290 = vrcp.pop %v2288
    %v2291 = vmul.f32 1.0, %v2290
    %v2292 = vrcp.pop %v2289
    %v2293 = vmul.f32 1.0, %v2292
    %v2294 = vadd.f32 %v2251, %v1326
    %v2295 = vadd.f32 %v2254, %v1326
    %v2296 = vmul.f32 %v2277, %v2294
    %v2297 = vmul.f32 %v2279, %v2295
    %v2298 = vadd.f32 %v2262, %v2296
    %v2299 = vadd.f32 %v2265, %v2297
    %v2300 = vtanh.pop %v2298
    %v2301 = vtanh.pop %v2299
    %v2302 = vsub.f32 1.0, %v2291
    %v2303 = vsub.f32 1.0, %v2293
    %v2304 = vmul.f32 %v2302, %v2300
    %v2305 = vmul.f32 %v2303, %v2301
    %v2306 = vmul.f32 %v2291, %v2170
    %v2307 = vmul.f32 %v2293, %v2171
    %v2308 = vadd.f32 %v2304, %v2306
    %v2309 = vadd.f32 %v2305, %v2307
    %v2310 = vld [vmem:[%s6] sm:$0xff]
    %v2311 = vld [vmem:[%s6 + $0x8] sm:$0xf]
    %v2312 = vld [vmem:[%s6 + $0xc] sm:$0xff]
    %v2313 = vld [vmem:[%s6 + $0x14] sm:$0xf]
    %v2314 = vld [vmem:[%s6 + $0x18] sm:$0xff]
    %v2315 = vld [vmem:[%s6 + $0x20] sm:$0xf]
    %v2316 = vld [vmem:[%s6 + $0x24] sm:$0xff]
    %v2317 = vld [vmem:[%s6 + $0x2c] sm:$0xf]
    %v2318 = vld [vmem:[%s6 + $0x30] sm:$0xff]
    %v2319 = vld [vmem:[%s6 + $0x38] sm:$0xf]
    %v2320 = vld [vmem:[%s6 + $0x3c] sm:$0xff]
    %v2321 = vld [vmem:[%s6 + $0x44] sm:$0xf]
    %v2322 = vld [vmem:[%s6 + $0x48] sm:$0xff]
    %v2323 = vld [vmem:[%s6 + $0x50] sm:$0xf]
    %v2324 = vld [vmem:[%s6 + $0x54] sm:$0xff]
    %v2325 = vld [vmem:[%s6 + $0x5c] sm:$0xf]
    %v2326 = vld [vmem:[%s6 + $0x60] sm:$0xff]
    %v2327 = vld [vmem:[%s6 + $0x68] sm:$0xf]
    %v2328 = vld [vmem:[%s6 + $0x6c] sm:$0xff]
    %v2329 = vld [vmem:[%s6 + $0x74] sm:$0xf]
    %v2330 = vld [vmem:[%s6 + $0x78] sm:$0xff]
    %v2331 = vld [vmem:[%s6 + $0x80] sm:$0xf]
    %v2332 = vld [vmem:[%s6 + $0x84] sm:$0xff]
    %v2333 = vld [vmem:[%s6 + $0x8c] sm:$0xf]
    %v2334 = vld [vmem:[%s6 + $0x90] sm:$0xff]
    %v2335 = vld [vmem:[%s6 + $0x98] sm:$0xf]
    %v2336 = vld [vmem:[%s6 + $0x9c] sm:$0xff]
    %v2337 = vld [vmem:[%s6 + $0xa4] sm:$0xf]
    %v2338 = vld [vmem:[%s6 + $0xa8] sm:$0xff]
    %v2339 = vld [vmem:[%s6 + $0xb0] sm:$0xf]
    %v2340 = vld [vmem:[%s6 + $0xb4] sm:$0xff]
    %v2341 = vld [vmem:[%s6 + $0xbc] sm:$0xf]
    %v2342 = vld [vmem:[%s6 + $0xc0] sm:$0xff]
    %v2343 = vld [vmem:[%s6 + $0xc8] sm:$0xf]
    %v2344 = vld [vmem:[%s6 + $0xcc] sm:$0xff]
    %v2345 = vld [vmem:[%s6 + $0xd4] sm:$0xf]
    %v2346 = vld [vmem:[%s6 + $0xd8] sm:$0xff]
    %v2347 = vld [vmem:[%s6 + $0xe0] sm:$0xf]
    %v2348 = vld [vmem:[%s6 + $0xe4] sm:$0xff]
    %v2349 = vld [vmem:[%s6 + $0xec] sm:$0xf]
    %v2350 = vld [vmem:[%s6 + $0xf0] sm:$0xff]
    %v2351 = vld [vmem:[%s6 + $0xf8] sm:$0xf]
    %v2352 = vld [vmem:[%s6 + $0xfc] sm:$0xff]
    %v2353 = vld [vmem:[%s6 + $0x104] sm:$0xf]
    %v2354 = vld [vmem:[%s6 + $0x108] sm:$0xff]
    %v2355 = vld [vmem:[%s6 + $0x110] sm:$0xf]
    %v2356 = vld [vmem:[%s6 + $0x114] sm:$0xff]
    %v2357 = vld [vmem:[%s6 + $0x11c] sm:$0xf]
    %v2358 = vld [vmem:[%s6 + $0x120] sm:$0xff]
    %v2359 = vld [vmem:[%s6 + $0x128] sm:$0xf]
    %v2360 = vld [vmem:[%s6 + $0x12c] sm:$0xff]
    %v2361 = vld [vmem:[%s6 + $0x134] sm:$0xf]
    %v2362 = vld [vmem:[%s6 + $0x138] sm:$0xff]
    %v2363 = vld [vmem:[%s6 + $0x140] sm:$0xf]
    %v2364 = vld [vmem:[%s6 + $0x144] sm:$0xff]
    %v2365 = vld [vmem:[%s6 + $0x14c] sm:$0xf]
    %v2366 = vld [vmem:[%s6 + $0x150] sm:$0xff]
    %v2367 = vld [vmem:[%s6 + $0x158] sm:$0xf]
    %v2368 = vld [vmem:[%s6 + $0x15c] sm:$0xff]
    %v2369 = vld [vmem:[%s6 + $0x164] sm:$0xf]
    %v2370 = vld [vmem:[%s6 + $0x168] sm:$0xff]
    %v2371 = vld [vmem:[%s6 + $0x170] sm:$0xf]
    %v2372 = vld [vmem:[%s6 + $0x174] sm:$0xff]
    %v2373 = vld [vmem:[%s6 + $0x17c] sm:$0xf]
    %v2374 = vld [vmem:[%s0 + $0x38] sm:$0xf]
    %v2375 = vld [vmem:[%s0 + $0x3c] sm:$0xf]
    %v2376 = vld [vmem:[%s1 + $0x38] sm:$0xf]
    %v2377 = vld [vmem:[%s1 + $0x3c] sm:$0xf]
    %v2380 = vunpack.c.l.b16 %v2376
    %v2381 = vunpack.c.l.b16 %v2377
    %v2382 = vpack.c.b16 %v2381, %v2380
    %v2416 = vunpack.c.l.b16 %v2342
    %v2417 = vunpack.c.h.b16 %v2342
    %v2418 = vunpack.c.l.b16 %v2343
    %v2419 = vunpack.c.l.b16 %v2344
    %v2420 = vunpack.c.h.b16 %v2344
    %v2421 = vunpack.c.l.b16 %v2345
    %v2422 = vunpack.c.l.b16 %v2346
    %v2423 = vunpack.c.h.b16 %v2346
    %v2424 = vunpack.c.l.b16 %v2347
    %v2425 = vunpack.c.l.b16 %v2348
    %v2426 = vunpack.c.h.b16 %v2348
    %v2427 = vunpack.c.l.b16 %v2349
    %v2428 = vunpack.c.l.b16 %v2350
    %v2429 = vunpack.c.h.b16 %v2350
    %v2430 = vunpack.c.l.b16 %v2351
    %v2431 = vunpack.c.l.b16 %v2352
    %v2432 = vunpack.c.h.b16 %v2352
    %v2433 = vunpack.c.l.b16 %v2353
    %v2434 = vunpack.c.l.b16 %v2354
    %v2435 = vunpack.c.h.b16 %v2354
    %v2436 = vunpack.c.l.b16 %v2355
    %v2437 = vunpack.c.l.b16 %v2356
    %v2438 = vunpack.c.h.b16 %v2356
    %v2439 = vunpack.c.l.b16 %v2357
    %v2440 = vunpack.c.l.b16 %v2358
    %v2441 = vunpack.c.h.b16 %v2358
    %v2442 = vunpack.c.l.b16 %v2359
    %v2443 = vunpack.c.l.b16 %v2360
    %v2444 = vunpack.c.h.b16 %v2360
    %v2445 = vunpack.c.l.b16 %v2361
    %v2446 = vunpack.c.l.b16 %v2362
    %v2447 = vunpack.c.h.b16 %v2362
    %v2448 = vunpack.c.l.b16 %v2363
    %v2449 = vunpack.c.l.b16 %v2364
    %v2450 = vunpack.c.h.b16 %v2364
    %v2451 = vunpack.c.l.b16 %v2365
    %v2452 = vunpack.c.l.b16 %v2366
    %v2453 = vunpack.c.h.b16 %v2366
    %v2454 = vunpack.c.l.b16 %v2367
    %v2455 = vunpack.c.l.b16 %v2368
    %v2456 = vunpack.c.h.b16 %v2368
    %v2457 = vunpack.c.l.b16 %v2369
    %v2458 = vunpack.c.l.b16 %v2370
    %v2459 = vunpack.c.h.b16 %v2370
    %v2460 = vunpack.c.l.b16 %v2371
    %v2461 = vunpack.c.l.b16 %v2372
    %v2462 = vunpack.c.h.b16 %v2372
    %v2463 = vunpack.c.l.b16 %v2373
    %v2464 = vpack.c.b16 %v2419, %v2416
    %v2465 = vpack.c.b16 %v2420, %v2417
    %v2466 = vpack.c.b16 %v2421, %v2418
    %v2467 = vpack.c.b16 %v2425, %v2422
    %v2468 = vpack.c.b16 %v2426, %v2423
    %v2469 = vpack.c.b16 %v2427, %v2424
    %v2470 = vpack.c.b16 %v2431, %v2428
    %v2471 = vpack.c.b16 %v2432, %v2429
    %v2472 = vpack.c.b16 %v2433, %v2430
    %v2473 = vpack.c.b16 %v2437, %v2434
    %v2474 = vpack.c.b16 %v2438, %v2435
    %v2475 = vpack.c.b16 %v2439, %v2436
    %v2476 = vpack.c.b16 %v2443, %v2440
    %v2477 = vpack.c.b16 %v2444, %v2441
    %v2478 = vpack.c.b16 %v2445, %v2442
    %v2479 = vpack.c.b16 %v2449, %v2446
    %v2480 = vpack.c.b16 %v2450, %v2447
    %v2481 = vpack.c.b16 %v2451, %v2448
    %v2482 = vpack.c.b16 %v2455, %v2452
    %v2483 = vpack.c.b16 %v2456, %v2453
    %v2484 = vpack.c.b16 %v2457, %v2454
    %v2485 = vpack.c.b16 %v2461, %v2458
    %v2486 = vpack.c.b16 %v2462, %v2459
    %v2487 = vpack.c.b16 %v2463, %v2460
    %2512 = vmatprep.subr.bf16.mxu0 %v2465
    %2513 = vmatpush1.bf16.msra.mxu0 %v2464
    %2514 = vmatprep.subr.bf16.mxu0 %v2468
    %2515 = vmatpush1.bf16.msra.mxu0 %v2467
    %2516 = vmatprep.subr.bf16.mxu0 %v2471
    %2517 = vmatpush1.bf16.msra.mxu0 %v2470
    %2518 = vmatprep.subr.bf16.mxu0 %v2474
    %2519 = vmatpush1.bf16.msra.mxu0 %v2473
    %2520 = vmatprep.subr.bf16.mxu0 %v2477
    %2521 = vmatpush1.bf16.msra.mxu0 %v2476
    %2522 = vmatprep.subr.bf16.mxu0 %v2480
    %2523 = vmatpush1.bf16.msra.mxu0 %v2479
    %2524 = vmatprep.subr.bf16.mxu0 %v2483
    %2525 = vmatpush1.bf16.msra.mxu0 %v2482
    %2526 = vmatprep.subr.bf16.mxu0 %v2486
    %2527 = vmatpush1.bf16.msra.mxu0 %v2485
    %2528 = vmatprep.subr.bf16.mxu0 0
    %2529 = vmatpush1.bf16.msra.mxu0 0
    %2530 = vmatprep.subr.bf16.mxu0 0
    %2531 = vmatpush1.bf16.msra.mxu0 0
    %2532 = vmatprep.subr.bf16.mxu0 0
    %2533 = vmatpush1.bf16.msra.mxu0 0
    %2534 = vmatprep.subr.bf16.mxu0 0
    %2535 = vmatpush1.bf16.msra.mxu0 0
    %2536 = vmatprep.subr.bf16.mxu0 0
    %2537 = vmatpush1.bf16.msra.mxu0 0
    %2538 = vmatprep.subr.bf16.mxu0 0
    %2539 = vmatpush1.bf16.msra.mxu0 0
    %2540 = vmatprep.subr.bf16.mxu0 0
    %2541 = vmatpush1.bf16.msra.mxu0 0
    %2542 = vmatprep.subr.bf16.mxu0 0
    %2543 = vmatpush1.bf16.msra.mxu0 0
    %2544 = vmatprep.mubr.bf16.mxu0 0
    %2545 = vmatmul.mubr.bf16.gmra.mrb[0].mxu0 %v2382
    %v2546 = vpop.f32.mrb[0].mxu0
    %v2547 = vadd.f32 0.0, %v2546
    %v2548 = vpop.f32.mrb[0].mxu0
    %v2549 = vadd.f32 0.0, %v2548
    %v2550 = vpop.f32.mrb[0].mxu0
    %v2551 = vadd.f32 0.0, %v2550
    %v2552 = vpop.f32.mrb[0].mxu0
    %v2553 = vadd.f32 0.0, %v2552
    %2554 = vdwg.mxu0
    %2555 = vmatprep.subr.bf16.mxu0 0
    %2556 = vmatpush1.bf16.msra.mxu0 %v2466
    %2557 = vmatprep.subr.bf16.mxu0 0
    %2558 = vmatpush1.bf16.msra.mxu0 %v2469
    %2559 = vmatprep.subr.bf16.mxu0 0
    %2560 = vmatpush1.bf16.msra.mxu0 %v2472
    %2561 = vmatprep.subr.bf16.mxu0 0
    %2562 = vmatpush1.bf16.msra.mxu0 %v2475
    %2563 = vmatprep.subr.bf16.mxu0 0
    %2564 = vmatpush1.bf16.msra.mxu0 %v2478
    %2565 = vmatprep.subr.bf16.mxu0 0
    %2566 = vmatpush1.bf16.msra.mxu0 %v2481
    %2567 = vmatprep.subr.bf16.mxu0 0
    %2568 = vmatpush1.bf16.msra.mxu0 %v2484
    %2569 = vmatprep.subr.bf16.mxu0 0
    %2570 = vmatpush1.bf16.msra.mxu0 %v2487
    %2571 = vmatprep.subr.bf16.mxu0 0
    %2572 = vmatpush1.bf16.msra.mxu0 0
    %2573 = vmatprep.subr.bf16.mxu0 0
    %2574 = vmatpush1.bf16.msra.mxu0 0
    %2575 = vmatprep.subr.bf16.mxu0 0
    %2576 = vmatpush1.bf16.msra.mxu0 0
    %2577 = vmatprep.subr.bf16.mxu0 0
    %2578 = vmatpush1.bf16.msra.mxu0 0
    %2579 = vmatprep.subr.bf16.mxu0 0
    %2580 = vmatpush1.bf16.msra.mxu0 0
    %2581 = vmatprep.subr.bf16.mxu0 0
    %2582 = vmatpush1.bf16.msra.mxu0 0
    %2583 = vmatprep.subr.bf16.mxu0 0
    %2584 = vmatpush1.bf16.msra.mxu0 0
    %2585 = vmatprep.subr.bf16.mxu0 0
    %2586 = vmatpush1.bf16.msra.mxu0 0
    %2587 = vmatprep.mubr.bf16.mxu0 0
    %2588 = vmatmul.mubr.bf16.gmra.mrb[0].mxu0 %v2382
    %v2589 = vpop.f32.mrb[0].mxu0
    %v2590 = vadd.f32 0.0, %v2589
    %v2591 = vpop.f32.mrb[0].mxu0
    %v2592 = vpop.f32.mrb[0].mxu0
    %v2593 = vadd.f32 0.0, %v2592
    %v2594 = vpop.f32.mrb[0].mxu0
    %2595 = vdwg.mxu0
    %v2598 = vunpack.c.l.b16 %v2374
    %v2599 = vunpack.c.l.b16 %v2375
    %v2600 = vpack.c.b16 %v2599, %v2598
    %v2634 = vunpack.c.l.b16 %v2310
    %v2635 = vunpack.c.h.b16 %v2310
    %v2636 = vunpack.c.l.b16 %v2311
    %v2637 = vunpack.c.l.b16 %v2312
    %v2638 = vunpack.c.h.b16 %v2312
    %v2639 = vunpack.c.l.b16 %v2313
    %v2640 = vunpack.c.l.b16 %v2314
    %v2641 = vunpack.c.h.b16 %v2314
    %v2642 = vunpack.c.l.b16 %v2315
    %v2643 = vunpack.c.l.b16 %v2316
    %v2644 = vunpack.c.h.b16 %v2316
    %v2645 = vunpack.c.l.b16 %v2317
    %v2646 = vunpack.c.l.b16 %v2318
    %v2647 = vunpack.c.h.b16 %v2318
    %v2648 = vunpack.c.l.b16 %v2319
    %v2649 = vunpack.c.l.b16 %v2320
    %v2650 = vunpack.c.h.b16 %v2320
    %v2651 = vunpack.c.l.b16 %v2321
    %v2652 = vunpack.c.l.b16 %v2322
    %v2653 = vunpack.c.h.b16 %v2322
    %v2654 = vunpack.c.l.b16 %v2323
    %v2655 = vunpack.c.l.b16 %v2324
    %v2656 = vunpack.c.h.b16 %v2324
    %v2657 = vunpack.c.l.b16 %v2325
    %v2658 = vunpack.c.l.b16 %v2326
    %v2659 = vunpack.c.h.b16 %v2326
    %v2660 = vunpack.c.l.b16 %v2327
    %v2661 = vunpack.c.l.b16 %v2328
    %v2662 = vunpack.c.h.b16 %v2328
    %v2663 = vunpack.c.l.b16 %v2329
    %v2664 = vunpack.c.l.b16 %v2330
    %v2665 = vunpack.c.h.b16 %v2330
    %v2666 = vunpack.c.l.b16 %v2331
    %v2667 = vunpack.c.l.b16 %v2332
    %v2668 = vunpack.c.h.b16 %v2332
    %v2669 = vunpack.c.l.b16 %v2333
    %v2670 = vunpack.c.l.b16 %v2334
    %v2671 = vunpack.c.h.b16 %v2334
    %v2672 = vunpack.c.l.b16 %v2335
    %v2673 = vunpack.c.l.b16 %v2336
    %v2674 = vunpack.c.h.b16 %v2336
    %v2675 = vunpack.c.l.b16 %v2337
    %v2676 = vunpack.c.l.b16 %v2338
    %v2677 = vunpack.c.h.b16 %v2338
    %v2678 = vunpack.c.l.b16 %v2339
    %v2679 = vunpack.c.l.b16 %v2340
    %v2680 = vunpack.c.h.b16 %v2340
    %v2681 = vunpack.c.l.b16 %v2341
    %v2682 = vpack.c.b16 %v2637, %v2634
    %v2683 = vpack.c.b16 %v2638, %v2635
    %v2684 = vpack.c.b16 %v2639, %v2636
    %v2685 = vpack.c.b16 %v2643, %v2640
    %v2686 = vpack.c.b16 %v2644, %v2641
    %v2687 = vpack.c.b16 %v2645, %v2642
    %v2688 = vpack.c.b16 %v2649, %v2646
    %v2689 = vpack.c.b16 %v2650, %v2647
    %v2690 = vpack.c.b16 %v2651, %v2648
    %v2691 = vpack.c.b16 %v2655, %v2652
    %v2692 = vpack.c.b16 %v2656, %v2653
    %v2693 = vpack.c.b16 %v2657, %v2654
    %v2694 = vpack.c.b16 %v2661, %v2658
    %v2695 = vpack.c.b16 %v2662, %v2659
    %v2696 = vpack.c.b16 %v2663, %v2660
    %v2697 = vpack.c.b16 %v2667, %v2664
    %v2698 = vpack.c.b16 %v2668, %v2665
    %v2699 = vpack.c.b16 %v2669, %v2666
    %v2700 = vpack.c.b16 %v2673, %v2670
    %v2701 = vpack.c.b16 %v2674, %v2671
    %v2702 = vpack.c.b16 %v2675, %v2672
    %v2703 = vpack.c.b16 %v2679, %v2676
    %v2704 = vpack.c.b16 %v2680, %v2677
    %v2705 = vpack.c.b16 %v2681, %v2678
    %2730 = vmatprep.subr.bf16.mxu0 %v2683
    %2731 = vmatpush1.bf16.msra.mxu0 %v2682
    %2732 = vmatprep.subr.bf16.mxu0 %v2686
    %2733 = vmatpush1.bf16.msra.mxu0 %v2685
    %2734 = vmatprep.subr.bf16.mxu0 %v2689
    %2735 = vmatpush1.bf16.msra.mxu0 %v2688
    %2736 = vmatprep.subr.bf16.mxu0 %v2692
    %2737 = vmatpush1.bf16.msra.mxu0 %v2691
    %2738 = vmatprep.subr.bf16.mxu0 %v2695
    %2739 = vmatpush1.bf16.msra.mxu0 %v2694
    %2740 = vmatprep.subr.bf16.mxu0 %v2698
    %2741 = vmatpush1.bf16.msra.mxu0 %v2697
    %2742 = vmatprep.subr.bf16.mxu0 %v2701
    %2743 = vmatpush1.bf16.msra.mxu0 %v2700
    %2744 = vmatprep.subr.bf16.mxu0 %v2704
    %2745 = vmatpush1.bf16.msra.mxu0 %v2703
    %2746 = vmatprep.subr.bf16.mxu0 0
    %2747 = vmatpush1.bf16.msra.mxu0 0
    %2748 = vmatprep.subr.bf16.mxu0 0
    %2749 = vmatpush1.bf16.msra.mxu0 0
    %2750 = vmatprep.subr.bf16.mxu0 0
    %2751 = vmatpush1.bf16.msra.mxu0 0
    %2752 = vmatprep.subr.bf16.mxu0 0
    %2753 = vmatpush1.bf16.msra.mxu0 0
    %2754 = vmatprep.subr.bf16.mxu0 0
    %2755 = vmatpush1.bf16.msra.mxu0 0
    %2756 = vmatprep.subr.bf16.mxu0 0
    %2757 = vmatpush1.bf16.msra.mxu0 0
    %2758 = vmatprep.subr.bf16.mxu0 0
    %2759 = vmatpush1.bf16.msra.mxu0 0
    %2760 = vmatprep.subr.bf16.mxu0 0
    %2761 = vmatpush1.bf16.msra.mxu0 0
    %2762 = vmatprep.mubr.bf16.mxu0 0
    %2763 = vmatmul.mubr.bf16.gmra.mrb[0].mxu0 %v2600
    %v2764 = vpop.f32.mrb[0].mxu0
    %v2765 = vadd.f32 %v2547, %v2764
    %v2766 = vpop.f32.mrb[0].mxu0
    %v2767 = vadd.f32 %v2549, %v2766
    %v2768 = vpop.f32.mrb[0].mxu0
    %v2769 = vadd.f32 %v2551, %v2768
    %v2770 = vpop.f32.mrb[0].mxu0
    %v2771 = vadd.f32 %v2553, %v2770
    %2772 = vdwg.mxu0
    %2773 = vmatprep.subr.bf16.mxu0 0
    %2774 = vmatpush1.bf16.msra.mxu0 %v2684
    %2775 = vmatprep.subr.bf16.mxu0 0
    %2776 = vmatpush1.bf16.msra.mxu0 %v2687
    %2777 = vmatprep.subr.bf16.mxu0 0
    %2778 = vmatpush1.bf16.msra.mxu0 %v2690
    %2779 = vmatprep.subr.bf16.mxu0 0
    %2780 = vmatpush1.bf16.msra.mxu0 %v2693
    %2781 = vmatprep.subr.bf16.mxu0 0
    %2782 = vmatpush1.bf16.msra.mxu0 %v2696
    %2783 = vmatprep.subr.bf16.mxu0 0
    %2784 = vmatpush1.bf16.msra.mxu0 %v2699
    %2785 = vmatprep.subr.bf16.mxu0 0
    %2786 = vmatpush1.bf16.msra.mxu0 %v2702
    %2787 = vmatprep.subr.bf16.mxu0 0
    %2788 = vmatpush1.bf16.msra.mxu0 %v2705
    %2789 = vmatprep.subr.bf16.mxu0 0
    %2790 = vmatpush1.bf16.msra.mxu0 0
    %2791 = vmatprep.subr.bf16.mxu0 0
    %2792 = vmatpush1.bf16.msra.mxu0 0
    %2793 = vmatprep.subr.bf16.mxu0 0
    %2794 = vmatpush1.bf16.msra.mxu0 0
    %2795 = vmatprep.subr.bf16.mxu0 0
    %2796 = vmatpush1.bf16.msra.mxu0 0
    %2797 = vmatprep.subr.bf16.mxu0 0
    %2798 = vmatpush1.bf16.msra.mxu0 0
    %2799 = vmatprep.subr.bf16.mxu0 0
    %2800 = vmatpush1.bf16.msra.mxu0 0
    %2801 = vmatprep.subr.bf16.mxu0 0
    %2802 = vmatpush1.bf16.msra.mxu0 0
    %2803 = vmatprep.subr.bf16.mxu0 0
    %2804 = vmatpush1.bf16.msra.mxu0 0
    %2805 = vmatprep.mubr.bf16.mxu0 0
    %2806 = vmatmul.mubr.bf16.gmra.mrb[0].mxu0 %v2600
    %v2807 = vpop.f32.mrb[0].mxu0
    %v2808 = vadd.f32 %v2590, %v2807
    %v2809 = vpop.f32.mrb[0].mxu0
    %v2810 = vpop.f32.mrb[0].mxu0
    %v2811 = vadd.f32 %v2593, %v2810
    %v2812 = vpop.f32.mrb[0].mxu0
    %2813 = vdwg.mxu0
    %v2814 = vld [vmem:[%s7] sm:$0x7]
    %v2816 = vlaneseq
    %v2817 = vshrl.u32 %v2816, 7
    %v2818 = vsub.s32 0, %v2817
    %v2819 = vrot.slane %v2814, %v2818
    %v2820 = vlaneseq
    %v2821 = vshrl.u32 %v2820, 7
    %v2822 = vsub.s32 1, %v2821
    %v2823 = vrot.slane %v2814, %v2822
    %v2824 = vlaneseq
    %v2825 = vshrl.u32 %v2824, 7
    %v2826 = vsub.s32 2, %v2825
    %v2827 = vrot.slane %v2814, %v2826
    %v2831 = vadd.f32 %v2765, %v2819
    %v2832 = vadd.f32 %v2767, %v2823
    %v2833 = vadd.f32 %v2808, %v2827
    %v2834 = vadd.f32 %v2769, %v2819
    %v2835 = vadd.f32 %v2771, %v2823
    %v2836 = vadd.f32 %v2811, %v2827
    %v2837 = vld [vmem:[%s8] sm:$0x1]
    %v2838 = vadd.f32 %v2831, 0.0
    %v2839 = vadd.f32 %v2834, 0.0
    %v2840 = vxor.u32 %v2838, 2147483648
    %v2841 = vxor.u32 %v2839, 2147483648
    %v2842 = vmul.f32 %v2840, 1.442695
    %v2843 = vpow.pop %v2842
    %v2844 = vmul.f32 %v2841, 1.442695
    %v2845 = vpow.pop %v2844
    %v2846 = vadd.f32 %v2843, 1.0
    %v2847 = vadd.f32 %v2845, 1.0
    %v2848 = vrcp.pop %v2846
    %v2849 = vmul.f32 1.0, %v2848
    %v2850 = vrcp.pop %v2847
    %v2851 = vmul.f32 1.0, %v2850
    %v2852 = vadd.f32 %v2832, 0.0
    %v2853 = vadd.f32 %v2835, 0.0
    %v2854 = vxor.u32 %v2852, 2147483648
    %v2855 = vxor.u32 %v2853, 2147483648
    %v2856 = vmul.f32 %v2854, 1.442695
    %v2857 = vpow.pop %v2856
    %v2858 = vmul.f32 %v2855, 1.442695
    %v2859 = vpow.pop %v2858
    %v2860 = vadd.f32 %v2857, 1.0
    %v2861 = vadd.f32 %v2859, 1.0
    %v2862 = vrcp.pop %v2860
    %v2863 = vmul.f32 1.0, %v2862
    %v2864 = vrcp.pop %v2861
    %v2865 = vmul.f32 1.0, %v2864
    %v2867 = vlaneseq
    %v2868 = vshrl.u32 %v2867, 7
    %v2869 = vsub.s32 0, %v2868
    %v2870 = vrot.slane %v2837, %v2869
    %v2872 = vadd.f32 %v2870, 0.0
    %v2873 = vmul.f32 %v2849, %v2872
    %v2874 = vmul.f32 %v2851, %v2872
    %v2875 = vadd.f32 %v2833, %v2873
    %v2876 = vadd.f32 %v2836, %v2874
    %v2877 = vtanh.pop %v2875
    %v2878 = vtanh.pop %v2876
    %v2879 = vsub.f32 1.0, %v2863
    %v2880 = vsub.f32 1.0, %v2865
    %v2881 = vmul.f32 %v2879, %v2877
    %v2882 = vmul.f32 %v2880, %v2878
    %v2883 = vmul.f32 %v2863, 0.0
    %v2884 = vmul.f32 %v2865, 0.0
    %v2885 = vadd.f32 %v2881, %v2883
    %v2886 = vadd.f32 %v2882, %v2884
    %2889 = vrot.lane.b32.xlu0 %v2885, 32
    %v2890 = vpop.permute.xlu0 %2889
    %2891 = vrot.lane.b32.xlu0 %v2886, 32
    %v2892 = vpop.permute.xlu0 %2891
    %vm2895 = vcmask 261120
    %v2896 = vsel %vm2895, %v2308, %v2890
    %v2897 = vsel %vm2895, %v2309, %v2892
    %vm2898 = vcmask 523264
    %v2899 = vsel %vm2898, %v2896, 0.0
    %2900 = vadd.xlane.f32.xlu0 %v2899
    %v2901 = vpop.xlane.xlu0 %2900
    %v2902 = vsel %vm2898, %v2897, 0.0
    %2903 = vadd.xlane.f32.xlu0 %v2902
    %v2904 = vpop.xlane.xlu0 %2903
    %v2905 = vrcp.pop 64.0
    %v2906 = vmul.f32 %v2901, %v2905
    %v2907 = vmul.f32 %v2904, %v2905
    %v2908 = vsub.f32 %v2896, %v2906
    %v2909 = vsub.f32 %v2897, %v2907
    %v2910 = vmul.f32 %v2908, %v2908
    %v2911 = vmul.f32 %v2909, %v2909
    %v2912 = vsel %vm2898, %v2910, 0.0
    %2913 = vadd.xlane.f32.xlu0 %v2912
    %v2914 = vpop.xlane.xlu0 %2913
    %v2915 = vsel %vm2898, %v2911, 0.0
    %2916 = vadd.xlane.f32.xlu0 %v2915
    %v2917 = vpop.xlane.xlu0 %2916
    %v2918 = vmul.f32 %v2914, %v2905
    %v2919 = vmul.f32 %v2917, %v2905
    %v2920 = vadd.f32 %v2918, 1e-05
    %v2921 = vadd.f32 %v2919, 1e-05
    %v2922 = vrsqrt.pop %v2920
    %v2923 = vrsqrt.pop %v2921
    %v2924 = vmul.f32 %v2908, %v2922
    %v2925 = vmul.f32 %v2909, %v2923
    %v2926 = vld [vmem:[%s9] sm:$0x1]
    %v2928 = vlaneseq
    %v2929 = vshrl.u32 %v2928, 7
    %v2930 = vsub.s32 0, %v2929
    %v2931 = vrot.slane %v2926, %v2930
    %v2933 = vmul.f32 %v2924, %v2931
    %v2934 = vmul.f32 %v2925, %v2931
    %v2935 = vld [vmem:[%s10] sm:$0x1]
    %v2937 = vlaneseq
    %v2938 = vshrl.u32 %v2937, 7
    %v2939 = vsub.s32 0, %v2938
    %v2940 = vrot.slane %v2935, %v2939
    %v2942 = vadd.f32 %v2933, %v2940
    %v2943 = vadd.f32 %v2934, %v2940
    %v2944 = vld [vmem:[%s11] sm:$0xff]
    %v2945 = vld [vmem:[%s11 + $0x8] sm:$0xff]
    %v2946 = vld [vmem:[%s11 + $0x10] sm:$0xff]
    %v2947 = vld [vmem:[%s11 + $0x18] sm:$0xff]
    %v2948 = vld [vmem:[%s11 + $0x20] sm:$0xff]
    %v2949 = vld [vmem:[%s11 + $0x28] sm:$0xff]
    %v2950 = vld [vmem:[%s11 + $0x30] sm:$0xff]
    %v2951 = vld [vmem:[%s11 + $0x38] sm:$0xff]
    %v2952 = vld [vmem:[%s12] sm:$0x1]
    %v2954 = vlaneseq
    %v2955 = vshrl.u32 %v2954, 7
    %v2956 = vsub.s32 0, %v2955
    %v2957 = vrot.slane %v2952, %v2956
    %v2960 = vsel %vm2898, %v2942, 0
    %v2963 = vsel %vm2898, %v2943, 0
    %2965 = vmatprep.subr.mxu0 0.0
    %2966 = vmatpush1.msra.mxu0 %v2944
    %2967 = vmatprep.subr.mxu0 0.0
    %2968 = vmatpush1.msra.mxu0 %v2945
    %2969 = vmatprep.subr.mxu0 0.0
    %2970 = vmatpush1.msra.mxu0 %v2946
    %2971 = vmatprep.subr.mxu0 0.0
    %2972 = vmatpush1.msra.mxu0 %v2947
    %2973 = vmatprep.subr.mxu0 0.0
    %2974 = vmatpush1.msra.mxu0 %v2948
    %2975 = vmatprep.subr.mxu0 0.0
    %2976 = vmatpush1.msra.mxu0 %v2949
    %2977 = vmatprep.subr.mxu0 0.0
    %2978 = vmatpush1.msra.mxu0 %v2950
    %2979 = vmatprep.subr.mxu0 0.0
    %2980 = vmatpush1.msra.mxu0 %v2951
    %2981 = vmatprep.subr.mxu0 0.0
    %2982 = vmatpush1.msra.mxu0 0.0
    %2983 = vmatprep.subr.mxu0 0.0
    %2984 = vmatpush1.msra.mxu0 0.0
    %2985 = vmatprep.subr.mxu0 0.0
    %2986 = vmatpush1.msra.mxu0 0.0
    %2987 = vmatprep.subr.mxu0 0.0
    %2988 = vmatpush1.msra.mxu0 0.0
    %2989 = vmatprep.subr.mxu0 0.0
    %2990 = vmatpush1.msra.mxu0 0.0
    %2991 = vmatprep.subr.mxu0 0.0
    %2992 = vmatpush1.msra.mxu0 0.0
    %2993 = vmatprep.subr.mxu0 0.0
    %2994 = vmatpush1.msra.mxu0 0.0
    %2995 = vmatprep.subr.mxu0 0.0
    %2996 = vmatpush1.msra.mxu0 0.0
    %2997 = vmatprep.subr.mxu0 0.0
    %2998 = vmatpush1.msra.mxu0 0.0
    %2999 = vmatprep.subr.mxu0 0.0
    %3000 = vmatpush1.msra.mxu0 0.0
    %3001 = vmatprep.subr.mxu0 0.0
    %3002 = vmatpush1.msra.mxu0 0.0
    %3003 = vmatprep.subr.mxu0 0.0
    %3004 = vmatpush1.msra.mxu0 0.0
    %3005 = vmatprep.subr.mxu0 0.0
    %3006 = vmatpush1.msra.mxu0 0.0
    %3007 = vmatprep.subr.mxu0 0.0
    %3008 = vmatpush1.msra.mxu0 0.0
    %3009 = vmatprep.subr.mxu0 0.0
    %3010 = vmatpush1.msra.mxu0 0.0
    %3011 = vmatprep.subr.mxu0 0.0
    %3012 = vmatpush1.msra.mxu0 0.0
    %3013 = vmatprep.subr.mxu0 0.0
    %3014 = vmatpush1.msra.mxu0 0.0
    %3015 = vmatprep.subr.mxu0 0.0
    %3016 = vmatpush1.msra.mxu0 0.0
    %3017 = vmatprep.subr.mxu0 0.0
    %3018 = vmatpush1.msra.mxu0 0.0
    %3019 = vmatprep.subr.mxu0 0.0
    %3020 = vmatpush1.msra.mxu0 0.0
    %3021 = vmatprep.subr.mxu0 0.0
    %3022 = vmatpush1.msra.mxu0 0.0
    %3023 = vmatprep.subr.mxu0 0.0
    %3024 = vmatpush1.msra.mxu0 0.0
    %3025 = vmatprep.subr.mxu0 0.0
    %3026 = vmatpush1.msra.mxu0 0.0
    %3027 = vmatprep.subr.mxu0 0.0
    %3028 = vmatpush1.msra.mxu0 0.0
    %3029 = vmatprep.mubr.f32.mxu0 0.0
    %3030 = vmatmul.mubr.f32.gmra.mrb[0].mxu0 %v2960
    %v3031 = vpop.f32.mrb[0].mxu0
    %v3032 = vadd.f32 %v2957, %v3031
    %v3033 = vpop.f32.mrb[0].mxu0
    %3034 = vmatprep.mubr.f32.mxu0 0.0
    %3035 = vmatmul.mubr.f32.gmra.mrb[0].mxu0 %v2963
    %v3036 = vpop.f32.mrb[0].mxu0
    %v3037 = vadd.f32 %v2957, %v3036
    %v3038 = vpop.f32.mrb[0].mxu0
    %3039 = vdwg.mxu0
    %vm3040 = vcmask 39936
    %3041 = vst.msk [vmem:[%s13] sm:$0xff] %vm3040, %v3032
    %3042 = vst.msk [vmem:[%s13 + $0x8] sm:$0xff] %vm3040, %v3037
    // Predicated region
    $region58: #{text_rnn_forward.3} parent=1 // pred_check
      _
    $region59: #{text_rnn_forward.3} parent=1 // pred_check_branch
      %3044 = sbr.rel (0) target = $region61
    $region60: #{text_rnn_forward.3} parent=1 // pred_region
      _
    $region61: #{text_rnn_forward.3} parent=1 // pred_fallthru
      _
    // Predicated region
    $region62: #{text_rnn_forward.3} parent=1 // pred_check
      _
    $region63: #{text_rnn_forward.3} parent=1 // pred_check_branch
      %3046 = sbr.rel (0) target = $region65
    $region64: #{text_rnn_forward.3} parent=1 // pred_region
      _
    $region65: #{text_rnn_forward.3} parent=1 // pred_fallthru
      _
    %3047 = vsyncpa [#allocation4], 1

// kernel: text_rnn_forward.2
$region0: #{text_rnn_forward.2}
  #allocation0 [shape = 'u32[]', space=smem, size = 0x4, offset = 0x4, fixed_abs, tag = 'smem constant byte address 0x4 - core index']
  #allocation1 [shape = 'u32[144,128]{1,0:T(1,128)}', space=vmem, size = 0x12000, scoped, tag = 'internal scratch']
  #allocation2 [shape = 'f32[128,768]{1,0:T(8,128)}', space=vmem, size = 0x60000, scoped, tag = 'scratch operand']
  %s0 = inlined_call_operand.vmem [shape: bf16[128,128], index: 0, kind: input, shape index: {}]
  %s1 = inlined_call_operand.vmem [shape: bf16[128,768], index: 1, kind: input, shape index: {}]
  %s2 = inlined_call_operand.vmem [shape: bf16[128,384], index: 2, kind: input, shape index: {}]
  %s3 = inlined_call_operand.vmem [shape: bf16[128,384], index: 3, kind: input, shape index: {}]
  %s4 = inlined_call_operand.vmem [shape: f32[1,768], index: 4, kind: input, shape index: {}]
  %s5 = inlined_call_operand.vmem [shape: f32[1,128], index: 5, kind: input, shape index: {}]
  %s6 = inlined_call_operand.vmem [shape: f32[1,128], index: 6, kind: input, shape index: {}]
  %s7 = inlined_call_operand.vmem [shape: bf16[128,128], index: 7, kind: output, shape index: {0}]
  %s8 = inlined_call_operand.vmem [shape: bf16[128,128], index: 8, kind: output, shape index: {1}]
  %9 = xla_tuple %s7, %s8
  %s10 = sld [smem:[#allocation0]]
  $region46: #{text_rnn_forward.2} parent=0
    _
  %s12 = ssub.s32 1, %s10
  %s13 = scalar_select 0, %s12, %s10
  // Predicated region
  $region2: #{text_rnn_forward.2} parent=0 // pred_check
    _
  $region3: #{text_rnn_forward.2} parent=0 // pred_check_branch
    %15 = sbr.rel (0) target = $region5
  $region4: #{text_rnn_forward.2} parent=0 // pred_region
    _
  $region5: #{text_rnn_forward.2} parent=0 // pred_fallthru
    _
  // Predicated region
  $region6: #{text_rnn_forward.2} parent=0 // pred_check
    _
  $region7: #{text_rnn_forward.2} parent=0 // pred_check_branch
    %17 = sbr.rel (0) target = $region9
  $region8: #{text_rnn_forward.2} parent=0 // pred_region
    _
  $region9: #{text_rnn_forward.2} parent=0 // pred_fallthru
    _
  // Predicated region
  $region10: #{text_rnn_forward.2} parent=0 // pred_check
    _
  $region11: #{text_rnn_forward.2} parent=0 // pred_check_branch
    %19 = sbr.rel (0) target = $region13
  $region12: #{text_rnn_forward.2} parent=0 // pred_region
    _
  $region13: #{text_rnn_forward.2} parent=0 // pred_fallthru
    _
  // Predicated region
  $region14: #{text_rnn_forward.2} parent=0 // pred_check
    _
  $region15: #{text_rnn_forward.2} parent=0 // pred_check_branch
    %21 = sbr.rel (0) target = $region17
  $region16: #{text_rnn_forward.2} parent=0 // pred_region
    _
  $region17: #{text_rnn_forward.2} parent=0 // pred_fallthru
    _
  // Predicated region
  $region18: #{text_rnn_forward.2} parent=0 // pred_check
    _
  $region19: #{text_rnn_forward.2} parent=0 // pred_check_branch
    %23 = sbr.rel (0) target = $region21
  $region20: #{text_rnn_forward.2} parent=0 // pred_region
    _
  $region21: #{text_rnn_forward.2} parent=0 // pred_fallthru
    _
  // Predicated region
  $region22: #{text_rnn_forward.2} parent=0 // pred_check
    _
  $region23: #{text_rnn_forward.2} parent=0 // pred_check_branch
    %25 = sbr.rel (0) target = $region25
  $region24: #{text_rnn_forward.2} parent=0 // pred_region
    _
  $region25: #{text_rnn_forward.2} parent=0 // pred_fallthru
    _
  // Predicated region
  $region26: #{text_rnn_forward.2} parent=0 // pred_check
    _
  $region27: #{text_rnn_forward.2} parent=0 // pred_check_branch
    %27 = sbr.rel (0) target = $region29
  $region28: #{text_rnn_forward.2} parent=0 // pred_region
    _
  $region29: #{text_rnn_forward.2} parent=0 // pred_fallthru
    _
  %v29 = vld [vmem:[%s0] sm:$0xf]
  %v30 = vld [vmem:[%s0 + $0x4] sm:$0xf]
  %v31 = vld [vmem:[%s0 + $0x8] sm:$0xf]
  %v32 = vld [vmem:[%s0 + $0xc] sm:$0xf]
  %v33 = vld [vmem:[%s0 + $0x10] sm:$0xf]
  %v34 = vld [vmem:[%s0 + $0x14] sm:$0xf]
  %v35 = vld [vmem:[%s0 + $0x18] sm:$0xf]
  %v36 = vld [vmem:[%s0 + $0x1c] sm:$0xf]
  %v37 = vld [vmem:[%s0 + $0x20] sm:$0xf]
  %v38 = vld [vmem:[%s0 + $0x24] sm:$0xf]
  %v39 = vld [vmem:[%s0 + $0x28] sm:$0xf]
  %v40 = vld [vmem:[%s0 + $0x2c] sm:$0xf]
  %v41 = vld [vmem:[%s0 + $0x30] sm:$0xf]
  %v42 = vld [vmem:[%s0 + $0x34] sm:$0xf]
  %v43 = vld [vmem:[%s0 + $0x38] sm:$0xf]
  %v44 = vld [vmem:[%s0 + $0x3c] sm:$0xf]
  %v45 = vld [vmem:[%s1] sm:$0xff]
  %v46 = vld [vmem:[%s1 + $0x8] sm:$0xff]
  %v47 = vld [vmem:[%s1 + $0x10] sm:$0xff]
  %v48 = vld [vmem:[%s1 + $0x18] sm:$0xff]
  %v49 = vld [vmem:[%s1 + $0x20] sm:$0xff]
  %v50 = vld [vmem:[%s1 + $0x28] sm:$0xff]
  %v51 = vld [vmem:[%s1 + $0x30] sm:$0xff]
  %v52 = vld [vmem:[%s1 + $0x38] sm:$0xff]
  %v53 = vld [vmem:[%s1 + $0x40] sm:$0xff]
  %v54 = vld [vmem:[%s1 + $0x48] sm:$0xff]
  %v55 = vld [vmem:[%s1 + $0x50] sm:$0xff]
  %v56 = vld [vmem:[%s1 + $0x58] sm:$0xff]
  %v57 = vld [vmem:[%s1 + $0x60] sm:$0xff]
  %v58 = vld [vmem:[%s1 + $0x68] sm:$0xff]
  %v59 = vld [vmem:[%s1 + $0x70] sm:$0xff]
  %v60 = vld [vmem:[%s1 + $0x78] sm:$0xff]
  %v61 = vld [vmem:[%s1 + $0x80] sm:$0xff]
  %v62 = vld [vmem:[%s1 + $0x88] sm:$0xff]
  %v63 = vld [vmem:[%s1 + $0x90] sm:$0xff]
  %v64 = vld [vmem:[%s1 + $0x98] sm:$0xff]
  %v65 = vld [vmem:[%s1 + $0xa0] sm:$0xff]
  %v66 = vld [vmem:[%s1 + $0xa8] sm:$0xff]
  %v67 = vld [vmem:[%s1 + $0xb0] sm:$0xff]
  %v68 = vld [vmem:[%s1 + $0xb8] sm:$0xff]
  %v69 = vld [vmem:[%s1 + $0xc0] sm:$0xff]
  %v70 = vld [vmem:[%s1 + $0xc8] sm:$0xff]
  %v71 = vld [vmem:[%s1 + $0xd0] sm:$0xff]
  %v72 = vld [vmem:[%s1 + $0xd8] sm:$0xff]
  %v73 = vld [vmem:[%s1 + $0xe0] sm:$0xff]
  %v74 = vld [vmem:[%s1 + $0xe8] sm:$0xff]
  %v75 = vld [vmem:[%s1 + $0xf0] sm:$0xff]
  %v76 = vld [vmem:[%s1 + $0xf8] sm:$0xff]
  %v77 = vld [vmem:[%s1 + $0x100] sm:$0xff]
  %v78 = vld [vmem:[%s1 + $0x108] sm:$0xff]
  %v79 = vld [vmem:[%s1 + $0x110] sm:$0xff]
  %v80 = vld [vmem:[%s1 + $0x118] sm:$0xff]
  %v81 = vld [vmem:[%s1 + $0x120] sm:$0xff]
  %v82 = vld [vmem:[%s1 + $0x128] sm:$0xff]
  %v83 = vld [vmem:[%s1 + $0x130] sm:$0xff]
  %v84 = vld [vmem:[%s1 + $0x138] sm:$0xff]
  %v85 = vld [vmem:[%s1 + $0x140] sm:$0xff]
  %v86 = vld [vmem:[%s1 + $0x148] sm:$0xff]
  %v87 = vld [vmem:[%s1 + $0x150] sm:$0xff]
  %v88 = vld [vmem:[%s1 + $0x158] sm:$0xff]
  %v89 = vld [vmem:[%s1 + $0x160] sm:$0xff]
  %v90 = vld [vmem:[%s1 + $0x168] sm:$0xff]
  %v91 = vld [vmem:[%s1 + $0x170] sm:$0xff]
  %v92 = vld [vmem:[%s1 + $0x178] sm:$0xff]
  %v93 = vld [vmem:[%s4] sm:$0x3f]
  %v95 = vlaneseq
  %v96 = vshrl.u32 %v95, 7
  %v97 = vsub.s32 0, %v96
  %v98 = vrot.slane %v93, %v97
  %v99 = vlaneseq
  %v100 = vshrl.u32 %v99, 7
  %v101 = vsub.s32 1, %v100
  %v102 = vrot.slane %v93, %v101
  %v103 = vlaneseq
  %v104 = vshrl.u32 %v103, 7
  %v105 = vsub.s32 2, %v104
  %v106 = vrot.slane %v93, %v105
  %v107 = vlaneseq
  %v108 = vshrl.u32 %v107, 7
  %v109 = vsub.s32 3, %v108
  %v110 = vrot.slane %v93, %v109
  %v111 = vlaneseq
  %v112 = vshrl.u32 %v111, 7
  %v113 = vsub.s32 4, %v112
  %v114 = vrot.slane %v93, %v113
  %v115 = vlaneseq
  %v116 = vshrl.u32 %v115, 7
  %v117 = vsub.s32 5, %v116
  %v118 = vrot.slane %v93, %v117
  %v141 = vunpack.c.l.b16 %v29
  %v142 = vunpack.c.l.b16 %v30
  %v143 = vunpack.c.l.b16 %v31
  %v144 = vunpack.c.l.b16 %v32
  %v145 = vunpack.c.l.b16 %v33
  %v146 = vunpack.c.l.b16 %v34
  %v147 = vunpack.c.l.b16 %v35
  %v148 = vunpack.c.l.b16 %v36
  %v149 = vunpack.c.l.b16 %v37
  %v150 = vunpack.c.l.b16 %v38
  %v151 = vunpack.c.l.b16 %v39
  %v152 = vunpack.c.l.b16 %v40
  %v153 = vunpack.c.l.b16 %v41
  %v154 = vunpack.c.l.b16 %v42
  %v155 = vunpack.c.l.b16 %v43
  %v156 = vunpack.c.l.b16 %v44
  %v157 = vpack.c.b16 %v142, %v141
  %v158 = vpack.c.b16 %v144, %v143
  %v159 = vpack.c.b16 %v146, %v145
  %v160 = vpack.c.b16 %v148, %v147
  %v161 = vpack.c.b16 %v150, %v149
  %v162 = vpack.c.b16 %v152, %v151
  %v163 = vpack.c.b16 %v154, %v153
  %v164 = vpack.c.b16 %v156, %v155
  %v221 = vunpack.c.l.b16 %v45
  %v222 = vunpack.c.h.b16 %v45
  %v223 = vunpack.c.l.b16 %v46
  %v224 = vunpack.c.h.b16 %v46
  %v225 = vunpack.c.l.b16 %v47
  %v226 = vunpack.c.h.b16 %v47
  %v227 = vunpack.c.l.b16 %v48
  %v228 = vunpack.c.h.b16 %v48
  %v229 = vunpack.c.l.b16 %v49
  %v230 = vunpack.c.h.b16 %v49
  %v231 = vunpack.c.l.b16 %v50
  %v232 = vunpack.c.h.b16 %v50
  %v233 = vunpack.c.l.b16 %v51
  %v234 = vunpack.c.h.b16 %v51
  %v235 = vunpack.c.l.b16 %v52
  %v236 = vunpack.c.h.b16 %v52
  %v237 = vunpack.c.l.b16 %v53
  %v238 = vunpack.c.h.b16 %v53
  %v239 = vunpack.c.l.b16 %v54
  %v240 = vunpack.c.h.b16 %v54
  %v241 = vunpack.c.l.b16 %v55
  %v242 = vunpack.c.h.b16 %v55
  %v243 = vunpack.c.l.b16 %v56
  %v244 = vunpack.c.h.b16 %v56
  %v245 = vunpack.c.l.b16 %v57
  %v246 = vunpack.c.h.b16 %v57
  %v247 = vunpack.c.l.b16 %v58
  %v248 = vunpack.c.h.b16 %v58
  %v249 = vunpack.c.l.b16 %v59
  %v250 = vunpack.c.h.b16 %v59
  %v251 = vunpack.c.l.b16 %v60
  %v252 = vunpack.c.h.b16 %v60
  %v253 = vunpack.c.l.b16 %v61
  %v254 = vunpack.c.h.b16 %v61
  %v255 = vunpack.c.l.b16 %v62
  %v256 = vunpack.c.h.b16 %v62
  %v257 = vunpack.c.l.b16 %v63
  %v258 = vunpack.c.h.b16 %v63
  %v259 = vunpack.c.l.b16 %v64
  %v260 = vunpack.c.h.b16 %v64
  %v261 = vunpack.c.l.b16 %v65
  %v262 = vunpack.c.h.b16 %v65
  %v263 = vunpack.c.l.b16 %v66
  %v264 = vunpack.c.h.b16 %v66
  %v265 = vunpack.c.l.b16 %v67
  %v266 = vunpack.c.h.b16 %v67
  %v267 = vunpack.c.l.b16 %v68
  %v268 = vunpack.c.h.b16 %v68
  %v269 = vunpack.c.l.b16 %v69
  %v270 = vunpack.c.h.b16 %v69
  %v271 = vunpack.c.l.b16 %v70
  %v272 = vunpack.c.h.b16 %v70
  %v273 = vunpack.c.l.b16 %v71
  %v274 = vunpack.c.h.b16 %v71
  %v275 = vunpack.c.l.b16 %v72
  %v276 = vunpack.c.h.b16 %v72
  %v277 = vunpack.c.l.b16 %v73
  %v278 = vunpack.c.h.b16 %v73
  %v279 = vunpack.c.l.b16 %v74
  %v280 = vunpack.c.h.b16 %v74
  %v281 = vunpack.c.l.b16 %v75
  %v282 = vunpack.c.h.b16 %v75
  %v283 = vunpack.c.l.b16 %v76
  %v284 = vunpack.c.h.b16 %v76
  %v285 = vunpack.c.l.b16 %v77
  %v286 = vunpack.c.h.b16 %v77
  %v287 = vunpack.c.l.b16 %v78
  %v288 = vunpack.c.h.b16 %v78
  %v289 = vunpack.c.l.b16 %v79
  %v290 = vunpack.c.h.b16 %v79
  %v291 = vunpack.c.l.b16 %v80
  %v292 = vunpack.c.h.b16 %v80
  %v293 = vunpack.c.l.b16 %v81
  %v294 = vunpack.c.h.b16 %v81
  %v295 = vunpack.c.l.b16 %v82
  %v296 = vunpack.c.h.b16 %v82
  %v297 = vunpack.c.l.b16 %v83
  %v298 = vunpack.c.h.b16 %v83
  %v299 = vunpack.c.l.b16 %v84
  %v300 = vunpack.c.h.b16 %v84
  %v301 = vunpack.c.l.b16 %v85
  %v302 = vunpack.c.h.b16 %v85
  %v303 = vunpack.c.l.b16 %v86
  %v304 = vunpack.c.h.b16 %v86
  %v305 = vunpack.c.l.b16 %v87
  %v306 = vunpack.c.h.b16 %v87
  %v307 = vunpack.c.l.b16 %v88
  %v308 = vunpack.c.h.b16 %v88
  %v309 = vunpack.c.l.b16 %v89
  %v310 = vunpack.c.h.b16 %v89
  %v311 = vunpack.c.l.b16 %v90
  %v312 = vunpack.c.h.b16 %v90
  %v313 = vunpack.c.l.b16 %v91
  %v314 = vunpack.c.h.b16 %v91
  %v315 = vunpack.c.l.b16 %v92
  %v316 = vunpack.c.h.b16 %v92
  %v317 = vpack.c.b16 %v227, %v221
  %v318 = vpack.c.b16 %v228, %v222
  %v319 = vpack.c.b16 %v229, %v223
  %v320 = vpack.c.b16 %v230, %v224
  %v321 = vpack.c.b16 %v231, %v225
  %v322 = vpack.c.b16 %v232, %v226
  %v323 = vpack.c.b16 %v239, %v233
  %v324 = vpack.c.b16 %v240, %v234
  %v325 = vpack.c.b16 %v241, %v235
  %v326 = vpack.c.b16 %v242, %v236
  %v327 = vpack.c.b16 %v243, %v237
  %v328 = vpack.c.b16 %v244, %v238
  %v329 = vpack.c.b16 %v251, %v245
  %v330 = vpack.c.b16 %v252, %v246
  %v331 = vpack.c.b16 %v253, %v247
  %v332 = vpack.c.b16 %v254, %v248
  %v333 = vpack.c.b16 %v255, %v249
  %v334 = vpack.c.b16 %v256, %v250
  %v335 = vpack.c.b16 %v263, %v257
  %v336 = vpack.c.b16 %v264, %v258
  %v337 = vpack.c.b16 %v265, %v259
  %v338 = vpack.c.b16 %v266, %v260
  %v339 = vpack.c.b16 %v267, %v261
  %v340 = vpack.c.b16 %v268, %v262
  %v341 = vpack.c.b16 %v275, %v269
  %v342 = vpack.c.b16 %v276, %v270
  %v343 = vpack.c.b16 %v277, %v271
  %v344 = vpack.c.b16 %v278, %v272
  %v345 = vpack.c.b16 %v279, %v273
  %v346 = vpack.c.b16 %v280, %v274
  %v347 = vpack.c.b16 %v287, %v281
  %v348 = vpack.c.b16 %v288, %v282
  %v349 = vpack.c.b16 %v289, %v283
  %v350 = vpack.c.b16 %v290, %v284
  %v351 = vpack.c.b16 %v291, %v285
  %v352 = vpack.c.b16 %v292, %v286
  %v353 = vpack.c.b16 %v299, %v293
  %v354 = vpack.c.b16 %v300, %v294
  %v355 = vpack.c.b16 %v301, %v295
  %v356 = vpack.c.b16 %v302, %v296
  %v357 = vpack.c.b16 %v303, %v297
  %v358 = vpack.c.b16 %v304, %v298
  %v359 = vpack.c.b16 %v311, %v305
  %v360 = vpack.c.b16 %v312, %v306
  %v361 = vpack.c.b16 %v313, %v307
  %v362 = vpack.c.b16 %v314, %v308
  %v363 = vpack.c.b16 %v315, %v309
  %v364 = vpack.c.b16 %v316, %v310
  %413 = vmatprep.subr.bf16.mxu0 %v318
  %414 = vmatpush1.bf16.msra.mxu0 %v317
  %415 = vmatprep.subr.bf16.mxu0 %v324
  %416 = vmatpush1.bf16.msra.mxu0 %v323
  %417 = vmatprep.subr.bf16.mxu0 %v330
  %418 = vmatpush1.bf16.msra.mxu0 %v329
  %419 = vmatprep.subr.bf16.mxu0 %v336
  %420 = vmatpush1.bf16.msra.mxu0 %v335
  %421 = vmatprep.subr.bf16.mxu0 %v342
  %422 = vmatpush1.bf16.msra.mxu0 %v341
  %423 = vmatprep.subr.bf16.mxu0 %v348
  %424 = vmatpush1.bf16.msra.mxu0 %v347
  %425 = vmatprep.subr.bf16.mxu0 %v354
  %426 = vmatpush1.bf16.msra.mxu0 %v353
  %427 = vmatprep.subr.bf16.mxu0 %v360
  %428 = vmatpush1.bf16.msra.mxu0 %v359
  %429 = vmatprep.subr.bf16.mxu0 0
  %430 = vmatpush1.bf16.msra.mxu0 0
  %431 = vmatprep.subr.bf16.mxu0 0
  %432 = vmatpush1.bf16.msra.mxu0 0
  %433 = vmatprep.subr.bf16.mxu0 0
  %434 = vmatpush1.bf16.msra.mxu0 0
  %435 = vmatprep.subr.bf16.mxu0 0
  %436 = vmatpush1.bf16.msra.mxu0 0
  %437 = vmatprep.subr.bf16.mxu0 0
  %438 = vmatpush1.bf16.msra.mxu0 0
  %439 = vmatprep.subr.bf16.mxu0 0
  %440 = vmatpush1.bf16.msra.mxu0 0
  %441 = vmatprep.subr.bf16.mxu0 0
  %442 = vmatpush1.bf16.msra.mxu0 0
  %443 = vmatprep.subr.bf16.mxu0 0
  %444 = vmatpush1.bf16.msra.mxu0 0
  %445 = vmatprep.mubr.bf16.mxu0 0
  %446 = vmatmul.mubr.bf16.gmra.mrb[0].mxu0 %v157
  %v447 = vpop.f32.mrb[0].mxu0
  %v448 = vadd.f32 %v98, %v447
  %v449 = vpop.f32.mrb[0].mxu0
  %v450 = vadd.f32 %v102, %v449
  %v451 = vpop.f32.mrb[0].mxu0
  %v452 = vadd.f32 %v98, %v451
  %v453 = vpop.f32.mrb[0].mxu0
  %v454 = vadd.f32 %v102, %v453
  %455 = vmatprep.mubr.bf16.mxu0 0
  %456 = vmatmul.mubr.bf16.gmra.mrb[0].mxu0 %v158
  %v457 = vpop.f32.mrb[0].mxu0
  %v458 = vadd.f32 %v98, %v457
  %v459 = vpop.f32.mrb[0].mxu0
  %v460 = vadd.f32 %v102, %v459
  %v461 = vpop.f32.mrb[0].mxu0
  %v462 = vadd.f32 %v98, %v461
  %v463 = vpop.f32.mrb[0].mxu0
  %v464 = vadd.f32 %v102, %v463
  %465 = vmatprep.mubr.bf16.mxu0 0
  %466 = vmatmul.mubr.bf16.gmra.mrb[0].mxu0 %v159
  %v467 = vpop.f32.mrb[0].mxu0
  %v468 = vadd.f32 %v98, %v467
  %v469 = vpop.f32.mrb[0].mxu0
  %v470 = vadd.f32 %v102, %v469
  %v471 = vpop.f32.mrb[0].mxu0
  %v472 = vadd.f32 %v98, %v471
  %v473 = vpop.f32.mrb[0].mxu0
  %v474 = vadd.f32 %v102, %v473
  %475 = vmatprep.mubr.bf16.mxu0 0
  %476 = vmatmul.mubr.bf16.gmra.mrb[0].mxu0 %v160
  %v477 = vpop.f32.mrb[0].mxu0
  %v478 = vadd.f32 %v98, %v477
  %v479 = vpop.f32.mrb[0].mxu0
  %v480 = vadd.f32 %v102, %v479
  %v481 = vpop.f32.mrb[0].mxu0
  %v482 = vadd.f32 %v98, %v481
  %v483 = vpop.f32.mrb[0].mxu0
  %v484 = vadd.f32 %v102, %v483
  %485 = vmatprep.mubr.bf16.mxu0 0
  %486 = vmatmul.mubr.bf16.gmra.mrb[0].mxu0 %v161
  %v487 = vpop.f32.mrb[0].mxu0
  %v488 = vadd.f32 %v98, %v487
  %v489 = vpop.f32.mrb[0].mxu0
  %v490 = vadd.f32 %v102, %v489
  %v491 = vpop.f32.mrb[0].mxu0
  %v492 = vadd.f32 %v98, %v491
  %v493 = vpop.f32.mrb[0].mxu0
  %v494 = vadd.f32 %v102, %v493
  %495 = vmatprep.mubr.bf16.mxu0 0
  %496 = vmatmul.mubr.bf16.gmra.mrb[0].mxu0 %v162
  %v497 = vpop.f32.mrb[0].mxu0
  %v498 = vadd.f32 %v98, %v497
  %v499 = vpop.f32.mrb[0].mxu0
  %v500 = vadd.f32 %v102, %v499
  %v501 = vpop.f32.mrb[0].mxu0
  %v502 = vadd.f32 %v98, %v501
  %v503 = vpop.f32.mrb[0].mxu0
  %v504 = vadd.f32 %v102, %v503
  %505 = vmatprep.mubr.bf16.mxu0 0
  %506 = vmatmul.mubr.bf16.gmra.mrb[0].mxu0 %v163
  %v507 = vpop.f32.mrb[0].mxu0
  %v508 = vadd.f32 %v98, %v507
  %v509 = vpop.f32.mrb[0].mxu0
  %v510 = vadd.f32 %v102, %v509
  %v511 = vpop.f32.mrb[0].mxu0
  %v512 = vadd.f32 %v98, %v511
  %v513 = vpop.f32.mrb[0].mxu0
  %v514 = vadd.f32 %v102, %v513
  %515 = vmatprep.mubr.bf16.mxu0 0
  %516 = vmatmul.mubr.bf16.gmra.mrb[0].mxu0 %v164
  %v517 = vpop.f32.mrb[0].mxu0
  %v518 = vadd.f32 %v98, %v517
  %v519 = vpop.f32.mrb[0].mxu0
  %v520 = vadd.f32 %v102, %v519
  %v521 = vpop.f32.mrb[0].mxu0
  %v522 = vadd.f32 %v98, %v521
  %v523 = vpop.f32.mrb[0].mxu0
  %v524 = vadd.f32 %v102, %v523
  %525 = vdwg.mxu0
  %526 = vmatprep.subr.bf16.mxu0 %v320
  %527 = vmatpush1.bf16.msra.mxu0 %v319
  %528 = vmatprep.subr.bf16.mxu0 %v326
  %529 = vmatpush1.bf16.msra.mxu0 %v325
  %530 = vmatprep.subr.bf16.mxu0 %v332
  %531 = vmatpush1.bf16.msra.mxu0 %v331
  %532 = vmatprep.subr.bf16.mxu0 %v338
  %533 = vmatpush1.bf16.msra.mxu0 %v337
  %534 = vmatprep.subr.bf16.mxu0 %v344
  %535 = vmatpush1.bf16.msra.mxu0 %v343
  %536 = vmatprep.subr.bf16.mxu0 %v350
  %537 = vmatpush1.bf16.msra.mxu0 %v349
  %538 = vmatprep.subr.bf16.mxu0 %v356
  %539 = vmatpush1.bf16.msra.mxu0 %v355
  %540 = vmatprep.subr.bf16.mxu0 %v362
  %541 = vmatpush1.bf16.msra.mxu0 %v361
  %542 = vmatprep.subr.bf16.mxu0 0
  %543 = vmatpush1.bf16.msra.mxu0 0
  %544 = vmatprep.subr.bf16.mxu0 0
  %545 = vmatpush1.bf16.msra.mxu0 0
  %546 = vmatprep.subr.bf16.mxu0 0
  %547 = vmatpush1.bf16.msra.mxu0 0
  %548 = vmatprep.subr.bf16.mxu0 0
  %549 = vmatpush1.bf16.msra.mxu0 0
  %550 = vmatprep.subr.bf16.mxu0 0
  %551 = vmatpush1.bf16.msra.mxu0 0
  %552 = vmatprep.subr.bf16.mxu0 0
  %553 = vmatpush1.bf16.msra.mxu0 0
  %554 = vmatprep.subr.bf16.mxu0 0
  %555 = vmatpush1.bf16.msra.mxu0 0
  %556 = vmatprep.subr.bf16.mxu0 0
  %557 = vmatpush1.bf16.msra.mxu0 0
  %558 = vmatprep.mubr.bf16.mxu0 0
  %559 = vmatmul.mubr.bf16.gmra.mrb[0].mxu0 %v157
  %v560 = vpop.f32.mrb[0].mxu0
  %v561 = vadd.f32 %v106, %v560
  %v562 = vpop.f32.mrb[0].mxu0
  %v563 = vadd.f32 %v110, %v562
  %v564 = vpop.f32.mrb[0].mxu0
  %v565 = vadd.f32 %v106, %v564
  %v566 = vpop.f32.mrb[0].mxu0
  %v567 = vadd.f32 %v110, %v566
  %568 = vmatprep.mubr.bf16.mxu0 0
  %569 = vmatmul.mubr.bf16.gmra.mrb[0].mxu0 %v158
  %v570 = vpop.f32.mrb[0].mxu0
  %v571 = vadd.f32 %v106, %v570
  %v572 = vpop.f32.mrb[0].mxu0
  %v573 = vadd.f32 %v110, %v572
  %v574 = vpop.f32.mrb[0].mxu0
  %v575 = vadd.f32 %v106, %v574
  %v576 = vpop.f32.mrb[0].mxu0
  %v577 = vadd.f32 %v110, %v576
  %578 = vmatprep.mubr.bf16.mxu0 0
  %579 = vmatmul.mubr.bf16.gmra.mrb[0].mxu0 %v159
  %v580 = vpop.f32.mrb[0].mxu0
  %v581 = vadd.f32 %v106, %v580
  %v582 = vpop.f32.mrb[0].mxu0
  %v583 = vadd.f32 %v110, %v582
  %v584 = vpop.f32.mrb[0].mxu0
  %v585 = vadd.f32 %v106, %v584
  %v586 = vpop.f32.mrb[0].mxu0
  %v587 = vadd.f32 %v110, %v586
  %588 = vmatprep.mubr.bf16.mxu0 0
  %589 = vmatmul.mubr.bf16.gmra.mrb[0].mxu0 %v160
  %v590 = vpop.f32.mrb[0].mxu0
  %v591 = vadd.f32 %v106, %v590
  %v592 = vpop.f32.mrb[0].mxu0
  %v593 = vadd.f32 %v110, %v592
  %v594 = vpop.f32.mrb[0].mxu0
  %v595 = vadd.f32 %v106, %v594
  %v596 = vpop.f32.mrb[0].mxu0
  %v597 = vadd.f32 %v110, %v596
  %598 = vmatprep.mubr.bf16.mxu0 0
  %599 = vmatmul.mubr.bf16.gmra.mrb[0].mxu0 %v161
  %v600 = vpop.f32.mrb[0].mxu0
  %v601 = vadd.f32 %v106, %v600
  %v602 = vpop.f32.mrb[0].mxu0
  %v603 = vadd.f32 %v110, %v602
  %v604 = vpop.f32.mrb[0].mxu0
  %v605 = vadd.f32 %v106, %v604
  %v606 = vpop.f32.mrb[0].mxu0
  %v607 = vadd.f32 %v110, %v606
  %608 = vmatprep.mubr.bf16.mxu0 0
  %609 = vmatmul.mubr.bf16.gmra.mrb[0].mxu0 %v162
  %v610 = vpop.f32.mrb[0].mxu0
  %v611 = vadd.f32 %v106, %v610
  %v612 = vpop.f32.mrb[0].mxu0
  %v613 = vadd.f32 %v110, %v612
  %v614 = vpop.f32.mrb[0].mxu0
  %v615 = vadd.f32 %v106, %v614
  %v616 = vpop.f32.mrb[0].mxu0
  %v617 = vadd.f32 %v110, %v616
  %618 = vmatprep.mubr.bf16.mxu0 0
  %619 = vmatmul.mubr.bf16.gmra.mrb[0].mxu0 %v163
  %v620 = vpop.f32.mrb[0].mxu0
  %v621 = vadd.f32 %v106, %v620
  %v622 = vpop.f32.mrb[0].mxu0
  %v623 = vadd.f32 %v110, %v622
  %v624 = vpop.f32.mrb[0].mxu0
  %v625 = vadd.f32 %v106, %v624
  %v626 = vpop.f32.mrb[0].mxu0
  %v627 = vadd.f32 %v110, %v626
  %628 = vmatprep.mubr.bf16.mxu0 0
  %629 = vmatmul.mubr.bf16.gmra.mrb[0].mxu0 %v164
  %v630 = vpop.f32.mrb[0].mxu0
  %v631 = vadd.f32 %v106, %v630
  %v632 = vpop.f32.mrb[0].mxu0
  %v633 = vadd.f32 %v110, %v632
  %v634 = vpop.f32.mrb[0].mxu0
  %v635 = vadd.f32 %v106, %v634
  %v636 = vpop.f32.mrb[0].mxu0
  %v637 = vadd.f32 %v110, %v636
  %638 = vdwg.mxu0
  %639 = vmatprep.subr.bf16.mxu0 %v322
  %640 = vmatpush1.bf16.msra.mxu0 %v321
  %641 = vmatprep.subr.bf16.mxu0 %v328
  %642 = vmatpush1.bf16.msra.mxu0 %v327
  %643 = vmatprep.subr.bf16.mxu0 %v334
  %644 = vmatpush1.bf16.msra.mxu0 %v333
  %645 = vmatprep.subr.bf16.mxu0 %v340
  %646 = vmatpush1.bf16.msra.mxu0 %v339
  %647 = vmatprep.subr.bf16.mxu0 %v346
  %648 = vmatpush1.bf16.msra.mxu0 %v345
  %649 = vmatprep.subr.bf16.mxu0 %v352
  %650 = vmatpush1.bf16.msra.mxu0 %v351
  %651 = vmatprep.subr.bf16.mxu0 %v358
  %652 = vmatpush1.bf16.msra.mxu0 %v357
  %653 = vmatprep.subr.bf16.mxu0 %v364
  %654 = vmatpush1.bf16.msra.mxu0 %v363
  %655 = vmatprep.subr.bf16.mxu0 0
  %656 = vmatpush1.bf16.msra.mxu0 0
  %657 = vmatprep.subr.bf16.mxu0 0
  %658 = vmatpush1.bf16.msra.mxu0 0
  %659 = vmatprep.subr.bf16.mxu0 0
  %660 = vmatpush1.bf16.msra.mxu0 0
  %661 = vmatprep.subr.bf16.mxu0 0
  %662 = vmatpush1.bf16.msra.mxu0 0
  %663 = vmatprep.subr.bf16.mxu0 0
  %664 = vmatpush1.bf16.msra.mxu0 0
  %665 = vmatprep.subr.bf16.mxu0 0
  %666 = vmatpush1.bf16.msra.mxu0 0
  %667 = vmatprep.subr.bf16.mxu0 0
  %668 = vmatpush1.bf16.msra.mxu0 0
  %669 = vmatprep.subr.bf16.mxu0 0
  %670 = vmatpush1.bf16.msra.mxu0 0
  %671 = vmatprep.mubr.bf16.mxu0 0
  %672 = vmatmul.mubr.bf16.gmra.mrb[0].mxu0 %v157
  %v673 = vpop.f32.mrb[0].mxu0
  %v674 = vadd.f32 %v114, %v673
  %v675 = vpop.f32.mrb[0].mxu0
  %v676 = vadd.f32 %v118, %v675
  %v677 = vpop.f32.mrb[0].mxu0
  %v678 = vadd.f32 %v114, %v677
  %v679 = vpop.f32.mrb[0].mxu0
  %v680 = vadd.f32 %v118, %v679
  %681 = vmatprep.mubr.bf16.mxu0 0
  %682 = vmatmul.mubr.bf16.gmra.mrb[0].mxu0 %v158
  %v683 = vpop.f32.mrb[0].mxu0
  %v684 = vadd.f32 %v114, %v683
  %v685 = vpop.f32.mrb[0].mxu0
  %v686 = vadd.f32 %v118, %v685
  %v687 = vpop.f32.mrb[0].mxu0
  %v688 = vadd.f32 %v114, %v687
  %v689 = vpop.f32.mrb[0].mxu0
  %v690 = vadd.f32 %v118, %v689
  %691 = vmatprep.mubr.bf16.mxu0 0
  %692 = vmatmul.mubr.bf16.gmra.mrb[0].mxu0 %v159
  %v693 = vpop.f32.mrb[0].mxu0
  %v694 = vadd.f32 %v114, %v693
  %v695 = vpop.f32.mrb[0].mxu0
  %v696 = vadd.f32 %v118, %v695
  %v697 = vpop.f32.mrb[0].mxu0
  %v698 = vadd.f32 %v114, %v697
  %v699 = vpop.f32.mrb[0].mxu0
  %v700 = vadd.f32 %v118, %v699
  %701 = vmatprep.mubr.bf16.mxu0 0
  %702 = vmatmul.mubr.bf16.gmra.mrb[0].mxu0 %v160
  %v703 = vpop.f32.mrb[0].mxu0
  %v704 = vadd.f32 %v114, %v703
  %v705 = vpop.f32.mrb[0].mxu0
  %v706 = vadd.f32 %v118, %v705
  %v707 = vpop.f32.mrb[0].mxu0
  %v708 = vadd.f32 %v114, %v707
  %v709 = vpop.f32.mrb[0].mxu0
  %v710 = vadd.f32 %v118, %v709
  %711 = vmatprep.mubr.bf16.mxu0 0
  %712 = vmatmul.mubr.bf16.gmra.mrb[0].mxu0 %v161
  %v713 = vpop.f32.mrb[0].mxu0
  %v714 = vadd.f32 %v114, %v713
  %v715 = vpop.f32.mrb[0].mxu0
  %v716 = vadd.f32 %v118, %v715
  %v717 = vpop.f32.mrb[0].mxu0
  %v718 = vadd.f32 %v114, %v717
  %v719 = vpop.f32.mrb[0].mxu0
  %v720 = vadd.f32 %v118, %v719
  %721 = vmatprep.mubr.bf16.mxu0 0
  %722 = vmatmul.mubr.bf16.gmra.mrb[0].mxu0 %v162
  %v723 = vpop.f32.mrb[0].mxu0
  %v724 = vadd.f32 %v114, %v723
  %v725 = vpop.f32.mrb[0].mxu0
  %v726 = vadd.f32 %v118, %v725
  %v727 = vpop.f32.mrb[0].mxu0
  %v728 = vadd.f32 %v114, %v727
  %v729 = vpop.f32.mrb[0].mxu0
  %v730 = vadd.f32 %v118, %v729
  %731 = vmatprep.mubr.bf16.mxu0 0
  %732 = vmatmul.mubr.bf16.gmra.mrb[0].mxu0 %v163
  %v733 = vpop.f32.mrb[0].mxu0
  %v734 = vadd.f32 %v114, %v733
  %v735 = vpop.f32.mrb[0].mxu0
  %v736 = vadd.f32 %v118, %v735
  %v737 = vpop.f32.mrb[0].mxu0
  %v738 = vadd.f32 %v114, %v737
  %v739 = vpop.f32.mrb[0].mxu0
  %v740 = vadd.f32 %v118, %v739
  %741 = vmatprep.mubr.bf16.mxu0 0
  %742 = vmatmul.mubr.bf16.gmra.mrb[0].mxu0 %v164
  %v743 = vpop.f32.mrb[0].mxu0
  %v744 = vadd.f32 %v114, %v743
  %v745 = vpop.f32.mrb[0].mxu0
  %v746 = vadd.f32 %v118, %v745
  %v747 = vpop.f32.mrb[0].mxu0
  %v748 = vadd.f32 %v114, %v747
  %v749 = vpop.f32.mrb[0].mxu0
  %v750 = vadd.f32 %v118, %v749
  %751 = vdwg.mxu0
  %752 = vst [vmem:[#allocation2] sm:$0xff] %v448
  %753 = vst [vmem:[#allocation2 + $0x8] sm:$0xff] %v450
  %754 = vst [vmem:[#allocation2 + $0x10] sm:$0xff] %v561
  %755 = vst [vmem:[#allocation2 + $0x18] sm:$0xff] %v563
  %756 = vst [vmem:[#allocation2 + $0x20] sm:$0xff] %v674
  %757 = vst [vmem:[#allocation2 + $0x28] sm:$0xff] %v676
  %758 = vst [vmem:[#allocation2 + $0x30] sm:$0xff] %v452
  %759 = vst [vmem:[#allocation2 + $0x38] sm:$0xff] %v454
  %760 = vst [vmem:[#allocation2 + $0x40] sm:$0xff] %v565
  %761 = vst [vmem:[#allocation2 + $0x48] sm:$0xff] %v567
  %762 = vst [vmem:[#allocation2 + $0x50] sm:$0xff] %v678
  %763 = vst [vmem:[#allocation2 + $0x58] sm:$0xff] %v680
  %764 = vst [vmem:[#allocation2 + $0x60] sm:$0xff] %v458
  %765 = vst [vmem:[#allocation2 + $0x68] sm:$0xff] %v460
  %766 = vst [vmem:[#allocation2 + $0x70] sm:$0xff] %v571
  %767 = vst [vmem:[#allocation2 + $0x78] sm:$0xff] %v573
  %768 = vst [vmem:[#allocation2 + $0x80] sm:$0xff] %v684
  %769 = vst [vmem:[#allocation2 + $0x88] sm:$0xff] %v686
  %770 = vst [vmem:[#allocation2 + $0x90] sm:$0xff] %v462
  %771 = vst [vmem:[#allocation2 + $0x98] sm:$0xff] %v464
  %772 = vst [vmem:[#allocation2 + $0xa0] sm:$0xff] %v575
  %773 = vst [vmem:[#allocation2 + $0xa8] sm:$0xff] %v577
  %774 = vst [vmem:[#allocation2 + $0xb0] sm:$0xff] %v688
  %775 = vst [vmem:[#allocation2 + $0xb8] sm:$0xff] %v690
  %776 = vst [vmem:[#allocation2 + $0xc0] sm:$0xff] %v468
  %777 = vst [vmem:[#allocation2 + $0xc8] sm:$0xff] %v470
  %778 = vst [vmem:[#allocation2 + $0xd0] sm:$0xff] %v581
  %779 = vst [vmem:[#allocation2 + $0xd8] sm:$0xff] %v583
  %780 = vst [vmem:[#allocation2 + $0xe0] sm:$0xff] %v694
  %781 = vst [vmem:[#allocation2 + $0xe8] sm:$0xff] %v696
  %782 = vst [vmem:[#allocation2 + $0xf0] sm:$0xff] %v472
  %783 = vst [vmem:[#allocation2 + $0xf8] sm:$0xff] %v474
  %784 = vst [vmem:[#allocation2 + $0x100] sm:$0xff] %v585
  %785 = vst [vmem:[#allocation2 + $0x108] sm:$0xff] %v587
  %786 = vst [vmem:[#allocation2 + $0x110] sm:$0xff] %v698
  %787 = vst [vmem:[#allocation2 + $0x118] sm:$0xff] %v700
  %788 = vst [vmem:[#allocation2 + $0x120] sm:$0xff] %v478
  %789 = vst [vmem:[#allocation2 + $0x128] sm:$0xff] %v480
  %790 = vst [vmem:[#allocation2 + $0x130] sm:$0xff] %v591
  %791 = vst [vmem:[#allocation2 + $0x138] sm:$0xff] %v593
  %792 = vst [vmem:[#allocation2 + $0x140] sm:$0xff] %v704
  %793 = vst [vmem:[#allocation2 + $0x148] sm:$0xff] %v706
  %794 = vst [vmem:[#allocation2 + $0x150] sm:$0xff] %v482
  %795 = vst [vmem:[#allocation2 + $0x158] sm:$0xff] %v484
  %796 = vst [vmem:[#allocation2 + $0x160] sm:$0xff] %v595
  %797 = vst [vmem:[#allocation2 + $0x168] sm:$0xff] %v597
  %798 = vst [vmem:[#allocation2 + $0x170] sm:$0xff] %v708
  %799 = vst [vmem:[#allocation2 + $0x178] sm:$0xff] %v710
  %800 = vst [vmem:[#allocation2 + $0x180] sm:$0xff] %v488
  %801 = vst [vmem:[#allocation2 + $0x188] sm:$0xff] %v490
  %802 = vst [vmem:[#allocation2 + $0x190] sm:$0xff] %v601
  %803 = vst [vmem:[#allocation2 + $0x198] sm:$0xff] %v603
  %804 = vst [vmem:[#allocation2 + $0x1a0] sm:$0xff] %v714
  %805 = vst [vmem:[#allocation2 + $0x1a8] sm:$0xff] %v716
  %806 = vst [vmem:[#allocation2 + $0x1b0] sm:$0xff] %v492
  %807 = vst [vmem:[#allocation2 + $0x1b8] sm:$0xff] %v494
  %808 = vst [vmem:[#allocation2 + $0x1c0] sm:$0xff] %v605
  %809 = vst [vmem:[#allocation2 + $0x1c8] sm:$0xff] %v607
  %810 = vst [vmem:[#allocation2 + $0x1d0] sm:$0xff] %v718
  %811 = vst [vmem:[#allocation2 + $0x1d8] sm:$0xff] %v720
  %812 = vst [vmem:[#allocation2 + $0x1e0] sm:$0xff] %v498
  %813 = vst [vmem:[#allocation2 + $0x1e8] sm:$0xff] %v500
  %814 = vst [vmem:[#allocation2 + $0x1f0] sm:$0xff] %v611
  %815 = vst [vmem:[#allocation2 + $0x1f8] sm:$0xff] %v613
  %816 = vst [vmem:[#allocation2 + $0x200] sm:$0xff] %v724
  %817 = vst [vmem:[#allocation2 + $0x208] sm:$0xff] %v726
  %818 = vst [vmem:[#allocation2 + $0x210] sm:$0xff] %v502
  %819 = vst [vmem:[#allocation2 + $0x218] sm:$0xff] %v504
  %820 = vst [vmem:[#allocation2 + $0x220] sm:$0xff] %v615
  %821 = vst [vmem:[#allocation2 + $0x228] sm:$0xff] %v617
  %822 = vst [vmem:[#allocation2 + $0x230] sm:$0xff] %v728
  %823 = vst [vmem:[#allocation2 + $0x238] sm:$0xff] %v730
  %824 = vst [vmem:[#allocation2 + $0x240] sm:$0xff] %v508
  %825 = vst [vmem:[#allocation2 + $0x248] sm:$0xff] %v510
  %826 = vst [vmem:[#allocation2 + $0x250] sm:$0xff] %v621
  %827 = vst [vmem:[#allocation2 + $0x258] sm:$0xff] %v623
  %828 = vst [vmem:[#allocation2 + $0x260] sm:$0xff] %v734
  %829 = vst [vmem:[#allocation2 + $0x268] sm:$0xff] %v736
  %830 = vst [vmem:[#allocation2 + $0x270] sm:$0xff] %v512
  %831 = vst [vmem:[#allocation2 + $0x278] sm:$0xff] %v514
  %832 = vst [vmem:[#allocation2 + $0x280] sm:$0xff] %v625
  %833 = vst [vmem:[#allocation2 + $0x288] sm:$0xff] %v627
  %834 = vst [vmem:[#allocation2 + $0x290] sm:$0xff] %v738
  %835 = vst [vmem:[#allocation2 + $0x298] sm:$0xff] %v740
  %836 = vst [vmem:[#allocation2 + $0x2a0] sm:$0xff] %v518
  %837 = vst [vmem:[#allocation2 + $0x2a8] sm:$0xff] %v520
  %838 = vst [vmem:[#allocation2 + $0x2b0] sm:$0xff] %v631
  %839 = vst [vmem:[#allocation2 + $0x2b8] sm:$0xff] %v633
  %840 = vst [vmem:[#allocation2 + $0x2c0] sm:$0xff] %v744
  %841 = vst [vmem:[#allocation2 + $0x2c8] sm:$0xff] %v746
  %842 = vst [vmem:[#allocation2 + $0x2d0] sm:$0xff] %v522
  %843 = vst [vmem:[#allocation2 + $0x2d8] sm:$0xff] %v524
  %844 = vst [vmem:[#allocation2 + $0x2e0] sm:$0xff] %v635
  %845 = vst [vmem:[#allocation2 + $0x2e8] sm:$0xff] %v637
  %846 = vst [vmem:[#allocation2 + $0x2f0] sm:$0xff] %v748
  %847 = vst [vmem:[#allocation2 + $0x2f8] sm:$0xff] %v750
  %v848 = vld [vmem:[%s2] sm:$0xff]
  %v849 = vld [vmem:[%s2 + $0x8] sm:$0xf]
  %v850 = vld [vmem:[%s2 + $0xc] sm:$0xff]
  %v851 = vld [vmem:[%s2 + $0x14] sm:$0xf]
  %v852 = vld [vmem:[%s2 + $0x18] sm:$0xff]
  %v853 = vld [vmem:[%s2 + $0x20] sm:$0xf]
  %v854 = vld [vmem:[%s2 + $0x24] sm:$0xff]
  %v855 = vld [vmem:[%s2 + $0x2c] sm:$0xf]
  %v856 = vld [vmem:[%s2 + $0x30] sm:$0xff]
  %v857 = vld [vmem:[%s2 + $0x38] sm:$0xf]
  %v858 = vld [vmem:[%s2 + $0x3c] sm:$0xff]
  %v859 = vld [vmem:[%s2 + $0x44] sm:$0xf]
  %v860 = vld [vmem:[%s2 + $0x48] sm:$0xff]
  %v861 = vld [vmem:[%s2 + $0x50] sm:$0xf]
  %v862 = vld [vmem:[%s2 + $0x54] sm:$0xff]
  %v863 = vld [vmem:[%s2 + $0x5c] sm:$0xf]
  %v864 = vld [vmem:[%s2 + $0x60] sm:$0xff]
  %v865 = vld [vmem:[%s2 + $0x68] sm:$0xf]
  %v866 = vld [vmem:[%s2 + $0x6c] sm:$0xff]
  %v867 = vld [vmem:[%s2 + $0x74] sm:$0xf]
  %v868 = vld [vmem:[%s2 + $0x78] sm:$0xff]
  %v869 = vld [vmem:[%s2 + $0x80] sm:$0xf]
  %v870 = vld [vmem:[%s2 + $0x84] sm:$0xff]
  %v871 = vld [vmem:[%s2 + $0x8c] sm:$0xf]
  %v872 = vld [vmem:[%s2 + $0x90] sm:$0xff]
  %v873 = vld [vmem:[%s2 + $0x98] sm:$0xf]
  %v874 = vld [vmem:[%s2 + $0x9c] sm:$0xff]
  %v875 = vld [vmem:[%s2 + $0xa4] sm:$0xf]
  %v876 = vld [vmem:[%s2 + $0xa8] sm:$0xff]
  %v877 = vld [vmem:[%s2 + $0xb0] sm:$0xf]
  %v878 = vld [vmem:[%s2 + $0xb4] sm:$0xff]
  %v879 = vld [vmem:[%s2 + $0xbc] sm:$0xf]
  %v880 = vld [vmem:[%s3] sm:$0xff]
  %v881 = vld [vmem:[%s3 + $0x8] sm:$0xf]
  %v882 = vld [vmem:[%s3 + $0xc] sm:$0xff]
  %v883 = vld [vmem:[%s3 + $0x14] sm:$0xf]
  %v884 = vld [vmem:[%s3 + $0x18] sm:$0xff]
  %v885 = vld [vmem:[%s3 + $0x20] sm:$0xf]
  %v886 = vld [vmem:[%s3 + $0x24] sm:$0xff]
  %v887 = vld [vmem:[%s3 + $0x2c] sm:$0xf]
  %v888 = vld [vmem:[%s3 + $0x30] sm:$0xff]
  %v889 = vld [vmem:[%s3 + $0x38] sm:$0xf]
  %v890 = vld [vmem:[%s3 + $0x3c] sm:$0xff]
  %v891 = vld [vmem:[%s3 + $0x44] sm:$0xf]
  %v892 = vld [vmem:[%s3 + $0x48] sm:$0xff]
  %v893 = vld [vmem:[%s3 + $0x50] sm:$0xf]
  %v894 = vld [vmem:[%s3 + $0x54] sm:$0xff]
  %v895 = vld [vmem:[%s3 + $0x5c] sm:$0xf]
  %v896 = vld [vmem:[%s3 + $0x60] sm:$0xff]
  %v897 = vld [vmem:[%s3 + $0x68] sm:$0xf]
  %v898 = vld [vmem:[%s3 + $0x6c] sm:$0xff]
  %v899 = vld [vmem:[%s3 + $0x74] sm:$0xf]
  %v900 = vld [vmem:[%s3 + $0x78] sm:$0xff]
  %v901 = vld [vmem:[%s3 + $0x80] sm:$0xf]
  %v902 = vld [vmem:[%s3 + $0x84] sm:$0xff]
  %v903 = vld [vmem:[%s3 + $0x8c] sm:$0xf]
  %v904 = vld [vmem:[%s3 + $0x90] sm:$0xff]
  %v905 = vld [vmem:[%s3 + $0x98] sm:$0xf]
  %v906 = vld [vmem:[%s3 + $0x9c] sm:$0xff]
  %v907 = vld [vmem:[%s3 + $0xa4] sm:$0xf]
  %v908 = vld [vmem:[%s3 + $0xa8] sm:$0xff]
  %v909 = vld [vmem:[%s3 + $0xb0] sm:$0xf]
  %v910 = vld [vmem:[%s3 + $0xb4] sm:$0xff]
  %v911 = vld [vmem:[%s3 + $0xbc] sm:$0xf]
  %v912 = vld [vmem:[%s5] sm:$0x1]
  %v913 = vld [vmem:[%s6] sm:$0x1]
  %v946 = vunpack.c.l.b16 %v848
  %v947 = vunpack.c.h.b16 %v848
  %v948 = vunpack.c.l.b16 %v849
  %v949 = vunpack.c.l.b16 %v850
  %v950 = vunpack.c.h.b16 %v850
  %v951 = vunpack.c.l.b16 %v851
  %v952 = vunpack.c.l.b16 %v852
  %v953 = vunpack.c.h.b16 %v852
  %v954 = vunpack.c.l.b16 %v853
  %v955 = vunpack.c.l.b16 %v854
  %v956 = vunpack.c.h.b16 %v854
  %v957 = vunpack.c.l.b16 %v855
  %v958 = vunpack.c.l.b16 %v856
  %v959 = vunpack.c.h.b16 %v856
  %v960 = vunpack.c.l.b16 %v857
  %v961 = vunpack.c.l.b16 %v858
  %v962 = vunpack.c.h.b16 %v858
  %v963 = vunpack.c.l.b16 %v859
  %v964 = vunpack.c.l.b16 %v860
  %v965 = vunpack.c.h.b16 %v860
  %v966 = vunpack.c.l.b16 %v861
  %v967 = vunpack.c.l.b16 %v862
  %v968 = vunpack.c.h.b16 %v862
  %v969 = vunpack.c.l.b16 %v863
  %v970 = vunpack.c.l.b16 %v864
  %v971 = vunpack.c.h.b16 %v864
  %v972 = vunpack.c.l.b16 %v865
  %v973 = vunpack.c.l.b16 %v866
  %v974 = vunpack.c.h.b16 %v866
  %v975 = vunpack.c.l.b16 %v867
  %v976 = vunpack.c.l.b16 %v868
  %v977 = vunpack.c.h.b16 %v868
  %v978 = vunpack.c.l.b16 %v869
  %v979 = vunpack.c.l.b16 %v870
  %v980 = vunpack.c.h.b16 %v870
  %v981 = vunpack.c.l.b16 %v871
  %v982 = vunpack.c.l.b16 %v872
  %v983 = vunpack.c.h.b16 %v872
  %v984 = vunpack.c.l.b16 %v873
  %v985 = vunpack.c.l.b16 %v874
  %v986 = vunpack.c.h.b16 %v874
  %v987 = vunpack.c.l.b16 %v875
  %v988 = vunpack.c.l.b16 %v876
  %v989 = vunpack.c.h.b16 %v876
  %v990 = vunpack.c.l.b16 %v877
  %v991 = vunpack.c.l.b16 %v878
  %v992 = vunpack.c.h.b16 %v878
  %v993 = vunpack.c.l.b16 %v879
  %v994 = vpack.c.b16 %v949, %v946
  %v995 = vpack.c.b16 %v950, %v947
  %v996 = vpack.c.b16 %v951, %v948
  %v997 = vpack.c.b16 %v955, %v952
  %v998 = vpack.c.b16 %v956, %v953
  %v999 = vpack.c.b16 %v957, %v954
  %v1000 = vpack.c.b16 %v961, %v958
  %v1001 = vpack.c.b16 %v962, %v959
  %v1002 = vpack.c.b16 %v963, %v960
  %v1003 = vpack.c.b16 %v967, %v964
  %v1004 = vpack.c.b16 %v968, %v965
  %v1005 = vpack.c.b16 %v969, %v966
  %v1006 = vpack.c.b16 %v973, %v970
  %v1007 = vpack.c.b16 %v974, %v971
  %v1008 = vpack.c.b16 %v975, %v972
  %v1009 = vpack.c.b16 %v979, %v976
  %v1010 = vpack.c.b16 %v980, %v977
  %v1011 = vpack.c.b16 %v981, %v978
  %v1012 = vpack.c.b16 %v985, %v982
  %v1013 = vpack.c.b16 %v986, %v983
  %v1014 = vpack.c.b16 %v987, %v984
  %v1015 = vpack.c.b16 %v991, %v988
  %v1016 = vpack.c.b16 %v992, %v989
  %v1017 = vpack.c.b16 %v993, %v990
  %1042 = vmatprep.subr.bf16.mxu0 %v995
  %1043 = vmatpush1.bf16.msra.mxu0 %v994
  %1044 = vmatprep.subr.bf16.mxu0 %v998
  %1045 = vmatpush1.bf16.msra.mxu0 %v997
  %1046 = vmatprep.subr.bf16.mxu0 %v1001
  %1047 = vmatpush1.bf16.msra.mxu0 %v1000
  %1048 = vmatprep.subr.bf16.mxu0 %v1004
  %1049 = vmatpush1.bf16.msra.mxu0 %v1003
  %1050 = vmatprep.subr.bf16.mxu0 %v1007
  %1051 = vmatpush1.bf16.msra.mxu0 %v1006
  %1052 = vmatprep.subr.bf16.mxu0 %v1010
  %1053 = vmatpush1.bf16.msra.mxu0 %v1009
  %1054 = vmatprep.subr.bf16.mxu0 %v1013
  %1055 = vmatpush1.bf16.msra.mxu0 %v1012
  %1056 = vmatprep.subr.bf16.mxu0 %v1016
  %1057 = vmatpush1.bf16.msra.mxu0 %v1015
  %1058 = vmatprep.subr.bf16.mxu0 0
  %1059 = vmatpush1.bf16.msra.mxu0 0
  %1060 = vmatprep.subr.bf16.mxu0 0
  %1061 = vmatpush1.bf16.msra.mxu0 0
  %1062 = vmatprep.subr.bf16.mxu0 0
  %1063 = vmatpush1.bf16.msra.mxu0 0
  %1064 = vmatprep.subr.bf16.mxu0 0
  %1065 = vmatpush1.bf16.msra.mxu0 0
  %1066 = vmatprep.subr.bf16.mxu0 0
  %1067 = vmatpush1.bf16.msra.mxu0 0
  %1068 = vmatprep.subr.bf16.mxu0 0
  %1069 = vmatpush1.bf16.msra.mxu0 0
  %1070 = vmatprep.subr.bf16.mxu0 0
  %1071 = vmatpush1.bf16.msra.mxu0 0
  %1072 = vmatprep.subr.bf16.mxu0 0
  %1073 = vmatpush1.bf16.msra.mxu0 0
  %1074 = vmatprep.mubr.bf16.mxu0 0
  %1075 = vmatmul.mubr.bf16.gmra.mrb[0].mxu0 0
  %v1076 = vpop.f32.mrb[0].mxu0
  %v1077 = vadd.f32 0.0, %v1076
  %v1078 = vpop.f32.mrb[0].mxu0
  %v1079 = vadd.f32 0.0, %v1078
  %v1080 = vpop.f32.mrb[0].mxu0
  %v1081 = vadd.f32 0.0, %v1080
  %v1082 = vpop.f32.mrb[0].mxu0
  %v1083 = vadd.f32 0.0, %v1082
  %1084 = vdwg.mxu0
  %1085 = vmatprep.subr.bf16.mxu0 0
  %1086 = vmatpush1.bf16.msra.mxu0 %v996
  %1087 = vmatprep.subr.bf16.mxu0 0
  %1088 = vmatpush1.bf16.msra.mxu0 %v999
  %1089 = vmatprep.subr.bf16.mxu0 0
  %1090 = vmatpush1.bf16.msra.mxu0 %v1002
  %1091 = vmatprep.subr.bf16.mxu0 0
  %1092 = vmatpush1.bf16.msra.mxu0 %v1005
  %1093 = vmatprep.subr.bf16.mxu0 0
  %1094 = vmatpush1.bf16.msra.mxu0 %v1008
  %1095 = vmatprep.subr.bf16.mxu0 0
  %1096 = vmatpush1.bf16.msra.mxu0 %v1011
  %1097 = vmatprep.subr.bf16.mxu0 0
  %1098 = vmatpush1.bf16.msra.mxu0 %v1014
  %1099 = vmatprep.subr.bf16.mxu0 0
  %1100 = vmatpush1.bf16.msra.mxu0 %v1017
  %1101 = vmatprep.subr.bf16.mxu0 0
  %1102 = vmatpush1.bf16.msra.mxu0 0
  %1103 = vmatprep.subr.bf16.mxu0 0
  %1104 = vmatpush1.bf16.msra.mxu0 0
  %1105 = vmatprep.subr.bf16.mxu0 0
  %1106 = vmatpush1.bf16.msra.mxu0 0
  %1107 = vmatprep.subr.bf16.mxu0 0
  %1108 = vmatpush1.bf16.msra.mxu0 0
  %1109 = vmatprep.subr.bf16.mxu0 0
  %1110 = vmatpush1.bf16.msra.mxu0 0
  %1111 = vmatprep.subr.bf16.mxu0 0
  %1112 = vmatpush1.bf16.msra.mxu0 0
  %1113 = vmatprep.subr.bf16.mxu0 0
  %1114 = vmatpush1.bf16.msra.mxu0 0
  %1115 = vmatprep.subr.bf16.mxu0 0
  %1116 = vmatpush1.bf16.msra.mxu0 0
  %1117 = vmatprep.mubr.bf16.mxu0 0
  %1118 = vmatmul.mubr.bf16.gmra.mrb[0].mxu0 0
  %v1119 = vpop.f32.mrb[0].mxu0
  %v1120 = vadd.f32 0.0, %v1119
  %v1121 = vpop.f32.mrb[0].mxu0
  %v1122 = vpop.f32.mrb[0].mxu0
  %v1123 = vadd.f32 0.0, %v1122
  %v1124 = vpop.f32.mrb[0].mxu0
  %1125 = vdwg.mxu0
  %v1158 = vunpack.c.l.b16 %v880
  %v1159 = vunpack.c.h.b16 %v880
  %v1160 = vunpack.c.l.b16 %v881
  %v1161 = vunpack.c.l.b16 %v882
  %v1162 = vunpack.c.h.b16 %v882
  %v1163 = vunpack.c.l.b16 %v883
  %v1164 = vunpack.c.l.b16 %v884
  %v1165 = vunpack.c.h.b16 %v884
  %v1166 = vunpack.c.l.b16 %v885
  %v1167 = vunpack.c.l.b16 %v886
  %v1168 = vunpack.c.h.b16 %v886
  %v1169 = vunpack.c.l.b16 %v887
  %v1170 = vunpack.c.l.b16 %v888
  %v1171 = vunpack.c.h.b16 %v888
  %v1172 = vunpack.c.l.b16 %v889
  %v1173 = vunpack.c.l.b16 %v890
  %v1174 = vunpack.c.h.b16 %v890
  %v1175 = vunpack.c.l.b16 %v891
  %v1176 = vunpack.c.l.b16 %v892
  %v1177 = vunpack.c.h.b16 %v892
  %v1178 = vunpack.c.l.b16 %v893
  %v1179 = vunpack.c.l.b16 %v894
  %v1180 = vunpack.c.h.b16 %v894
  %v1181 = vunpack.c.l.b16 %v895
  %v1182 = vunpack.c.l.b16 %v896
  %v1183 = vunpack.c.h.b16 %v896
  %v1184 = vunpack.c.l.b16 %v897
  %v1185 = vunpack.c.l.b16 %v898
  %v1186 = vunpack.c.h.b16 %v898
  %v1187 = vunpack.c.l.b16 %v899
  %v1188 = vunpack.c.l.b16 %v900
  %v1189 = vunpack.c.h.b16 %v900
  %v1190 = vunpack.c.l.b16 %v901
  %v1191 = vunpack.c.l.b16 %v902
  %v1192 = vunpack.c.h.b16 %v902
  %v1193 = vunpack.c.l.b16 %v903
  %v1194 = vunpack.c.l.b16 %v904
  %v1195 = vunpack.c.h.b16 %v904
  %v1196 = vunpack.c.l.b16 %v905
  %v1197 = vunpack.c.l.b16 %v906
  %v1198 = vunpack.c.h.b16 %v906
  %v1199 = vunpack.c.l.b16 %v907
  %v1200 = vunpack.c.l.b16 %v908
  %v1201 = vunpack.c.h.b16 %v908
  %v1202 = vunpack.c.l.b16 %v909
  %v1203 = vunpack.c.l.b16 %v910
  %v1204 = vunpack.c.h.b16 %v910
  %v1205 = vunpack.c.l.b16 %v911
  %v1206 = vpack.c.b16 %v1161, %v1158
  %v1207 = vpack.c.b16 %v1162, %v1159
  %v1208 = vpack.c.b16 %v1163, %v1160
  %v1209 = vpack.c.b16 %v1167, %v1164
  %v1210 = vpack.c.b16 %v1168, %v1165
  %v1211 = vpack.c.b16 %v1169, %v1166
  %v1212 = vpack.c.b16 %v1173, %v1170
  %v1213 = vpack.c.b16 %v1174, %v1171
  %v1214 = vpack.c.b16 %v1175, %v1172
  %v1215 = vpack.c.b16 %v1179, %v1176
  %v1216 = vpack.c.b16 %v1180, %v1177
  %v1217 = vpack.c.b16 %v1181, %v1178
  %v1218 = vpack.c.b16 %v1185, %v1182
  %v1219 = vpack.c.b16 %v1186, %v1183
  %v1220 = vpack.c.b16 %v1187, %v1184
  %v1221 = vpack.c.b16 %v1191, %v1188
  %v1222 = vpack.c.b16 %v1192, %v1189
  %v1223 = vpack.c.b16 %v1193, %v1190
  %v1224 = vpack.c.b16 %v1197, %v1194
  %v1225 = vpack.c.b16 %v1198, %v1195
  %v1226 = vpack.c.b16 %v1199, %v1196
  %v1227 = vpack.c.b16 %v1203, %v1200
  %v1228 = vpack.c.b16 %v1204, %v1201
  %v1229 = vpack.c.b16 %v1205, %v1202
  %1254 = vmatprep.subr.bf16.mxu0 %v1207
  %1255 = vmatpush1.bf16.msra.mxu0 %v1206
  %1256 = vmatprep.subr.bf16.mxu0 %v1210
  %1257 = vmatpush1.bf16.msra.mxu0 %v1209
  %1258 = vmatprep.subr.bf16.mxu0 %v1213
  %1259 = vmatpush1.bf16.msra.mxu0 %v1212
  %1260 = vmatprep.subr.bf16.mxu0 %v1216
  %1261 = vmatpush1.bf16.msra.mxu0 %v1215
  %1262 = vmatprep.subr.bf16.mxu0 %v1219
  %1263 = vmatpush1.bf16.msra.mxu0 %v1218
  %1264 = vmatprep.subr.bf16.mxu0 %v1222
  %1265 = vmatpush1.bf16.msra.mxu0 %v1221
  %1266 = vmatprep.subr.bf16.mxu0 %v1225
  %1267 = vmatpush1.bf16.msra.mxu0 %v1224
  %1268 = vmatprep.subr.bf16.mxu0 %v1228
  %1269 = vmatpush1.bf16.msra.mxu0 %v1227
  %1270 = vmatprep.subr.bf16.mxu0 0
  %1271 = vmatpush1.bf16.msra.mxu0 0
  %1272 = vmatprep.subr.bf16.mxu0 0
  %1273 = vmatpush1.bf16.msra.mxu0 0
  %1274 = vmatprep.subr.bf16.mxu0 0
  %1275 = vmatpush1.bf16.msra.mxu0 0
  %1276 = vmatprep.subr.bf16.mxu0 0
  %1277 = vmatpush1.bf16.msra.mxu0 0
  %1278 = vmatprep.subr.bf16.mxu0 0
  %1279 = vmatpush1.bf16.msra.mxu0 0
  %1280 = vmatprep.subr.bf16.mxu0 0
  %1281 = vmatpush1.bf16.msra.mxu0 0
  %1282 = vmatprep.subr.bf16.mxu0 0
  %1283 = vmatpush1.bf16.msra.mxu0 0
  %1284 = vmatprep.subr.bf16.mxu0 0
  %1285 = vmatpush1.bf16.msra.mxu0 0
  %1286 = vmatprep.mubr.bf16.mxu0 0
  %1287 = vmatmul.mubr.bf16.gmra.mrb[0].mxu0 0
  %v1288 = vpop.f32.mrb[0].mxu0
  %v1289 = vadd.f32 0.0, %v1288
  %v1290 = vpop.f32.mrb[0].mxu0
  %v1291 = vadd.f32 0.0, %v1290
  %v1292 = vpop.f32.mrb[0].mxu0
  %v1293 = vadd.f32 0.0, %v1292
  %v1294 = vpop.f32.mrb[0].mxu0
  %v1295 = vadd.f32 0.0, %v1294
  %1296 = vdwg.mxu0
  %1297 = vmatprep.subr.bf16.mxu0 0
  %1298 = vmatpush1.bf16.msra.mxu0 %v1208
  %1299 = vmatprep.subr.bf16.mxu0 0
  %1300 = vmatpush1.bf16.msra.mxu0 %v1211
  %1301 = vmatprep.subr.bf16.mxu0 0
  %1302 = vmatpush1.bf16.msra.mxu0 %v1214
  %1303 = vmatprep.subr.bf16.mxu0 0
  %1304 = vmatpush1.bf16.msra.mxu0 %v1217
  %1305 = vmatprep.subr.bf16.mxu0 0
  %1306 = vmatpush1.bf16.msra.mxu0 %v1220
  %1307 = vmatprep.subr.bf16.mxu0 0
  %1308 = vmatpush1.bf16.msra.mxu0 %v1223
  %1309 = vmatprep.subr.bf16.mxu0 0
  %1310 = vmatpush1.bf16.msra.mxu0 %v1226
  %1311 = vmatprep.subr.bf16.mxu0 0
  %1312 = vmatpush1.bf16.msra.mxu0 %v1229
  %1313 = vmatprep.subr.bf16.mxu0 0
  %1314 = vmatpush1.bf16.msra.mxu0 0
  %1315 = vmatprep.subr.bf16.mxu0 0
  %1316 = vmatpush1.bf16.msra.mxu0 0
  %1317 = vmatprep.subr.bf16.mxu0 0
  %1318 = vmatpush1.bf16.msra.mxu0 0
  %1319 = vmatprep.subr.bf16.mxu0 0
  %1320 = vmatpush1.bf16.msra.mxu0 0
  %1321 = vmatprep.subr.bf16.mxu0 0
  %1322 = vmatpush1.bf16.msra.mxu0 0
  %1323 = vmatprep.subr.bf16.mxu0 0
  %1324 = vmatpush1.bf16.msra.mxu0 0
  %1325 = vmatprep.subr.bf16.mxu0 0
  %1326 = vmatpush1.bf16.msra.mxu0 0
  %1327 = vmatprep.subr.bf16.mxu0 0
  %1328 = vmatpush1.bf16.msra.mxu0 0
  %1329 = vmatprep.mubr.bf16.mxu0 0
  %1330 = vmatmul.mubr.bf16.gmra.mrb[0].mxu0 0
  %v1331 = vpop.f32.mrb[0].mxu0
  %v1332 = vadd.f32 0.0, %v1331
  %v1333 = vpop.f32.mrb[0].mxu0
  %v1334 = vpop.f32.mrb[0].mxu0
  %v1335 = vadd.f32 0.0, %v1334
  %v1336 = vpop.f32.mrb[0].mxu0
  %1337 = vdwg.mxu0
  %s1338 = smul.u32 0, 6
  %s1339 = smul.addr %s1338, 8
  %s1340 = scalar_lea.vmem [#allocation2], %s1339
  %v1341 = vld [vmem:[%s1340] sm:$0xff]
  %v1342 = vld [vmem:[%s1340 + $0x8] sm:$0xff]
  %v1343 = vld [vmem:[%s1340 + $0x10] sm:$0xff]
  %v1344 = vld [vmem:[%s1340 + $0x30] sm:$0xff]
  %v1345 = vld [vmem:[%s1340 + $0x38] sm:$0xff]
  %v1346 = vld [vmem:[%s1340 + $0x40] sm:$0xff]
  %s1347 = smul.u32 14, 6
  %s1348 = smul.addr %s1347, 8
  %s1349 = scalar_lea.vmem [#allocation2], %s1348
  %v1350 = vld [vmem:[%s1349 + $0x18] sm:$0xff]
  %v1351 = vld [vmem:[%s1349 + $0x20] sm:$0xff]
  %v1352 = vld [vmem:[%s1349 + $0x28] sm:$0xff]
  %v1353 = vld [vmem:[%s1349 + $0x48] sm:$0xff]
  %v1354 = vld [vmem:[%s1349 + $0x50] sm:$0xff]
  %v1355 = vld [vmem:[%s1349 + $0x58] sm:$0xff]
  %v1356 = vadd.f32 %v1341, %v1077
  %v1357 = vadd.f32 %v1344, %v1081
  %v1358 = vxor.u32 %v1356, 2147483648
  %v1359 = vxor.u32 %v1357, 2147483648
  %v1360 = vmul.f32 %v1358, 1.442695
  %v1361 = vpow.pop %v1360
  %v1362 = vmul.f32 %v1359, 1.442695
  %v1363 = vpow.pop %v1362
  %v1364 = vadd.f32 %v1361, 1.0
  %v1365 = vadd.f32 %v1363, 1.0
  %v1366 = vrcp.pop %v1364
  %v1367 = vmul.f32 1.0, %v1366
  %v1368 = vrcp.pop %v1365
  %v1369 = vmul.f32 1.0, %v1368
  %v1370 = vadd.f32 %v1342, %v1079
  %v1371 = vadd.f32 %v1345, %v1083
  %v1372 = vxor.u32 %v1370, 2147483648
  %v1373 = vxor.u32 %v1371, 2147483648
  %v1374 = vmul.f32 %v1372, 1.442695
  %v1375 = vpow.pop %v1374
  %v1376 = vmul.f32 %v1373, 1.442695
  %v1377 = vpow.pop %v1376
  %v1378 = vadd.f32 %v1375, 1.0
  %v1379 = vadd.f32 %v1377, 1.0
  %v1380 = vrcp.pop %v1378
  %v1381 = vmul.f32 1.0, %v1380
  %v1382 = vrcp.pop %v1379
  %v1383 = vmul.f32 1.0, %v1382
  %v1385 = vlaneseq
  %v1386 = vshrl.u32 %v1385, 7
  %v1387 = vsub.s32 0, %v1386
  %v1388 = vrot.slane %v912, %v1387
  %v1390 = vadd.f32 %v1120, %v1388
  %v1391 = vadd.f32 %v1123, %v1388
  %v1392 = vmul.f32 %v1367, %v1390
  %v1393 = vmul.f32 %v1369, %v1391
  %v1394 = vadd.f32 %v1343, %v1392
  %v1395 = vadd.f32 %v1346, %v1393
  %v1396 = vtanh.pop %v1394
  %v1397 = vtanh.pop %v1395
  %v1398 = vsub.f32 1.0, %v1381
  %v1399 = vsub.f32 1.0, %v1383
  %v1400 = vmul.f32 %v1398, %v1396
  %v1401 = vmul.f32 %v1399, %v1397
  %v1402 = vmul.f32 %v1381, 0.0
  %v1403 = vmul.f32 %v1383, 0.0
  %v1404 = vadd.f32 %v1400, %v1402
  %v1405 = vadd.f32 %v1401, %v1403
  %v1406 = vadd.f32 %v1350, %v1289
  %v1407 = vadd.f32 %v1353, %v1293
  %v1408 = vxor.u32 %v1406, 2147483648
  %v1409 = vxor.u32 %v1407, 2147483648
  %v1410 = vmul.f32 %v1408, 1.442695
  %v1411 = vpow.pop %v1410
  %v1412 = vmul.f32 %v1409, 1.442695
  %v1413 = vpow.pop %v1412
  %v1414 = vadd.f32 %v1411, 1.0
  %v1415 = vadd.f32 %v1413, 1.0
  %v1416 = vrcp.pop %v1414
  %v1417 = vmul.f32 1.0, %v1416
  %v1418 = vrcp.pop %v1415
  %v1419 = vmul.f32 1.0, %v1418
  %v1420 = vadd.f32 %v1351, %v1291
  %v1421 = vadd.f32 %v1354, %v1295
  %v1422 = vxor.u32 %v1420, 2147483648
  %v1423 = vxor.u32 %v1421, 2147483648
  %v1424 = vmul.f32 %v1422, 1.442695
  %v1425 = vpow.pop %v1424
  %v1426 = vmul.f32 %v1423, 1.442695
  %v1427 = vpow.pop %v1426
  %v1428 = vadd.f32 %v1425, 1.0
  %v1429 = vadd.f32 %v1427, 1.0
  %v1430 = vrcp.pop %v1428
  %v1431 = vmul.f32 1.0, %v1430
  %v1432 = vrcp.pop %v1429
  %v1433 = vmul.f32 1.0, %v1432
  %v1435 = vlaneseq
  %v1436 = vshrl.u32 %v1435, 7
  %v1437 = vsub.s32 0, %v1436
  %v1438 = vrot.slane %v913, %v1437
  %v1440 = vadd.f32 %v1332, %v1438
  %v1441 = vadd.f32 %v1335, %v1438
  %v1442 = vmul.f32 %v1417, %v1440
  %v1443 = vmul.f32 %v1419, %v1441
  %v1444 = vadd.f32 %v1352, %v1442
  %v1445 = vadd.f32 %v1355, %v1443
  %v1446 = vtanh.pop %v1444
  %v1447 = vtanh.pop %v1445
  %v1448 = vsub.f32 1.0, %v1431
  %v1449 = vsub.f32 1.0, %v1433
  %v1450 = vmul.f32 %v1448, %v1446
  %v1451 = vmul.f32 %v1449, %v1447
  %v1452 = vmul.f32 %v1431, 0.0
  %v1453 = vmul.f32 %v1433, 0.0
  %v1454 = vadd.f32 %v1450, %v1452
  %v1455 = vadd.f32 %v1451, %v1453
  %v1456 = vpack.c.bf16 %v1405, %v1404
  %v1458 = vunpack.c.l.b16 %v1456
  %v1459 = vunpack.c.h.b16 %v1456
  %v1460 = vpack.c.b16 %v1458, %v1458
  %v1461 = vpack.c.b16 %v1459, %v1459
  %1464 = vst [vmem:[%s7] sm:$0xf] %v1460
  %1465 = vst [vmem:[%s7 + $0x4] sm:$0xf] %v1461
  %v1466 = vpack.c.bf16 %v1455, %v1454
  %v1468 = vunpack.c.l.b16 %v1466
  %v1469 = vunpack.c.h.b16 %v1466
  %v1470 = vpack.c.b16 %v1468, %v1468
  %v1471 = vpack.c.b16 %v1469, %v1469
  %s1474 = scalar_lea.vmem %s8, 56
  %1475 = vst [vmem:[%s1474] sm:$0xf] %v1470
  %1476 = vst [vmem:[%s1474 + $0x4] sm:$0xf] %v1471
  %1477 = vmatprep.subr.bf16.mxu0 %v995
  %1478 = vmatpush1.bf16.msra.mxu0 %v994
  %1479 = vmatprep.subr.bf16.mxu0 %v998
  %1480 = vmatpush1.bf16.msra.mxu0 %v997
  %1481 = vmatprep.subr.bf16.mxu0 %v1001
  %1482 = vmatpush1.bf16.msra.mxu0 %v1000
  %1483 = vmatprep.subr.bf16.mxu0 %v1004
  %1484 = vmatpush1.bf16.msra.mxu0 %v1003
  %1485 = vmatprep.subr.bf16.mxu0 %v1007
  %1486 = vmatpush1.bf16.msra.mxu0 %v1006
  %1487 = vmatprep.subr.bf16.mxu0 %v1010
  %1488 = vmatpush1.bf16.msra.mxu0 %v1009
  %1489 = vmatprep.subr.bf16.mxu0 %v1013
  %1490 = vmatpush1.bf16.msra.mxu0 %v1012
  %1491 = vmatprep.subr.bf16.mxu0 %v1016
  %1492 = vmatpush1.bf16.msra.mxu0 %v1015
  %1493 = vmatprep.subr.bf16.mxu0 0
  %1494 = vmatpush1.bf16.msra.mxu0 0
  %1495 = vmatprep.subr.bf16.mxu0 0
  %1496 = vmatpush1.bf16.msra.mxu0 0
  %1497 = vmatprep.subr.bf16.mxu0 0
  %1498 = vmatpush1.bf16.msra.mxu0 0
  %1499 = vmatprep.subr.bf16.mxu0 0
  %1500 = vmatpush1.bf16.msra.mxu0 0
  %1501 = vmatprep.subr.bf16.mxu0 0
  %1502 = vmatpush1.bf16.msra.mxu0 0
  %1503 = vmatprep.subr.bf16.mxu0 0
  %1504 = vmatpush1.bf16.msra.mxu0 0
  %1505 = vmatprep.subr.bf16.mxu0 0
  %1506 = vmatpush1.bf16.msra.mxu0 0
  %1507 = vmatprep.subr.bf16.mxu0 0
  %1508 = vmatpush1.bf16.msra.mxu0 0
  %1509 = vmatprep.mubr.bf16.mxu0 0
  %1510 = vmatmul.mubr.bf16.gmra.mrb[0].mxu0 %v1456
  %v1511 = vpop.f32.mrb[0].mxu0
  %v1512 = vadd.f32 0.0, %v1511
  %v1513 = vpop.f32.mrb[0].mxu0
  %v1514 = vadd.f32 0.0, %v1513
  %v1515 = vpop.f32.mrb[0].mxu0
  %v1516 = vadd.f32 0.0, %v1515
  %v1517 = vpop.f32.mrb[0].mxu0
  %v1518 = vadd.f32 0.0, %v1517
  %1519 = vdwg.mxu0
  %1520 = vmatprep.subr.bf16.mxu0 0
  %1521 = vmatpush1.bf16.msra.mxu0 %v996
  %1522 = vmatprep.subr.bf16.mxu0 0
  %1523 = vmatpush1.bf16.msra.mxu0 %v999
  %1524 = vmatprep.subr.bf16.mxu0 0
  %1525 = vmatpush1.bf16.msra.mxu0 %v1002
  %1526 = vmatprep.subr.bf16.mxu0 0
  %1527 = vmatpush1.bf16.msra.mxu0 %v1005
  %1528 = vmatprep.subr.bf16.mxu0 0
  %1529 = vmatpush1.bf16.msra.mxu0 %v1008
  %1530 = vmatprep.subr.bf16.mxu0 0
  %1531 = vmatpush1.bf16.msra.mxu0 %v1011
  %1532 = vmatprep.subr.bf16.mxu0 0
  %1533 = vmatpush1.bf16.msra.mxu0 %v1014
  %1534 = vmatprep.subr.bf16.mxu0 0
  %1535 = vmatpush1.bf16.msra.mxu0 %v1017
  %1536 = vmatprep.subr.bf16.mxu0 0
  %1537 = vmatpush1.bf16.msra.mxu0 0
  %1538 = vmatprep.subr.bf16.mxu0 0
  %1539 = vmatpush1.bf16.msra.mxu0 0
  %1540 = vmatprep.subr.bf16.mxu0 0
  %1541 = vmatpush1.bf16.msra.mxu0 0
  %1542 = vmatprep.subr.bf16.mxu0 0
  %1543 = vmatpush1.bf16.msra.mxu0 0
  %1544 = vmatprep.subr.bf16.mxu0 0
  %1545 = vmatpush1.bf16.msra.mxu0 0
  %1546 = vmatprep.subr.bf16.mxu0 0
  %1547 = vmatpush1.bf16.msra.mxu0 0
  %1548 = vmatprep.subr.bf16.mxu0 0
  %1549 = vmatpush1.bf16.msra.mxu0 0
  %1550 = vmatprep.subr.bf16.mxu0 0
  %1551 = vmatpush1.bf16.msra.mxu0 0
  %1552 = vmatprep.mubr.bf16.mxu0 0
  %1553 = vmatmul.mubr.bf16.gmra.mrb[0].mxu0 %v1456
  %v1554 = vpop.f32.mrb[0].mxu0
  %v1555 = vadd.f32 0.0, %v1554
  %v1556 = vpop.f32.mrb[0].mxu0
  %v1557 = vpop.f32.mrb[0].mxu0
  %v1558 = vadd.f32 0.0, %v1557
  %v1559 = vpop.f32.mrb[0].mxu0
  %1560 = vdwg.mxu0
  %1561 = vmatprep.subr.bf16.mxu0 %v1207
  %1562 = vmatpush1.bf16.msra.mxu0 %v1206
  %1563 = vmatprep.subr.bf16.mxu0 %v1210
  %1564 = vmatpush1.bf16.msra.mxu0 %v1209
  %1565 = vmatprep.subr.bf16.mxu0 %v1213
  %1566 = vmatpush1.bf16.msra.mxu0 %v1212
  %1567 = vmatprep.subr.bf16.mxu0 %v1216
  %1568 = vmatpush1.bf16.msra.mxu0 %v1215
  %1569 = vmatprep.subr.bf16.mxu0 %v1219
  %1570 = vmatpush1.bf16.msra.mxu0 %v1218
  %1571 = vmatprep.subr.bf16.mxu0 %v1222
  %1572 = vmatpush1.bf16.msra.mxu0 %v1221
  %1573 = vmatprep.subr.bf16.mxu0 %v1225
  %1574 = vmatpush1.bf16.msra.mxu0 %v1224
  %1575 = vmatprep.subr.bf16.mxu0 %v1228
  %1576 = vmatpush1.bf16.msra.mxu0 %v1227
  %1577 = vmatprep.subr.bf16.mxu0 0
  %1578 = vmatpush1.bf16.msra.mxu0 0
  %1579 = vmatprep.subr.bf16.mxu0 0
  %1580 = vmatpush1.bf16.msra.mxu0 0
  %1581 = vmatprep.subr.bf16.mxu0 0
  %1582 = vmatpush1.bf16.msra.mxu0 0
  %1583 = vmatprep.subr.bf16.mxu0 0
  %1584 = vmatpush1.bf16.msra.mxu0 0
  %1585 = vmatprep.subr.bf16.mxu0 0
  %1586 = vmatpush1.bf16.msra.mxu0 0
  %1587 = vmatprep.subr.bf16.mxu0 0
  %1588 = vmatpush1.bf16.msra.mxu0 0
  %1589 = vmatprep.subr.bf16.mxu0 0
  %1590 = vmatpush1.bf16.msra.mxu0 0
  %1591 = vmatprep.subr.bf16.mxu0 0
  %1592 = vmatpush1.bf16.msra.mxu0 0
  %1593 = vmatprep.mubr.bf16.mxu0 0
  %1594 = vmatmul.mubr.bf16.gmra.mrb[0].mxu0 %v1466
  %v1595 = vpop.f32.mrb[0].mxu0
  %v1596 = vadd.f32 0.0, %v1595
  %v1597 = vpop.f32.mrb[0].mxu0
  %v1598 = vadd.f32 0.0, %v1597
  %v1599 = vpop.f32.mrb[0].mxu0
  %v1600 = vadd.f32 0.0, %v1599
  %v1601 = vpop.f32.mrb[0].mxu0
  %v1602 = vadd.f32 0.0, %v1601
  %1603 = vdwg.mxu0
  %1604 = vmatprep.subr.bf16.mxu0 0
  %1605 = vmatpush1.bf16.msra.mxu0 %v1208
  %1606 = vmatprep.subr.bf16.mxu0 0
  %1607 = vmatpush1.bf16.msra.mxu0 %v1211
  %1608 = vmatprep.subr.bf16.mxu0 0
  %1609 = vmatpush1.bf16.msra.mxu0 %v1214
  %1610 = vmatprep.subr.bf16.mxu0 0
  %1611 = vmatpush1.bf16.msra.mxu0 %v1217
  %1612 = vmatprep.subr.bf16.mxu0 0
  %1613 = vmatpush1.bf16.msra.mxu0 %v1220
  %1614 = vmatprep.subr.bf16.mxu0 0
  %1615 = vmatpush1.bf16.msra.mxu0 %v1223
  %1616 = vmatprep.subr.bf16.mxu0 0
  %1617 = vmatpush1.bf16.msra.mxu0 %v1226
  %1618 = vmatprep.subr.bf16.mxu0 0
  %1619 = vmatpush1.bf16.msra.mxu0 %v1229
  %1620 = vmatprep.subr.bf16.mxu0 0
  %1621 = vmatpush1.bf16.msra.mxu0 0
  %1622 = vmatprep.subr.bf16.mxu0 0
  %1623 = vmatpush1.bf16.msra.mxu0 0
  %1624 = vmatprep.subr.bf16.mxu0 0
  %1625 = vmatpush1.bf16.msra.mxu0 0
  %1626 = vmatprep.subr.bf16.mxu0 0
  %1627 = vmatpush1.bf16.msra.mxu0 0
  %1628 = vmatprep.subr.bf16.mxu0 0
  %1629 = vmatpush1.bf16.msra.mxu0 0
  %1630 = vmatprep.subr.bf16.mxu0 0
  %1631 = vmatpush1.bf16.msra.mxu0 0
  %1632 = vmatprep.subr.bf16.mxu0 0
  %1633 = vmatpush1.bf16.msra.mxu0 0
  %1634 = vmatprep.subr.bf16.mxu0 0
  %1635 = vmatpush1.bf16.msra.mxu0 0
  %1636 = vmatprep.mubr.bf16.mxu0 0
  %1637 = vmatmul.mubr.bf16.gmra.mrb[0].mxu0 %v1466
  %v1638 = vpop.f32.mrb[0].mxu0
  %v1639 = vadd.f32 0.0, %v1638
  %v1640 = vpop.f32.mrb[0].mxu0
  %v1641 = vpop.f32.mrb[0].mxu0
  %v1642 = vadd.f32 0.0, %v1641
  %v1643 = vpop.f32.mrb[0].mxu0
  %1644 = vdwg.mxu0
  %s1645 = smul.u32 2, 6
  %s1646 = smul.addr %s1645, 8
  %s1647 = scalar_lea.vmem [#allocation2], %s1646
  %v1648 = vld [vmem:[%s1647] sm:$0xff]
  %v1649 = vld [vmem:[%s1647 + $0x8] sm:$0xff]
  %v1650 = vld [vmem:[%s1647 + $0x10] sm:$0xff]
  %v1651 = vld [vmem:[%s1647 + $0x30] sm:$0xff]
  %v1652 = vld [vmem:[%s1647 + $0x38] sm:$0xff]
  %v1653 = vld [vmem:[%s1647 + $0x40] sm:$0xff]
  %s1654 = smul.u32 12, 6
  %s1655 = smul.addr %s1654, 8
  %s1656 = scalar_lea.vmem [#allocation2], %s1655
  %v1657 = vld [vmem:[%s1656 + $0x18] sm:$0xff]
  %v1658 = vld [vmem:[%s1656 + $0x20] sm:$0xff]
  %v1659 = vld [vmem:[%s1656 + $0x28] sm:$0xff]
  %v1660 = vld [vmem:[%s1656 + $0x48] sm:$0xff]
  %v1661 = vld [vmem:[%s1656 + $0x50] sm:$0xff]
  %v1662 = vld [vmem:[%s1656 + $0x58] sm:$0xff]
  %v1663 = vadd.f32 %v1648, %v1512
  %v1664 = vadd.f32 %v1651, %v1516
  %v1665 = vxor.u32 %v1663, 2147483648
  %v1666 = vxor.u32 %v1664, 2147483648
  %v1667 = vmul.f32 %v1665, 1.442695
  %v1668 = vpow.pop %v1667
  %v1669 = vmul.f32 %v1666, 1.442695
  %v1670 = vpow.pop %v1669
  %v1671 = vadd.f32 %v1668, 1.0
  %v1672 = vadd.f32 %v1670, 1.0
  %v1673 = vrcp.pop %v1671
  %v1674 = vmul.f32 1.0, %v1673
  %v1675 = vrcp.pop %v1672
  %v1676 = vmul.f32 1.0, %v1675
  %v1677 = vadd.f32 %v1649, %v1514
  %v1678 = vadd.f32 %v1652, %v1518
  %v1679 = vxor.u32 %v1677, 2147483648
  %v1680 = vxor.u32 %v1678, 2147483648
  %v1681 = vmul.f32 %v1679, 1.442695
  %v1682 = vpow.pop %v1681
  %v1683 = vmul.f32 %v1680, 1.442695
  %v1684 = vpow.pop %v1683
  %v1685 = vadd.f32 %v1682, 1.0
  %v1686 = vadd.f32 %v1684, 1.0
  %v1687 = vrcp.pop %v1685
  %v1688 = vmul.f32 1.0, %v1687
  %v1689 = vrcp.pop %v1686
  %v1690 = vmul.f32 1.0, %v1689
  %v1691 = vadd.f32 %v1555, %v1388
  %v1692 = vadd.f32 %v1558, %v1388
  %v1693 = vmul.f32 %v1674, %v1691
  %v1694 = vmul.f32 %v1676, %v1692
  %v1695 = vadd.f32 %v1650, %v1693
  %v1696 = vadd.f32 %v1653, %v1694
  %v1697 = vtanh.pop %v1695
  %v1698 = vtanh.pop %v1696
  %v1699 = vsub.f32 1.0, %v1688
  %v1700 = vsub.f32 1.0, %v1690
  %v1701 = vmul.f32 %v1699, %v1697
  %v1702 = vmul.f32 %v1700, %v1698
  %v1703 = vmul.f32 %v1688, %v1404
  %v1704 = vmul.f32 %v1690, %v1405
  %v1705 = vadd.f32 %v1701, %v1703
  %v1706 = vadd.f32 %v1702, %v1704
  %v1707 = vadd.f32 %v1657, %v1596
  %v1708 = vadd.f32 %v1660, %v1600
  %v1709 = vxor.u32 %v1707, 2147483648
  %v1710 = vxor.u32 %v1708, 2147483648
  %v1711 = vmul.f32 %v1709, 1.442695
  %v1712 = vpow.pop %v1711
  %v1713 = vmul.f32 %v1710, 1.442695
  %v1714 = vpow.pop %v1713
  %v1715 = vadd.f32 %v1712, 1.0
  %v1716 = vadd.f32 %v1714, 1.0
  %v1717 = vrcp.pop %v1715
  %v1718 = vmul.f32 1.0, %v1717
  %v1719 = vrcp.pop %v1716
  %v1720 = vmul.f32 1.0, %v1719
  %v1721 = vadd.f32 %v1658, %v1598
  %v1722 = vadd.f32 %v1661, %v1602
  %v1723 = vxor.u32 %v1721, 2147483648
  %v1724 = vxor.u32 %v1722, 2147483648
  %v1725 = vmul.f32 %v1723, 1.442695
  %v1726 = vpow.pop %v1725
  %v1727 = vmul.f32 %v1724, 1.442695
  %v1728 = vpow.pop %v1727
  %v1729 = vadd.f32 %v1726, 1.0
  %v1730 = vadd.f32 %v1728, 1.0
  %v1731 = vrcp.pop %v1729
  %v1732 = vmul.f32 1.0, %v1731
  %v1733 = vrcp.pop %v1730
  %v1734 = vmul.f32 1.0, %v1733
  %v1735 = vadd.f32 %v1639, %v1438
  %v1736 = vadd.f32 %v1642, %v1438
  %v1737 = vmul.f32 %v1718, %v1735
  %v1738 = vmul.f32 %v1720, %v1736
  %v1739 = vadd.f32 %v1659, %v1737
  %v1740 = vadd.f32 %v1662, %v1738
  %v1741 = vtanh.pop %v1739
  %v1742 = vtanh.pop %v1740
  %v1743 = vsub.f32 1.0, %v1732
  %v1744 = vsub.f32 1.0, %v1734
  %v1745 = vmul.f32 %v1743, %v1741
  %v1746 = vmul.f32 %v1744, %v1742
  %v1747 = vmul.f32 %v1732, %v1454
  %v1748 = vmul.f32 %v1734, %v1455
  %v1749 = vadd.f32 %v1745, %v1747
  %v1750 = vadd.f32 %v1746, %v1748
  %v1751 = vpack.c.bf16 %v1706, %v1705
  %v1753 = vunpack.c.l.b16 %v1751
  %v1754 = vunpack.c.h.b16 %v1751
  %v1755 = vpack.c.b16 %v1753, %v1753
  %v1756 = vpack.c.b16 %v1754, %v1754
  %s1759 = scalar_lea.vmem %s7, 8
  %1760 = vst [vmem:[%s1759] sm:$0xf] %v1755
  %1761 = vst [vmem:[%s1759 + $0x4] sm:$0xf] %v1756
  %v1762 = vpack.c.bf16 %v1750, %v1749
  %v1764 = vunpack.c.l.b16 %v1762
  %v1765 = vunpack.c.h.b16 %v1762
  %v1766 = vpack.c.b16 %v1764, %v1764
  %v1767 = vpack.c.b16 %v1765, %v1765
  %s1770 = scalar_lea.vmem %s8, 48
  %1771 = vst [vmem:[%s1770] sm:$0xf] %v1766
  %1772 = vst [vmem:[%s1770 + $0x4] sm:$0xf] %v1767
  %1773 = vmatprep.subr.bf16.mxu0 %v995
  %1774 = vmatpush1.bf16.msra.mxu0 %v994
  %1775 = vmatprep.subr.bf16.mxu0 %v998
  %1776 = vmatpush1.bf16.msra.mxu0 %v997
  %1777 = vmatprep.subr.bf16.mxu0 %v1001
  %1778 = vmatpush1.bf16.msra.mxu0 %v1000
  %1779 = vmatprep.subr.bf16.mxu0 %v1004
  %1780 = vmatpush1.bf16.msra.mxu0 %v1003
  %1781 = vmatprep.subr.bf16.mxu0 %v1007
  %1782 = vmatpush1.bf16.msra.mxu0 %v1006
  %1783 = vmatprep.subr.bf16.mxu0 %v1010
  %1784 = vmatpush1.bf16.msra.mxu0 %v1009
  %1785 = vmatprep.subr.bf16.mxu0 %v1013
  %1786 = vmatpush1.bf16.msra.mxu0 %v1012
  %1787 = vmatprep.subr.bf16.mxu0 %v1016
  %1788 = vmatpush1.bf16.msra.mxu0 %v1015
  %1789 = vmatprep.subr.bf16.mxu0 0
  %1790 = vmatpush1.bf16.msra.mxu0 0
  %1791 = vmatprep.subr.bf16.mxu0 0
  %1792 = vmatpush1.bf16.msra.mxu0 0
  %1793 = vmatprep.subr.bf16.mxu0 0
  %1794 = vmatpush1.bf16.msra.mxu0 0
  %1795 = vmatprep.subr.bf16.mxu0 0
  %1796 = vmatpush1.bf16.msra.mxu0 0
  %1797 = vmatprep.subr.bf16.mxu0 0
  %1798 = vmatpush1.bf16.msra.mxu0 0
  %1799 = vmatprep.subr.bf16.mxu0 0
  %1800 = vmatpush1.bf16.msra.mxu0 0
  %1801 = vmatprep.subr.bf16.mxu0 0
  %1802 = vmatpush1.bf16.msra.mxu0 0
  %1803 = vmatprep.subr.bf16.mxu0 0
  %1804 = vmatpush1.bf16.msra.mxu0 0
  %1805 = vmatprep.mubr.bf16.mxu0 0
  %1806 = vmatmul.mubr.bf16.gmra.mrb[0].mxu0 %v1751
  %v1807 = vpop.f32.mrb[0].mxu0
  %v1808 = vadd.f32 0.0, %v1807
  %v1809 = vpop.f32.mrb[0].mxu0
  %v1810 = vadd.f32 0.0, %v1809
  %v1811 = vpop.f32.mrb[0].mxu0
  %v1812 = vadd.f32 0.0, %v1811
  %v1813 = vpop.f32.mrb[0].mxu0
  %v1814 = vadd.f32 0.0, %v1813
  %1815 = vdwg.mxu0
  %1816 = vmatprep.subr.bf16.mxu0 0
  %1817 = vmatpush1.bf16.msra.mxu0 %v996
  %1818 = vmatprep.subr.bf16.mxu0 0
  %1819 = vmatpush1.bf16.msra.mxu0 %v999
  %1820 = vmatprep.subr.bf16.mxu0 0
  %1821 = vmatpush1.bf16.msra.mxu0 %v1002
  %1822 = vmatprep.subr.bf16.mxu0 0
  %1823 = vmatpush1.bf16.msra.mxu0 %v1005
  %1824 = vmatprep.subr.bf16.mxu0 0
  %1825 = vmatpush1.bf16.msra.mxu0 %v1008
  %1826 = vmatprep.subr.bf16.mxu0 0
  %1827 = vmatpush1.bf16.msra.mxu0 %v1011
  %1828 = vmatprep.subr.bf16.mxu0 0
  %1829 = vmatpush1.bf16.msra.mxu0 %v1014
  %1830 = vmatprep.subr.bf16.mxu0 0
  %1831 = vmatpush1.bf16.msra.mxu0 %v1017
  %1832 = vmatprep.subr.bf16.mxu0 0
  %1833 = vmatpush1.bf16.msra.mxu0 0
  %1834 = vmatprep.subr.bf16.mxu0 0
  %1835 = vmatpush1.bf16.msra.mxu0 0
  %1836 = vmatprep.subr.bf16.mxu0 0
  %1837 = vmatpush1.bf16.msra.mxu0 0
  %1838 = vmatprep.subr.bf16.mxu0 0
  %1839 = vmatpush1.bf16.msra.mxu0 0
  %1840 = vmatprep.subr.bf16.mxu0 0
  %1841 = vmatpush1.bf16.msra.mxu0 0
  %1842 = vmatprep.subr.bf16.mxu0 0
  %1843 = vmatpush1.bf16.msra.mxu0 0
  %1844 = vmatprep.subr.bf16.mxu0 0
  %1845 = vmatpush1.bf16.msra.mxu0 0
  %1846 = vmatprep.subr.bf16.mxu0 0
  %1847 = vmatpush1.bf16.msra.mxu0 0
  %1848 = vmatprep.mubr.bf16.mxu0 0
  %1849 = vmatmul.mubr.bf16.gmra.mrb[0].mxu0 %v1751
  %v1850 = vpop.f32.mrb[0].mxu0
  %v1851 = vadd.f32 0.0, %v1850
  %v1852 = vpop.f32.mrb[0].mxu0
  %v1853 = vpop.f32.mrb[0].mxu0
  %v1854 = vadd.f32 0.0, %v1853
  %v1855 = vpop.f32.mrb[0].mxu0
  %1856 = vdwg.mxu0
  %1857 = vmatprep.subr.bf16.mxu0 %v1207
  %1858 = vmatpush1.bf16.msra.mxu0 %v1206
  %1859 = vmatprep.subr.bf16.mxu0 %v1210
  %1860 = vmatpush1.bf16.msra.mxu0 %v1209
  %1861 = vmatprep.subr.bf16.mxu0 %v1213
  %1862 = vmatpush1.bf16.msra.mxu0 %v1212
  %1863 = vmatprep.subr.bf16.mxu0 %v1216
  %1864 = vmatpush1.bf16.msra.mxu0 %v1215
  %1865 = vmatprep.subr.bf16.mxu0 %v1219
  %1866 = vmatpush1.bf16.msra.mxu0 %v1218
  %1867 = vmatprep.subr.bf16.mxu0 %v1222
  %1868 = vmatpush1.bf16.msra.mxu0 %v1221
  %1869 = vmatprep.subr.bf16.mxu0 %v1225
  %1870 = vmatpush1.bf16.msra.mxu0 %v1224
  %1871 = vmatprep.subr.bf16.mxu0 %v1228
  %1872 = vmatpush1.bf16.msra.mxu0 %v1227
  %1873 = vmatprep.subr.bf16.mxu0 0
  %1874 = vmatpush1.bf16.msra.mxu0 0
  %1875 = vmatprep.subr.bf16.mxu0 0
  %1876 = vmatpush1.bf16.msra.mxu0 0
  %1877 = vmatprep.subr.bf16.mxu0 0
  %1878 = vmatpush1.bf16.msra.mxu0 0
  %1879 = vmatprep.subr.bf16.mxu0 0
  %1880 = vmatpush1.bf16.msra.mxu0 0
  %1881 = vmatprep.subr.bf16.mxu0 0
  %1882 = vmatpush1.bf16.msra.mxu0 0
  %1883 = vmatprep.subr.bf16.mxu0 0
  %1884 = vmatpush1.bf16.msra.mxu0 0
  %1885 = vmatprep.subr.bf16.mxu0 0
  %1886 = vmatpush1.bf16.msra.mxu0 0
  %1887 = vmatprep.subr.bf16.mxu0 0
  %1888 = vmatpush1.bf16.msra.mxu0 0
  %1889 = vmatprep.mubr.bf16.mxu0 0
  %1890 = vmatmul.mubr.bf16.gmra.mrb[0].mxu0 %v1762
  %v1891 = vpop.f32.mrb[0].mxu0
  %v1892 = vadd.f32 0.0, %v1891
  %v1893 = vpop.f32.mrb[0].mxu0
  %v1894 = vadd.f32 0.0, %v1893
  %v1895 = vpop.f32.mrb[0].mxu0
  %v1896 = vadd.f32 0.0, %v1895
  %v1897 = vpop.f32.mrb[0].mxu0
  %v1898 = vadd.f32 0.0, %v1897
  %1899 = vdwg.mxu0
  %1900 = vmatprep.subr.bf16.mxu0 0
  %1901 = vmatpush1.bf16.msra.mxu0 %v1208
  %1902 = vmatprep.subr.bf16.mxu0 0
  %1903 = vmatpush1.bf16.msra.mxu0 %v1211
  %1904 = vmatprep.subr.bf16.mxu0 0
  %1905 = vmatpush1.bf16.msra.mxu0 %v1214
  %1906 = vmatprep.subr.bf16.mxu0 0
  %1907 = vmatpush1.bf16.msra.mxu0 %v1217
  %1908 = vmatprep.subr.bf16.mxu0 0
  %1909 = vmatpush1.bf16.msra.mxu0 %v1220
  %1910 = vmatprep.subr.bf16.mxu0 0
  %1911 = vmatpush1.bf16.msra.mxu0 %v1223
  %1912 = vmatprep.subr.bf16.mxu0 0
  %1913 = vmatpush1.bf16.msra.mxu0 %v1226
  %1914 = vmatprep.subr.bf16.mxu0 0
  %1915 = vmatpush1.bf16.msra.mxu0 %v1229
  %1916 = vmatprep.subr.bf16.mxu0 0
  %1917 = vmatpush1.bf16.msra.mxu0 0
  %1918 = vmatprep.subr.bf16.mxu0 0
  %1919 = vmatpush1.bf16.msra.mxu0 0
  %1920 = vmatprep.subr.bf16.mxu0 0
  %1921 = vmatpush1.bf16.msra.mxu0 0
  %1922 = vmatprep.subr.bf16.mxu0 0
  %1923 = vmatpush1.bf16.msra.mxu0 0
  %1924 = vmatprep.subr.bf16.mxu0 0
  %1925 = vmatpush1.bf16.msra.mxu0 0
  %1926 = vmatprep.subr.bf16.mxu0 0
  %1927 = vmatpush1.bf16.msra.mxu0 0
  %1928 = vmatprep.subr.bf16.mxu0 0
  %1929 = vmatpush1.bf16.msra.mxu0 0
  %1930 = vmatprep.subr.bf16.mxu0 0
  %1931 = vmatpush1.bf16.msra.mxu0 0
  %1932 = vmatprep.mubr.bf16.mxu0 0
  %1933 = vmatmul.mubr.bf16.gmra.mrb[0].mxu0 %v1762
  %v1934 = vpop.f32.mrb[0].mxu0
  %v1935 = vadd.f32 0.0, %v1934
  %v1936 = vpop.f32.mrb[0].mxu0
  %v1937 = vpop.f32.mrb[0].mxu0
  %v1938 = vadd.f32 0.0, %v1937
  %v1939 = vpop.f32.mrb[0].mxu0
  %1940 = vdwg.mxu0
  %s1941 = smul.u32 4, 6
  %s1942 = smul.addr %s1941, 8
  %s1943 = scalar_lea.vmem [#allocation2], %s1942
  %v1944 = vld [vmem:[%s1943] sm:$0xff]
  %v1945 = vld [vmem:[%s1943 + $0x8] sm:$0xff]
  %v1946 = vld [vmem:[%s1943 + $0x10] sm:$0xff]
  %v1947 = vld [vmem:[%s1943 + $0x30] sm:$0xff]
  %v1948 = vld [vmem:[%s1943 + $0x38] sm:$0xff]
  %v1949 = vld [vmem:[%s1943 + $0x40] sm:$0xff]
  %s1950 = smul.u32 10, 6
  %s1951 = smul.addr %s1950, 8
  %s1952 = scalar_lea.vmem [#allocation2], %s1951
  %v1953 = vld [vmem:[%s1952 + $0x18] sm:$0xff]
  %v1954 = vld [vmem:[%s1952 + $0x20] sm:$0xff]
  %v1955 = vld [vmem:[%s1952 + $0x28] sm:$0xff]
  %v1956 = vld [vmem:[%s1952 + $0x48] sm:$0xff]
  %v1957 = vld [vmem:[%s1952 + $0x50] sm:$0xff]
  %v1958 = vld [vmem:[%s1952 + $0x58] sm:$0xff]
  %v1959 = vadd.f32 %v1944, %v1808
  %v1960 = vadd.f32 %v1947, %v1812
  %v1961 = vxor.u32 %v1959, 2147483648
  %v1962 = vxor.u32 %v1960, 2147483648
  %v1963 = vmul.f32 %v1961, 1.442695
  %v1964 = vpow.pop %v1963
  %v1965 = vmul.f32 %v1962, 1.442695
  %v1966 = vpow.pop %v1965
  %v1967 = vadd.f32 %v1964, 1.0
  %v1968 = vadd.f32 %v1966, 1.0
  %v1969 = vrcp.pop %v1967
  %v1970 = vmul.f32 1.0, %v1969
  %v1971 = vrcp.pop %v1968
  %v1972 = vmul.f32 1.0, %v1971
  %v1973 = vadd.f32 %v1945, %v1810
  %v1974 = vadd.f32 %v1948, %v1814
  %v1975 = vxor.u32 %v1973, 2147483648
  %v1976 = vxor.u32 %v1974, 2147483648
  %v1977 = vmul.f32 %v1975, 1.442695
  %v1978 = vpow.pop %v1977
  %v1979 = vmul.f32 %v1976, 1.442695
  %v1980 = vpow.pop %v1979
  %v1981 = vadd.f32 %v1978, 1.0
  %v1982 = vadd.f32 %v1980, 1.0
  %v1983 = vrcp.pop %v1981
  %v1984 = vmul.f32 1.0, %v1983
  %v1985 = vrcp.pop %v1982
  %v1986 = vmul.f32 1.0, %v1985
  %v1987 = vadd.f32 %v1851, %v1388
  %v1988 = vadd.f32 %v1854, %v1388
  %v1989 = vmul.f32 %v1970, %v1987
  %v1990 = vmul.f32 %v1972, %v1988
  %v1991 = vadd.f32 %v1946, %v1989
  %v1992 = vadd.f32 %v1949, %v1990
  %v1993 = vtanh.pop %v1991
  %v1994 = vtanh.pop %v1992
  %v1995 = vsub.f32 1.0, %v1984
  %v1996 = vsub.f32 1.0, %v1986
  %v1997 = vmul.f32 %v1995, %v1993
  %v1998 = vmul.f32 %v1996, %v1994
  %v1999 = vmul.f32 %v1984, %v1705
  %v2000 = vmul.f32 %v1986, %v1706
  %v2001 = vadd.f32 %v1997, %v1999
  %v2002 = vadd.f32 %v1998, %v2000
  %v2003 = vadd.f32 %v1953, %v1892
  %v2004 = vadd.f32 %v1956, %v1896
  %v2005 = vxor.u32 %v2003, 2147483648
  %v2006 = vxor.u32 %v2004, 2147483648
  %v2007 = vmul.f32 %v2005, 1.442695
  %v2008 = vpow.pop %v2007
  %v2009 = vmul.f32 %v2006, 1.442695
  %v2010 = vpow.pop %v2009
  %v2011 = vadd.f32 %v2008, 1.0
  %v2012 = vadd.f32 %v2010, 1.0
  %v2013 = vrcp.pop %v2011
  %v2014 = vmul.f32 1.0, %v2013
  %v2015 = vrcp.pop %v2012
  %v2016 = vmul.f32 1.0, %v2015
  %v2017 = vadd.f32 %v1954, %v1894
  %v2018 = vadd.f32 %v1957, %v1898
  %v2019 = vxor.u32 %v2017, 2147483648
  %v2020 = vxor.u32 %v2018, 2147483648
  %v2021 = vmul.f32 %v2019, 1.442695
  %v2022 = vpow.pop %v2021
  %v2023 = vmul.f32 %v2020, 1.442695
  %v2024 = vpow.pop %v2023
  %v2025 = vadd.f32 %v2022, 1.0
  %v2026 = vadd.f32 %v2024, 1.0
  %v2027 = vrcp.pop %v2025
  %v2028 = vmul.f32 1.0, %v2027
  %v2029 = vrcp.pop %v2026
  %v2030 = vmul.f32 1.0, %v2029
  %v2031 = vadd.f32 %v1935, %v1438
  %v2032 = vadd.f32 %v1938, %v1438
  %v2033 = vmul.f32 %v2014, %v2031
  %v2034 = vmul.f32 %v2016, %v2032
  %v2035 = vadd.f32 %v1955, %v2033
  %v2036 = vadd.f32 %v1958, %v2034
  %v2037 = vtanh.pop %v2035
  %v2038 = vtanh.pop %v2036
  %v2039 = vsub.f32 1.0, %v2028
  %v2040 = vsub.f32 1.0, %v2030
  %v2041 = vmul.f32 %v2039, %v2037
  %v2042 = vmul.f32 %v2040, %v2038
  %v2043 = vmul.f32 %v2028, %v1749
  %v2044 = vmul.f32 %v2030, %v1750
  %v2045 = vadd.f32 %v2041, %v2043
  %v2046 = vadd.f32 %v2042, %v2044
  %v2047 = vpack.c.bf16 %v2002, %v2001
  %v2049 = vunpack.c.l.b16 %v2047
  %v2050 = vunpack.c.h.b16 %v2047
  %v2051 = vpack.c.b16 %v2049, %v2049
  %v2052 = vpack.c.b16 %v2050, %v2050
  %s2055 = scalar_lea.vmem %s7, 16
  %2056 = vst [vmem:[%s2055] sm:$0xf] %v2051
  %2057 = vst [vmem:[%s2055 + $0x4] sm:$0xf] %v2052
  %v2058 = vpack.c.bf16 %v2046, %v2045
  %v2060 = vunpack.c.l.b16 %v2058
  %v2061 = vunpack.c.h.b16 %v2058
  %v2062 = vpack.c.b16 %v2060, %v2060
  %v2063 = vpack.c.b16 %v2061, %v2061
  %s2066 = scalar_lea.vmem %s8, 40
  %2067 = vst [vmem:[%s2066] sm:$0xf] %v2062
  %2068 = vst [vmem:[%s2066 + $0x4] sm:$0xf] %v2063
  %2069 = vmatprep.subr.bf16.mxu0 %v995
  %2070 = vmatpush1.bf16.msra.mxu0 %v994
  %2071 = vmatprep.subr.bf16.mxu0 %v998
  %2072 = vmatpush1.bf16.msra.mxu0 %v997
  %2073 = vmatprep.subr.bf16.mxu0 %v1001
  %2074 = vmatpush1.bf16.msra.mxu0 %v1000
  %2075 = vmatprep.subr.bf16.mxu0 %v1004
  %2076 = vmatpush1.bf16.msra.mxu0 %v1003
  %2077 = vmatprep.subr.bf16.mxu0 %v1007
  %2078 = vmatpush1.bf16.msra.mxu0 %v1006
  %2079 = vmatprep.subr.bf16.mxu0 %v1010
  %2080 = vmatpush1.bf16.msra.mxu0 %v1009
  %2081 = vmatprep.subr.bf16.mxu0 %v1013
  %2082 = vmatpush1.bf16.msra.mxu0 %v1012
  %2083 = vmatprep.subr.bf16.mxu0 %v1016
  %2084 = vmatpush1.bf16.msra.mxu0 %v1015
  %2085 = vmatprep.subr.bf16.mxu0 0
  %2086 = vmatpush1.bf16.msra.mxu0 0
  %2087 = vmatprep.subr.bf16.mxu0 0
  %2088 = vmatpush1.bf16.msra.mxu0 0
  %2089 = vmatprep.subr.bf16.mxu0 0
  %2090 = vmatpush1.bf16.msra.mxu0 0
  %2091 = vmatprep.subr.bf16.mxu0 0
  %2092 = vmatpush1.bf16.msra.mxu0 0
  %2093 = vmatprep.subr.bf16.mxu0 0
  %2094 = vmatpush1.bf16.msra.mxu0 0
  %2095 = vmatprep.subr.bf16.mxu0 0
  %2096 = vmatpush1.bf16.msra.mxu0 0
  %2097 = vmatprep.subr.bf16.mxu0 0
  %2098 = vmatpush1.bf16.msra.mxu0 0
  %2099 = vmatprep.subr.bf16.mxu0 0
  %2100 = vmatpush1.bf16.msra.mxu0 0
  %2101 = vmatprep.mubr.bf16.mxu0 0
  %2102 = vmatmul.mubr.bf16.gmra.mrb[0].mxu0 %v2047
  %v2103 = vpop.f32.mrb[0].mxu0
  %v2104 = vadd.f32 0.0, %v2103
  %v2105 = vpop.f32.mrb[0].mxu0
  %v2106 = vadd.f32 0.0, %v2105
  %v2107 = vpop.f32.mrb[0].mxu0
  %v2108 = vadd.f32 0.0, %v2107
  %v2109 = vpop.f32.mrb[0].mxu0
  %v2110 = vadd.f32 0.0, %v2109
  %2111 = vdwg.mxu0
  %2112 = vmatprep.subr.bf16.mxu0 0
  %2113 = vmatpush1.bf16.msra.mxu0 %v996
  %2114 = vmatprep.subr.bf16.mxu0 0
  %2115 = vmatpush1.bf16.msra.mxu0 %v999
  %2116 = vmatprep.subr.bf16.mxu0 0
  %2117 = vmatpush1.bf16.msra.mxu0 %v1002
  %2118 = vmatprep.subr.bf16.mxu0 0
  %2119 = vmatpush1.bf16.msra.mxu0 %v1005
  %2120 = vmatprep.subr.bf16.mxu0 0
  %2121 = vmatpush1.bf16.msra.mxu0 %v1008
  %2122 = vmatprep.subr.bf16.mxu0 0
  %2123 = vmatpush1.bf16.msra.mxu0 %v1011
  %2124 = vmatprep.subr.bf16.mxu0 0
  %2125 = vmatpush1.bf16.msra.mxu0 %v1014
  %2126 = vmatprep.subr.bf16.mxu0 0
  %2127 = vmatpush1.bf16.msra.mxu0 %v1017
  %2128 = vmatprep.subr.bf16.mxu0 0
  %2129 = vmatpush1.bf16.msra.mxu0 0
  %2130 = vmatprep.subr.bf16.mxu0 0
  %2131 = vmatpush1.bf16.msra.mxu0 0
  %2132 = vmatprep.subr.bf16.mxu0 0
  %2133 = vmatpush1.bf16.msra.mxu0 0
  %2134 = vmatprep.subr.bf16.mxu0 0
  %2135 = vmatpush1.bf16.msra.mxu0 0
  %2136 = vmatprep.subr.bf16.mxu0 0
  %2137 = vmatpush1.bf16.msra.mxu0 0
  %2138 = vmatprep.subr.bf16.mxu0 0
  %2139 = vmatpush1.bf16.msra.mxu0 0
  %2140 = vmatprep.subr.bf16.mxu0 0
  %2141 = vmatpush1.bf16.msra.mxu0 0
  %2142 = vmatprep.subr.bf16.mxu0 0
  %2143 = vmatpush1.bf16.msra.mxu0 0
  %2144 = vmatprep.mubr.bf16.mxu0 0
  %2145 = vmatmul.mubr.bf16.gmra.mrb[0].mxu0 %v2047
  %v2146 = vpop.f32.mrb[0].mxu0
  %v2147 = vadd.f32 0.0, %v2146
  %v2148 = vpop.f32.mrb[0].mxu0
  %v2149 = vpop.f32.mrb[0].mxu0
  %v2150 = vadd.f32 0.0, %v2149
  %v2151 = vpop.f32.mrb[0].mxu0
  %2152 = vdwg.mxu0
  %2153 = vmatprep.subr.bf16.mxu0 %v1207
  %2154 = vmatpush1.bf16.msra.mxu0 %v1206
  %2155 = vmatprep.subr.bf16.mxu0 %v1210
  %2156 = vmatpush1.bf16.msra.mxu0 %v1209
  %2157 = vmatprep.subr.bf16.mxu0 %v1213
  %2158 = vmatpush1.bf16.msra.mxu0 %v1212
  %2159 = vmatprep.subr.bf16.mxu0 %v1216
  %2160 = vmatpush1.bf16.msra.mxu0 %v1215
  %2161 = vmatprep.subr.bf16.mxu0 %v1219
  %2162 = vmatpush1.bf16.msra.mxu0 %v1218
  %2163 = vmatprep.subr.bf16.mxu0 %v1222
  %2164 = vmatpush1.bf16.msra.mxu0 %v1221
  %2165 = vmatprep.subr.bf16.mxu0 %v1225
  %2166 = vmatpush1.bf16.msra.mxu0 %v1224
  %2167 = vmatprep.subr.bf16.mxu0 %v1228
  %2168 = vmatpush1.bf16.msra.mxu0 %v1227
  %2169 = vmatprep.subr.bf16.mxu0 0
  %2170 = vmatpush1.bf16.msra.mxu0 0
  %2171 = vmatprep.subr.bf16.mxu0 0
  %2172 = vmatpush1.bf16.msra.mxu0 0
  %2173 = vmatprep.subr.bf16.mxu0 0
  %2174 = vmatpush1.bf16.msra.mxu0 0
  %2175 = vmatprep.subr.bf16.mxu0 0
  %2176 = vmatpush1.bf16.msra.mxu0 0
  %2177 = vmatprep.subr.bf16.mxu0 0
  %2178 = vmatpush1.bf16.msra.mxu0 0
  %2179 = vmatprep.subr.bf16.mxu0 0
  %2180 = vmatpush1.bf16.msra.mxu0 0
  %2181 = vmatprep.subr.bf16.mxu0 0
  %2182 = vmatpush1.bf16.msra.mxu0 0
  %2183 = vmatprep.subr.bf16.mxu0 0
  %2184 = vmatpush1.bf16.msra.mxu0 0
  %2185 = vmatprep.mubr.bf16.mxu0 0
  %2186 = vmatmul.mubr.bf16.gmra.mrb[0].mxu0 %v2058
  %v2187 = vpop.f32.mrb[0].mxu0
  %v2188 = vadd.f32 0.0, %v2187
  %v2189 = vpop.f32.mrb[0].mxu0
  %v2190 = vadd.f32 0.0, %v2189
  %v2191 = vpop.f32.mrb[0].mxu0
  %v2192 = vadd.f32 0.0, %v2191
  %v2193 = vpop.f32.mrb[0].mxu0
  %v2194 = vadd.f32 0.0, %v2193
  %2195 = vdwg.mxu0
  %2196 = vmatprep.subr.bf16.mxu0 0
  %2197 = vmatpush1.bf16.msra.mxu0 %v1208
  %2198 = vmatprep.subr.bf16.mxu0 0
  %2199 = vmatpush1.bf16.msra.mxu0 %v1211
  %2200 = vmatprep.subr.bf16.mxu0 0
  %2201 = vmatpush1.bf16.msra.mxu0 %v1214
  %2202 = vmatprep.subr.bf16.mxu0 0
  %2203 = vmatpush1.bf16.msra.mxu0 %v1217
  %2204 = vmatprep.subr.bf16.mxu0 0
  %2205 = vmatpush1.bf16.msra.mxu0 %v1220
  %2206 = vmatprep.subr.bf16.mxu0 0
  %2207 = vmatpush1.bf16.msra.mxu0 %v1223
  %2208 = vmatprep.subr.bf16.mxu0 0
  %2209 = vmatpush1.bf16.msra.mxu0 %v1226
  %2210 = vmatprep.subr.bf16.mxu0 0
  %2211 = vmatpush1.bf16.msra.mxu0 %v1229
  %2212 = vmatprep.subr.bf16.mxu0 0
  %2213 = vmatpush1.bf16.msra.mxu0 0
  %2214 = vmatprep.subr.bf16.mxu0 0
  %2215 = vmatpush1.bf16.msra.mxu0 0
  %2216 = vmatprep.subr.bf16.mxu0 0
  %2217 = vmatpush1.bf16.msra.mxu0 0
  %2218 = vmatprep.subr.bf16.mxu0 0
  %2219 = vmatpush1.bf16.msra.mxu0 0
  %2220 = vmatprep.subr.bf16.mxu0 0
  %2221 = vmatpush1.bf16.msra.mxu0 0
  %2222 = vmatprep.subr.bf16.mxu0 0
  %2223 = vmatpush1.bf16.msra.mxu0 0
  %2224 = vmatprep.subr.bf16.mxu0 0
  %2225 = vmatpush1.bf16.msra.mxu0 0
  %2226 = vmatprep.subr.bf16.mxu0 0
  %2227 = vmatpush1.bf16.msra.mxu0 0
  %2228 = vmatprep.mubr.bf16.mxu0 0
  %2229 = vmatmul.mubr.bf16.gmra.mrb[0].mxu0 %v2058
  %v2230 = vpop.f32.mrb[0].mxu0
  %v2231 = vadd.f32 0.0, %v2230
  %v2232 = vpop.f32.mrb[0].mxu0
  %v2233 = vpop.f32.mrb[0].mxu0
  %v2234 = vadd.f32 0.0, %v2233
  %v2235 = vpop.f32.mrb[0].mxu0
  %2236 = vdwg.mxu0
  %s2237 = smul.u32 6, 6
  %s2238 = smul.addr %s2237, 8
  %s2239 = scalar_lea.vmem [#allocation2], %s2238
  %v2240 = vld [vmem:[%s2239] sm:$0xff]
  %v2241 = vld [vmem:[%s2239 + $0x8] sm:$0xff]
  %v2242 = vld [vmem:[%s2239 + $0x10] sm:$0xff]
  %v2243 = vld [vmem:[%s2239 + $0x30] sm:$0xff]
  %v2244 = vld [vmem:[%s2239 + $0x38] sm:$0xff]
  %v2245 = vld [vmem:[%s2239 + $0x40] sm:$0xff]
  %s2246 = smul.u32 8, 6
  %s2247 = smul.addr %s2246, 8
  %s2248 = scalar_lea.vmem [#allocation2], %s2247
  %v2249 = vld [vmem:[%s2248 + $0x18] sm:$0xff]
  %v2250 = vld [vmem:[%s2248 + $0x20] sm:$0xff]
  %v2251 = vld [vmem:[%s2248 + $0x28] sm:$0xff]
  %v2252 = vld [vmem:[%s2248 + $0x48] sm:$0xff]
  %v2253 = vld [vmem:[%s2248 + $0x50] sm:$0xff]
  %v2254 = vld [vmem:[%s2248 + $0x58] sm:$0xff]
  %v2255 = vadd.f32 %v2240, %v2104
  %v2256 = vadd.f32 %v2243, %v2108
  %v2257 = vxor.u32 %v2255, 2147483648
  %v2258 = vxor.u32 %v2256, 2147483648
  %v2259 = vmul.f32 %v2257, 1.442695
  %v2260 = vpow.pop %v2259
  %v2261 = vmul.f32 %v2258, 1.442695
  %v2262 = vpow.pop %v2261
  %v2263 = vadd.f32 %v2260, 1.0
  %v2264 = vadd.f32 %v2262, 1.0
  %v2265 = vrcp.pop %v2263
  %v2266 = vmul.f32 1.0, %v2265
  %v2267 = vrcp.pop %v2264
  %v2268 = vmul.f32 1.0, %v2267
  %v2269 = vadd.f32 %v2241, %v2106
  %v2270 = vadd.f32 %v2244, %v2110
  %v2271 = vxor.u32 %v2269, 2147483648
  %v2272 = vxor.u32 %v2270, 2147483648
  %v2273 = vmul.f32 %v2271, 1.442695
  %v2274 = vpow.pop %v2273
  %v2275 = vmul.f32 %v2272, 1.442695
  %v2276 = vpow.pop %v2275
  %v2277 = vadd.f32 %v2274, 1.0
  %v2278 = vadd.f32 %v2276, 1.0
  %v2279 = vrcp.pop %v2277
  %v2280 = vmul.f32 1.0, %v2279
  %v2281 = vrcp.pop %v2278
  %v2282 = vmul.f32 1.0, %v2281
  %v2283 = vadd.f32 %v2147, %v1388
  %v2284 = vadd.f32 %v2150, %v1388
  %v2285 = vmul.f32 %v2266, %v2283
  %v2286 = vmul.f32 %v2268, %v2284
  %v2287 = vadd.f32 %v2242, %v2285
  %v2288 = vadd.f32 %v2245, %v2286
  %v2289 = vtanh.pop %v2287
  %v2290 = vtanh.pop %v2288
  %v2291 = vsub.f32 1.0, %v2280
  %v2292 = vsub.f32 1.0, %v2282
  %v2293 = vmul.f32 %v2291, %v2289
  %v2294 = vmul.f32 %v2292, %v2290
  %v2295 = vmul.f32 %v2280, %v2001
  %v2296 = vmul.f32 %v2282, %v2002
  %v2297 = vadd.f32 %v2293, %v2295
  %v2298 = vadd.f32 %v2294, %v2296
  %v2299 = vadd.f32 %v2249, %v2188
  %v2300 = vadd.f32 %v2252, %v2192
  %v2301 = vxor.u32 %v2299, 2147483648
  %v2302 = vxor.u32 %v2300, 2147483648
  %v2303 = vmul.f32 %v2301, 1.442695
  %v2304 = vpow.pop %v2303
  %v2305 = vmul.f32 %v2302, 1.442695
  %v2306 = vpow.pop %v2305
  %v2307 = vadd.f32 %v2304, 1.0
  %v2308 = vadd.f32 %v2306, 1.0
  %v2309 = vrcp.pop %v2307
  %v2310 = vmul.f32 1.0, %v2309
  %v2311 = vrcp.pop %v2308
  %v2312 = vmul.f32 1.0, %v2311
  %v2313 = vadd.f32 %v2250, %v2190
  %v2314 = vadd.f32 %v2253, %v2194
  %v2315 = vxor.u32 %v2313, 2147483648
  %v2316 = vxor.u32 %v2314, 2147483648
  %v2317 = vmul.f32 %v2315, 1.442695
  %v2318 = vpow.pop %v2317
  %v2319 = vmul.f32 %v2316, 1.442695
  %v2320 = vpow.pop %v2319
  %v2321 = vadd.f32 %v2318, 1.0
  %v2322 = vadd.f32 %v2320, 1.0
  %v2323 = vrcp.pop %v2321
  %v2324 = vmul.f32 1.0, %v2323
  %v2325 = vrcp.pop %v2322
  %v2326 = vmul.f32 1.0, %v2325
  %v2327 = vadd.f32 %v2231, %v1438
  %v2328 = vadd.f32 %v2234, %v1438
  %v2329 = vmul.f32 %v2310, %v2327
  %v2330 = vmul.f32 %v2312, %v2328
  %v2331 = vadd.f32 %v2251, %v2329
  %v2332 = vadd.f32 %v2254, %v2330
  %v2333 = vtanh.pop %v2331
  %v2334 = vtanh.pop %v2332
  %v2335 = vsub.f32 1.0, %v2324
  %v2336 = vsub.f32 1.0, %v2326
  %v2337 = vmul.f32 %v2335, %v2333
  %v2338 = vmul.f32 %v2336, %v2334
  %v2339 = vmul.f32 %v2324, %v2045
  %v2340 = vmul.f32 %v2326, %v2046
  %v2341 = vadd.f32 %v2337, %v2339
  %v2342 = vadd.f32 %v2338, %v2340
  %v2343 = vpack.c.bf16 %v2298, %v2297
  %v2345 = vunpack.c.l.b16 %v2343
  %v2346 = vunpack.c.h.b16 %v2343
  %v2347 = vpack.c.b16 %v2345, %v2345
  %v2348 = vpack.c.b16 %v2346, %v2346
  %s2351 = scalar_lea.vmem %s7, 24
  %2352 = vst [vmem:[%s2351] sm:$0xf] %v2347
  %2353 = vst [vmem:[%s2351 + $0x4] sm:$0xf] %v2348
  %v2354 = vpack.c.bf16 %v2342, %v2341
  %v2356 = vunpack.c.l.b16 %v2354
  %v2357 = vunpack.c.h.b16 %v2354
  %v2358 = vpack.c.b16 %v2356, %v2356
  %v2359 = vpack.c.b16 %v2357, %v2357
  %s2362 = scalar_lea.vmem %s8, 32
  %2363 = vst [vmem:[%s2362] sm:$0xf] %v2358
  %2364 = vst [vmem:[%s2362 + $0x4] sm:$0xf] %v2359
  %2365 = vmatprep.subr.bf16.mxu0 %v995
  %2366 = vmatpush1.bf16.msra.mxu0 %v994
  %2367 = vmatprep.subr.bf16.mxu0 %v998
  %2368 = vmatpush1.bf16.msra.mxu0 %v997
  %2369 = vmatprep.subr.bf16.mxu0 %v1001
  %2370 = vmatpush1.bf16.msra.mxu0 %v1000
  %2371 = vmatprep.subr.bf16.mxu0 %v1004
  %2372 = vmatpush1.bf16.msra.mxu0 %v1003
  %2373 = vmatprep.subr.bf16.mxu0 %v1007
  %2374 = vmatpush1.bf16.msra.mxu0 %v1006
  %2375 = vmatprep.subr.bf16.mxu0 %v1010
  %2376 = vmatpush1.bf16.msra.mxu0 %v1009
  %2377 = vmatprep.subr.bf16.mxu0 %v1013
  %2378 = vmatpush1.bf16.msra.mxu0 %v1012
  %2379 = vmatprep.subr.bf16.mxu0 %v1016
  %2380 = vmatpush1.bf16.msra.mxu0 %v1015
  %2381 = vmatprep.subr.bf16.mxu0 0
  %2382 = vmatpush1.bf16.msra.mxu0 0
  %2383 = vmatprep.subr.bf16.mxu0 0
  %2384 = vmatpush1.bf16.msra.mxu0 0
  %2385 = vmatprep.subr.bf16.mxu0 0
  %2386 = vmatpush1.bf16.msra.mxu0 0
  %2387 = vmatprep.subr.bf16.mxu0 0
  %2388 = vmatpush1.bf16.msra.mxu0 0
  %2389 = vmatprep.subr.bf16.mxu0 0
  %2390 = vmatpush1.bf16.msra.mxu0 0
  %2391 = vmatprep.subr.bf16.mxu0 0
  %2392 = vmatpush1.bf16.msra.mxu0 0
  %2393 = vmatprep.subr.bf16.mxu0 0
  %2394 = vmatpush1.bf16.msra.mxu0 0
  %2395 = vmatprep.subr.bf16.mxu0 0
  %2396 = vmatpush1.bf16.msra.mxu0 0
  %2397 = vmatprep.mubr.bf16.mxu0 0
  %2398 = vmatmul.mubr.bf16.gmra.mrb[0].mxu0 %v2343
  %v2399 = vpop.f32.mrb[0].mxu0
  %v2400 = vadd.f32 0.0, %v2399
  %v2401 = vpop.f32.mrb[0].mxu0
  %v2402 = vadd.f32 0.0, %v2401
  %v2403 = vpop.f32.mrb[0].mxu0
  %v2404 = vadd.f32 0.0, %v2403
  %v2405 = vpop.f32.mrb[0].mxu0
  %v2406 = vadd.f32 0.0, %v2405
  %2407 = vdwg.mxu0
  %2408 = vmatprep.subr.bf16.mxu0 0
  %2409 = vmatpush1.bf16.msra.mxu0 %v996
  %2410 = vmatprep.subr.bf16.mxu0 0
  %2411 = vmatpush1.bf16.msra.mxu0 %v999
  %2412 = vmatprep.subr.bf16.mxu0 0
  %2413 = vmatpush1.bf16.msra.mxu0 %v1002
  %2414 = vmatprep.subr.bf16.mxu0 0
  %2415 = vmatpush1.bf16.msra.mxu0 %v1005
  %2416 = vmatprep.subr.bf16.mxu0 0
  %2417 = vmatpush1.bf16.msra.mxu0 %v1008
  %2418 = vmatprep.subr.bf16.mxu0 0
  %2419 = vmatpush1.bf16.msra.mxu0 %v1011
  %2420 = vmatprep.subr.bf16.mxu0 0
  %2421 = vmatpush1.bf16.msra.mxu0 %v1014
  %2422 = vmatprep.subr.bf16.mxu0 0
  %2423 = vmatpush1.bf16.msra.mxu0 %v1017
  %2424 = vmatprep.subr.bf16.mxu0 0
  %2425 = vmatpush1.bf16.msra.mxu0 0
  %2426 = vmatprep.subr.bf16.mxu0 0
  %2427 = vmatpush1.bf16.msra.mxu0 0
  %2428 = vmatprep.subr.bf16.mxu0 0
  %2429 = vmatpush1.bf16.msra.mxu0 0
  %2430 = vmatprep.subr.bf16.mxu0 0
  %2431 = vmatpush1.bf16.msra.mxu0 0
  %2432 = vmatprep.subr.bf16.mxu0 0
  %2433 = vmatpush1.bf16.msra.mxu0 0
  %2434 = vmatprep.subr.bf16.mxu0 0
  %2435 = vmatpush1.bf16.msra.mxu0 0
  %2436 = vmatprep.subr.bf16.mxu0 0
  %2437 = vmatpush1.bf16.msra.mxu0 0
  %2438 = vmatprep.subr.bf16.mxu0 0
  %2439 = vmatpush1.bf16.msra.mxu0 0
  %2440 = vmatprep.mubr.bf16.mxu0 0
  %2441 = vmatmul.mubr.bf16.gmra.mrb[0].mxu0 %v2343
  %v2442 = vpop.f32.mrb[0].mxu0
  %v2443 = vadd.f32 0.0, %v2442
  %v2444 = vpop.f32.mrb[0].mxu0
  %v2445 = vpop.f32.mrb[0].mxu0
  %v2446 = vadd.f32 0.0, %v2445
  %v2447 = vpop.f32.mrb[0].mxu0
  %2448 = vdwg.mxu0
  %2449 = vmatprep.subr.bf16.mxu0 %v1207
  %2450 = vmatpush1.bf16.msra.mxu0 %v1206
  %2451 = vmatprep.subr.bf16.mxu0 %v1210
  %2452 = vmatpush1.bf16.msra.mxu0 %v1209
  %2453 = vmatprep.subr.bf16.mxu0 %v1213
  %2454 = vmatpush1.bf16.msra.mxu0 %v1212
  %2455 = vmatprep.subr.bf16.mxu0 %v1216
  %2456 = vmatpush1.bf16.msra.mxu0 %v1215
  %2457 = vmatprep.subr.bf16.mxu0 %v1219
  %2458 = vmatpush1.bf16.msra.mxu0 %v1218
  %2459 = vmatprep.subr.bf16.mxu0 %v1222
  %2460 = vmatpush1.bf16.msra.mxu0 %v1221
  %2461 = vmatprep.subr.bf16.mxu0 %v1225
  %2462 = vmatpush1.bf16.msra.mxu0 %v1224
  %2463 = vmatprep.subr.bf16.mxu0 %v1228
  %2464 = vmatpush1.bf16.msra.mxu0 %v1227
  %2465 = vmatprep.subr.bf16.mxu0 0
  %2466 = vmatpush1.bf16.msra.mxu0 0
  %2467 = vmatprep.subr.bf16.mxu0 0
  %2468 = vmatpush1.bf16.msra.mxu0 0
  %2469 = vmatprep.subr.bf16.mxu0 0
  %2470 = vmatpush1.bf16.msra.mxu0 0
  %2471 = vmatprep.subr.bf16.mxu0 0
  %2472 = vmatpush1.bf16.msra.mxu0 0
  %2473 = vmatprep.subr.bf16.mxu0 0
  %2474 = vmatpush1.bf16.msra.mxu0 0
  %2475 = vmatprep.subr.bf16.mxu0 0
  %2476 = vmatpush1.bf16.msra.mxu0 0
  %2477 = vmatprep.subr.bf16.mxu0 0
  %2478 = vmatpush1.bf16.msra.mxu0 0
  %2479 = vmatprep.subr.bf16.mxu0 0
  %2480 = vmatpush1.bf16.msra.mxu0 0
  %2481 = vmatprep.mubr.bf16.mxu0 0
  %2482 = vmatmul.mubr.bf16.gmra.mrb[0].mxu0 %v2354
  %v2483 = vpop.f32.mrb[0].mxu0
  %v2484 = vadd.f32 0.0, %v2483
  %v2485 = vpop.f32.mrb[0].mxu0
  %v2486 = vadd.f32 0.0, %v2485
  %v2487 = vpop.f32.mrb[0].mxu0
  %v2488 = vadd.f32 0.0, %v2487
  %v2489 = vpop.f32.mrb[0].mxu0
  %v2490 = vadd.f32 0.0, %v2489
  %2491 = vdwg.mxu0
  %2492 = vmatprep.subr.bf16.mxu0 0
  %2493 = vmatpush1.bf16.msra.mxu0 %v1208
  %2494 = vmatprep.subr.bf16.mxu0 0
  %2495 = vmatpush1.bf16.msra.mxu0 %v1211
  %2496 = vmatprep.subr.bf16.mxu0 0
  %2497 = vmatpush1.bf16.msra.mxu0 %v1214
  %2498 = vmatprep.subr.bf16.mxu0 0
  %2499 = vmatpush1.bf16.msra.mxu0 %v1217
  %2500 = vmatprep.subr.bf16.mxu0 0
  %2501 = vmatpush1.bf16.msra.mxu0 %v1220
  %2502 = vmatprep.subr.bf16.mxu0 0
  %2503 = vmatpush1.bf16.msra.mxu0 %v1223
  %2504 = vmatprep.subr.bf16.mxu0 0
  %2505 = vmatpush1.bf16.msra.mxu0 %v1226
  %2506 = vmatprep.subr.bf16.mxu0 0
  %2507 = vmatpush1.bf16.msra.mxu0 %v1229
  %2508 = vmatprep.subr.bf16.mxu0 0
  %2509 = vmatpush1.bf16.msra.mxu0 0
  %2510 = vmatprep.subr.bf16.mxu0 0
  %2511 = vmatpush1.bf16.msra.mxu0 0
  %2512 = vmatprep.subr.bf16.mxu0 0
  %2513 = vmatpush1.bf16.msra.mxu0 0
  %2514 = vmatprep.subr.bf16.mxu0 0
  %2515 = vmatpush1.bf16.msra.mxu0 0
  %2516 = vmatprep.subr.bf16.mxu0 0
  %2517 = vmatpush1.bf16.msra.mxu0 0
  %2518 = vmatprep.subr.bf16.mxu0 0
  %2519 = vmatpush1.bf16.msra.mxu0 0
  %2520 = vmatprep.subr.bf16.mxu0 0
  %2521 = vmatpush1.bf16.msra.mxu0 0
  %2522 = vmatprep.subr.bf16.mxu0 0
  %2523 = vmatpush1.bf16.msra.mxu0 0
  %2524 = vmatprep.mubr.bf16.mxu0 0
  %2525 = vmatmul.mubr.bf16.gmra.mrb[0].mxu0 %v2354
  %v2526 = vpop.f32.mrb[0].mxu0
  %v2527 = vadd.f32 0.0, %v2526
  %v2528 = vpop.f32.mrb[0].mxu0
  %v2529 = vpop.f32.mrb[0].mxu0
  %v2530 = vadd.f32 0.0, %v2529
  %v2531 = vpop.f32.mrb[0].mxu0
  %2532 = vdwg.mxu0
  %v2533 = vld [vmem:[%s2248] sm:$0xff]
  %v2534 = vld [vmem:[%s2248 + $0x8] sm:$0xff]
  %v2535 = vld [vmem:[%s2248 + $0x10] sm:$0xff]
  %v2536 = vld [vmem:[%s2248 + $0x30] sm:$0xff]
  %v2537 = vld [vmem:[%s2248 + $0x38] sm:$0xff]
  %v2538 = vld [vmem:[%s2248 + $0x40] sm:$0xff]
  %v2539 = vld [vmem:[%s2239 + $0x18] sm:$0xff]
  %v2540 = vld [vmem:[%s2239 + $0x20] sm:$0xff]
  %v2541 = vld [vmem:[%s2239 + $0x28] sm:$0xff]
  %v2542 = vld [vmem:[%s2239 + $0x48] sm:$0xff]
  %v2543 = vld [vmem:[%s2239 + $0x50] sm:$0xff]
  %v2544 = vld [vmem:[%s2239 + $0x58] sm:$0xff]
  %v2545 = vadd.f32 %v2533, %v2400
  %v2546 = vadd.f32 %v2536, %v2404
  %v2547 = vxor.u32 %v2545, 2147483648
  %v2548 = vxor.u32 %v2546, 2147483648
  %v2549 = vmul.f32 %v2547, 1.442695
  %v2550 = vpow.pop %v2549
  %v2551 = vmul.f32 %v2548, 1.442695
  %v2552 = vpow.pop %v2551
  %v2553 = vadd.f32 %v2550, 1.0
  %v2554 = vadd.f32 %v2552, 1.0
  %v2555 = vrcp.pop %v2553
  %v2556 = vmul.f32 1.0, %v2555
  %v2557 = vrcp.pop %v2554
  %v2558 = vmul.f32 1.0, %v2557
  %v2559 = vadd.f32 %v2534, %v2402
  %v2560 = vadd.f32 %v2537, %v2406
  %v2561 = vxor.u32 %v2559, 2147483648
  %v2562 = vxor.u32 %v2560, 2147483648
  %v2563 = vmul.f32 %v2561, 1.442695
  %v2564 = vpow.pop %v2563
  %v2565 = vmul.f32 %v2562, 1.442695
  %v2566 = vpow.pop %v2565
  %v2567 = vadd.f32 %v2564, 1.0
  %v2568 = vadd.f32 %v2566, 1.0
  %v2569 = vrcp.pop %v2567
  %v2570 = vmul.f32 1.0, %v2569
  %v2571 = vrcp.pop %v2568
  %v2572 = vmul.f32 1.0, %v2571
  %v2573 = vadd.f32 %v2443, %v1388
  %v2574 = vadd.f32 %v2446, %v1388
  %v2575 = vmul.f32 %v2556, %v2573
  %v2576 = vmul.f32 %v2558, %v2574
  %v2577 = vadd.f32 %v2535, %v2575
  %v2578 = vadd.f32 %v2538, %v2576
  %v2579 = vtanh.pop %v2577
  %v2580 = vtanh.pop %v2578
  %v2581 = vsub.f32 1.0, %v2570
  %v2582 = vsub.f32 1.0, %v2572
  %v2583 = vmul.f32 %v2581, %v2579
  %v2584 = vmul.f32 %v2582, %v2580
  %v2585 = vmul.f32 %v2570, %v2297
  %v2586 = vmul.f32 %v2572, %v2298
  %v2587 = vadd.f32 %v2583, %v2585
  %v2588 = vadd.f32 %v2584, %v2586
  %v2589 = vadd.f32 %v2539, %v2484
  %v2590 = vadd.f32 %v2542, %v2488
  %v2591 = vxor.u32 %v2589, 2147483648
  %v2592 = vxor.u32 %v2590, 2147483648
  %v2593 = vmul.f32 %v2591, 1.442695
  %v2594 = vpow.pop %v2593
  %v2595 = vmul.f32 %v2592, 1.442695
  %v2596 = vpow.pop %v2595
  %v2597 = vadd.f32 %v2594, 1.0
  %v2598 = vadd.f32 %v2596, 1.0
  %v2599 = vrcp.pop %v2597
  %v2600 = vmul.f32 1.0, %v2599
  %v2601 = vrcp.pop %v2598
  %v2602 = vmul.f32 1.0, %v2601
  %v2603 = vadd.f32 %v2540, %v2486
  %v2604 = vadd.f32 %v2543, %v2490
  %v2605 = vxor.u32 %v2603, 2147483648
  %v2606 = vxor.u32 %v2604, 2147483648
  %v2607 = vmul.f32 %v2605, 1.442695
  %v2608 = vpow.pop %v2607
  %v2609 = vmul.f32 %v2606, 1.442695
  %v2610 = vpow.pop %v2609
  %v2611 = vadd.f32 %v2608, 1.0
  %v2612 = vadd.f32 %v2610, 1.0
  %v2613 = vrcp.pop %v2611
  %v2614 = vmul.f32 1.0, %v2613
  %v2615 = vrcp.pop %v2612
  %v2616 = vmul.f32 1.0, %v2615
  %v2617 = vadd.f32 %v2527, %v1438
  %v2618 = vadd.f32 %v2530, %v1438
  %v2619 = vmul.f32 %v2600, %v2617
  %v2620 = vmul.f32 %v2602, %v2618
  %v2621 = vadd.f32 %v2541, %v2619
  %v2622 = vadd.f32 %v2544, %v2620
  %v2623 = vtanh.pop %v2621
  %v2624 = vtanh.pop %v2622
  %v2625 = vsub.f32 1.0, %v2614
  %v2626 = vsub.f32 1.0, %v2616
  %v2627 = vmul.f32 %v2625, %v2623
  %v2628 = vmul.f32 %v2626, %v2624
  %v2629 = vmul.f32 %v2614, %v2341
  %v2630 = vmul.f32 %v2616, %v2342
  %v2631 = vadd.f32 %v2627, %v2629
  %v2632 = vadd.f32 %v2628, %v2630
  %v2633 = vpack.c.bf16 %v2588, %v2587
  %v2635 = vunpack.c.l.b16 %v2633
  %v2636 = vunpack.c.h.b16 %v2633
  %v2637 = vpack.c.b16 %v2635, %v2635
  %v2638 = vpack.c.b16 %v2636, %v2636
  %s2641 = scalar_lea.vmem %s7, 32
  %2642 = vst [vmem:[%s2641] sm:$0xf] %v2637
  %2643 = vst [vmem:[%s2641 + $0x4] sm:$0xf] %v2638
  %v2644 = vpack.c.bf16 %v2632, %v2631
  %v2646 = vunpack.c.l.b16 %v2644
  %v2647 = vunpack.c.h.b16 %v2644
  %v2648 = vpack.c.b16 %v2646, %v2646
  %v2649 = vpack.c.b16 %v2647, %v2647
  %s2652 = scalar_lea.vmem %s8, 24
  %2653 = vst [vmem:[%s2652] sm:$0xf] %v2648
  %2654 = vst [vmem:[%s2652 + $0x4] sm:$0xf] %v2649
  %2655 = vmatprep.subr.bf16.mxu0 %v995
  %2656 = vmatpush1.bf16.msra.mxu0 %v994
  %2657 = vmatprep.subr.bf16.mxu0 %v998
  %2658 = vmatpush1.bf16.msra.mxu0 %v997
  %2659 = vmatprep.subr.bf16.mxu0 %v1001
  %2660 = vmatpush1.bf16.msra.mxu0 %v1000
  %2661 = vmatprep.subr.bf16.mxu0 %v1004
  %2662 = vmatpush1.bf16.msra.mxu0 %v1003
  %2663 = vmatprep.subr.bf16.mxu0 %v1007
  %2664 = vmatpush1.bf16.msra.mxu0 %v1006
  %2665 = vmatprep.subr.bf16.mxu0 %v1010
  %2666 = vmatpush1.bf16.msra.mxu0 %v1009
  %2667 = vmatprep.subr.bf16.mxu0 %v1013
  %2668 = vmatpush1.bf16.msra.mxu0 %v1012
  %2669 = vmatprep.subr.bf16.mxu0 %v1016
  %2670 = vmatpush1.bf16.msra.mxu0 %v1015
  %2671 = vmatprep.subr.bf16.mxu0 0
  %2672 = vmatpush1.bf16.msra.mxu0 0
  %2673 = vmatprep.subr.bf16.mxu0 0
  %2674 = vmatpush1.bf16.msra.mxu0 0
  %2675 = vmatprep.subr.bf16.mxu0 0
  %2676 = vmatpush1.bf16.msra.mxu0 0
  %2677 = vmatprep.subr.bf16.mxu0 0
  %2678 = vmatpush1.bf16.msra.mxu0 0
  %2679 = vmatprep.subr.bf16.mxu0 0
  %2680 = vmatpush1.bf16.msra.mxu0 0
  %2681 = vmatprep.subr.bf16.mxu0 0
  %2682 = vmatpush1.bf16.msra.mxu0 0
  %2683 = vmatprep.subr.bf16.mxu0 0
  %2684 = vmatpush1.bf16.msra.mxu0 0
  %2685 = vmatprep.subr.bf16.mxu0 0
  %2686 = vmatpush1.bf16.msra.mxu0 0
  %2687 = vmatprep.mubr.bf16.mxu0 0
  %2688 = vmatmul.mubr.bf16.gmra.mrb[0].mxu0 %v2633
  %v2689 = vpop.f32.mrb[0].mxu0
  %v2690 = vadd.f32 0.0, %v2689
  %v2691 = vpop.f32.mrb[0].mxu0
  %v2692 = vadd.f32 0.0, %v2691
  %v2693 = vpop.f32.mrb[0].mxu0
  %v2694 = vadd.f32 0.0, %v2693
  %v2695 = vpop.f32.mrb[0].mxu0
  %v2696 = vadd.f32 0.0, %v2695
  %2697 = vdwg.mxu0
  %2698 = vmatprep.subr.bf16.mxu0 0
  %2699 = vmatpush1.bf16.msra.mxu0 %v996
  %2700 = vmatprep.subr.bf16.mxu0 0
  %2701 = vmatpush1.bf16.msra.mxu0 %v999
  %2702 = vmatprep.subr.bf16.mxu0 0
  %2703 = vmatpush1.bf16.msra.mxu0 %v1002
  %2704 = vmatprep.subr.bf16.mxu0 0
  %2705 = vmatpush1.bf16.msra.mxu0 %v1005
  %2706 = vmatprep.subr.bf16.mxu0 0
  %2707 = vmatpush1.bf16.msra.mxu0 %v1008
  %2708 = vmatprep.subr.bf16.mxu0 0
  %2709 = vmatpush1.bf16.msra.mxu0 %v1011
  %2710 = vmatprep.subr.bf16.mxu0 0
  %2711 = vmatpush1.bf16.msra.mxu0 %v1014
  %2712 = vmatprep.subr.bf16.mxu0 0
  %2713 = vmatpush1.bf16.msra.mxu0 %v1017
  %2714 = vmatprep.subr.bf16.mxu0 0
  %2715 = vmatpush1.bf16.msra.mxu0 0
  %2716 = vmatprep.subr.bf16.mxu0 0
  %2717 = vmatpush1.bf16.msra.mxu0 0
  %2718 = vmatprep.subr.bf16.mxu0 0
  %2719 = vmatpush1.bf16.msra.mxu0 0
  %2720 = vmatprep.subr.bf16.mxu0 0
  %2721 = vmatpush1.bf16.msra.mxu0 0
  %2722 = vmatprep.subr.bf16.mxu0 0
  %2723 = vmatpush1.bf16.msra.mxu0 0
  %2724 = vmatprep.subr.bf16.mxu0 0
  %2725 = vmatpush1.bf16.msra.mxu0 0
  %2726 = vmatprep.subr.bf16.mxu0 0
  %2727 = vmatpush1.bf16.msra.mxu0 0
  %2728 = vmatprep.subr.bf16.mxu0 0
  %2729 = vmatpush1.bf16.msra.mxu0 0
  %2730 = vmatprep.mubr.bf16.mxu0 0
  %2731 = vmatmul.mubr.bf16.gmra.mrb[0].mxu0 %v2633
  %v2732 = vpop.f32.mrb[0].mxu0
  %v2733 = vadd.f32 0.0, %v2732
  %v2734 = vpop.f32.mrb[0].mxu0
  %v2735 = vpop.f32.mrb[0].mxu0
  %v2736 = vadd.f32 0.0, %v2735
  %v2737 = vpop.f32.mrb[0].mxu0
  %2738 = vdwg.mxu0
  %2739 = vmatprep.subr.bf16.mxu0 %v1207
  %2740 = vmatpush1.bf16.msra.mxu0 %v1206
  %2741 = vmatprep.subr.bf16.mxu0 %v1210
  %2742 = vmatpush1.bf16.msra.mxu0 %v1209
  %2743 = vmatprep.subr.bf16.mxu0 %v1213
  %2744 = vmatpush1.bf16.msra.mxu0 %v1212
  %2745 = vmatprep.subr.bf16.mxu0 %v1216
  %2746 = vmatpush1.bf16.msra.mxu0 %v1215
  %2747 = vmatprep.subr.bf16.mxu0 %v1219
  %2748 = vmatpush1.bf16.msra.mxu0 %v1218
  %2749 = vmatprep.subr.bf16.mxu0 %v1222
  %2750 = vmatpush1.bf16.msra.mxu0 %v1221
  %2751 = vmatprep.subr.bf16.mxu0 %v1225
  %2752 = vmatpush1.bf16.msra.mxu0 %v1224
  %2753 = vmatprep.subr.bf16.mxu0 %v1228
  %2754 = vmatpush1.bf16.msra.mxu0 %v1227
  %2755 = vmatprep.subr.bf16.mxu0 0
  %2756 = vmatpush1.bf16.msra.mxu0 0
  %2757 = vmatprep.subr.bf16.mxu0 0
  %2758 = vmatpush1.bf16.msra.mxu0 0
  %2759 = vmatprep.subr.bf16.mxu0 0
  %2760 = vmatpush1.bf16.msra.mxu0 0
  %2761 = vmatprep.subr.bf16.mxu0 0
  %2762 = vmatpush1.bf16.msra.mxu0 0
  %2763 = vmatprep.subr.bf16.mxu0 0
  %2764 = vmatpush1.bf16.msra.mxu0 0
  %2765 = vmatprep.subr.bf16.mxu0 0
  %2766 = vmatpush1.bf16.msra.mxu0 0
  %2767 = vmatprep.subr.bf16.mxu0 0
  %2768 = vmatpush1.bf16.msra.mxu0 0
  %2769 = vmatprep.subr.bf16.mxu0 0
  %2770 = vmatpush1.bf16.msra.mxu0 0
  %2771 = vmatprep.mubr.bf16.mxu0 0
  %2772 = vmatmul.mubr.bf16.gmra.mrb[0].mxu0 %v2644
  %v2773 = vpop.f32.mrb[0].mxu0
  %v2774 = vadd.f32 0.0, %v2773
  %v2775 = vpop.f32.mrb[0].mxu0
  %v2776 = vadd.f32 0.0, %v2775
  %v2777 = vpop.f32.mrb[0].mxu0
  %v2778 = vadd.f32 0.0, %v2777
  %v2779 = vpop.f32.mrb[0].mxu0
  %v2780 = vadd.f32 0.0, %v2779
  %2781 = vdwg.mxu0
  %2782 = vmatprep.subr.bf16.mxu0 0
  %2783 = vmatpush1.bf16.msra.mxu0 %v1208
  %2784 = vmatprep.subr.bf16.mxu0 0
  %2785 = vmatpush1.bf16.msra.mxu0 %v1211
  %2786 = vmatprep.subr.bf16.mxu0 0
  %2787 = vmatpush1.bf16.msra.mxu0 %v1214
  %2788 = vmatprep.subr.bf16.mxu0 0
  %2789 = vmatpush1.bf16.msra.mxu0 %v1217
  %2790 = vmatprep.subr.bf16.mxu0 0
  %2791 = vmatpush1.bf16.msra.mxu0 %v1220
  %2792 = vmatprep.subr.bf16.mxu0 0
  %2793 = vmatpush1.bf16.msra.mxu0 %v1223
  %2794 = vmatprep.subr.bf16.mxu0 0
  %2795 = vmatpush1.bf16.msra.mxu0 %v1226
  %2796 = vmatprep.subr.bf16.mxu0 0
  %2797 = vmatpush1.bf16.msra.mxu0 %v1229
  %2798 = vmatprep.subr.bf16.mxu0 0
  %2799 = vmatpush1.bf16.msra.mxu0 0
  %2800 = vmatprep.subr.bf16.mxu0 0
  %2801 = vmatpush1.bf16.msra.mxu0 0
  %2802 = vmatprep.subr.bf16.mxu0 0
  %2803 = vmatpush1.bf16.msra.mxu0 0
  %2804 = vmatprep.subr.bf16.mxu0 0
  %2805 = vmatpush1.bf16.msra.mxu0 0
  %2806 = vmatprep.subr.bf16.mxu0 0
  %2807 = vmatpush1.bf16.msra.mxu0 0
  %2808 = vmatprep.subr.bf16.mxu0 0
  %2809 = vmatpush1.bf16.msra.mxu0 0
  %2810 = vmatprep.subr.bf16.mxu0 0
  %2811 = vmatpush1.bf16.msra.mxu0 0
  %2812 = vmatprep.subr.bf16.mxu0 0
  %2813 = vmatpush1.bf16.msra.mxu0 0
  %2814 = vmatprep.mubr.bf16.mxu0 0
  %2815 = vmatmul.mubr.bf16.gmra.mrb[0].mxu0 %v2644
  %v2816 = vpop.f32.mrb[0].mxu0
  %v2817 = vadd.f32 0.0, %v2816
  %v2818 = vpop.f32.mrb[0].mxu0
  %v2819 = vpop.f32.mrb[0].mxu0
  %v2820 = vadd.f32 0.0, %v2819
  %v2821 = vpop.f32.mrb[0].mxu0
  %2822 = vdwg.mxu0
  %v2823 = vld [vmem:[%s1952] sm:$0xff]
  %v2824 = vld [vmem:[%s1952 + $0x8] sm:$0xff]
  %v2825 = vld [vmem:[%s1952 + $0x10] sm:$0xff]
  %v2826 = vld [vmem:[%s1952 + $0x30] sm:$0xff]
  %v2827 = vld [vmem:[%s1952 + $0x38] sm:$0xff]
  %v2828 = vld [vmem:[%s1952 + $0x40] sm:$0xff]
  %v2829 = vld [vmem:[%s1943 + $0x18] sm:$0xff]
  %v2830 = vld [vmem:[%s1943 + $0x20] sm:$0xff]
  %v2831 = vld [vmem:[%s1943 + $0x28] sm:$0xff]
  %v2832 = vld [vmem:[%s1943 + $0x48] sm:$0xff]
  %v2833 = vld [vmem:[%s1943 + $0x50] sm:$0xff]
  %v2834 = vld [vmem:[%s1943 + $0x58] sm:$0xff]
  %v2835 = vadd.f32 %v2823, %v2690
  %v2836 = vadd.f32 %v2826, %v2694
  %v2837 = vxor.u32 %v2835, 2147483648
  %v2838 = vxor.u32 %v2836, 2147483648
  %v2839 = vmul.f32 %v2837, 1.442695
  %v2840 = vpow.pop %v2839
  %v2841 = vmul.f32 %v2838, 1.442695
  %v2842 = vpow.pop %v2841
  %v2843 = vadd.f32 %v2840, 1.0
  %v2844 = vadd.f32 %v2842, 1.0
  %v2845 = vrcp.pop %v2843
  %v2846 = vmul.f32 1.0, %v2845
  %v2847 = vrcp.pop %v2844
  %v2848 = vmul.f32 1.0, %v2847
  %v2849 = vadd.f32 %v2824, %v2692
  %v2850 = vadd.f32 %v2827, %v2696
  %v2851 = vxor.u32 %v2849, 2147483648
  %v2852 = vxor.u32 %v2850, 2147483648
  %v2853 = vmul.f32 %v2851, 1.442695
  %v2854 = vpow.pop %v2853
  %v2855 = vmul.f32 %v2852, 1.442695
  %v2856 = vpow.pop %v2855
  %v2857 = vadd.f32 %v2854, 1.0
  %v2858 = vadd.f32 %v2856, 1.0
  %v2859 = vrcp.pop %v2857
  %v2860 = vmul.f32 1.0, %v2859
  %v2861 = vrcp.pop %v2858
  %v2862 = vmul.f32 1.0, %v2861
  %v2863 = vadd.f32 %v2733, %v1388
  %v2864 = vadd.f32 %v2736, %v1388
  %v2865 = vmul.f32 %v2846, %v2863
  %v2866 = vmul.f32 %v2848, %v2864
  %v2867 = vadd.f32 %v2825, %v2865
  %v2868 = vadd.f32 %v2828, %v2866
  %v2869 = vtanh.pop %v2867
  %v2870 = vtanh.pop %v2868
  %v2871 = vsub.f32 1.0, %v2860
  %v2872 = vsub.f32 1.0, %v2862
  %v2873 = vmul.f32 %v2871, %v2869
  %v2874 = vmul.f32 %v2872, %v2870
  %v2875 = vmul.f32 %v2860, %v2587
  %v2876 = vmul.f32 %v2862, %v2588
  %v2877 = vadd.f32 %v2873, %v2875
  %v2878 = vadd.f32 %v2874, %v2876
  %v2879 = vadd.f32 %v2829, %v2774
  %v2880 = vadd.f32 %v2832, %v2778
  %v2881 = vxor.u32 %v2879, 2147483648
  %v2882 = vxor.u32 %v2880, 2147483648
  %v2883 = vmul.f32 %v2881, 1.442695
  %v2884 = vpow.pop %v2883
  %v2885 = vmul.f32 %v2882, 1.442695
  %v2886 = vpow.pop %v2885
  %v2887 = vadd.f32 %v2884, 1.0
  %v2888 = vadd.f32 %v2886, 1.0
  %v2889 = vrcp.pop %v2887
  %v2890 = vmul.f32 1.0, %v2889
  %v2891 = vrcp.pop %v2888
  %v2892 = vmul.f32 1.0, %v2891
  %v2893 = vadd.f32 %v2830, %v2776
  %v2894 = vadd.f32 %v2833, %v2780
  %v2895 = vxor.u32 %v2893, 2147483648
  %v2896 = vxor.u32 %v2894, 2147483648
  %v2897 = vmul.f32 %v2895, 1.442695
  %v2898 = vpow.pop %v2897
  %v2899 = vmul.f32 %v2896, 1.442695
  %v2900 = vpow.pop %v2899
  %v2901 = vadd.f32 %v2898, 1.0
  %v2902 = vadd.f32 %v2900, 1.0
  %v2903 = vrcp.pop %v2901
  %v2904 = vmul.f32 1.0, %v2903
  %v2905 = vrcp.pop %v2902
  %v2906 = vmul.f32 1.0, %v2905
  %v2907 = vadd.f32 %v2817, %v1438
  %v2908 = vadd.f32 %v2820, %v1438
  %v2909 = vmul.f32 %v2890, %v2907
  %v2910 = vmul.f32 %v2892, %v2908
  %v2911 = vadd.f32 %v2831, %v2909
  %v2912 = vadd.f32 %v2834, %v2910
  %v2913 = vtanh.pop %v2911
  %v2914 = vtanh.pop %v2912
  %v2915 = vsub.f32 1.0, %v2904
  %v2916 = vsub.f32 1.0, %v2906
  %v2917 = vmul.f32 %v2915, %v2913
  %v2918 = vmul.f32 %v2916, %v2914
  %v2919 = vmul.f32 %v2904, %v2631
  %v2920 = vmul.f32 %v2906, %v2632
  %v2921 = vadd.f32 %v2917, %v2919
  %v2922 = vadd.f32 %v2918, %v2920
  %v2923 = vpack.c.bf16 %v2878, %v2877
  %v2925 = vunpack.c.l.b16 %v2923
  %v2926 = vunpack.c.h.b16 %v2923
  %v2927 = vpack.c.b16 %v2925, %v2925
  %v2928 = vpack.c.b16 %v2926, %v2926
  %s2931 = scalar_lea.vmem %s7, 40
  %2932 = vst [vmem:[%s2931] sm:$0xf] %v2927
  %2933 = vst [vmem:[%s2931 + $0x4] sm:$0xf] %v2928
  %v2934 = vpack.c.bf16 %v2922, %v2921
  %v2936 = vunpack.c.l.b16 %v2934
  %v2937 = vunpack.c.h.b16 %v2934
  %v2938 = vpack.c.b16 %v2936, %v2936
  %v2939 = vpack.c.b16 %v2937, %v2937
  %s2942 = scalar_lea.vmem %s8, 16
  %2943 = vst [vmem:[%s2942] sm:$0xf] %v2938
  %2944 = vst [vmem:[%s2942 + $0x4] sm:$0xf] %v2939
  %2945 = vmatprep.subr.bf16.mxu0 %v995
  %2946 = vmatpush1.bf16.msra.mxu0 %v994
  %2947 = vmatprep.subr.bf16.mxu0 %v998
  %2948 = vmatpush1.bf16.msra.mxu0 %v997
  %2949 = vmatprep.subr.bf16.mxu0 %v1001
  %2950 = vmatpush1.bf16.msra.mxu0 %v1000
  %2951 = vmatprep.subr.bf16.mxu0 %v1004
  %2952 = vmatpush1.bf16.msra.mxu0 %v1003
  %2953 = vmatprep.subr.bf16.mxu0 %v1007
  %2954 = vmatpush1.bf16.msra.mxu0 %v1006
  %2955 = vmatprep.subr.bf16.mxu0 %v1010
  %2956 = vmatpush1.bf16.msra.mxu0 %v1009
  %2957 = vmatprep.subr.bf16.mxu0 %v1013
  %2958 = vmatpush1.bf16.msra.mxu0 %v1012
  %2959 = vmatprep.subr.bf16.mxu0 %v1016
  %2960 = vmatpush1.bf16.msra.mxu0 %v1015
  %2961 = vmatprep.subr.bf16.mxu0 0
  %2962 = vmatpush1.bf16.msra.mxu0 0
  %2963 = vmatprep.subr.bf16.mxu0 0
  %2964 = vmatpush1.bf16.msra.mxu0 0
  %2965 = vmatprep.subr.bf16.mxu0 0
  %2966 = vmatpush1.bf16.msra.mxu0 0
  %2967 = vmatprep.subr.bf16.mxu0 0
  %2968 = vmatpush1.bf16.msra.mxu0 0
  %2969 = vmatprep.subr.bf16.mxu0 0
  %2970 = vmatpush1.bf16.msra.mxu0 0
  %2971 = vmatprep.subr.bf16.mxu0 0
  %2972 = vmatpush1.bf16.msra.mxu0 0
  %2973 = vmatprep.subr.bf16.mxu0 0
  %2974 = vmatpush1.bf16.msra.mxu0 0
  %2975 = vmatprep.subr.bf16.mxu0 0
  %2976 = vmatpush1.bf16.msra.mxu0 0
  %2977 = vmatprep.mubr.bf16.mxu0 0
  %2978 = vmatmul.mubr.bf16.gmra.mrb[0].mxu0 %v2923
  %v2979 = vpop.f32.mrb[0].mxu0
  %v2980 = vadd.f32 0.0, %v2979
  %v2981 = vpop.f32.mrb[0].mxu0
  %v2982 = vadd.f32 0.0, %v2981
  %v2983 = vpop.f32.mrb[0].mxu0
  %v2984 = vadd.f32 0.0, %v2983
  %v2985 = vpop.f32.mrb[0].mxu0
  %v2986 = vadd.f32 0.0, %v2985
  %2987 = vdwg.mxu0
  %2988 = vmatprep.subr.bf16.mxu0 0
  %2989 = vmatpush1.bf16.msra.mxu0 %v996
  %2990 = vmatprep.subr.bf16.mxu0 0
  %2991 = vmatpush1.bf16.msra.mxu0 %v999
  %2992 = vmatprep.subr.bf16.mxu0 0
  %2993 = vmatpush1.bf16.msra.mxu0 %v1002
  %2994 = vmatprep.subr.bf16.mxu0 0
  %2995 = vmatpush1.bf16.msra.mxu0 %v1005
  %2996 = vmatprep.subr.bf16.mxu0 0
  %2997 = vmatpush1.bf16.msra.mxu0 %v1008
  %2998 = vmatprep.subr.bf16.mxu0 0
  %2999 = vmatpush1.bf16.msra.mxu0 %v1011
  %3000 = vmatprep.subr.bf16.mxu0 0
  %3001 = vmatpush1.bf16.msra.mxu0 %v1014
  %3002 = vmatprep.subr.bf16.mxu0 0
  %3003 = vmatpush1.bf16.msra.mxu0 %v1017
  %3004 = vmatprep.subr.bf16.mxu0 0
  %3005 = vmatpush1.bf16.msra.mxu0 0
  %3006 = vmatprep.subr.bf16.mxu0 0
  %3007 = vmatpush1.bf16.msra.mxu0 0
  %3008 = vmatprep.subr.bf16.mxu0 0
  %3009 = vmatpush1.bf16.msra.mxu0 0
  %3010 = vmatprep.subr.bf16.mxu0 0
  %3011 = vmatpush1.bf16.msra.mxu0 0
  %3012 = vmatprep.subr.bf16.mxu0 0
  %3013 = vmatpush1.bf16.msra.mxu0 0
  %3014 = vmatprep.subr.bf16.mxu0 0
  %3015 = vmatpush1.bf16.msra.mxu0 0
  %3016 = vmatprep.subr.bf16.mxu0 0
  %3017 = vmatpush1.bf16.msra.mxu0 0
  %3018 = vmatprep.subr.bf16.mxu0 0
  %3019 = vmatpush1.bf16.msra.mxu0 0
  %3020 = vmatprep.mubr.bf16.mxu0 0
  %3021 = vmatmul.mubr.bf16.gmra.mrb[0].mxu0 %v2923
  %v3022 = vpop.f32.mrb[0].mxu0
  %v3023 = vadd.f32 0.0, %v3022
  %v3024 = vpop.f32.mrb[0].mxu0
  %v3025 = vpop.f32.mrb[0].mxu0
  %v3026 = vadd.f32 0.0, %v3025
  %v3027 = vpop.f32.mrb[0].mxu0
  %3028 = vdwg.mxu0
  %3029 = vmatprep.subr.bf16.mxu0 %v1207
  %3030 = vmatpush1.bf16.msra.mxu0 %v1206
  %3031 = vmatprep.subr.bf16.mxu0 %v1210
  %3032 = vmatpush1.bf16.msra.mxu0 %v1209
  %3033 = vmatprep.subr.bf16.mxu0 %v1213
  %3034 = vmatpush1.bf16.msra.mxu0 %v1212
  %3035 = vmatprep.subr.bf16.mxu0 %v1216
  %3036 = vmatpush1.bf16.msra.mxu0 %v1215
  %3037 = vmatprep.subr.bf16.mxu0 %v1219
  %3038 = vmatpush1.bf16.msra.mxu0 %v1218
  %3039 = vmatprep.subr.bf16.mxu0 %v1222
  %3040 = vmatpush1.bf16.msra.mxu0 %v1221
  %3041 = vmatprep.subr.bf16.mxu0 %v1225
  %3042 = vmatpush1.bf16.msra.mxu0 %v1224
  %3043 = vmatprep.subr.bf16.mxu0 %v1228
  %3044 = vmatpush1.bf16.msra.mxu0 %v1227
  %3045 = vmatprep.subr.bf16.mxu0 0
  %3046 = vmatpush1.bf16.msra.mxu0 0
  %3047 = vmatprep.subr.bf16.mxu0 0
  %3048 = vmatpush1.bf16.msra.mxu0 0
  %3049 = vmatprep.subr.bf16.mxu0 0
  %3050 = vmatpush1.bf16.msra.mxu0 0
  %3051 = vmatprep.subr.bf16.mxu0 0
  %3052 = vmatpush1.bf16.msra.mxu0 0
  %3053 = vmatprep.subr.bf16.mxu0 0
  %3054 = vmatpush1.bf16.msra.mxu0 0
  %3055 = vmatprep.subr.bf16.mxu0 0
  %3056 = vmatpush1.bf16.msra.mxu0 0
  %3057 = vmatprep.subr.bf16.mxu0 0
  %3058 = vmatpush1.bf16.msra.mxu0 0
  %3059 = vmatprep.subr.bf16.mxu0 0
  %3060 = vmatpush1.bf16.msra.mxu0 0
  %3061 = vmatprep.mubr.bf16.mxu0 0
  %3062 = vmatmul.mubr.bf16.gmra.mrb[0].mxu0 %v2934
  %v3063 = vpop.f32.mrb[0].mxu0
  %v3064 = vadd.f32 0.0, %v3063
  %v3065 = vpop.f32.mrb[0].mxu0
  %v3066 = vadd.f32 0.0, %v3065
  %v3067 = vpop.f32.mrb[0].mxu0
  %v3068 = vadd.f32 0.0, %v3067
  %v3069 = vpop.f32.mrb[0].mxu0
  %v3070 = vadd.f32 0.0, %v3069
  %3071 = vdwg.mxu0
  %3072 = vmatprep.subr.bf16.mxu0 0
  %3073 = vmatpush1.bf16.msra.mxu0 %v1208
  %3074 = vmatprep.subr.bf16.mxu0 0
  %3075 = vmatpush1.bf16.msra.mxu0 %v1211
  %3076 = vmatprep.subr.bf16.mxu0 0
  %3077 = vmatpush1.bf16.msra.mxu0 %v1214
  %3078 = vmatprep.subr.bf16.mxu0 0
  %3079 = vmatpush1.bf16.msra.mxu0 %v1217
  %3080 = vmatprep.subr.bf16.mxu0 0
  %3081 = vmatpush1.bf16.msra.mxu0 %v1220
  %3082 = vmatprep.subr.bf16.mxu0 0
  %3083 = vmatpush1.bf16.msra.mxu0 %v1223
  %3084 = vmatprep.subr.bf16.mxu0 0
  %3085 = vmatpush1.bf16.msra.mxu0 %v1226
  %3086 = vmatprep.subr.bf16.mxu0 0
  %3087 = vmatpush1.bf16.msra.mxu0 %v1229
  %3088 = vmatprep.subr.bf16.mxu0 0
  %3089 = vmatpush1.bf16.msra.mxu0 0
  %3090 = vmatprep.subr.bf16.mxu0 0
  %3091 = vmatpush1.bf16.msra.mxu0 0
  %3092 = vmatprep.subr.bf16.mxu0 0
  %3093 = vmatpush1.bf16.msra.mxu0 0
  %3094 = vmatprep.subr.bf16.mxu0 0
  %3095 = vmatpush1.bf16.msra.mxu0 0
  %3096 = vmatprep.subr.bf16.mxu0 0
  %3097 = vmatpush1.bf16.msra.mxu0 0
  %3098 = vmatprep.subr.bf16.mxu0 0
  %3099 = vmatpush1.bf16.msra.mxu0 0
  %3100 = vmatprep.subr.bf16.mxu0 0
  %3101 = vmatpush1.bf16.msra.mxu0 0
  %3102 = vmatprep.subr.bf16.mxu0 0
  %3103 = vmatpush1.bf16.msra.mxu0 0
  %3104 = vmatprep.mubr.bf16.mxu0 0
  %3105 = vmatmul.mubr.bf16.gmra.mrb[0].mxu0 %v2934
  %v3106 = vpop.f32.mrb[0].mxu0
  %v3107 = vadd.f32 0.0, %v3106
  %v3108 = vpop.f32.mrb[0].mxu0
  %v3109 = vpop.f32.mrb[0].mxu0
  %v3110 = vadd.f32 0.0, %v3109
  %v3111 = vpop.f32.mrb[0].mxu0
  %3112 = vdwg.mxu0
  %v3113 = vld [vmem:[%s1656] sm:$0xff]
  %v3114 = vld [vmem:[%s1656 + $0x8] sm:$0xff]
  %v3115 = vld [vmem:[%s1656 + $0x10] sm:$0xff]
  %v3116 = vld [vmem:[%s1656 + $0x30] sm:$0xff]
  %v3117 = vld [vmem:[%s1656 + $0x38] sm:$0xff]
  %v3118 = vld [vmem:[%s1656 + $0x40] sm:$0xff]
  %v3119 = vld [vmem:[%s1647 + $0x18] sm:$0xff]
  %v3120 = vld [vmem:[%s1647 + $0x20] sm:$0xff]
  %v3121 = vld [vmem:[%s1647 + $0x28] sm:$0xff]
  %v3122 = vld [vmem:[%s1647 + $0x48] sm:$0xff]
  %v3123 = vld [vmem:[%s1647 + $0x50] sm:$0xff]
  %v3124 = vld [vmem:[%s1647 + $0x58] sm:$0xff]
  %v3125 = vadd.f32 %v3113, %v2980
  %v3126 = vadd.f32 %v3116, %v2984
  %v3127 = vxor.u32 %v3125, 2147483648
  %v3128 = vxor.u32 %v3126, 2147483648
  %v3129 = vmul.f32 %v3127, 1.442695
  %v3130 = vpow.pop %v3129
  %v3131 = vmul.f32 %v3128, 1.442695
  %v3132 = vpow.pop %v3131
  %v3133 = vadd.f32 %v3130, 1.0
  %v3134 = vadd.f32 %v3132, 1.0
  %v3135 = vrcp.pop %v3133
  %v3136 = vmul.f32 1.0, %v3135
  %v3137 = vrcp.pop %v3134
  %v3138 = vmul.f32 1.0, %v3137
  %v3139 = vadd.f32 %v3114, %v2982
  %v3140 = vadd.f32 %v3117, %v2986
  %v3141 = vxor.u32 %v3139, 2147483648
  %v3142 = vxor.u32 %v3140, 2147483648
  %v3143 = vmul.f32 %v3141, 1.442695
  %v3144 = vpow.pop %v3143
  %v3145 = vmul.f32 %v3142, 1.442695
  %v3146 = vpow.pop %v3145
  %v3147 = vadd.f32 %v3144, 1.0
  %v3148 = vadd.f32 %v3146, 1.0
  %v3149 = vrcp.pop %v3147
  %v3150 = vmul.f32 1.0, %v3149
  %v3151 = vrcp.pop %v3148
  %v3152 = vmul.f32 1.0, %v3151
  %v3153 = vadd.f32 %v3023, %v1388
  %v3154 = vadd.f32 %v3026, %v1388
  %v3155 = vmul.f32 %v3136, %v3153
  %v3156 = vmul.f32 %v3138, %v3154
  %v3157 = vadd.f32 %v3115, %v3155
  %v3158 = vadd.f32 %v3118, %v3156
  %v3159 = vtanh.pop %v3157
  %v3160 = vtanh.pop %v3158
  %v3161 = vsub.f32 1.0, %v3150
  %v3162 = vsub.f32 1.0, %v3152
  %v3163 = vmul.f32 %v3161, %v3159
  %v3164 = vmul.f32 %v3162, %v3160
  %v3165 = vmul.f32 %v3150, %v2877
  %v3166 = vmul.f32 %v3152, %v2878
  %v3167 = vadd.f32 %v3163, %v3165
  %v3168 = vadd.f32 %v3164, %v3166
  %v3169 = vadd.f32 %v3119, %v3064
  %v3170 = vadd.f32 %v3122, %v3068
  %v3171 = vxor.u32 %v3169, 2147483648
  %v3172 = vxor.u32 %v3170, 2147483648
  %v3173 = vmul.f32 %v3171, 1.442695
  %v3174 = vpow.pop %v3173
  %v3175 = vmul.f32 %v3172, 1.442695
  %v3176 = vpow.pop %v3175
  %v3177 = vadd.f32 %v3174, 1.0
  %v3178 = vadd.f32 %v3176, 1.0
  %v3179 = vrcp.pop %v3177
  %v3180 = vmul.f32 1.0, %v3179
  %v3181 = vrcp.pop %v3178
  %v3182 = vmul.f32 1.0, %v3181
  %v3183 = vadd.f32 %v3120, %v3066
  %v3184 = vadd.f32 %v3123, %v3070
  %v3185 = vxor.u32 %v3183, 2147483648
  %v3186 = vxor.u32 %v3184, 2147483648
  %v3187 = vmul.f32 %v3185, 1.442695
  %v3188 = vpow.pop %v3187
  %v3189 = vmul.f32 %v3186, 1.442695
  %v3190 = vpow.pop %v3189
  %v3191 = vadd.f32 %v3188, 1.0
  %v3192 = vadd.f32 %v3190, 1.0
  %v3193 = vrcp.pop %v3191
  %v3194 = vmul.f32 1.0, %v3193
  %v3195 = vrcp.pop %v3192
  %v3196 = vmul.f32 1.0, %v3195
  %v3197 = vadd.f32 %v3107, %v1438
  %v3198 = vadd.f32 %v3110, %v1438
  %v3199 = vmul.f32 %v3180, %v3197
  %v3200 = vmul.f32 %v3182, %v3198
  %v3201 = vadd.f32 %v3121, %v3199
  %v3202 = vadd.f32 %v3124, %v3200
  %v3203 = vtanh.pop %v3201
  %v3204 = vtanh.pop %v3202
  %v3205 = vsub.f32 1.0, %v3194
  %v3206 = vsub.f32 1.0, %v3196
  %v3207 = vmul.f32 %v3205, %v3203
  %v3208 = vmul.f32 %v3206, %v3204
  %v3209 = vmul.f32 %v3194, %v2921
  %v3210 = vmul.f32 %v3196, %v2922
  %v3211 = vadd.f32 %v3207, %v3209
  %v3212 = vadd.f32 %v3208, %v3210
  %v3213 = vpack.c.bf16 %v3168, %v3167
  %v3215 = vunpack.c.l.b16 %v3213
  %v3216 = vunpack.c.h.b16 %v3213
  %v3217 = vpack.c.b16 %v3215, %v3215
  %v3218 = vpack.c.b16 %v3216, %v3216
  %s3221 = scalar_lea.vmem %s7, 48
  %3222 = vst [vmem:[%s3221] sm:$0xf] %v3217
  %3223 = vst [vmem:[%s3221 + $0x4] sm:$0xf] %v3218
  %v3224 = vpack.c.bf16 %v3212, %v3211
  %v3226 = vunpack.c.l.b16 %v3224
  %v3227 = vunpack.c.h.b16 %v3224
  %v3228 = vpack.c.b16 %v3226, %v3226
  %v3229 = vpack.c.b16 %v3227, %v3227
  %s3232 = scalar_lea.vmem %s8, 8
  %3233 = vst [vmem:[%s3232] sm:$0xf] %v3228
  %3234 = vst [vmem:[%s3232 + $0x4] sm:$0xf] %v3229
  %3235 = vmatprep.subr.bf16.mxu0 %v995
  %3236 = vmatpush1.bf16.msra.mxu0 %v994
  %3237 = vmatprep.subr.bf16.mxu0 %v998
  %3238 = vmatpush1.bf16.msra.mxu0 %v997
  %3239 = vmatprep.subr.bf16.mxu0 %v1001
  %3240 = vmatpush1.bf16.msra.mxu0 %v1000
  %3241 = vmatprep.subr.bf16.mxu0 %v1004
  %3242 = vmatpush1.bf16.msra.mxu0 %v1003
  %3243 = vmatprep.subr.bf16.mxu0 %v1007
  %3244 = vmatpush1.bf16.msra.mxu0 %v1006
  %3245 = vmatprep.subr.bf16.mxu0 %v1010
  %3246 = vmatpush1.bf16.msra.mxu0 %v1009
  %3247 = vmatprep.subr.bf16.mxu0 %v1013
  %3248 = vmatpush1.bf16.msra.mxu0 %v1012
  %3249 = vmatprep.subr.bf16.mxu0 %v1016
  %3250 = vmatpush1.bf16.msra.mxu0 %v1015
  %3251 = vmatprep.subr.bf16.mxu0 0
  %3252 = vmatpush1.bf16.msra.mxu0 0
  %3253 = vmatprep.subr.bf16.mxu0 0
  %3254 = vmatpush1.bf16.msra.mxu0 0
  %3255 = vmatprep.subr.bf16.mxu0 0
  %3256 = vmatpush1.bf16.msra.mxu0 0
  %3257 = vmatprep.subr.bf16.mxu0 0
  %3258 = vmatpush1.bf16.msra.mxu0 0
  %3259 = vmatprep.subr.bf16.mxu0 0
  %3260 = vmatpush1.bf16.msra.mxu0 0
  %3261 = vmatprep.subr.bf16.mxu0 0
  %3262 = vmatpush1.bf16.msra.mxu0 0
  %3263 = vmatprep.subr.bf16.mxu0 0
  %3264 = vmatpush1.bf16.msra.mxu0 0
  %3265 = vmatprep.subr.bf16.mxu0 0
  %3266 = vmatpush1.bf16.msra.mxu0 0
  %3267 = vmatprep.mubr.bf16.mxu0 0
  %3268 = vmatmul.mubr.bf16.gmra.mrb[0].mxu0 %v3213
  %v3269 = vpop.f32.mrb[0].mxu0
  %v3270 = vadd.f32 0.0, %v3269
  %v3271 = vpop.f32.mrb[0].mxu0
  %v3272 = vadd.f32 0.0, %v3271
  %v3273 = vpop.f32.mrb[0].mxu0
  %v3274 = vadd.f32 0.0, %v3273
  %v3275 = vpop.f32.mrb[0].mxu0
  %v3276 = vadd.f32 0.0, %v3275
  %3277 = vdwg.mxu0
  %3278 = vmatprep.subr.bf16.mxu0 0
  %3279 = vmatpush1.bf16.msra.mxu0 %v996
  %3280 = vmatprep.subr.bf16.mxu0 0
  %3281 = vmatpush1.bf16.msra.mxu0 %v999
  %3282 = vmatprep.subr.bf16.mxu0 0
  %3283 = vmatpush1.bf16.msra.mxu0 %v1002
  %3284 = vmatprep.subr.bf16.mxu0 0
  %3285 = vmatpush1.bf16.msra.mxu0 %v1005
  %3286 = vmatprep.subr.bf16.mxu0 0
  %3287 = vmatpush1.bf16.msra.mxu0 %v1008
  %3288 = vmatprep.subr.bf16.mxu0 0
  %3289 = vmatpush1.bf16.msra.mxu0 %v1011
  %3290 = vmatprep.subr.bf16.mxu0 0
  %3291 = vmatpush1.bf16.msra.mxu0 %v1014
  %3292 = vmatprep.subr.bf16.mxu0 0
  %3293 = vmatpush1.bf16.msra.mxu0 %v1017
  %3294 = vmatprep.subr.bf16.mxu0 0
  %3295 = vmatpush1.bf16.msra.mxu0 0
  %3296 = vmatprep.subr.bf16.mxu0 0
  %3297 = vmatpush1.bf16.msra.mxu0 0
  %3298 = vmatprep.subr.bf16.mxu0 0
  %3299 = vmatpush1.bf16.msra.mxu0 0
  %3300 = vmatprep.subr.bf16.mxu0 0
  %3301 = vmatpush1.bf16.msra.mxu0 0
  %3302 = vmatprep.subr.bf16.mxu0 0
  %3303 = vmatpush1.bf16.msra.mxu0 0
  %3304 = vmatprep.subr.bf16.mxu0 0
  %3305 = vmatpush1.bf16.msra.mxu0 0
  %3306 = vmatprep.subr.bf16.mxu0 0
  %3307 = vmatpush1.bf16.msra.mxu0 0
  %3308 = vmatprep.subr.bf16.mxu0 0
  %3309 = vmatpush1.bf16.msra.mxu0 0
  %3310 = vmatprep.mubr.bf16.mxu0 0
  %3311 = vmatmul.mubr.bf16.gmra.mrb[0].mxu0 %v3213
  %v3312 = vpop.f32.mrb[0].mxu0
  %v3313 = vadd.f32 0.0, %v3312
  %v3314 = vpop.f32.mrb[0].mxu0
  %v3315 = vpop.f32.mrb[0].mxu0
  %v3316 = vadd.f32 0.0, %v3315
  %v3317 = vpop.f32.mrb[0].mxu0
  %3318 = vdwg.mxu0
  %3319 = vmatprep.subr.bf16.mxu0 %v1207
  %3320 = vmatpush1.bf16.msra.mxu0 %v1206
  %3321 = vmatprep.subr.bf16.mxu0 %v1210
  %3322 = vmatpush1.bf16.msra.mxu0 %v1209
  %3323 = vmatprep.subr.bf16.mxu0 %v1213
  %3324 = vmatpush1.bf16.msra.mxu0 %v1212
  %3325 = vmatprep.subr.bf16.mxu0 %v1216
  %3326 = vmatpush1.bf16.msra.mxu0 %v1215
  %3327 = vmatprep.subr.bf16.mxu0 %v1219
  %3328 = vmatpush1.bf16.msra.mxu0 %v1218
  %3329 = vmatprep.subr.bf16.mxu0 %v1222
  %3330 = vmatpush1.bf16.msra.mxu0 %v1221
  %3331 = vmatprep.subr.bf16.mxu0 %v1225
  %3332 = vmatpush1.bf16.msra.mxu0 %v1224
  %3333 = vmatprep.subr.bf16.mxu0 %v1228
  %3334 = vmatpush1.bf16.msra.mxu0 %v1227
  %3335 = vmatprep.subr.bf16.mxu0 0
  %3336 = vmatpush1.bf16.msra.mxu0 0
  %3337 = vmatprep.subr.bf16.mxu0 0
  %3338 = vmatpush1.bf16.msra.mxu0 0
  %3339 = vmatprep.subr.bf16.mxu0 0
  %3340 = vmatpush1.bf16.msra.mxu0 0
  %3341 = vmatprep.subr.bf16.mxu0 0
  %3342 = vmatpush1.bf16.msra.mxu0 0
  %3343 = vmatprep.subr.bf16.mxu0 0
  %3344 = vmatpush1.bf16.msra.mxu0 0
  %3345 = vmatprep.subr.bf16.mxu0 0
  %3346 = vmatpush1.bf16.msra.mxu0 0
  %3347 = vmatprep.subr.bf16.mxu0 0
  %3348 = vmatpush1.bf16.msra.mxu0 0
  %3349 = vmatprep.subr.bf16.mxu0 0
  %3350 = vmatpush1.bf16.msra.mxu0 0
  %3351 = vmatprep.mubr.bf16.mxu0 0
  %3352 = vmatmul.mubr.bf16.gmra.mrb[0].mxu0 %v3224
  %v3353 = vpop.f32.mrb[0].mxu0
  %v3354 = vadd.f32 0.0, %v3353
  %v3355 = vpop.f32.mrb[0].mxu0
  %v3356 = vadd.f32 0.0, %v3355
  %v3357 = vpop.f32.mrb[0].mxu0
  %v3358 = vadd.f32 0.0, %v3357
  %v3359 = vpop.f32.mrb[0].mxu0
  %v3360 = vadd.f32 0.0, %v3359
  %3361 = vdwg.mxu0
  %3362 = vmatprep.subr.bf16.mxu0 0
  %3363 = vmatpush1.bf16.msra.mxu0 %v1208
  %3364 = vmatprep.subr.bf16.mxu0 0
  %3365 = vmatpush1.bf16.msra.mxu0 %v1211
  %3366 = vmatprep.subr.bf16.mxu0 0
  %3367 = vmatpush1.bf16.msra.mxu0 %v1214
  %3368 = vmatprep.subr.bf16.mxu0 0
  %3369 = vmatpush1.bf16.msra.mxu0 %v1217
  %3370 = vmatprep.subr.bf16.mxu0 0
  %3371 = vmatpush1.bf16.msra.mxu0 %v1220
  %3372 = vmatprep.subr.bf16.mxu0 0
  %3373 = vmatpush1.bf16.msra.mxu0 %v1223
  %3374 = vmatprep.subr.bf16.mxu0 0
  %3375 = vmatpush1.bf16.msra.mxu0 %v1226
  %3376 = vmatprep.subr.bf16.mxu0 0
  %3377 = vmatpush1.bf16.msra.mxu0 %v1229
  %3378 = vmatprep.subr.bf16.mxu0 0
  %3379 = vmatpush1.bf16.msra.mxu0 0
  %3380 = vmatprep.subr.bf16.mxu0 0
  %3381 = vmatpush1.bf16.msra.mxu0 0
  %3382 = vmatprep.subr.bf16.mxu0 0
  %3383 = vmatpush1.bf16.msra.mxu0 0
  %3384 = vmatprep.subr.bf16.mxu0 0
  %3385 = vmatpush1.bf16.msra.mxu0 0
  %3386 = vmatprep.subr.bf16.mxu0 0
  %3387 = vmatpush1.bf16.msra.mxu0 0
  %3388 = vmatprep.subr.bf16.mxu0 0
  %3389 = vmatpush1.bf16.msra.mxu0 0
  %3390 = vmatprep.subr.bf16.mxu0 0
  %3391 = vmatpush1.bf16.msra.mxu0 0
  %3392 = vmatprep.subr.bf16.mxu0 0
  %3393 = vmatpush1.bf16.msra.mxu0 0
  %3394 = vmatprep.mubr.bf16.mxu0 0
  %3395 = vmatmul.mubr.bf16.gmra.mrb[0].mxu0 %v3224
  %v3396 = vpop.f32.mrb[0].mxu0
  %v3397 = vadd.f32 0.0, %v3396
  %v3398 = vpop.f32.mrb[0].mxu0
  %v3399 = vpop.f32.mrb[0].mxu0
  %v3400 = vadd.f32 0.0, %v3399
  %v3401 = vpop.f32.mrb[0].mxu0
  %3402 = vdwg.mxu0
  %v3403 = vld [vmem:[%s1349] sm:$0xff]
  %v3404 = vld [vmem:[%s1349 + $0x8] sm:$0xff]
  %v3405 = vld [vmem:[%s1349 + $0x10] sm:$0xff]
  %v3406 = vld [vmem:[%s1349 + $0x30] sm:$0xff]
  %v3407 = vld [vmem:[%s1349 + $0x38] sm:$0xff]
  %v3408 = vld [vmem:[%s1349 + $0x40] sm:$0xff]
  %v3409 = vld [vmem:[%s1340 + $0x18] sm:$0xff]
  %v3410 = vld [vmem:[%s1340 + $0x20] sm:$0xff]
  %v3411 = vld [vmem:[%s1340 + $0x28] sm:$0xff]
  %v3412 = vld [vmem:[%s1340 + $0x48] sm:$0xff]
  %v3413 = vld [vmem:[%s1340 + $0x50] sm:$0xff]
  %v3414 = vld [vmem:[%s1340 + $0x58] sm:$0xff]
  %v3415 = vadd.f32 %v3403, %v3270
  %v3416 = vadd.f32 %v3406, %v3274
  %v3417 = vxor.u32 %v3415, 2147483648
  %v3418 = vxor.u32 %v3416, 2147483648
  %v3419 = vmul.f32 %v3417, 1.442695
  %v3420 = vpow.pop %v3419
  %v3421 = vmul.f32 %v3418, 1.442695
  %v3422 = vpow.pop %v3421
  %v3423 = vadd.f32 %v3420, 1.0
  %v3424 = vadd.f32 %v3422, 1.0
  %v3425 = vrcp.pop %v3423
  %v3426 = vmul.f32 1.0, %v3425
  %v3427 = vrcp.pop %v3424
  %v3428 = vmul.f32 1.0, %v3427
  %v3429 = vadd.f32 %v3404, %v3272
  %v3430 = vadd.f32 %v3407, %v3276
  %v3431 = vxor.u32 %v3429, 2147483648
  %v3432 = vxor.u32 %v3430, 2147483648
  %v3433 = vmul.f32 %v3431, 1.442695
  %v3434 = vpow.pop %v3433
  %v3435 = vmul.f32 %v3432, 1.442695
  %v3436 = vpow.pop %v3435
  %v3437 = vadd.f32 %v3434, 1.0
  %v3438 = vadd.f32 %v3436, 1.0
  %v3439 = vrcp.pop %v3437
  %v3440 = vmul.f32 1.0, %v3439
  %v3441 = vrcp.pop %v3438
  %v3442 = vmul.f32 1.0, %v3441
  %v3443 = vadd.f32 %v3313, %v1388
  %v3444 = vadd.f32 %v3316, %v1388
  %v3445 = vmul.f32 %v3426, %v3443
  %v3446 = vmul.f32 %v3428, %v3444
  %v3447 = vadd.f32 %v3405, %v3445
  %v3448 = vadd.f32 %v3408, %v3446
  %v3449 = vtanh.pop %v3447
  %v3450 = vtanh.pop %v3448
  %v3451 = vsub.f32 1.0, %v3440
  %v3452 = vsub.f32 1.0, %v3442
  %v3453 = vmul.f32 %v3451, %v3449
  %v3454 = vmul.f32 %v3452, %v3450
  %v3455 = vmul.f32 %v3440, %v3167
  %v3456 = vmul.f32 %v3442, %v3168
  %v3457 = vadd.f32 %v3453, %v3455
  %v3458 = vadd.f32 %v3454, %v3456
  %v3459 = vadd.f32 %v3409, %v3354
  %v3460 = vadd.f32 %v3412, %v3358
  %v3461 = vxor.u32 %v3459, 2147483648
  %v3462 = vxor.u32 %v3460, 2147483648
  %v3463 = vmul.f32 %v3461, 1.442695
  %v3464 = vpow.pop %v3463
  %v3465 = vmul.f32 %v3462, 1.442695
  %v3466 = vpow.pop %v3465
  %v3467 = vadd.f32 %v3464, 1.0
  %v3468 = vadd.f32 %v3466, 1.0
  %v3469 = vrcp.pop %v3467
  %v3470 = vmul.f32 1.0, %v3469
  %v3471 = vrcp.pop %v3468
  %v3472 = vmul.f32 1.0, %v3471
  %v3473 = vadd.f32 %v3410, %v3356
  %v3474 = vadd.f32 %v3413, %v3360
  %v3475 = vxor.u32 %v3473, 2147483648
  %v3476 = vxor.u32 %v3474, 2147483648
  %v3477 = vmul.f32 %v3475, 1.442695
  %v3478 = vpow.pop %v3477
  %v3479 = vmul.f32 %v3476, 1.442695
  %v3480 = vpow.pop %v3479
  %v3481 = vadd.f32 %v3478, 1.0
  %v3482 = vadd.f32 %v3480, 1.0
  %v3483 = vrcp.pop %v3481
  %v3484 = vmul.f32 1.0, %v3483
  %v3485 = vrcp.pop %v3482
  %v3486 = vmul.f32 1.0, %v3485
  %v3487 = vadd.f32 %v3397, %v1438
  %v3488 = vadd.f32 %v3400, %v1438
  %v3489 = vmul.f32 %v3470, %v3487
  %v3490 = vmul.f32 %v3472, %v3488
  %v3491 = vadd.f32 %v3411, %v3489
  %v3492 = vadd.f32 %v3414, %v3490
  %v3493 = vtanh.pop %v3491
  %v3494 = vtanh.pop %v3492
  %v3495 = vsub.f32 1.0, %v3484
  %v3496 = vsub.f32 1.0, %v3486
  %v3497 = vmul.f32 %v3495, %v3493
  %v3498 = vmul.f32 %v3496, %v3494
  %v3499 = vmul.f32 %v3484, %v3211
  %v3500 = vmul.f32 %v3486, %v3212
  %v3501 = vadd.f32 %v3497, %v3499
  %v3502 = vadd.f32 %v3498, %v3500
  %v3503 = vpack.c.bf16 %v3458, %v3457
  %v3505 = vunpack.c.l.b16 %v3503
  %v3506 = vunpack.c.h.b16 %v3503
  %v3507 = vpack.c.b16 %v3505, %v3505
  %v3508 = vpack.c.b16 %v3506, %v3506
  %s3511 = scalar_lea.vmem %s7, 56
  %3512 = vst [vmem:[%s3511] sm:$0xf] %v3507
  %3513 = vst [vmem:[%s3511 + $0x4] sm:$0xf] %v3508
  %v3514 = vpack.c.bf16 %v3502, %v3501
  %v3516 = vunpack.c.l.b16 %v3514
  %v3517 = vunpack.c.h.b16 %v3514
  %v3518 = vpack.c.b16 %v3516, %v3516
  %v3519 = vpack.c.b16 %v3517, %v3517
  %3522 = vst [vmem:[%s8] sm:$0xf] %v3518
  %3523 = vst [vmem:[%s8 + $0x4] sm:$0xf] %v3519
  // Predicated region
  $region30: #{text_rnn_forward.2} parent=0 // pred_check
    _
  $region31: #{text_rnn_forward.2} parent=0 // pred_check_branch
    %3525 = sbr.rel (0) target = $region33
  $region32: #{text_rnn_forward.2} parent=0 // pred_region
    _
  $region33: #{text_rnn_forward.2} parent=0 // pred_fallthru
    _
  // Predicated region
  $region34: #{text_rnn_forward.2} parent=0 // pred_check
    _
  $region35: #{text_rnn_forward.2} parent=0 // pred_check_branch
    %3527 = sbr.rel (0) target = $region37
  $region36: #{text_rnn_forward.2} parent=0 // pred_region
    _
  $region37: #{text_rnn_forward.2} parent=0 // pred_fallthru
    _
  // Predicated region
  $region38: #{text_rnn_forward.2} parent=0 // pred_check
    _
  $region39: #{text_rnn_forward.2} parent=0 // pred_check_branch
    %3529 = sbr.rel (0) target = $region41
  $region40: #{text_rnn_forward.2} parent=0 // pred_region
    _
  $region41: #{text_rnn_forward.2} parent=0 // pred_fallthru
    _
  // Predicated region
  $region42: #{text_rnn_forward.2} parent=0 // pred_check
    _
  $region43: #{text_rnn_forward.2} parent=0 // pred_check_branch
    %3531 = sbr.rel (0) target = $region45
  $region44: #{text_rnn_forward.2} parent=0 // pred_region
    _
  $region45: #{text_rnn_forward.2} parent=0 // pred_fallthru
    _

</llo_original>
